<compile_context>
chip_gen: v7x
topology: tpu7x:2x2x1
jax: 0.10.0
libtpu: 0.0.40
codegen_flags: <defaults>
</compile_context>

<pallas_src>
import functools

import numpy as np
import jax
import jax.numpy as jnp
from jax.experimental import pallas as pl
from jax.experimental.pallas import tpu as pltpu


# --------------------------------------------------------------------------
# Fused Fire kernel
# --------------------------------------------------------------------------
def _fire_kernel(xc_ref, xlo_ref, xhi_ref, wsq_ref, w1_ref, w3_ref,
                 scs_ref, bss_ref, sc1_ref, bs1_ref, sc3_ref, bs3_ref,
                 o_ref, s_ref, *, TD, H, W, C1, C3, use_bypass):
    t = pl.program_id(1)
    T = pl.num_programs(1)
    Cin = xc_ref.shape[-1]
    Cs = wsq_ref.shape[-1]
    M = TD * H * W
    Cout = C1 + C3

    # Hoisted weight / folded-BN reads (squeeze() runs up to 3x per step).
    w_sq = wsq_ref[...]
    sc_s, bs_s = scs_ref[...], bss_ref[...]
    sc_1, bs_1 = sc1_ref[...], bs1_ref[...]
    sc_3, bs_3 = sc3_ref[...], bs3_ref[...]

    def squeeze(x2d_bf16):
        # (rows, Cin) bf16 @ (Cin, Cs) bf16 -> f32, BN scale/bias, ReLU, back to bf16.
        y = jnp.dot(x2d_bf16, w_sq, preferred_element_type=jnp.float32)
        y = y * sc_s + bs_s
        return jnp.maximum(y, 0.0).astype(jnp.bfloat16)

    # ---- zero only the scratch regions the conv reads but compute never writes ----
    # The (TD, H, W) interior is fully overwritten below, so it is NOT zeroed.
    zrow = jnp.zeros((TD + 2, 1, W + 2, Cs), jnp.bfloat16)          # h-border rows
    s_ref[pl.ds(0, TD + 2), pl.ds(0, 1), pl.ds(0, W + 2), :] = zrow
    s_ref[pl.ds(0, TD + 2), pl.ds(H + 1, 1), pl.ds(0, W + 2), :] = zrow
    zcol = jnp.zeros((TD + 2, H + 2, 1, Cs), jnp.bfloat16)          # w-border columns
    s_ref[pl.ds(0, TD + 2), pl.ds(0, H + 2), pl.ds(0, 1), :] = zcol
    s_ref[pl.ds(0, TD + 2), pl.ds(0, H + 2), pl.ds(W + 1, 1), :] = zcol

    # Depth-halo planes must be re-zeroed at the volume boundary every time: the scratch
    # persists across grid iterations, so the previous step's data there is stale.
    @pl.when(t == 0)
    def _():
        s_ref[0, pl.ds(0, H + 2), pl.ds(0, W + 2), :] = (
            jnp.zeros((H + 2, W + 2, Cs), jnp.bfloat16))

    @pl.when(t == T - 1)
    def _():
        s_ref[TD + 1, pl.ds(0, H + 2), pl.ds(0, W + 2), :] = (
            jnp.zeros((H + 2, W + 2, Cs), jnp.bfloat16))

    # ---- squeeze -> BN -> ReLU; bf16 result stays in the halo'd VMEM scratch ----
    xc = xc_ref[...].reshape(M, Cin)                       # bf16
    s_c = squeeze(xc)                                      # (M, Cs) bf16, reused by e1x1
    s_ref[pl.ds(1, TD), pl.ds(1, H), pl.ds(1, W), :] = s_c.reshape(TD, H, W, Cs)

    # Depth halo planes: recompute squeeze for the neighbouring input planes (cost ~2/TD);
    # at the volume boundary the plane stays zero (just cleared above).
    @pl.when(t > 0)
    def _():
        v = squeeze(xlo_ref[...].reshape(H * W, Cin))
        s_ref[0, pl.ds(1, H), pl.ds(1, W), :] = v.reshape(H, W, Cs)

    @pl.when(t < T - 1)
    def _():
        v = squeeze(xhi_ref[...].reshape(H * W, Cin))
        s_ref[TD + 1, pl.ds(1, H), pl.ds(1, W), :] = v.reshape(H, W, Cs)

    # ---- expand3x3 (3x3x3, pad=1): kw folded into the contraction -> 9 matmuls, K=3*Cs.
    # One contiguous (TD, H, W+2, Cs) slab load per (kd, kh); the 3 kw windows are value
    # slices of that slab stacked along channels to match w3's (3, 3, 3*Cs, C3) layout.
    acc3 = jnp.zeros((M, C3), jnp.float32)
    for kd in range(3):
        for kh in range(3):
            slab = s_ref[pl.ds(kd, TD), pl.ds(kh, H), pl.ds(0, W + 2), :]
            lhs = jnp.concatenate([slab[:, :, kw:kw + W, :] for kw in range(3)],
                                  axis=-1).reshape(M, 3 * Cs)
            acc3 = acc3 + jnp.dot(lhs, w3_ref[kd, kh],
                                  preferred_element_type=jnp.float32)
    y3 = acc3 * sc_3 + bs_3

    # ---- expand1x1 on the centre squeeze activations ----
    y1 = jnp.dot(s_c, w1_ref[...], preferred_element_type=jnp.float32)
    y1 = y1 * sc_1 + bs_1

    if use_bypass:  # residual add BEFORE the final ReLU, as in the PyTorch module
        xf = xc.astype(jnp.float32)
        y1 = y1 + xf[:, :C1]
        y3 = y3 + xf[:, C1:]

    # ---- single lane-dense store of the concatenated output tile ----
    y = jnp.concatenate([jnp.maximum(y1, 0.0), jnp.maximum(y3, 0.0)], axis=-1)
    o_ref[...] = y.reshape(1, TD, H, W, Cout).astype(o_ref.dtype)


# --------------------------------------------------------------------------
# Wrapper
# --------------------------------------------------------------------------
def _fold_bn(conv_bias, gamma, beta, mean, var, eps=1e-5):
    scale = gamma / jnp.sqrt(var + eps)
    bias = (conv_bias - mean) * scale + beta
    return (scale.reshape(1, -1).astype(jnp.float32),
            bias.reshape(1, -1).astype(jnp.float32))


def _tpu_vmem_capacity_bytes():
    try:
        cap = getattr(pltpu.get_tpu_info(), "vmem_capacity_bytes", None)
        if cap:
            return int(cap)
    except Exception:
        pass
    return 64 * 1024 * 1024        # conservative fallback (v7x per-core VMEM)


_VMEM_CAP = _tpu_vmem_capacity_bytes()
_VMEM_LIMIT = min(int(_VMEM_CAP * 0.85), 100 * 1024 * 1024)
_TD_BUDGET = _VMEM_LIMIT // 2      # headroom for weights, halo planes, compiler temporaries


def _choose_td(D, H, W, Cin, Cs, C1, C3, out_bytes, max_slab_rows=None):
    """Largest divisor of D whose slab fits the per-step VMEM budget (lane-padded)."""
    pad128 = lambda c: -(-c // 128) * 128
    Cin_p, Cs_p = pad128(Cin), pad128(Cs)
    C1_p, C3_p, Co_p = pad128(C1), pad128(C3), pad128(C1 + C3)
    per_row = (2 * 2 * Cin_p               # x slab, bf16, double-buffered
               + 2 * out_bytes * Co_p      # output block, double-buffered
               + 2 * Cs_p                  # bf16 halo'd squeeze scratch
               + 2 * Cin_p + 2 * Cs_p      # xc / s_c temporaries
               + 2 * 3 * Cs_p              # kw-folded LHS
               + 4 * C3_p                  # f32 expand3x3 accumulator
               + 4 * (C1_p + C3_p)         # y1 / y3 epilogue
               + out_bytes * Co_p)         # staged concat before the store
    row_cap = min(8192, max(_TD_BUDGET // per_row, H * W))
    if max_slab_rows is not None:
        row_cap = min(row_cap, max(max_slab_rows, H * W))
    best = 1
    for cand in range(1, D + 1):
        if D % cand == 0 and cand * H * W <= row_cap:
            best = cand
    return best


@functools.partial(jax.jit, static_argnames=("use_bypass", "out_dtype", "max_slab_rows"))
def fire_forward(x_ncdhw, params, use_bypass=False, out_dtype=jnp.float32,
                 max_slab_rows=None):
    # NCDHW -> NDHWC (channels-last), bf16 for the kernel's HBM reads.
    x = jnp.transpose(x_ncdhw, (0, 2, 3, 4, 1)).astype(jnp.bfloat16)
    N, D, H, W, Cin = x.shape

    w_sq = params["w_sq"].astype(jnp.bfloat16)                   # (Cin, Cs)
    w_e1 = params["w_e1"].astype(jnp.bfloat16)                   # (Cs, C1)
    Cs, C1 = w_sq.shape[1], w_e1.shape[1]
    C3 = params["w_e3"].shape[-1]
    # kw folded into the contraction: (3,3,3,Cs,C3) -> (3,3,3*Cs,C3), kw-major / Cs-minor.
    w_e3 = params["w_e3"].astype(jnp.bfloat16).reshape(3, 3, 3 * Cs, C3)
    Cout = C1 + C3
    if use_bypass:
        assert Cin == Cout, "bypass requires inplanes == expand1x1 + expand3x3"

    sc_s, bs_s = _fold_bn(params["b_sq"], *params["bn_sq"])
    sc_1, bs_1 = _fold_bn(params["b_e1"], *params["bn_e1"])
    sc_3, bs_3 = _fold_bn(params["b_e3"], *params["bn_e3"])

    out_bytes = int(np.dtype(out_dtype).itemsize)
    TD = _choose_td(D, H, W, Cin, Cs, C1, C3, out_bytes, max_slab_rows)
    T = D // TD

    kernel = functools.partial(_fire_kernel, TD=TD, H=H, W=W, C1=C1, C3=C3,
                               use_bypass=use_bypass)

    def full(shape):
        return pl.BlockSpec(shape, lambda n, t, _nd=len(shape): (0,) * _nd)

    grid_spec = pltpu.PrefetchScalarGridSpec(
        num_scalar_prefetch=0,
        grid=(N, T),
        in_specs=[
            # centre depth slab of x
            pl.BlockSpec((1, TD, H, W, Cin), lambda n, t: (n, t, 0, 0, 0)),
            # lower / upper depth halo planes (index clamped; masked in-kernel at boundary)
            pl.BlockSpec((1, 1, H, W, Cin),
                         lambda n, t: (n, jnp.maximum(t * TD - 1, 0), 0, 0, 0)),
            pl.BlockSpec((1, 1, H, W, Cin),
                         lambda n, t: (n, jnp.minimum(t * TD + TD, D - 1), 0, 0, 0)),
            # weights + folded BN scale/bias (tiny, effectively resident)
            full((Cin, Cs)), full((Cs, C1)), full((3, 3, 3 * Cs, C3)),
            full((1, Cs)), full((1, Cs)),
            full((1, C1)), full((1, C1)),
            full((1, C3)), full((1, C3)),
        ],
        out_specs=pl.BlockSpec((1, TD, H, W, Cout), lambda n, t: (n, t, 0, 0, 0)),
        scratch_shapes=[pltpu.VMEM((TD + 2, H + 2, W + 2, Cs), jnp.bfloat16)],
    )

    out = pl.pallas_call(
        kernel,
        out_shape=jax.ShapeDtypeStruct((N, D, H, W, Cout), out_dtype),
        grid_spec=grid_spec,
        compiler_params=pltpu.CompilerParams(
            dimension_semantics=("parallel", "parallel"),
            vmem_limit_bytes=_VMEM_LIMIT),
    )(x, x, x, w_sq, w_e1, w_e3, sc_s, bs_s, sc_1, bs_1, sc_3, bs_3)

    return jnp.transpose(out, (0, 4, 1, 2, 3))  # back to NCDHW


# --------------------------------------------------------------------------
# Pure-JAX reference (mirrors the kernel's bf16/f32 numerics)
# --------------------------------------------------------------------------
def fire_forward_ref(x_ncdhw, params, use_bypass=False):
    x = jnp.transpose(x_ncdhw, (0, 2, 3, 4, 1)).astype(jnp.bfloat16)
    N, D, H, W, Cin = x.shape
    P = N * D * H * W
    x2d = x.reshape(P, Cin)

    w_sq = params["w_sq"].astype(jnp.bfloat16)
    w_e1 = params["w_e1"].astype(jnp.bfloat16)
    w_e3 = params["w_e3"].astype(jnp.bfloat16)
    Cs, C1, C3 = w_sq.shape[1], w_e1.shape[1], w_e3.shape[-1]

    sc_s, bs_s = _fold_bn(params["b_sq"], *params["bn_sq"])
    sc_1, bs_1 = _fold_bn(params["b_e1"], *params["bn_e1"])
    sc_3, bs_3 = _fold_bn(params["b_e3"], *params["bn_e3"])

    s = jnp.dot(x2d, w_sq, preferred_element_type=jnp.float32) * sc_s + bs_s
    s = jnp.maximum(s, 0.0).astype(jnp.bfloat16)
    sp = jnp.pad(s.reshape(N, D, H, W, Cs), ((0, 0), (1, 1), (1, 1), (1, 1), (0, 0)))

    y3 = jnp.zeros((P, C3), jnp.float32)
    for kd in range(3):
        for kh in range(3):
            for kw in range(3):
                win = sp[:, kd:kd + D, kh:kh + H, kw:kw + W, :].reshape(P, Cs)
                y3 = y3 + jnp.dot(win, w_e3[kd, kh, kw],
                                  preferred_element_type=jnp.float32)
    y3 = y3 * sc_3 + bs_3
    y1 = jnp.dot(s, w_e1, preferred_element_type=jnp.float32) * sc_1 + bs_1

    if use_bypass:
        y1 = y1 + x2d[:, :C1].astype(jnp.float32)
        y3 = y3 + x2d[:, C1:].astype(jnp.float32)

    y = jnp.concatenate([jnp.maximum(y1, 0.0), jnp.maximum(y3, 0.0)], axis=-1)
    return jnp.transpose(y.reshape(N, D, H, W, C1 + C3), (0, 4, 1, 2, 3))


# --------------------------------------------------------------------------
# Deterministic synthetic parameters (shapes per Fire.__init__)
# --------------------------------------------------------------------------
def init_fire_params(key, inplanes, squeeze_planes, e1_planes, e3_planes):
    ks = jax.random.split(key, 12)

    def bn(kg, kb, km, kv, c):
        return (jax.random.uniform(kg, (c,), jnp.float32, 0.5, 1.5),   # gamma
                jax.random.normal(kb, (c,), jnp.float32) * 0.1,        # beta
                jax.random.normal(km, (c,), jnp.float32) * 0.1,        # running_mean
                jax.random.uniform(kv, (c,), jnp.float32, 0.5, 1.5))   # running_var

    return {
        # squeeze conv: PyTorch weight (Cs, Cin, 1,1,1) -> matmul layout (Cin, Cs)
        "w_sq": jax.random.normal(ks[0], (inplanes, squeeze_planes), jnp.float32) * 0.1,
        "b_sq": jax.random.normal(ks[1], (squeeze_planes,), jnp.float32) * 0.05,
        "bn_sq": bn(ks[2], ks[3], ks[4], ks[5], squeeze_planes),
        # expand1x1 conv: (C1, Cs, 1,1,1) -> (Cs, C1)
        "w_e1": jax.random.normal(ks[6], (squeeze_planes, e1_planes), jnp.float32) * 0.1,
        "b_e1": jax.random.normal(ks[7], (e1_planes,), jnp.float32) * 0.05,
        "bn_e1": bn(ks[8], ks[9], ks[10], ks[11], e1_planes),
        # expand3x3 conv: PyTorch (C3, Cs, 3,3,3) -> tap-major layout (3,3,3,Cs,C3)
        "w_e3": jax.random.normal(jax.random.fold_in(key, 100),
                                  (3, 3, 3, squeeze_planes, e3_planes), jnp.float32) * 0.05,
        "b_e3": jax.random.normal(jax.random.fold_in(key, 101),
                                  (e3_planes,), jnp.float32) * 0.05,
        "bn_e3": bn(jax.random.fold_in(key, 102), jax.random.fold_in(key, 103),
                    jax.random.fold_in(key, 104), jax.random.fold_in(key, 105),
                    e3_planes),
    }


# --------------------------------------------------------------------------
if __name__ == "__main__":
    # Small shapes: N=2, Cin=16, D=4, H=W=8; squeeze=8, expand1x1=8, expand3x3=8.
    # use_bypass=True requires Cin == expand1x1 + expand3x3 = 16.
    key = jax.random.PRNGKey(0)
    kx, kp = jax.random.split(key)

    N, Cin, D, H, W = 2, 16, 4, 8, 8
    squeeze_planes, e1_planes, e3_planes = 8, 8, 8

    x = jax.random.normal(kx, (N, Cin, D, H, W), jnp.float32)  # NCDHW like PyTorch
    params = init_fire_params(kp, Cin, squeeze_planes, e1_planes, e3_planes)

    for use_bypass in (True, False):
        ref = jax.block_until_ready(fire_forward_ref(x, params, use_bypass=use_bypass))
        # default slab (single depth slab) and forced multi-slab (exercises halo path)
        for max_rows in (None, H * W):
            out = jax.block_until_ready(
                fire_forward(x, params, use_bypass=use_bypass, max_slab_rows=max_rows))
            assert out.shape == (N, e1_planes + e3_planes, D, H, W)
            max_err = float(jnp.max(jnp.abs(out - ref)))
            assert jnp.allclose(out, ref, atol=1e-2, rtol=1e-2), (
                f"mismatch (use_bypass={use_bypass}, max_slab_rows={max_rows}), "
                f"max abs err = {max_err}")

    print("KERNEL_OK")
</pallas_src>

<mosaic_0001>
module attributes {stable_mosaic.version = 11 : i64} {
  func.func @_fire_kernel(%arg0: i32, %arg1: i32, %arg2: memref<1x4x8x8x16xbf16, #tpu.memory_space<vmem>>, %arg3: memref<1x1x8x8x16xbf16, #tpu.memory_space<vmem>>, %arg4: memref<1x1x8x8x16xbf16, #tpu.memory_space<vmem>>, %arg5: memref<16x8xbf16, #tpu.memory_space<vmem>>, %arg6: memref<8x8xbf16, #tpu.memory_space<vmem>>, %arg7: memref<3x3x24x8xbf16, #tpu.memory_space<vmem>>, %arg8: memref<1x8xf32, #tpu.memory_space<vmem>>, %arg9: memref<1x8xf32, #tpu.memory_space<vmem>>, %arg10: memref<1x8xf32, #tpu.memory_space<vmem>>, %arg11: memref<1x8xf32, #tpu.memory_space<vmem>>, %arg12: memref<1x8xf32, #tpu.memory_space<vmem>>, %arg13: memref<1x8xf32, #tpu.memory_space<vmem>>, %arg14: memref<1x4x8x8x16xf32, #tpu.memory_space<vmem>>, %arg15: memref<6x10x10x8xbf16, #tpu.memory_space<vmem>>) attributes {dimension_semantics = [#tpu.dimension_semantics<parallel>, #tpu.dimension_semantics<parallel>], iteration_bounds = array<i64: 2, 1>, scalar_prefetch = 0 : i64, scratch_operands = 1 : i64, tpu.core_type = #tpu.core_type<tc>, window_params = [{transform_indices = @transform_0, window_bounds = array<i64: 1, 4, 8, 8, 16>}, {transform_indices = @transform_1, window_bounds = array<i64: 1, 1, 8, 8, 16>}, {transform_indices = @transform_2, window_bounds = array<i64: 1, 1, 8, 8, 16>}, {pipeline_mode = #tpu.pipeline_mode<synchronous>, transform_indices = @transform_3, window_bounds = array<i64: 16, 8>}, {pipeline_mode = #tpu.pipeline_mode<synchronous>, transform_indices = @transform_4, window_bounds = array<i64: 8, 8>}, {pipeline_mode = #tpu.pipeline_mode<synchronous>, transform_indices = @transform_5, window_bounds = array<i64: 3, 3, 24, 8>}, {pipeline_mode = #tpu.pipeline_mode<synchronous>, transform_indices = @transform_6, window_bounds = array<i64: 1, 8>}, {pipeline_mode = #tpu.pipeline_mode<synchronous>, transform_indices = @transform_7, window_bounds = array<i64: 1, 8>}, {pipeline_mode = #tpu.pipeline_mode<synchronous>, transform_indices = @transform_8, window_bounds = array<i64: 1, 8>}, {pipeline_mode = #tpu.pipeline_mode<synchronous>, transform_indices = @transform_9, window_bounds = array<i64: 1, 8>}, {pipeline_mode = #tpu.pipeline_mode<synchronous>, transform_indices = @transform_10, window_bounds = array<i64: 1, 8>}, {pipeline_mode = #tpu.pipeline_mode<synchronous>, transform_indices = @transform_11, window_bounds = array<i64: 1, 8>}, {transform_indices = @transform_12, window_bounds = array<i64: 1, 4, 8, 8, 16>}]} {
    %c0 = arith.constant 0 : index
    %c0_0 = arith.constant 0 : index
    %0 = vector.load %arg5[%c0, %c0_0] : memref<16x8xbf16, #tpu.memory_space<vmem>>, vector<16x8xbf16>
    %c0_1 = arith.constant 0 : index
    %c0_2 = arith.constant 0 : index
    %1 = vector.load %arg8[%c0_1, %c0_2] : memref<1x8xf32, #tpu.memory_space<vmem>>, vector<1x8xf32>
    %c0_3 = arith.constant 0 : index
    %c0_4 = arith.constant 0 : index
    %2 = vector.load %arg9[%c0_3, %c0_4] : memref<1x8xf32, #tpu.memory_space<vmem>>, vector<1x8xf32>
    %c0_5 = arith.constant 0 : index
    %c0_6 = arith.constant 0 : index
    %3 = vector.load %arg10[%c0_5, %c0_6] : memref<1x8xf32, #tpu.memory_space<vmem>>, vector<1x8xf32>
    %c0_7 = arith.constant 0 : index
    %c0_8 = arith.constant 0 : index
    %4 = vector.load %arg11[%c0_7, %c0_8] : memref<1x8xf32, #tpu.memory_space<vmem>>, vector<1x8xf32>
    %c0_9 = arith.constant 0 : index
    %c0_10 = arith.constant 0 : index
    %5 = vector.load %arg12[%c0_9, %c0_10] : memref<1x8xf32, #tpu.memory_space<vmem>>, vector<1x8xf32>
    %c0_11 = arith.constant 0 : index
    %c0_12 = arith.constant 0 : index
    %6 = vector.load %arg13[%c0_11, %c0_12] : memref<1x8xf32, #tpu.memory_space<vmem>>, vector<1x8xf32>
    %cst = arith.constant 0.000000e+00 : bf16
    %7 = vector.broadcast %cst : bf16 to vector<6x1x10x8xbf16>
    %c0_13 = arith.constant 0 : index
    %c0_14 = arith.constant 0 : index
    %c0_15 = arith.constant 0 : index
    %c0_16 = arith.constant 0 : index
    %8 = vector.load %arg15[%c0_13, %c0_14, %c0_15, %c0_16] : memref<6x10x10x8xbf16, #tpu.memory_space<vmem>>, vector<6x1x10x8xbf16>
    tpu.vector_store %arg15[%c0_13, %c0_14, %c0_15, %c0_16], %7 {strides = array<i32>} : memref<6x10x10x8xbf16, #tpu.memory_space<vmem>>, vector<6x1x10x8xbf16>,
    %c0_17 = arith.constant 0 : index
    %c9 = arith.constant 9 : index
    %c0_18 = arith.constant 0 : index
    %c0_19 = arith.constant 0 : index
    %9 = vector.load %arg15[%c0_17, %c9, %c0_18, %c0_19] : memref<6x10x10x8xbf16, #tpu.memory_space<vmem>>, vector<6x1x10x8xbf16>
    tpu.vector_store %arg15[%c0_17, %c9, %c0_18, %c0_19], %7 {strides = array<i32>} : memref<6x10x10x8xbf16, #tpu.memory_space<vmem>>, vector<6x1x10x8xbf16>,
    %cst_20 = arith.constant 0.000000e+00 : bf16
    %10 = vector.broadcast %cst_20 : bf16 to vector<6x10x1x8xbf16>
    %c0_21 = arith.constant 0 : index
    %c0_22 = arith.constant 0 : index
    %c0_23 = arith.constant 0 : index
    %c0_24 = arith.constant 0 : index
    %11 = vector.load %arg15[%c0_21, %c0_22, %c0_23, %c0_24] : memref<6x10x10x8xbf16, #tpu.memory_space<vmem>>, vector<6x10x1x8xbf16>
    tpu.vector_store %arg15[%c0_21, %c0_22, %c0_23, %c0_24], %10 {strides = array<i32>} : memref<6x10x10x8xbf16, #tpu.memory_space<vmem>>, vector<6x10x1x8xbf16>,
    %c0_25 = arith.constant 0 : index
    %c0_26 = arith.constant 0 : index
    %c9_27 = arith.constant 9 : index
    %c0_28 = arith.constant 0 : index
    %12 = vector.load %arg15[%c0_25, %c0_26, %c9_27, %c0_28] : memref<6x10x10x8xbf16, #tpu.memory_space<vmem>>, vector<6x10x1x8xbf16>
    tpu.vector_store %arg15[%c0_25, %c0_26, %c9_27, %c0_28], %10 {strides = array<i32>} : memref<6x10x10x8xbf16, #tpu.memory_space<vmem>>, vector<6x10x1x8xbf16>,
    %c0_i32 = arith.constant 0 : i32
    %13 = arith.cmpi eq, %arg1, %c0_i32 : i32
    %14 = arith.extui %13 : i1 to i32
    %c0_i32_29 = arith.constant 0 : i32
    %15 = arith.cmpi ne, %14, %c0_i32_29 : i32
    scf.if %15 {
      %cst_137 = arith.constant 0.000000e+00 : bf16
      %150 = vector.broadcast %cst_137 : bf16 to vector<10x10x8xbf16>
      %c0_138 = arith.constant 0 : index
      %c0_139 = arith.constant 0 : index
      %c0_140 = arith.constant 0 : index
      %c0_141 = arith.constant 0 : index
      %151 = vector.load %arg15[%c0_138, %c0_139, %c0_140, %c0_141] : memref<6x10x10x8xbf16, #tpu.memory_space<vmem>>, vector<1x10x10x8xbf16>
      %152 = vector.shape_cast %151 : vector<1x10x10x8xbf16> to vector<10x10x8xbf16>
      %153 = vector.shape_cast %150 : vector<10x10x8xbf16> to vector<1x10x10x8xbf16>
      tpu.vector_store %arg15[%c0_138, %c0_139, %c0_140, %c0_141], %153 {strides = array<i32>} : memref<6x10x10x8xbf16, #tpu.memory_space<vmem>>, vector<1x10x10x8xbf16>,
    } else {
    }
    %c0_i32_30 = arith.constant 0 : i32
    %16 = arith.cmpi eq, %arg1, %c0_i32_30 : i32
    %17 = arith.extui %16 : i1 to i32
    %c0_i32_31 = arith.constant 0 : i32
    %18 = arith.cmpi ne, %17, %c0_i32_31 : i32
    scf.if %18 {
      %cst_137 = arith.constant 0.000000e+00 : bf16
      %150 = vector.broadcast %cst_137 : bf16 to vector<10x10x8xbf16>
      %c5 = arith.constant 5 : index
      %c0_138 = arith.constant 0 : index
      %c0_139 = arith.constant 0 : index
      %c0_140 = arith.constant 0 : index
      %151 = vector.load %arg15[%c5, %c0_138, %c0_139, %c0_140] : memref<6x10x10x8xbf16, #tpu.memory_space<vmem>>, vector<1x10x10x8xbf16>
      %152 = vector.shape_cast %151 : vector<1x10x10x8xbf16> to vector<10x10x8xbf16>
      %153 = vector.shape_cast %150 : vector<10x10x8xbf16> to vector<1x10x10x8xbf16>
      tpu.vector_store %arg15[%c5, %c0_138, %c0_139, %c0_140], %153 {strides = array<i32>} : memref<6x10x10x8xbf16, #tpu.memory_space<vmem>>, vector<1x10x10x8xbf16>,
    } else {
    }
    %c0_32 = arith.constant 0 : index
    %c0_33 = arith.constant 0 : index
    %c0_34 = arith.constant 0 : index
    %c0_35 = arith.constant 0 : index
    %c0_36 = arith.constant 0 : index
    %19 = vector.load %arg2[%c0_32, %c0_33, %c0_34, %c0_35, %c0_36] : memref<1x4x8x8x16xbf16, #tpu.memory_space<vmem>>, vector<1x4x8x8x16xbf16>
    %20 = vector.shape_cast %19 : vector<1x4x8x8x16xbf16> to vector<256x16xbf16>
    %cst_37 = arith.constant dense<0.000000e+00> : vector<256x8xf32>
    %21 = tpu.matmul %20, %0, %cst_37 {dimension_numbers = #tpu.dot_dimension_numbers<[1], [0], [0], [1], [0, 0, 1, 1], [], []>} : vector<256x16xbf16>, vector<16x8xbf16>, vector<256x8xf32> -> vector<256x8xf32>
    %22 = vector.broadcast %1 : vector<1x8xf32> to vector<256x8xf32>
    %23 = arith.mulf %21, %22 : vector<256x8xf32>
    %24 = vector.broadcast %2 : vector<1x8xf32> to vector<256x8xf32>
    %25 = arith.addf %23, %24 : vector<256x8xf32>
    %cst_38 = arith.constant 0.000000e+00 : f32
    %26 = vector.broadcast %cst_38 : f32 to vector<256x8xf32>
    %27 = arith.maximumf %25, %26 : vector<256x8xf32>
    %28 = arith.truncf %27 : vector<256x8xf32> to vector<256x8xbf16>
    %29 = vector.shape_cast %28 : vector<256x8xbf16> to vector<4x8x8x8xbf16>
    %c1 = arith.constant 1 : index
    %c1_39 = arith.constant 1 : index
    %c1_40 = arith.constant 1 : index
    %c0_41 = arith.constant 0 : index
    %30 = vector.load %arg15[%c1, %c1_39, %c1_40, %c0_41] : memref<6x10x10x8xbf16, #tpu.memory_space<vmem>>, vector<4x8x8x8xbf16>
    tpu.vector_store %arg15[%c1, %c1_39, %c1_40, %c0_41], %29 {strides = array<i32>} : memref<6x10x10x8xbf16, #tpu.memory_space<vmem>>, vector<4x8x8x8xbf16>,
    %c0_i32_42 = arith.constant 0 : i32
    %31 = arith.cmpi sgt, %arg1, %c0_i32_42 : i32
    %32 = arith.extui %31 : i1 to i32
    %c0_i32_43 = arith.constant 0 : i32
    %33 = arith.cmpi ne, %32, %c0_i32_43 : i32
    scf.if %33 {
      %c0_137 = arith.constant 0 : index
      %c0_138 = arith.constant 0 : index
      %c0_139 = arith.constant 0 : index
      %c0_140 = arith.constant 0 : index
      %c0_141 = arith.constant 0 : index
      %150 = vector.load %arg3[%c0_137, %c0_138, %c0_139, %c0_140, %c0_141] : memref<1x1x8x8x16xbf16, #tpu.memory_space<vmem>>, vector<1x1x8x8x16xbf16>
      %151 = vector.shape_cast %150 : vector<1x1x8x8x16xbf16> to vector<64x16xbf16>
      %cst_142 = arith.constant dense<0.000000e+00> : vector<64x8xf32>
      %152 = tpu.matmul %151, %0, %cst_142 {dimension_numbers = #tpu.dot_dimension_numbers<[1], [0], [0], [1], [0, 0, 1, 1], [], []>} : vector<64x16xbf16>, vector<16x8xbf16>, vector<64x8xf32> -> vector<64x8xf32>
      %153 = vector.broadcast %1 : vector<1x8xf32> to vector<64x8xf32>
      %154 = arith.mulf %152, %153 : vector<64x8xf32>
      %155 = vector.broadcast %2 : vector<1x8xf32> to vector<64x8xf32>
      %156 = arith.addf %154, %155 : vector<64x8xf32>
      %cst_143 = arith.constant 0.000000e+00 : f32
      %157 = vector.broadcast %cst_143 : f32 to vector<64x8xf32>
      %158 = arith.maximumf %156, %157 : vector<64x8xf32>
      %159 = arith.truncf %158 : vector<64x8xf32> to vector<64x8xbf16>
      %160 = vector.shape_cast %159 : vector<64x8xbf16> to vector<8x8x8xbf16>
      %c0_144 = arith.constant 0 : index
      %c1_145 = arith.constant 1 : index
      %c1_146 = arith.constant 1 : index
      %c0_147 = arith.constant 0 : index
      %161 = vector.load %arg15[%c0_144, %c1_145, %c1_146, %c0_147] : memref<6x10x10x8xbf16, #tpu.memory_space<vmem>>, vector<1x8x8x8xbf16>
      %162 = vector.shape_cast %161 : vector<1x8x8x8xbf16> to vector<8x8x8xbf16>
      %163 = vector.shape_cast %160 : vector<8x8x8xbf16> to vector<1x8x8x8xbf16>
      tpu.vector_store %arg15[%c0_144, %c1_145, %c1_146, %c0_147], %163 {strides = array<i32>} : memref<6x10x10x8xbf16, #tpu.memory_space<vmem>>, vector<1x8x8x8xbf16>,
    } else {
    }
    %c0_i32_44 = arith.constant 0 : i32
    %34 = arith.cmpi slt, %arg1, %c0_i32_44 : i32
    %35 = arith.extui %34 : i1 to i32
    %c0_i32_45 = arith.constant 0 : i32
    %36 = arith.cmpi ne, %35, %c0_i32_45 : i32
    scf.if %36 {
      %c0_137 = arith.constant 0 : index
      %c0_138 = arith.constant 0 : index
      %c0_139 = arith.constant 0 : index
      %c0_140 = arith.constant 0 : index
      %c0_141 = arith.constant 0 : index
      %150 = vector.load %arg4[%c0_137, %c0_138, %c0_139, %c0_140, %c0_141] : memref<1x1x8x8x16xbf16, #tpu.memory_space<vmem>>, vector<1x1x8x8x16xbf16>
      %151 = vector.shape_cast %150 : vector<1x1x8x8x16xbf16> to vector<64x16xbf16>
      %cst_142 = arith.constant dense<0.000000e+00> : vector<64x8xf32>
      %152 = tpu.matmul %151, %0, %cst_142 {dimension_numbers = #tpu.dot_dimension_numbers<[1], [0], [0], [1], [0, 0, 1, 1], [], []>} : vector<64x16xbf16>, vector<16x8xbf16>, vector<64x8xf32> -> vector<64x8xf32>
      %153 = vector.broadcast %1 : vector<1x8xf32> to vector<64x8xf32>
      %154 = arith.mulf %152, %153 : vector<64x8xf32>
      %155 = vector.broadcast %2 : vector<1x8xf32> to vector<64x8xf32>
      %156 = arith.addf %154, %155 : vector<64x8xf32>
      %cst_143 = arith.constant 0.000000e+00 : f32
      %157 = vector.broadcast %cst_143 : f32 to vector<64x8xf32>
      %158 = arith.maximumf %156, %157 : vector<64x8xf32>
      %159 = arith.truncf %158 : vector<64x8xf32> to vector<64x8xbf16>
      %160 = vector.shape_cast %159 : vector<64x8xbf16> to vector<8x8x8xbf16>
      %c5 = arith.constant 5 : index
      %c1_144 = arith.constant 1 : index
      %c1_145 = arith.constant 1 : index
      %c0_146 = arith.constant 0 : index
      %161 = vector.load %arg15[%c5, %c1_144, %c1_145, %c0_146] : memref<6x10x10x8xbf16, #tpu.memory_space<vmem>>, vector<1x8x8x8xbf16>
      %162 = vector.shape_cast %161 : vector<1x8x8x8xbf16> to vector<8x8x8xbf16>
      %163 = vector.shape_cast %160 : vector<8x8x8xbf16> to vector<1x8x8x8xbf16>
      tpu.vector_store %arg15[%c5, %c1_144, %c1_145, %c0_146], %163 {strides = array<i32>} : memref<6x10x10x8xbf16, #tpu.memory_space<vmem>>, vector<1x8x8x8xbf16>,
    } else {
    }
    %cst_46 = arith.constant 0.000000e+00 : f32
    %37 = vector.broadcast %cst_46 : f32 to vector<256x8xf32>
    %c0_47 = arith.constant 0 : index
    %c0_48 = arith.constant 0 : index
    %c0_49 = arith.constant 0 : index
    %c0_50 = arith.constant 0 : index
    %38 = vector.load %arg15[%c0_47, %c0_48, %c0_49, %c0_50] : memref<6x10x10x8xbf16, #tpu.memory_space<vmem>>, vector<4x8x10x8xbf16>
    %39 = vector.extract_strided_slice %38 {offsets = [0, 0, 0, 0], sizes = [4, 8, 8, 8], strides = [1, 1, 1, 1]} : vector<4x8x10x8xbf16> to vector<4x8x8x8xbf16>
    %40 = vector.extract_strided_slice %38 {offsets = [0, 0, 1, 0], sizes = [4, 8, 8, 8], strides = [1, 1, 1, 1]} : vector<4x8x10x8xbf16> to vector<4x8x8x8xbf16>
    %41 = vector.extract_strided_slice %38 {offsets = [0, 0, 2, 0], sizes = [4, 8, 8, 8], strides = [1, 1, 1, 1]} : vector<4x8x10x8xbf16> to vector<4x8x8x8xbf16>
    %42 = tpu.concatenate %39, %40, %41 in 3 : vector<4x8x8x8xbf16>, vector<4x8x8x8xbf16>, vector<4x8x8x8xbf16> -> vector<4x8x8x24xbf16>
    %43 = vector.shape_cast %42 : vector<4x8x8x24xbf16> to vector<256x24xbf16>
    %c0_51 = arith.constant 0 : index
    %c0_52 = arith.constant 0 : index
    %c0_53 = arith.constant 0 : index
    %c0_54 = arith.constant 0 : index
    %44 = vector.load %arg7[%c0_51, %c0_52, %c0_53, %c0_54] : memref<3x3x24x8xbf16, #tpu.memory_space<vmem>>, vector<1x1x24x8xbf16>
    %45 = vector.shape_cast %44 : vector<1x1x24x8xbf16> to vector<24x8xbf16>
    %cst_55 = arith.constant dense<0.000000e+00> : vector<256x8xf32>
    %46 = tpu.matmul %43, %45, %cst_55 {dimension_numbers = #tpu.dot_dimension_numbers<[1], [0], [0], [1], [0, 0, 1, 1], [], []>} : vector<256x24xbf16>, vector<24x8xbf16>, vector<256x8xf32> -> vector<256x8xf32>
    %47 = arith.addf %37, %46 : vector<256x8xf32>
    %c0_56 = arith.constant 0 : index
    %c1_57 = arith.constant 1 : index
    %c0_58 = arith.constant 0 : index
    %c0_59 = arith.constant 0 : index
    %48 = vector.load %arg15[%c0_56, %c1_57, %c0_58, %c0_59] : memref<6x10x10x8xbf16, #tpu.memory_space<vmem>>, vector<4x8x10x8xbf16>
    %49 = vector.extract_strided_slice %48 {offsets = [0, 0, 0, 0], sizes = [4, 8, 8, 8], strides = [1, 1, 1, 1]} : vector<4x8x10x8xbf16> to vector<4x8x8x8xbf16>
    %50 = vector.extract_strided_slice %48 {offsets = [0, 0, 1, 0], sizes = [4, 8, 8, 8], strides = [1, 1, 1, 1]} : vector<4x8x10x8xbf16> to vector<4x8x8x8xbf16>
    %51 = vector.extract_strided_slice %48 {offsets = [0, 0, 2, 0], sizes = [4, 8, 8, 8], strides = [1, 1, 1, 1]} : vector<4x8x10x8xbf16> to vector<4x8x8x8xbf16>
    %52 = tpu.concatenate %49, %50, %51 in 3 : vector<4x8x8x8xbf16>, vector<4x8x8x8xbf16>, vector<4x8x8x8xbf16> -> vector<4x8x8x24xbf16>
    %53 = vector.shape_cast %52 : vector<4x8x8x24xbf16> to vector<256x24xbf16>
    %c0_60 = arith.constant 0 : index
    %c1_61 = arith.constant 1 : index
    %c0_62 = arith.constant 0 : index
    %c0_63 = arith.constant 0 : index
    %54 = vector.load %arg7[%c0_60, %c1_61, %c0_62, %c0_63] : memref<3x3x24x8xbf16, #tpu.memory_space<vmem>>, vector<1x1x24x8xbf16>
    %55 = vector.shape_cast %54 : vector<1x1x24x8xbf16> to vector<24x8xbf16>
    %cst_64 = arith.constant dense<0.000000e+00> : vector<256x8xf32>
    %56 = tpu.matmul %53, %55, %cst_64 {dimension_numbers = #tpu.dot_dimension_numbers<[1], [0], [0], [1], [0, 0, 1, 1], [], []>} : vector<256x24xbf16>, vector<24x8xbf16>, vector<256x8xf32> -> vector<256x8xf32>
    %57 = arith.addf %47, %56 : vector<256x8xf32>
    %c0_65 = arith.constant 0 : index
    %c2 = arith.constant 2 : index
    %c0_66 = arith.constant 0 : index
    %c0_67 = arith.constant 0 : index
    %58 = vector.load %arg15[%c0_65, %c2, %c0_66, %c0_67] : memref<6x10x10x8xbf16, #tpu.memory_space<vmem>>, vector<4x8x10x8xbf16>
    %59 = vector.extract_strided_slice %58 {offsets = [0, 0, 0, 0], sizes = [4, 8, 8, 8], strides = [1, 1, 1, 1]} : vector<4x8x10x8xbf16> to vector<4x8x8x8xbf16>
    %60 = vector.extract_strided_slice %58 {offsets = [0, 0, 1, 0], sizes = [4, 8, 8, 8], strides = [1, 1, 1, 1]} : vector<4x8x10x8xbf16> to vector<4x8x8x8xbf16>
    %61 = vector.extract_strided_slice %58 {offsets = [0, 0, 2, 0], sizes = [4, 8, 8, 8], strides = [1, 1, 1, 1]} : vector<4x8x10x8xbf16> to vector<4x8x8x8xbf16>
    %62 = tpu.concatenate %59, %60, %61 in 3 : vector<4x8x8x8xbf16>, vector<4x8x8x8xbf16>, vector<4x8x8x8xbf16> -> vector<4x8x8x24xbf16>
    %63 = vector.shape_cast %62 : vector<4x8x8x24xbf16> to vector<256x24xbf16>
    %c0_68 = arith.constant 0 : index
    %c2_69 = arith.constant 2 : index
    %c0_70 = arith.constant 0 : index
    %c0_71 = arith.constant 0 : index
    %64 = vector.load %arg7[%c0_68, %c2_69, %c0_70, %c0_71] : memref<3x3x24x8xbf16, #tpu.memory_space<vmem>>, vector<1x1x24x8xbf16>
    %65 = vector.shape_cast %64 : vector<1x1x24x8xbf16> to vector<24x8xbf16>
    %cst_72 = arith.constant dense<0.000000e+00> : vector<256x8xf32>
    %66 = tpu.matmul %63, %65, %cst_72 {dimension_numbers = #tpu.dot_dimension_numbers<[1], [0], [0], [1], [0, 0, 1, 1], [], []>} : vector<256x24xbf16>, vector<24x8xbf16>, vector<256x8xf32> -> vector<256x8xf32>
    %67 = arith.addf %57, %66 : vector<256x8xf32>
    %c1_73 = arith.constant 1 : index
    %c0_74 = arith.constant 0 : index
    %c0_75 = arith.constant 0 : index
    %c0_76 = arith.constant 0 : index
    %68 = vector.load %arg15[%c1_73, %c0_74, %c0_75, %c0_76] : memref<6x10x10x8xbf16, #tpu.memory_space<vmem>>, vector<4x8x10x8xbf16>
    %69 = vector.extract_strided_slice %68 {offsets = [0, 0, 0, 0], sizes = [4, 8, 8, 8], strides = [1, 1, 1, 1]} : vector<4x8x10x8xbf16> to vector<4x8x8x8xbf16>
    %70 = vector.extract_strided_slice %68 {offsets = [0, 0, 1, 0], sizes = [4, 8, 8, 8], strides = [1, 1, 1, 1]} : vector<4x8x10x8xbf16> to vector<4x8x8x8xbf16>
    %71 = vector.extract_strided_slice %68 {offsets = [0, 0, 2, 0], sizes = [4, 8, 8, 8], strides = [1, 1, 1, 1]} : vector<4x8x10x8xbf16> to vector<4x8x8x8xbf16>
    %72 = tpu.concatenate %69, %70, %71 in 3 : vector<4x8x8x8xbf16>, vector<4x8x8x8xbf16>, vector<4x8x8x8xbf16> -> vector<4x8x8x24xbf16>
    %73 = vector.shape_cast %72 : vector<4x8x8x24xbf16> to vector<256x24xbf16>
    %c1_77 = arith.constant 1 : index
    %c0_78 = arith.constant 0 : index
    %c0_79 = arith.constant 0 : index
    %c0_80 = arith.constant 0 : index
    %74 = vector.load %arg7[%c1_77, %c0_78, %c0_79, %c0_80] : memref<3x3x24x8xbf16, #tpu.memory_space<vmem>>, vector<1x1x24x8xbf16>
    %75 = vector.shape_cast %74 : vector<1x1x24x8xbf16> to vector<24x8xbf16>
    %cst_81 = arith.constant dense<0.000000e+00> : vector<256x8xf32>
    %76 = tpu.matmul %73, %75, %cst_81 {dimension_numbers = #tpu.dot_dimension_numbers<[1], [0], [0], [1], [0, 0, 1, 1], [], []>} : vector<256x24xbf16>, vector<24x8xbf16>, vector<256x8xf32> -> vector<256x8xf32>
    %77 = arith.addf %67, %76 : vector<256x8xf32>
    %c1_82 = arith.constant 1 : index
    %c1_83 = arith.constant 1 : index
    %c0_84 = arith.constant 0 : index
    %c0_85 = arith.constant 0 : index
    %78 = vector.load %arg15[%c1_82, %c1_83, %c0_84, %c0_85] : memref<6x10x10x8xbf16, #tpu.memory_space<vmem>>, vector<4x8x10x8xbf16>
    %79 = vector.extract_strided_slice %78 {offsets = [0, 0, 0, 0], sizes = [4, 8, 8, 8], strides = [1, 1, 1, 1]} : vector<4x8x10x8xbf16> to vector<4x8x8x8xbf16>
    %80 = vector.extract_strided_slice %78 {offsets = [0, 0, 1, 0], sizes = [4, 8, 8, 8], strides = [1, 1, 1, 1]} : vector<4x8x10x8xbf16> to vector<4x8x8x8xbf16>
    %81 = vector.extract_strided_slice %78 {offsets = [0, 0, 2, 0], sizes = [4, 8, 8, 8], strides = [1, 1, 1, 1]} : vector<4x8x10x8xbf16> to vector<4x8x8x8xbf16>
    %82 = tpu.concatenate %79, %80, %81 in 3 : vector<4x8x8x8xbf16>, vector<4x8x8x8xbf16>, vector<4x8x8x8xbf16> -> vector<4x8x8x24xbf16>
    %83 = vector.shape_cast %82 : vector<4x8x8x24xbf16> to vector<256x24xbf16>
    %c1_86 = arith.constant 1 : index
    %c1_87 = arith.constant 1 : index
    %c0_88 = arith.constant 0 : index
    %c0_89 = arith.constant 0 : index
    %84 = vector.load %arg7[%c1_86, %c1_87, %c0_88, %c0_89] : memref<3x3x24x8xbf16, #tpu.memory_space<vmem>>, vector<1x1x24x8xbf16>
    %85 = vector.shape_cast %84 : vector<1x1x24x8xbf16> to vector<24x8xbf16>
    %cst_90 = arith.constant dense<0.000000e+00> : vector<256x8xf32>
    %86 = tpu.matmul %83, %85, %cst_90 {dimension_numbers = #tpu.dot_dimension_numbers<[1], [0], [0], [1], [0, 0, 1, 1], [], []>} : vector<256x24xbf16>, vector<24x8xbf16>, vector<256x8xf32> -> vector<256x8xf32>
    %87 = arith.addf %77, %86 : vector<256x8xf32>
    %c1_91 = arith.constant 1 : index
    %c2_92 = arith.constant 2 : index
    %c0_93 = arith.constant 0 : index
    %c0_94 = arith.constant 0 : index
    %88 = vector.load %arg15[%c1_91, %c2_92, %c0_93, %c0_94] : memref<6x10x10x8xbf16, #tpu.memory_space<vmem>>, vector<4x8x10x8xbf16>
    %89 = vector.extract_strided_slice %88 {offsets = [0, 0, 0, 0], sizes = [4, 8, 8, 8], strides = [1, 1, 1, 1]} : vector<4x8x10x8xbf16> to vector<4x8x8x8xbf16>
    %90 = vector.extract_strided_slice %88 {offsets = [0, 0, 1, 0], sizes = [4, 8, 8, 8], strides = [1, 1, 1, 1]} : vector<4x8x10x8xbf16> to vector<4x8x8x8xbf16>
    %91 = vector.extract_strided_slice %88 {offsets = [0, 0, 2, 0], sizes = [4, 8, 8, 8], strides = [1, 1, 1, 1]} : vector<4x8x10x8xbf16> to vector<4x8x8x8xbf16>
    %92 = tpu.concatenate %89, %90, %91 in 3 : vector<4x8x8x8xbf16>, vector<4x8x8x8xbf16>, vector<4x8x8x8xbf16> -> vector<4x8x8x24xbf16>
    %93 = vector.shape_cast %92 : vector<4x8x8x24xbf16> to vector<256x24xbf16>
    %c1_95 = arith.constant 1 : index
    %c2_96 = arith.constant 2 : index
    %c0_97 = arith.constant 0 : index
    %c0_98 = arith.constant 0 : index
    %94 = vector.load %arg7[%c1_95, %c2_96, %c0_97, %c0_98] : memref<3x3x24x8xbf16, #tpu.memory_space<vmem>>, vector<1x1x24x8xbf16>
    %95 = vector.shape_cast %94 : vector<1x1x24x8xbf16> to vector<24x8xbf16>
    %cst_99 = arith.constant dense<0.000000e+00> : vector<256x8xf32>
    %96 = tpu.matmul %93, %95, %cst_99 {dimension_numbers = #tpu.dot_dimension_numbers<[1], [0], [0], [1], [0, 0, 1, 1], [], []>} : vector<256x24xbf16>, vector<24x8xbf16>, vector<256x8xf32> -> vector<256x8xf32>
    %97 = arith.addf %87, %96 : vector<256x8xf32>
    %c2_100 = arith.constant 2 : index
    %c0_101 = arith.constant 0 : index
    %c0_102 = arith.constant 0 : index
    %c0_103 = arith.constant 0 : index
    %98 = vector.load %arg15[%c2_100, %c0_101, %c0_102, %c0_103] : memref<6x10x10x8xbf16, #tpu.memory_space<vmem>>, vector<4x8x10x8xbf16>
    %99 = vector.extract_strided_slice %98 {offsets = [0, 0, 0, 0], sizes = [4, 8, 8, 8], strides = [1, 1, 1, 1]} : vector<4x8x10x8xbf16> to vector<4x8x8x8xbf16>
    %100 = vector.extract_strided_slice %98 {offsets = [0, 0, 1, 0], sizes = [4, 8, 8, 8], strides = [1, 1, 1, 1]} : vector<4x8x10x8xbf16> to vector<4x8x8x8xbf16>
    %101 = vector.extract_strided_slice %98 {offsets = [0, 0, 2, 0], sizes = [4, 8, 8, 8], strides = [1, 1, 1, 1]} : vector<4x8x10x8xbf16> to vector<4x8x8x8xbf16>
    %102 = tpu.concatenate %99, %100, %101 in 3 : vector<4x8x8x8xbf16>, vector<4x8x8x8xbf16>, vector<4x8x8x8xbf16> -> vector<4x8x8x24xbf16>
    %103 = vector.shape_cast %102 : vector<4x8x8x24xbf16> to vector<256x24xbf16>
    %c2_104 = arith.constant 2 : index
    %c0_105 = arith.constant 0 : index
    %c0_106 = arith.constant 0 : index
    %c0_107 = arith.constant 0 : index
    %104 = vector.load %arg7[%c2_104, %c0_105, %c0_106, %c0_107] : memref<3x3x24x8xbf16, #tpu.memory_space<vmem>>, vector<1x1x24x8xbf16>
    %105 = vector.shape_cast %104 : vector<1x1x24x8xbf16> to vector<24x8xbf16>
    %cst_108 = arith.constant dense<0.000000e+00> : vector<256x8xf32>
    %106 = tpu.matmul %103, %105, %cst_108 {dimension_numbers = #tpu.dot_dimension_numbers<[1], [0], [0], [1], [0, 0, 1, 1], [], []>} : vector<256x24xbf16>, vector<24x8xbf16>, vector<256x8xf32> -> vector<256x8xf32>
    %107 = arith.addf %97, %106 : vector<256x8xf32>
    %c2_109 = arith.constant 2 : index
    %c1_110 = arith.constant 1 : index
    %c0_111 = arith.constant 0 : index
    %c0_112 = arith.constant 0 : index
    %108 = vector.load %arg15[%c2_109, %c1_110, %c0_111, %c0_112] : memref<6x10x10x8xbf16, #tpu.memory_space<vmem>>, vector<4x8x10x8xbf16>
    %109 = vector.extract_strided_slice %108 {offsets = [0, 0, 0, 0], sizes = [4, 8, 8, 8], strides = [1, 1, 1, 1]} : vector<4x8x10x8xbf16> to vector<4x8x8x8xbf16>
    %110 = vector.extract_strided_slice %108 {offsets = [0, 0, 1, 0], sizes = [4, 8, 8, 8], strides = [1, 1, 1, 1]} : vector<4x8x10x8xbf16> to vector<4x8x8x8xbf16>
    %111 = vector.extract_strided_slice %108 {offsets = [0, 0, 2, 0], sizes = [4, 8, 8, 8], strides = [1, 1, 1, 1]} : vector<4x8x10x8xbf16> to vector<4x8x8x8xbf16>
    %112 = tpu.concatenate %109, %110, %111 in 3 : vector<4x8x8x8xbf16>, vector<4x8x8x8xbf16>, vector<4x8x8x8xbf16> -> vector<4x8x8x24xbf16>
    %113 = vector.shape_cast %112 : vector<4x8x8x24xbf16> to vector<256x24xbf16>
    %c2_113 = arith.constant 2 : index
    %c1_114 = arith.constant 1 : index
    %c0_115 = arith.constant 0 : index
    %c0_116 = arith.constant 0 : index
    %114 = vector.load %arg7[%c2_113, %c1_114, %c0_115, %c0_116] : memref<3x3x24x8xbf16, #tpu.memory_space<vmem>>, vector<1x1x24x8xbf16>
    %115 = vector.shape_cast %114 : vector<1x1x24x8xbf16> to vector<24x8xbf16>
    %cst_117 = arith.constant dense<0.000000e+00> : vector<256x8xf32>
    %116 = tpu.matmul %113, %115, %cst_117 {dimension_numbers = #tpu.dot_dimension_numbers<[1], [0], [0], [1], [0, 0, 1, 1], [], []>} : vector<256x24xbf16>, vector<24x8xbf16>, vector<256x8xf32> -> vector<256x8xf32>
    %117 = arith.addf %107, %116 : vector<256x8xf32>
    %c2_118 = arith.constant 2 : index
    %c2_119 = arith.constant 2 : index
    %c0_120 = arith.constant 0 : index
    %c0_121 = arith.constant 0 : index
    %118 = vector.load %arg15[%c2_118, %c2_119, %c0_120, %c0_121] : memref<6x10x10x8xbf16, #tpu.memory_space<vmem>>, vector<4x8x10x8xbf16>
    %119 = vector.extract_strided_slice %118 {offsets = [0, 0, 0, 0], sizes = [4, 8, 8, 8], strides = [1, 1, 1, 1]} : vector<4x8x10x8xbf16> to vector<4x8x8x8xbf16>
    %120 = vector.extract_strided_slice %118 {offsets = [0, 0, 1, 0], sizes = [4, 8, 8, 8], strides = [1, 1, 1, 1]} : vector<4x8x10x8xbf16> to vector<4x8x8x8xbf16>
    %121 = vector.extract_strided_slice %118 {offsets = [0, 0, 2, 0], sizes = [4, 8, 8, 8], strides = [1, 1, 1, 1]} : vector<4x8x10x8xbf16> to vector<4x8x8x8xbf16>
    %122 = tpu.concatenate %119, %120, %121 in 3 : vector<4x8x8x8xbf16>, vector<4x8x8x8xbf16>, vector<4x8x8x8xbf16> -> vector<4x8x8x24xbf16>
    %123 = vector.shape_cast %122 : vector<4x8x8x24xbf16> to vector<256x24xbf16>
    %c2_122 = arith.constant 2 : index
    %c2_123 = arith.constant 2 : index
    %c0_124 = arith.constant 0 : index
    %c0_125 = arith.constant 0 : index
    %124 = vector.load %arg7[%c2_122, %c2_123, %c0_124, %c0_125] : memref<3x3x24x8xbf16, #tpu.memory_space<vmem>>, vector<1x1x24x8xbf16>
    %125 = vector.shape_cast %124 : vector<1x1x24x8xbf16> to vector<24x8xbf16>
    %cst_126 = arith.constant dense<0.000000e+00> : vector<256x8xf32>
    %126 = tpu.matmul %123, %125, %cst_126 {dimension_numbers = #tpu.dot_dimension_numbers<[1], [0], [0], [1], [0, 0, 1, 1], [], []>} : vector<256x24xbf16>, vector<24x8xbf16>, vector<256x8xf32> -> vector<256x8xf32>
    %127 = arith.addf %117, %126 : vector<256x8xf32>
    %128 = vector.broadcast %5 : vector<1x8xf32> to vector<256x8xf32>
    %129 = arith.mulf %127, %128 : vector<256x8xf32>
    %130 = vector.broadcast %6 : vector<1x8xf32> to vector<256x8xf32>
    %131 = arith.addf %129, %130 : vector<256x8xf32>
    %c0_127 = arith.constant 0 : index
    %c0_128 = arith.constant 0 : index
    %132 = vector.load %arg6[%c0_127, %c0_128] : memref<8x8xbf16, #tpu.memory_space<vmem>>, vector<8x8xbf16>
    %cst_129 = arith.constant dense<0.000000e+00> : vector<256x8xf32>
    %133 = tpu.matmul %28, %132, %cst_129 {dimension_numbers = #tpu.dot_dimension_numbers<[1], [0], [0], [1], [0, 0, 1, 1], [], []>} : vector<256x8xbf16>, vector<8x8xbf16>, vector<256x8xf32> -> vector<256x8xf32>
    %134 = vector.broadcast %3 : vector<1x8xf32> to vector<256x8xf32>
    %135 = arith.mulf %133, %134 : vector<256x8xf32>
    %136 = vector.broadcast %4 : vector<1x8xf32> to vector<256x8xf32>
    %137 = arith.addf %135, %136 : vector<256x8xf32>
    %138 = arith.extf %20 : vector<256x16xbf16> to vector<256x16xf32>
    %139 = vector.extract_strided_slice %138 {offsets = [0, 0], sizes = [256, 8], strides = [1, 1]} : vector<256x16xf32> to vector<256x8xf32>
    %140 = arith.addf %137, %139 : vector<256x8xf32>
    %141 = vector.extract_strided_slice %138 {offsets = [0, 8], sizes = [256, 8], strides = [1, 1]} : vector<256x16xf32> to vector<256x8xf32>
    %142 = arith.addf %131, %141 : vector<256x8xf32>
    %cst_130 = arith.constant 0.000000e+00 : f32
    %143 = vector.broadcast %cst_130 : f32 to vector<256x8xf32>
    %144 = arith.maximumf %140, %143 : vector<256x8xf32>
    %cst_131 = arith.constant 0.000000e+00 : f32
    %145 = vector.broadcast %cst_131 : f32 to vector<256x8xf32>
    %146 = arith.maximumf %142, %145 : vector<256x8xf32>
    %147 = tpu.concatenate %144, %146 in 1 : vector<256x8xf32>, vector<256x8xf32> -> vector<256x16xf32>
    %148 = vector.shape_cast %147 : vector<256x16xf32> to vector<1x4x8x8x16xf32>
    %c0_132 = arith.constant 0 : index
    %c0_133 = arith.constant 0 : index
    %c0_134 = arith.constant 0 : index
    %c0_135 = arith.constant 0 : index
    %c0_136 = arith.constant 0 : index
    %149 = vector.load %arg14[%c0_132, %c0_133, %c0_134, %c0_135, %c0_136] : memref<1x4x8x8x16xf32, #tpu.memory_space<vmem>>, vector<1x4x8x8x16xf32>
    tpu.vector_store %arg14[%c0_132, %c0_133, %c0_134, %c0_135, %c0_136], %148 {strides = array<i32>} : memref<1x4x8x8x16xf32, #tpu.memory_space<vmem>>, vector<1x4x8x8x16xf32>,
    return
  }
  func.func @transform_0(%arg0: i32, %arg1: i32) -> (i32, i32, i32, i32, i32) {
    %c0_i32 = arith.constant 0 : i32
    %c0_i32_0 = arith.constant 0 : i32
    %c0_i32_1 = arith.constant 0 : i32
    %c0_i32_2 = arith.constant 0 : i32
    return %arg0, %arg1, %c0_i32, %c0_i32_0, %c0_i32_1 : i32, i32, i32, i32, i32
  }
  func.func @transform_1(%arg0: i32, %arg1: i32) -> (i32, i32, i32, i32, i32) {
    %c4_i32 = arith.constant 4 : i32
    %0 = arith.muli %arg1, %c4_i32 : i32
    %c1_i32 = arith.constant 1 : i32
    %1 = arith.subi %0, %c1_i32 : i32
    %c0_i32 = arith.constant 0 : i32
    %2 = arith.maxsi %1, %c0_i32 : i32
    %c0_i32_0 = arith.constant 0 : i32
    %c0_i32_1 = arith.constant 0 : i32
    %c0_i32_2 = arith.constant 0 : i32
    %c0_i32_3 = arith.constant 0 : i32
    return %arg0, %2, %c0_i32_0, %c0_i32_1, %c0_i32_2 : i32, i32, i32, i32, i32
  }
  func.func @transform_2(%arg0: i32, %arg1: i32) -> (i32, i32, i32, i32, i32) {
    %c4_i32 = arith.constant 4 : i32
    %0 = arith.muli %arg1, %c4_i32 : i32
    %c4_i32_0 = arith.constant 4 : i32
    %1 = arith.addi %0, %c4_i32_0 : i32
    %c3_i32 = arith.constant 3 : i32
    %2 = arith.minsi %1, %c3_i32 : i32
    %c0_i32 = arith.constant 0 : i32
    %c0_i32_1 = arith.constant 0 : i32
    %c0_i32_2 = arith.constant 0 : i32
    %c0_i32_3 = arith.constant 0 : i32
    return %arg0, %2, %c0_i32, %c0_i32_1, %c0_i32_2 : i32, i32, i32, i32, i32
  }
  func.func @transform_3(%arg0: i32, %arg1: i32) -> (i32, i32) {
    %c0_i32 = arith.constant 0 : i32
    %c0_i32_0 = arith.constant 0 : i32
    %c0_i32_1 = arith.constant 0 : i32
    return %c0_i32, %c0_i32_0 : i32, i32
  }
  func.func @transform_4(%arg0: i32, %arg1: i32) -> (i32, i32) {
    %c0_i32 = arith.constant 0 : i32
    %c0_i32_0 = arith.constant 0 : i32
    %c0_i32_1 = arith.constant 0 : i32
    return %c0_i32, %c0_i32_0 : i32, i32
  }
  func.func @transform_5(%arg0: i32, %arg1: i32) -> (i32, i32, i32, i32) {
    %c0_i32 = arith.constant 0 : i32
    %c0_i32_0 = arith.constant 0 : i32
    %c0_i32_1 = arith.constant 0 : i32
    %c0_i32_2 = arith.constant 0 : i32
    %c0_i32_3 = arith.constant 0 : i32
    return %c0_i32, %c0_i32_0, %c0_i32_1, %c0_i32_2 : i32, i32, i32, i32
  }
  func.func @transform_6(%arg0: i32, %arg1: i32) -> (i32, i32) {
    %c0_i32 = arith.constant 0 : i32
    %c0_i32_0 = arith.constant 0 : i32
    %c0_i32_1 = arith.constant 0 : i32
    return %c0_i32, %c0_i32_0 : i32, i32
  }
  func.func @transform_7(%arg0: i32, %arg1: i32) -> (i32, i32) {
    %c0_i32 = arith.constant 0 : i32
    %c0_i32_0 = arith.constant 0 : i32
    %c0_i32_1 = arith.constant 0 : i32
    return %c0_i32, %c0_i32_0 : i32, i32
  }
  func.func @transform_8(%arg0: i32, %arg1: i32) -> (i32, i32) {
    %c0_i32 = arith.constant 0 : i32
    %c0_i32_0 = arith.constant 0 : i32
    %c0_i32_1 = arith.constant 0 : i32
    return %c0_i32, %c0_i32_0 : i32, i32
  }
  func.func @transform_9(%arg0: i32, %arg1: i32) -> (i32, i32) {
    %c0_i32 = arith.constant 0 : i32
    %c0_i32_0 = arith.constant 0 : i32
    %c0_i32_1 = arith.constant 0 : i32
    return %c0_i32, %c0_i32_0 : i32, i32
  }
  func.func @transform_10(%arg0: i32, %arg1: i32) -> (i32, i32) {
    %c0_i32 = arith.constant 0 : i32
    %c0_i32_0 = arith.constant 0 : i32
    %c0_i32_1 = arith.constant 0 : i32
    return %c0_i32, %c0_i32_0 : i32, i32
  }
  func.func @transform_11(%arg0: i32, %arg1: i32) -> (i32, i32) {
    %c0_i32 = arith.constant 0 : i32
    %c0_i32_0 = arith.constant 0 : i32
    %c0_i32_1 = arith.constant 0 : i32
    return %c0_i32, %c0_i32_0 : i32, i32
  }
  func.func @transform_12(%arg0: i32, %arg1: i32) -> (i32, i32, i32, i32, i32) {
    %c0_i32 = arith.constant 0 : i32
    %c0_i32_0 = arith.constant 0 : i32
    %c0_i32_1 = arith.constant 0 : i32
    %c0_i32_2 = arith.constant 0 : i32
    return %arg0, %arg1, %c0_i32, %c0_i32_0, %c0_i32_1 : i32, i32, i32, i32, i32
  }
}

</mosaic_0001>

<llo_original>
// kernel: fire_forward.1
$region0: #{fire_forward.1}
  #allocation0 [shape = 'u32[]', space=smem, size = 0x4, offset = 0x4, fixed_abs, tag = 'smem constant byte address 0x4 - core index']
  #allocation1 [shape = 'u32[144,128]{1,0:T(1,128)}', space=vmem, size = 0x12000, scoped, tag = 'internal scratch']
  #allocation2 [shape = 'bf16[6,10,10,8]{3,2,1,0:T(8,128)(2,1)}', space=vmem, size = 0x3c000, scoped, tag = 'scratch operand']
  %s0 = inlined_call_operand.vmem [shape: bf16[2,4,8,8,16], index: 0, kind: input, shape index: {}, may-alias: {0,1,2}]
  %s1 = inlined_call_operand.vmem [shape: bf16[2,4,8,8,16], index: 1, kind: input, shape index: {}, may-alias: {0,1,2}]
  %s2 = inlined_call_operand.vmem [shape: bf16[2,4,8,8,16], index: 2, kind: input, shape index: {}, may-alias: {0,1,2}]
  %s3 = inlined_call_operand.vmem [shape: bf16[16,8], index: 3, kind: input, shape index: {}]
  %s4 = inlined_call_operand.vmem [shape: bf16[8,8], index: 4, kind: input, shape index: {}]
  %s5 = inlined_call_operand.vmem [shape: bf16[3,3,24,8], index: 5, kind: input, shape index: {}]
  %s6 = inlined_call_operand.vmem [shape: f32[1,8], index: 6, kind: input, shape index: {}]
  %s7 = inlined_call_operand.vmem [shape: f32[1,8], index: 7, kind: input, shape index: {}]
  %s8 = inlined_call_operand.vmem [shape: f32[1,8], index: 8, kind: input, shape index: {}]
  %s9 = inlined_call_operand.vmem [shape: f32[1,8], index: 9, kind: input, shape index: {}]
  %s10 = inlined_call_operand.vmem [shape: f32[1,8], index: 10, kind: input, shape index: {}]
  %s11 = inlined_call_operand.vmem [shape: f32[1,8], index: 11, kind: input, shape index: {}]
  %s12 = inlined_call_operand.hbm [shape: f32[2,4,8,8,16], index: 12, kind: output, shape index: {}]
  %s13 = sld [smem:[#allocation0]]
  $region93: #{fire_forward.1} parent=0
    _
  %s15 = ssub.s32 1, %s13
  %s16 = scalar_select 0, %s15, %s13
  $region1: #{fire_forward.1} parent=0
    #allocation3 [shape = 'u8[262144]{0}', space=vmem, size = 0x40000, scoped, tag = 'output window, operand 0']
    #allocation4 [shape = 's32[2]{0}', space=sflag, size = 0x8, scoped, tag = 'scoped memory for fire_forward.1']
    %17 = vsyncpa [#allocation4], 0
    %s18 = scalar_lea.sflag [#allocation4], 1
    %19 = vsyncpa %s18, 0
    loop: start=0, step=1, limit=4
    $region2: #{fire_forward.1} parent=1 // loop_pre_header
      _
    $region3: #{fire_forward.1} parent=1 // loop_header
      %s21 = sphi 0, %s25
      %p22 = scmp.ge.s32.totalorder %s21, 4
      %s28 = sphi 0, %s40
      %s29 = sphi 0, %s36
      %s30 = sphi 0, %s28
      %s31 = sphi 0, %s29
      %s32 = sphi 0, %s30
      %s33 = sphi 0, %s31
      %s45 = sphi 0, %s47
      %s48 = sphi 0, %s45
      %s49 = sphi 0, %s48
      %s65 = sphi 0, %s49
      %s81 = sphi 0, %s83
      %s84 = sphi 0, %s81
      %s85 = sphi 0, %s84
      %s101 = sphi 0, %s85
      %s117 = sphi 0, %s119
      %s120 = sphi 0, %s117
      %s121 = sphi 0, %s120
      %s137 = sphi 0, %s121
      %s141 = sphi 0, %s141
      %s143 = sphi 0, %s141
      %s144 = sphi 0, %s143
      %s158 = sphi 0, %s144
      %s162 = sphi 0, %s162
      %s164 = sphi 0, %s162
      %s165 = sphi 0, %s164
      %s179 = sphi 0, %s165
      %s183 = sphi 0, %s183
      %s185 = sphi 0, %s183
      %s186 = sphi 0, %s185
      %s200 = sphi 0, %s186
      %s204 = sphi 0, %s204
      %s206 = sphi 0, %s204
      %s207 = sphi 0, %s206
      %s221 = sphi 0, %s207
      %s225 = sphi 0, %s225
      %s227 = sphi 0, %s225
      %s228 = sphi 0, %s227
      %s242 = sphi 0, %s228
      %s246 = sphi 0, %s246
      %s248 = sphi 0, %s246
      %s249 = sphi 0, %s248
      %s263 = sphi 0, %s249
      %s267 = sphi 0, %s267
      %s269 = sphi 0, %s267
      %s270 = sphi 0, %s269
      %s284 = sphi 0, %s270
      %s288 = sphi 0, %s288
      %s290 = sphi 0, %s288
      %s291 = sphi 0, %s290
      %s305 = sphi 0, %s291
      %s309 = sphi 0, %s309
      %s311 = sphi 0, %s309
      %s312 = sphi 0, %s311
      %s326 = sphi 0, %s312
      %s334 = sphi 0, %s336
      %s337 = sphi 0, %s334
      %s338 = sphi 0, %s337
      %s354 = sphi 0, %s338
    $region4: #{fire_forward.1} parent=1 // loop_header_branch
      %24 = sbr.rel (%p22) target = $region8
    $region5: #{fire_forward.1} parent=1 // loop_body
      %s26 = ssub.s32 %s21, 1
      %s27 = ssub.s32 %s21, 2
      %s34 = sadd.s32 1, %s29
      %p35 = scmp.ge.s32.totalorder %s34, 1
      %s36 = scalar_select %p35, 0, %s34
      %s37 = sadd.s32 1, %s28
      %s38 = scalar_select %p35, %s37, %s28
      %p39 = scmp.ge.s32.totalorder %s38, 2
      %s40 = scalar_select %p39, 0, %s38
      %s41 = ssub.s32 %s28, %s40
      %s42 = ssub.s32 %s29, %s36
      %s43 = sor.u32 %s41, %s42
      %p44 = scmp.eq.s32.totalorder %s43, 0
      %s46 = sadd.s32 %s45, 1
      %s47 = scalar_select %p44, %s45, %s46
      %p50 = pneg %p44
      %p51 = scmp.eq.s32.totalorder %s21, 1
      %p52 = por %p50, %p51
      %p53 = scmp.ne.s32.totalorder %s45, %s48
      %p54 = scmp.eq.s32.totalorder %s21, 0
      %p55 = por %p53, %p54
      %p56 = scmp.ne.s32.totalorder %s45, %s48
      %p57 = scmp.eq.s32.totalorder %s26, 1
      %p58 = por %p56, %p57
      %p59 = scmp.ne.s32.totalorder %s48, %s49
      %p60 = scmp.eq.s32.totalorder %s26, 0
      %p61 = por %p59, %p60
      %p62 = scmp.ne.s32.totalorder %s48, %s49
      %p63 = scmp.eq.s32.totalorder %s27, 1
      %p64 = por %p62, %p63
      %p66 = scmp.ne.s32.totalorder %s49, %s65
      %p67 = scmp.eq.s32.totalorder %s27, 0
      %p68 = por %p66, %p67
      %s69 = smul.u32 %s29, 4
      %s70 = ssub.s32 %s69, 1
      %p71 = scmp.gt.s32.totalorder %s70, 0
      %s72 = scalar_select %p71, %s70, 0
      %s73 = smul.u32 %s36, 4
      %s74 = ssub.s32 %s73, 1
      %p75 = scmp.gt.s32.totalorder %s74, 0
      %s76 = scalar_select %p75, %s74, 0
      %s77 = ssub.s32 %s28, %s40
      %s78 = ssub.s32 %s72, %s76
      %s79 = sor.u32 %s77, %s78
      %p80 = scmp.eq.s32.totalorder %s79, 0
      %s82 = sadd.s32 %s81, 1
      %s83 = scalar_select %p80, %s81, %s82
      %p86 = pneg %p80
      %p87 = scmp.eq.s32.totalorder %s21, 1
      %p88 = por %p86, %p87
      %p89 = scmp.ne.s32.totalorder %s81, %s84
      %p90 = scmp.eq.s32.totalorder %s21, 0
      %p91 = por %p89, %p90
      %p92 = scmp.ne.s32.totalorder %s81, %s84
      %p93 = scmp.eq.s32.totalorder %s26, 1
      %p94 = por %p92, %p93
      %p95 = scmp.ne.s32.totalorder %s84, %s85
      %p96 = scmp.eq.s32.totalorder %s26, 0
      %p97 = por %p95, %p96
      %p98 = scmp.ne.s32.totalorder %s84, %s85
      %p99 = scmp.eq.s32.totalorder %s27, 1
      %p100 = por %p98, %p99
      %p102 = scmp.ne.s32.totalorder %s85, %s101
      %p103 = scmp.eq.s32.totalorder %s27, 0
      %p104 = por %p102, %p103
      %s105 = smul.u32 %s29, 4
      %s106 = sadd.s32 %s105, 4
      %p107 = scmp.lt.s32.totalorder %s106, 3
      %s108 = scalar_select %p107, %s106, 3
      %s109 = smul.u32 %s36, 4
      %s110 = sadd.s32 %s109, 4
      %p111 = scmp.lt.s32.totalorder %s110, 3
      %s112 = scalar_select %p111, %s110, 3
      %s113 = ssub.s32 %s28, %s40
      %s114 = ssub.s32 %s108, %s112
      %s115 = sor.u32 %s113, %s114
      %p116 = scmp.eq.s32.totalorder %s115, 0
      %s118 = sadd.s32 %s117, 1
      %s119 = scalar_select %p116, %s117, %s118
      %p122 = pneg %p116
      %p123 = scmp.eq.s32.totalorder %s21, 1
      %p124 = por %p122, %p123
      %p125 = scmp.ne.s32.totalorder %s117, %s120
      %p126 = scmp.eq.s32.totalorder %s21, 0
      %p127 = por %p125, %p126
      %p128 = scmp.ne.s32.totalorder %s117, %s120
      %p129 = scmp.eq.s32.totalorder %s26, 1
      %p130 = por %p128, %p129
      %p131 = scmp.ne.s32.totalorder %s120, %s121
      %p132 = scmp.eq.s32.totalorder %s26, 0
      %p133 = por %p131, %p132
      %p134 = scmp.ne.s32.totalorder %s120, %s121
      %p135 = scmp.eq.s32.totalorder %s27, 1
      %p136 = por %p134, %p135
      %p138 = scmp.ne.s32.totalorder %s121, %s137
      %p139 = scmp.eq.s32.totalorder %s27, 0
      %p140 = por %p138, %p139
      %s142 = sadd.s32 %s141, 1
      %p145 = scmp.eq.s32.totalorder %s21, 1
      %p146 = scmp.ne.s32.totalorder %s141, %s143
      %p147 = scmp.eq.s32.totalorder %s21, 0
      %p148 = por %p146, %p147
      %p149 = scmp.ne.s32.totalorder %s141, %s143
      %p150 = scmp.eq.s32.totalorder %s26, 1
      %p151 = por %p149, %p150
      %p152 = scmp.ne.s32.totalorder %s143, %s144
      %p153 = scmp.eq.s32.totalorder %s26, 0
      %p154 = por %p152, %p153
      %p155 = scmp.ne.s32.totalorder %s143, %s144
      %p156 = scmp.eq.s32.totalorder %s27, 1
      %p157 = por %p155, %p156
      %p159 = scmp.ne.s32.totalorder %s144, %s158
      %p160 = scmp.eq.s32.totalorder %s27, 0
      %p161 = por %p159, %p160
      %s163 = sadd.s32 %s162, 1
      %p166 = scmp.eq.s32.totalorder %s21, 1
      %p167 = scmp.ne.s32.totalorder %s162, %s164
      %p168 = scmp.eq.s32.totalorder %s21, 0
      %p169 = por %p167, %p168
      %p170 = scmp.ne.s32.totalorder %s162, %s164
      %p171 = scmp.eq.s32.totalorder %s26, 1
      %p172 = por %p170, %p171
      %p173 = scmp.ne.s32.totalorder %s164, %s165
      %p174 = scmp.eq.s32.totalorder %s26, 0
      %p175 = por %p173, %p174
      %p176 = scmp.ne.s32.totalorder %s164, %s165
      %p177 = scmp.eq.s32.totalorder %s27, 1
      %p178 = por %p176, %p177
      %p180 = scmp.ne.s32.totalorder %s165, %s179
      %p181 = scmp.eq.s32.totalorder %s27, 0
      %p182 = por %p180, %p181
      %s184 = sadd.s32 %s183, 1
      %p187 = scmp.eq.s32.totalorder %s21, 1
      %p188 = scmp.ne.s32.totalorder %s183, %s185
      %p189 = scmp.eq.s32.totalorder %s21, 0
      %p190 = por %p188, %p189
      %p191 = scmp.ne.s32.totalorder %s183, %s185
      %p192 = scmp.eq.s32.totalorder %s26, 1
      %p193 = por %p191, %p192
      %p194 = scmp.ne.s32.totalorder %s185, %s186
      %p195 = scmp.eq.s32.totalorder %s26, 0
      %p196 = por %p194, %p195
      %p197 = scmp.ne.s32.totalorder %s185, %s186
      %p198 = scmp.eq.s32.totalorder %s27, 1
      %p199 = por %p197, %p198
      %p201 = scmp.ne.s32.totalorder %s186, %s200
      %p202 = scmp.eq.s32.totalorder %s27, 0
      %p203 = por %p201, %p202
      %s205 = sadd.s32 %s204, 1
      %p208 = scmp.eq.s32.totalorder %s21, 1
      %p209 = scmp.ne.s32.totalorder %s204, %s206
      %p210 = scmp.eq.s32.totalorder %s21, 0
      %p211 = por %p209, %p210
      %p212 = scmp.ne.s32.totalorder %s204, %s206
      %p213 = scmp.eq.s32.totalorder %s26, 1
      %p214 = por %p212, %p213
      %p215 = scmp.ne.s32.totalorder %s206, %s207
      %p216 = scmp.eq.s32.totalorder %s26, 0
      %p217 = por %p215, %p216
      %p218 = scmp.ne.s32.totalorder %s206, %s207
      %p219 = scmp.eq.s32.totalorder %s27, 1
      %p220 = por %p218, %p219
      %p222 = scmp.ne.s32.totalorder %s207, %s221
      %p223 = scmp.eq.s32.totalorder %s27, 0
      %p224 = por %p222, %p223
      %s226 = sadd.s32 %s225, 1
      %p229 = scmp.eq.s32.totalorder %s21, 1
      %p230 = scmp.ne.s32.totalorder %s225, %s227
      %p231 = scmp.eq.s32.totalorder %s21, 0
      %p232 = por %p230, %p231
      %p233 = scmp.ne.s32.totalorder %s225, %s227
      %p234 = scmp.eq.s32.totalorder %s26, 1
      %p235 = por %p233, %p234
      %p236 = scmp.ne.s32.totalorder %s227, %s228
      %p237 = scmp.eq.s32.totalorder %s26, 0
      %p238 = por %p236, %p237
      %p239 = scmp.ne.s32.totalorder %s227, %s228
      %p240 = scmp.eq.s32.totalorder %s27, 1
      %p241 = por %p239, %p240
      %p243 = scmp.ne.s32.totalorder %s228, %s242
      %p244 = scmp.eq.s32.totalorder %s27, 0
      %p245 = por %p243, %p244
      %s247 = sadd.s32 %s246, 1
      %p250 = scmp.eq.s32.totalorder %s21, 1
      %p251 = scmp.ne.s32.totalorder %s246, %s248
      %p252 = scmp.eq.s32.totalorder %s21, 0
      %p253 = por %p251, %p252
      %p254 = scmp.ne.s32.totalorder %s246, %s248
      %p255 = scmp.eq.s32.totalorder %s26, 1
      %p256 = por %p254, %p255
      %p257 = scmp.ne.s32.totalorder %s248, %s249
      %p258 = scmp.eq.s32.totalorder %s26, 0
      %p259 = por %p257, %p258
      %p260 = scmp.ne.s32.totalorder %s248, %s249
      %p261 = scmp.eq.s32.totalorder %s27, 1
      %p262 = por %p260, %p261
      %p264 = scmp.ne.s32.totalorder %s249, %s263
      %p265 = scmp.eq.s32.totalorder %s27, 0
      %p266 = por %p264, %p265
      %s268 = sadd.s32 %s267, 1
      %p271 = scmp.eq.s32.totalorder %s21, 1
      %p272 = scmp.ne.s32.totalorder %s267, %s269
      %p273 = scmp.eq.s32.totalorder %s21, 0
      %p274 = por %p272, %p273
      %p275 = scmp.ne.s32.totalorder %s267, %s269
      %p276 = scmp.eq.s32.totalorder %s26, 1
      %p277 = por %p275, %p276
      %p278 = scmp.ne.s32.totalorder %s269, %s270
      %p279 = scmp.eq.s32.totalorder %s26, 0
      %p280 = por %p278, %p279
      %p281 = scmp.ne.s32.totalorder %s269, %s270
      %p282 = scmp.eq.s32.totalorder %s27, 1
      %p283 = por %p281, %p282
      %p285 = scmp.ne.s32.totalorder %s270, %s284
      %p286 = scmp.eq.s32.totalorder %s27, 0
      %p287 = por %p285, %p286
      %s289 = sadd.s32 %s288, 1
      %p292 = scmp.eq.s32.totalorder %s21, 1
      %p293 = scmp.ne.s32.totalorder %s288, %s290
      %p294 = scmp.eq.s32.totalorder %s21, 0
      %p295 = por %p293, %p294
      %p296 = scmp.ne.s32.totalorder %s288, %s290
      %p297 = scmp.eq.s32.totalorder %s26, 1
      %p298 = por %p296, %p297
      %p299 = scmp.ne.s32.totalorder %s290, %s291
      %p300 = scmp.eq.s32.totalorder %s26, 0
      %p301 = por %p299, %p300
      %p302 = scmp.ne.s32.totalorder %s290, %s291
      %p303 = scmp.eq.s32.totalorder %s27, 1
      %p304 = por %p302, %p303
      %p306 = scmp.ne.s32.totalorder %s291, %s305
      %p307 = scmp.eq.s32.totalorder %s27, 0
      %p308 = por %p306, %p307
      %s310 = sadd.s32 %s309, 1
      %p313 = scmp.eq.s32.totalorder %s21, 1
      %p314 = scmp.ne.s32.totalorder %s309, %s311
      %p315 = scmp.eq.s32.totalorder %s21, 0
      %p316 = por %p314, %p315
      %p317 = scmp.ne.s32.totalorder %s309, %s311
      %p318 = scmp.eq.s32.totalorder %s26, 1
      %p319 = por %p317, %p318
      %p320 = scmp.ne.s32.totalorder %s311, %s312
      %p321 = scmp.eq.s32.totalorder %s26, 0
      %p322 = por %p320, %p321
      %p323 = scmp.ne.s32.totalorder %s311, %s312
      %p324 = scmp.eq.s32.totalorder %s27, 1
      %p325 = por %p323, %p324
      %p327 = scmp.ne.s32.totalorder %s312, %s326
      %p328 = scmp.eq.s32.totalorder %s27, 0
      %p329 = por %p327, %p328
      %s330 = ssub.s32 %s28, %s40
      %s331 = ssub.s32 %s29, %s36
      %s332 = sor.u32 %s330, %s331
      %p333 = scmp.eq.s32.totalorder %s332, 0
      %s335 = sadd.s32 %s334, 1
      %s336 = scalar_select %p333, %s334, %s335
      %p339 = pneg %p333
      %p340 = scmp.eq.s32.totalorder %s21, 1
      %p341 = por %p339, %p340
      %p342 = scmp.ne.s32.totalorder %s334, %s337
      %p343 = scmp.eq.s32.totalorder %s21, 0
      %p344 = por %p342, %p343
      %p345 = scmp.ne.s32.totalorder %s334, %s337
      %p346 = scmp.eq.s32.totalorder %s26, 1
      %p347 = por %p345, %p346
      %p348 = scmp.ne.s32.totalorder %s337, %s338
      %p349 = scmp.eq.s32.totalorder %s26, 0
      %p350 = por %p348, %p349
      %p351 = scmp.ne.s32.totalorder %s337, %s338
      %p352 = scmp.eq.s32.totalorder %s27, 1
      %p353 = por %p351, %p352
      %p355 = scmp.ne.s32.totalorder %s338, %s354
      %p356 = scmp.eq.s32.totalorder %s27, 0
      %p357 = por %p355, %p356
      %p358 = scmp.le.s32.totalorder 1, %s21
      %p359 = scmp.lt.s32.totalorder %s21, 3
      %p360 = pnand %p358, %p359
      %p361 = pneg %p360
      // Predicated region
      $region9: #{fire_forward.1} parent=5 // pred_check
        _
      $region10: #{fire_forward.1} parent=5 // pred_check_branch
        %363 = sbr.rel (%p360) target = $region12
      $region11: #{fire_forward.1} parent=5 // pred_region
        %s364 = ssub.s32 %s21, 1
        // Predicated region
        $region13: #{fire_forward.1} parent=11 // pred_check
          %p365 = pneg %p154
        $region14: #{fire_forward.1} parent=11 // pred_check_branch
          %367 = sbr.rel (%p365) target = $region16
        $region15: #{fire_forward.1} parent=11 // pred_region
          _
        $region16: #{fire_forward.1} parent=11 // pred_fallthru
          _
        // Predicated region
        $region17: #{fire_forward.1} parent=11 // pred_check
          %p368 = pneg %p175
        $region18: #{fire_forward.1} parent=11 // pred_check_branch
          %370 = sbr.rel (%p368) target = $region20
        $region19: #{fire_forward.1} parent=11 // pred_region
          _
        $region20: #{fire_forward.1} parent=11 // pred_fallthru
          _
        // Predicated region
        $region21: #{fire_forward.1} parent=11 // pred_check
          %p371 = pneg %p196
        $region22: #{fire_forward.1} parent=11 // pred_check_branch
          %373 = sbr.rel (%p371) target = $region24
        $region23: #{fire_forward.1} parent=11 // pred_region
          _
        $region24: #{fire_forward.1} parent=11 // pred_fallthru
          _
        // Predicated region
        $region25: #{fire_forward.1} parent=11 // pred_check
          %p374 = pneg %p217
        $region26: #{fire_forward.1} parent=11 // pred_check_branch
          %376 = sbr.rel (%p374) target = $region28
        $region27: #{fire_forward.1} parent=11 // pred_region
          _
        $region28: #{fire_forward.1} parent=11 // pred_fallthru
          _
        // Predicated region
        $region29: #{fire_forward.1} parent=11 // pred_check
          %p377 = pneg %p238
        $region30: #{fire_forward.1} parent=11 // pred_check_branch
          %379 = sbr.rel (%p377) target = $region32
        $region31: #{fire_forward.1} parent=11 // pred_region
          _
        $region32: #{fire_forward.1} parent=11 // pred_fallthru
          _
        // Predicated region
        $region33: #{fire_forward.1} parent=11 // pred_check
          %p380 = pneg %p259
        $region34: #{fire_forward.1} parent=11 // pred_check_branch
          %382 = sbr.rel (%p380) target = $region36
        $region35: #{fire_forward.1} parent=11 // pred_region
          _
        $region36: #{fire_forward.1} parent=11 // pred_fallthru
          _
        // Predicated region
        $region37: #{fire_forward.1} parent=11 // pred_check
          %p383 = pneg %p280
        $region38: #{fire_forward.1} parent=11 // pred_check_branch
          %385 = sbr.rel (%p383) target = $region40
        $region39: #{fire_forward.1} parent=11 // pred_region
          _
        $region40: #{fire_forward.1} parent=11 // pred_fallthru
          _
        // Predicated region
        $region41: #{fire_forward.1} parent=11 // pred_check
          %p386 = pneg %p301
        $region42: #{fire_forward.1} parent=11 // pred_check_branch
          %388 = sbr.rel (%p386) target = $region44
        $region43: #{fire_forward.1} parent=11 // pred_region
          _
        $region44: #{fire_forward.1} parent=11 // pred_fallthru
          _
        // Predicated region
        $region45: #{fire_forward.1} parent=11 // pred_check
          %p389 = pneg %p322
        $region46: #{fire_forward.1} parent=11 // pred_check_branch
          %391 = sbr.rel (%p389) target = $region48
        $region47: #{fire_forward.1} parent=11 // pred_region
          _
        $region48: #{fire_forward.1} parent=11 // pred_fallthru
          _
      $region12: #{fire_forward.1} parent=5 // pred_fallthru
        _
      %p392 = scmp.lt.s32.totalorder %s21, 2
      // Predicated region
      $region49: #{fire_forward.1} parent=5 // pred_check
        %p393 = pneg %p392
      $region50: #{fire_forward.1} parent=5 // pred_check_branch
        %395 = sbr.rel (%p393) target = $region52
      $region51: #{fire_forward.1} parent=5 // pred_region
        // Predicated region
        $region53: #{fire_forward.1} parent=51 // pred_check
          %p396 = pneg %p55
        $region54: #{fire_forward.1} parent=51 // pred_check_branch
          %398 = sbr.rel (%p396) target = $region56
        $region55: #{fire_forward.1} parent=51 // pred_region
          %s399 = smul.u32 4, %s29
          %p400 = scmp.lt.s32.totalorder %s28, 1
          %s401 = scalar_select %p400, %s28, 1
          %p402 = scmp.lt.s32.totalorder %s399, 3
          %s403 = scalar_select %p402, %s399, 3
          %s404 = smul.addr %s403, 8
          %s405 = smul.addr %s401, 32
          %s406 = sadd.s32 %s404, %s405
          %s407 = smul.addr %s406, 4
          %s408 = scalar_lea.vmem %s0, %s407
          %s409 = smul.u32 4, %s29
        $region56: #{fire_forward.1} parent=51 // pred_fallthru
          _
        // Predicated region
        $region57: #{fire_forward.1} parent=51 // pred_check
          %p410 = pneg %p91
        $region58: #{fire_forward.1} parent=51 // pred_check_branch
          %412 = sbr.rel (%p410) target = $region60
        $region59: #{fire_forward.1} parent=51 // pred_region
          %s413 = smul.u32 %s29, 4
          %s414 = ssub.s32 %s413, 1
          %p415 = scmp.gt.s32.totalorder %s414, 0
          %s416 = scalar_select %p415, %s414, 0
          %p417 = scmp.lt.s32.totalorder %s28, 1
          %s418 = scalar_select %p417, %s28, 1
          %p419 = scmp.lt.s32.totalorder %s416, 3
          %s420 = scalar_select %p419, %s416, 3
          %s421 = smul.addr %s420, 8
          %s422 = smul.addr %s418, 32
          %s423 = sadd.s32 %s421, %s422
          %s424 = smul.addr %s423, 4
          %s425 = scalar_lea.vmem %s1, %s424
          %s426 = smul.u32 %s29, 4
          %s427 = ssub.s32 %s426, 1
          %p428 = scmp.gt.s32.totalorder %s427, 0
          %s429 = scalar_select %p428, %s427, 0
        $region60: #{fire_forward.1} parent=51 // pred_fallthru
          _
        // Predicated region
        $region61: #{fire_forward.1} parent=51 // pred_check
          %p430 = pneg %p127
        $region62: #{fire_forward.1} parent=51 // pred_check_branch
          %432 = sbr.rel (%p430) target = $region64
        $region63: #{fire_forward.1} parent=51 // pred_region
          %s433 = smul.u32 %s29, 4
          %s434 = sadd.s32 %s433, 4
          %p435 = scmp.lt.s32.totalorder %s434, 3
          %s436 = scalar_select %p435, %s434, 3
          %p437 = scmp.lt.s32.totalorder %s28, 1
          %s438 = scalar_select %p437, %s28, 1
          %p439 = scmp.lt.s32.totalorder %s436, 3
          %s440 = scalar_select %p439, %s436, 3
          %s441 = smul.addr %s440, 8
          %s442 = smul.addr %s438, 32
          %s443 = sadd.s32 %s441, %s442
          %s444 = smul.addr %s443, 4
          %s445 = scalar_lea.vmem %s2, %s444
          %s446 = smul.u32 %s29, 4
          %s447 = sadd.s32 %s446, 4
          %p448 = scmp.lt.s32.totalorder %s447, 3
          %s449 = scalar_select %p448, %s447, 3
        $region64: #{fire_forward.1} parent=51 // pred_fallthru
          _
      $region52: #{fire_forward.1} parent=5 // pred_fallthru
        _
      %p450 = scmp.le.s32.totalorder 1, %s21
      %p451 = scmp.lt.s32.totalorder %s21, 3
      %p452 = pnand %p450, %p451
      %p453 = pneg %p452
      // Predicated region
      $region65: #{fire_forward.1} parent=5 // pred_check
        _
      $region66: #{fire_forward.1} parent=5 // pred_check_branch
        %455 = sbr.rel (%p452) target = $region68
      $region67: #{fire_forward.1} parent=5 // pred_region
        %s456 = ssub.s32 %s21, 1
        %s457 = smul.u32 4, %s31
        %p458 = scmp.lt.s32.totalorder %s30, 1
        %s459 = scalar_select %p458, %s30, 1
        %p460 = scmp.lt.s32.totalorder %s457, 3
        %s461 = scalar_select %p460, %s457, 3
        %s462 = smul.addr %s461, 8
        %s463 = smul.addr %s459, 32
        %s464 = sadd.s32 %s462, %s463
        %s465 = smul.addr %s464, 4
        %s466 = scalar_lea.vmem %s0, %s465
        %p467 = pneg %p61
        %p468 = pneg %p58
        %s469 = smul.u32 %s31, 4
        %s470 = ssub.s32 %s469, 1
        %p471 = scmp.gt.s32.totalorder %s470, 0
        %s472 = scalar_select %p471, %s470, 0
        %p473 = scmp.lt.s32.totalorder %s30, 1
        %s474 = scalar_select %p473, %s30, 1
        %p475 = scmp.lt.s32.totalorder %s472, 3
        %s476 = scalar_select %p475, %s472, 3
        %s477 = smul.addr %s476, 8
        %s478 = smul.addr %s474, 32
        %s479 = sadd.s32 %s477, %s478
        %s480 = smul.addr %s479, 4
        %s481 = scalar_lea.vmem %s1, %s480
        %p482 = pneg %p97
        %p483 = pneg %p94
        %s484 = smul.u32 %s31, 4
        %s485 = sadd.s32 %s484, 4
        %p486 = scmp.lt.s32.totalorder %s485, 3
        %s487 = scalar_select %p486, %s485, 3
        %p488 = scmp.lt.s32.totalorder %s30, 1
        %s489 = scalar_select %p488, %s30, 1
        %p490 = scmp.lt.s32.totalorder %s487, 3
        %s491 = scalar_select %p490, %s487, 3
        %s492 = smul.addr %s491, 8
        %s493 = smul.addr %s489, 32
        %s494 = sadd.s32 %s492, %s493
        %s495 = smul.addr %s494, 4
        %s496 = scalar_lea.vmem %s2, %s495
        %p497 = pneg %p133
        %p498 = pneg %p130
        %p499 = pneg %p154
        %p500 = pneg %p151
        %p501 = pneg %p175
        %p502 = pneg %p172
        %p503 = pneg %p196
        %p504 = pneg %p193
        %p505 = pneg %p217
        %p506 = pneg %p214
        %p507 = pneg %p238
        %p508 = pneg %p235
        %p509 = pneg %p259
        %p510 = pneg %p256
        %p511 = pneg %p280
        %p512 = pneg %p277
        %p513 = pneg %p301
        %p514 = pneg %p298
        %p515 = pneg %p322
        %p516 = pneg %p319
        %p517 = pneg %p350
        %p518 = pneg %p347
        %s519 = sand.u32 %s337, 1
        %s520 = scalar_lea.sflag [#allocation4], %s519
        %s521 = sand.u32 %s337, 1
        %s522 = smul.addr %s521, 256
        %s523 = scalar_lea.vmem [#allocation3], %s522
        %s524 = smul.u32 4, %s31
        %p525 = scmp.lt.s32.totalorder %s30, 1
        %s526 = scalar_select %p525, %s30, 1
        %p527 = scmp.lt.s32.totalorder %s524, 3
        %s528 = scalar_select %p527, %s524, 3
        %s529 = smul.addr %s528, 8
        %s530 = smul.addr %s526, 32
        %s531 = sadd.s32 %s529, %s530
        %s532 = smul.addr %s531, 4
        %s533 = scalar_lea.vmem %s0, %s532
        %s534 = smul.u32 4, %s31
        %s535 = smul.u32 %s31, 4
        %s536 = ssub.s32 %s535, 1
        %p537 = scmp.gt.s32.totalorder %s536, 0
        %s538 = scalar_select %p537, %s536, 0
        %p539 = scmp.lt.s32.totalorder %s30, 1
        %s540 = scalar_select %p539, %s30, 1
        %p541 = scmp.lt.s32.totalorder %s538, 3
        %s542 = scalar_select %p541, %s538, 3
        %s543 = smul.addr %s542, 8
        %s544 = smul.addr %s540, 32
        %s545 = sadd.s32 %s543, %s544
        %s546 = smul.addr %s545, 4
        %s547 = scalar_lea.vmem %s1, %s546
        %s548 = smul.u32 %s31, 4
        %s549 = ssub.s32 %s548, 1
        %p550 = scmp.gt.s32.totalorder %s549, 0
        %s551 = scalar_select %p550, %s549, 0
        %s552 = smul.u32 %s31, 4
        %s553 = sadd.s32 %s552, 4
        %p554 = scmp.lt.s32.totalorder %s553, 3
        %s555 = scalar_select %p554, %s553, 3
        %p556 = scmp.lt.s32.totalorder %s30, 1
        %s557 = scalar_select %p556, %s30, 1
        %p558 = scmp.lt.s32.totalorder %s555, 3
        %s559 = scalar_select %p558, %s555, 3
        %s560 = smul.addr %s559, 8
        %s561 = smul.addr %s557, 32
        %s562 = sadd.s32 %s560, %s561
        %s563 = smul.addr %s562, 4
        %s564 = scalar_lea.vmem %s2, %s563
        %s565 = smul.u32 %s31, 4
        %s566 = sadd.s32 %s565, 4
        %p567 = scmp.lt.s32.totalorder %s566, 3
        %s568 = scalar_select %p567, %s566, 3
        %s569 = smul.u32 4, %s31
        %v571 = vld [vmem:[%s3] sm:$0xf]
        %v572 = vld [vmem:[%s3 + $0x4] sm:$0xf]
        %v573 = vld [vmem:[%s6] sm:$0x1]
        %v574 = vld [vmem:[%s7] sm:$0x1]
        %v575 = vld [vmem:[%s8] sm:$0x1]
        %v576 = vld [vmem:[%s9] sm:$0x1]
        %v577 = vld [vmem:[%s10] sm:$0x1]
        %v578 = vld [vmem:[%s11] sm:$0x1]
        %vm579 = vcmask 60416
        %580 = vst.msk [vmem:[#allocation2] sm:$0xf] %vm579, 0
        %vm581 = vcmask 57344
        %582 = vst.msk [vmem:[#allocation2 + $0x4] sm:$0x1] %vm581, 0
        %583 = vst.msk [vmem:[#allocation2 + $0x50] sm:$0xf] %vm579, 0
        %584 = vst.msk [vmem:[#allocation2 + $0x54] sm:$0x1] %vm581, 0
        %585 = vst.msk [vmem:[#allocation2 + $0xa0] sm:$0xf] %vm579, 0
        %586 = vst.msk [vmem:[#allocation2 + $0xa4] sm:$0x1] %vm581, 0
        %587 = vst.msk [vmem:[#allocation2 + $0xf0] sm:$0xf] %vm579, 0
        %588 = vst.msk [vmem:[#allocation2 + $0xf4] sm:$0x1] %vm581, 0
        %589 = vst.msk [vmem:[#allocation2 + $0x140] sm:$0xf] %vm579, 0
        %590 = vst.msk [vmem:[#allocation2 + $0x144] sm:$0x1] %vm581, 0
        %591 = vst.msk [vmem:[#allocation2 + $0x190] sm:$0xf] %vm579, 0
        %592 = vst.msk [vmem:[#allocation2 + $0x194] sm:$0x1] %vm581, 0
        %s593 = scalar_lea.vmem [#allocation2], 72
        %594 = vst.msk [vmem:[%s593] sm:$0xf] %vm579, 0
        %595 = vst.msk [vmem:[%s593 + $0x4] sm:$0x1] %vm581, 0
        %596 = vst.msk [vmem:[%s593 + $0x50] sm:$0xf] %vm579, 0
        %597 = vst.msk [vmem:[%s593 + $0x54] sm:$0x1] %vm581, 0
        %598 = vst.msk [vmem:[%s593 + $0xa0] sm:$0xf] %vm579, 0
        %599 = vst.msk [vmem:[%s593 + $0xa4] sm:$0x1] %vm581, 0
        %600 = vst.msk [vmem:[%s593 + $0xf0] sm:$0xf] %vm579, 0
        %601 = vst.msk [vmem:[%s593 + $0xf4] sm:$0x1] %vm581, 0
        %602 = vst.msk [vmem:[%s593 + $0x140] sm:$0xf] %vm579, 0
        %603 = vst.msk [vmem:[%s593 + $0x144] sm:$0x1] %vm581, 0
        %604 = vst.msk [vmem:[%s593 + $0x190] sm:$0xf] %vm579, 0
        %605 = vst.msk [vmem:[%s593 + $0x194] sm:$0x1] %vm581, 0
        %vm606 = vcmask 57344
        %vm607 = vsmask.f32 256
        %vm608 = vmand %vm606, %vm607
        %v609 = vld [vmem:[#allocation2] sm:$0x1]
        %v610 = vsel %vm608, 0, %v609
        %611 = vst [vmem:[#allocation2] sm:$0x1] %v610
        %v612 = vld [vmem:[#allocation2 + $0x8] sm:$0x1]
        %v613 = vsel %vm608, 0, %v612
        %614 = vst [vmem:[#allocation2 + $0x8] sm:$0x1] %v613
        %v615 = vld [vmem:[#allocation2 + $0x10] sm:$0x1]
        %v616 = vsel %vm608, 0, %v615
        %617 = vst [vmem:[#allocation2 + $0x10] sm:$0x1] %v616
        %v618 = vld [vmem:[#allocation2 + $0x18] sm:$0x1]
        %v619 = vsel %vm608, 0, %v618
        %620 = vst [vmem:[#allocation2 + $0x18] sm:$0x1] %v619
        %v621 = vld [vmem:[#allocation2 + $0x20] sm:$0x1]
        %v622 = vsel %vm608, 0, %v621
        %623 = vst [vmem:[#allocation2 + $0x20] sm:$0x1] %v622
        %v624 = vld [vmem:[#allocation2 + $0x28] sm:$0x1]
        %v625 = vsel %vm608, 0, %v624
        %626 = vst [vmem:[#allocation2 + $0x28] sm:$0x1] %v625
        %v627 = vld [vmem:[#allocation2 + $0x30] sm:$0x1]
        %v628 = vsel %vm608, 0, %v627
        %629 = vst [vmem:[#allocation2 + $0x30] sm:$0x1] %v628
        %v630 = vld [vmem:[#allocation2 + $0x38] sm:$0x1]
        %v631 = vsel %vm608, 0, %v630
        %632 = vst [vmem:[#allocation2 + $0x38] sm:$0x1] %v631
        %v633 = vld [vmem:[#allocation2 + $0x40] sm:$0x1]
        %v634 = vsel %vm608, 0, %v633
        %635 = vst [vmem:[#allocation2 + $0x40] sm:$0x1] %v634
        %v636 = vld [vmem:[#allocation2 + $0x48] sm:$0x1]
        %v637 = vsel %vm608, 0, %v636
        %638 = vst [vmem:[#allocation2 + $0x48] sm:$0x1] %v637
        %v639 = vld [vmem:[#allocation2 + $0x50] sm:$0x1]
        %v640 = vsel %vm608, 0, %v639
        %641 = vst [vmem:[#allocation2 + $0x50] sm:$0x1] %v640
        %v642 = vld [vmem:[#allocation2 + $0x58] sm:$0x1]
        %v643 = vsel %vm608, 0, %v642
        %644 = vst [vmem:[#allocation2 + $0x58] sm:$0x1] %v643
        %v645 = vld [vmem:[#allocation2 + $0x60] sm:$0x1]
        %v646 = vsel %vm608, 0, %v645
        %647 = vst [vmem:[#allocation2 + $0x60] sm:$0x1] %v646
        %v648 = vld [vmem:[#allocation2 + $0x68] sm:$0x1]
        %v649 = vsel %vm608, 0, %v648
        %650 = vst [vmem:[#allocation2 + $0x68] sm:$0x1] %v649
        %v651 = vld [vmem:[#allocation2 + $0x70] sm:$0x1]
        %v652 = vsel %vm608, 0, %v651
        %653 = vst [vmem:[#allocation2 + $0x70] sm:$0x1] %v652
        %v654 = vld [vmem:[#allocation2 + $0x78] sm:$0x1]
        %v655 = vsel %vm608, 0, %v654
        %656 = vst [vmem:[#allocation2 + $0x78] sm:$0x1] %v655
        %v657 = vld [vmem:[#allocation2 + $0x80] sm:$0x1]
        %v658 = vsel %vm608, 0, %v657
        %659 = vst [vmem:[#allocation2 + $0x80] sm:$0x1] %v658
        %v660 = vld [vmem:[#allocation2 + $0x88] sm:$0x1]
        %v661 = vsel %vm608, 0, %v660
        %662 = vst [vmem:[#allocation2 + $0x88] sm:$0x1] %v661
        %v663 = vld [vmem:[#allocation2 + $0x90] sm:$0x1]
        %v664 = vsel %vm608, 0, %v663
        %665 = vst [vmem:[#allocation2 + $0x90] sm:$0x1] %v664
        %v666 = vld [vmem:[#allocation2 + $0x98] sm:$0x1]
        %v667 = vsel %vm608, 0, %v666
        %668 = vst [vmem:[#allocation2 + $0x98] sm:$0x1] %v667
        %v669 = vld [vmem:[#allocation2 + $0xa0] sm:$0x1]
        %v670 = vsel %vm608, 0, %v669
        %671 = vst [vmem:[#allocation2 + $0xa0] sm:$0x1] %v670
        %v672 = vld [vmem:[#allocation2 + $0xa8] sm:$0x1]
        %v673 = vsel %vm608, 0, %v672
        %674 = vst [vmem:[#allocation2 + $0xa8] sm:$0x1] %v673
        %v675 = vld [vmem:[#allocation2 + $0xb0] sm:$0x1]
        %v676 = vsel %vm608, 0, %v675
        %677 = vst [vmem:[#allocation2 + $0xb0] sm:$0x1] %v676
        %v678 = vld [vmem:[#allocation2 + $0xb8] sm:$0x1]
        %v679 = vsel %vm608, 0, %v678
        %680 = vst [vmem:[#allocation2 + $0xb8] sm:$0x1] %v679
        %v681 = vld [vmem:[#allocation2 + $0xc0] sm:$0x1]
        %v682 = vsel %vm608, 0, %v681
        %683 = vst [vmem:[#allocation2 + $0xc0] sm:$0x1] %v682
        %v684 = vld [vmem:[#allocation2 + $0xc8] sm:$0x1]
        %v685 = vsel %vm608, 0, %v684
        %686 = vst [vmem:[#allocation2 + $0xc8] sm:$0x1] %v685
        %v687 = vld [vmem:[#allocation2 + $0xd0] sm:$0x1]
        %v688 = vsel %vm608, 0, %v687
        %689 = vst [vmem:[#allocation2 + $0xd0] sm:$0x1] %v688
        %v690 = vld [vmem:[#allocation2 + $0xd8] sm:$0x1]
        %v691 = vsel %vm608, 0, %v690
        %692 = vst [vmem:[#allocation2 + $0xd8] sm:$0x1] %v691
        %v693 = vld [vmem:[#allocation2 + $0xe0] sm:$0x1]
        %v694 = vsel %vm608, 0, %v693
        %695 = vst [vmem:[#allocation2 + $0xe0] sm:$0x1] %v694
        %v696 = vld [vmem:[#allocation2 + $0xe8] sm:$0x1]
        %v697 = vsel %vm608, 0, %v696
        %698 = vst [vmem:[#allocation2 + $0xe8] sm:$0x1] %v697
        %v699 = vld [vmem:[#allocation2 + $0xf0] sm:$0x1]
        %v700 = vsel %vm608, 0, %v699
        %701 = vst [vmem:[#allocation2 + $0xf0] sm:$0x1] %v700
        %v702 = vld [vmem:[#allocation2 + $0xf8] sm:$0x1]
        %v703 = vsel %vm608, 0, %v702
        %704 = vst [vmem:[#allocation2 + $0xf8] sm:$0x1] %v703
        %v705 = vld [vmem:[#allocation2 + $0x100] sm:$0x1]
        %v706 = vsel %vm608, 0, %v705
        %707 = vst [vmem:[#allocation2 + $0x100] sm:$0x1] %v706
        %v708 = vld [vmem:[#allocation2 + $0x108] sm:$0x1]
        %v709 = vsel %vm608, 0, %v708
        %710 = vst [vmem:[#allocation2 + $0x108] sm:$0x1] %v709
        %v711 = vld [vmem:[#allocation2 + $0x110] sm:$0x1]
        %v712 = vsel %vm608, 0, %v711
        %713 = vst [vmem:[#allocation2 + $0x110] sm:$0x1] %v712
        %v714 = vld [vmem:[#allocation2 + $0x118] sm:$0x1]
        %v715 = vsel %vm608, 0, %v714
        %716 = vst [vmem:[#allocation2 + $0x118] sm:$0x1] %v715
        %v717 = vld [vmem:[#allocation2 + $0x120] sm:$0x1]
        %v718 = vsel %vm608, 0, %v717
        %719 = vst [vmem:[#allocation2 + $0x120] sm:$0x1] %v718
        %v720 = vld [vmem:[#allocation2 + $0x128] sm:$0x1]
        %v721 = vsel %vm608, 0, %v720
        %722 = vst [vmem:[#allocation2 + $0x128] sm:$0x1] %v721
        %v723 = vld [vmem:[#allocation2 + $0x130] sm:$0x1]
        %v724 = vsel %vm608, 0, %v723
        %725 = vst [vmem:[#allocation2 + $0x130] sm:$0x1] %v724
        %v726 = vld [vmem:[#allocation2 + $0x138] sm:$0x1]
        %v727 = vsel %vm608, 0, %v726
        %728 = vst [vmem:[#allocation2 + $0x138] sm:$0x1] %v727
        %v729 = vld [vmem:[#allocation2 + $0x140] sm:$0x1]
        %v730 = vsel %vm608, 0, %v729
        %731 = vst [vmem:[#allocation2 + $0x140] sm:$0x1] %v730
        %v732 = vld [vmem:[#allocation2 + $0x148] sm:$0x1]
        %v733 = vsel %vm608, 0, %v732
        %734 = vst [vmem:[#allocation2 + $0x148] sm:$0x1] %v733
        %v735 = vld [vmem:[#allocation2 + $0x150] sm:$0x1]
        %v736 = vsel %vm608, 0, %v735
        %737 = vst [vmem:[#allocation2 + $0x150] sm:$0x1] %v736
        %v738 = vld [vmem:[#allocation2 + $0x158] sm:$0x1]
        %v739 = vsel %vm608, 0, %v738
        %740 = vst [vmem:[#allocation2 + $0x158] sm:$0x1] %v739
        %v741 = vld [vmem:[#allocation2 + $0x160] sm:$0x1]
        %v742 = vsel %vm608, 0, %v741
        %743 = vst [vmem:[#allocation2 + $0x160] sm:$0x1] %v742
        %v744 = vld [vmem:[#allocation2 + $0x168] sm:$0x1]
        %v745 = vsel %vm608, 0, %v744
        %746 = vst [vmem:[#allocation2 + $0x168] sm:$0x1] %v745
        %v747 = vld [vmem:[#allocation2 + $0x170] sm:$0x1]
        %v748 = vsel %vm608, 0, %v747
        %749 = vst [vmem:[#allocation2 + $0x170] sm:$0x1] %v748
        %v750 = vld [vmem:[#allocation2 + $0x178] sm:$0x1]
        %v751 = vsel %vm608, 0, %v750
        %752 = vst [vmem:[#allocation2 + $0x178] sm:$0x1] %v751
        %v753 = vld [vmem:[#allocation2 + $0x180] sm:$0x1]
        %v754 = vsel %vm608, 0, %v753
        %755 = vst [vmem:[#allocation2 + $0x180] sm:$0x1] %v754
        %v756 = vld [vmem:[#allocation2 + $0x188] sm:$0x1]
        %v757 = vsel %vm608, 0, %v756
        %758 = vst [vmem:[#allocation2 + $0x188] sm:$0x1] %v757
        %v759 = vld [vmem:[#allocation2 + $0x190] sm:$0x1]
        %v760 = vsel %vm608, 0, %v759
        %761 = vst [vmem:[#allocation2 + $0x190] sm:$0x1] %v760
        %v762 = vld [vmem:[#allocation2 + $0x198] sm:$0x1]
        %v763 = vsel %vm608, 0, %v762
        %764 = vst [vmem:[#allocation2 + $0x198] sm:$0x1] %v763
        %v765 = vld [vmem:[#allocation2 + $0x1a0] sm:$0x1]
        %v766 = vsel %vm608, 0, %v765
        %767 = vst [vmem:[#allocation2 + $0x1a0] sm:$0x1] %v766
        %v768 = vld [vmem:[#allocation2 + $0x1a8] sm:$0x1]
        %v769 = vsel %vm608, 0, %v768
        %770 = vst [vmem:[#allocation2 + $0x1a8] sm:$0x1] %v769
        %v771 = vld [vmem:[#allocation2 + $0x1b0] sm:$0x1]
        %v772 = vsel %vm608, 0, %v771
        %773 = vst [vmem:[#allocation2 + $0x1b0] sm:$0x1] %v772
        %v774 = vld [vmem:[#allocation2 + $0x1b8] sm:$0x1]
        %v775 = vsel %vm608, 0, %v774
        %776 = vst [vmem:[#allocation2 + $0x1b8] sm:$0x1] %v775
        %v777 = vld [vmem:[#allocation2 + $0x1c0] sm:$0x1]
        %v778 = vsel %vm608, 0, %v777
        %779 = vst [vmem:[#allocation2 + $0x1c0] sm:$0x1] %v778
        %v780 = vld [vmem:[#allocation2 + $0x1c8] sm:$0x1]
        %v781 = vsel %vm608, 0, %v780
        %782 = vst [vmem:[#allocation2 + $0x1c8] sm:$0x1] %v781
        %v783 = vld [vmem:[#allocation2 + $0x1d0] sm:$0x1]
        %v784 = vsel %vm608, 0, %v783
        %785 = vst [vmem:[#allocation2 + $0x1d0] sm:$0x1] %v784
        %v786 = vld [vmem:[#allocation2 + $0x1d8] sm:$0x1]
        %v787 = vsel %vm608, 0, %v786
        %788 = vst [vmem:[#allocation2 + $0x1d8] sm:$0x1] %v787
        %vm789 = vsmask.f32 7938
        %vm790 = vmand %vm606, %vm789
        %v791 = vld [vmem:[#allocation2 + $0x4] sm:$0x1]
        %v792 = vsel %vm790, 0, %v791
        %793 = vst [vmem:[#allocation2 + $0x4] sm:$0x1] %v792
        %v794 = vld [vmem:[#allocation2 + $0xc] sm:$0x1]
        %v795 = vsel %vm790, 0, %v794
        %796 = vst [vmem:[#allocation2 + $0xc] sm:$0x1] %v795
        %v797 = vld [vmem:[#allocation2 + $0x14] sm:$0x1]
        %v798 = vsel %vm790, 0, %v797
        %799 = vst [vmem:[#allocation2 + $0x14] sm:$0x1] %v798
        %v800 = vld [vmem:[#allocation2 + $0x1c] sm:$0x1]
        %v801 = vsel %vm790, 0, %v800
        %802 = vst [vmem:[#allocation2 + $0x1c] sm:$0x1] %v801
        %v803 = vld [vmem:[#allocation2 + $0x24] sm:$0x1]
        %v804 = vsel %vm790, 0, %v803
        %805 = vst [vmem:[#allocation2 + $0x24] sm:$0x1] %v804
        %v806 = vld [vmem:[#allocation2 + $0x2c] sm:$0x1]
        %v807 = vsel %vm790, 0, %v806
        %808 = vst [vmem:[#allocation2 + $0x2c] sm:$0x1] %v807
        %v809 = vld [vmem:[#allocation2 + $0x34] sm:$0x1]
        %v810 = vsel %vm790, 0, %v809
        %811 = vst [vmem:[#allocation2 + $0x34] sm:$0x1] %v810
        %v812 = vld [vmem:[#allocation2 + $0x3c] sm:$0x1]
        %v813 = vsel %vm790, 0, %v812
        %814 = vst [vmem:[#allocation2 + $0x3c] sm:$0x1] %v813
        %v815 = vld [vmem:[#allocation2 + $0x44] sm:$0x1]
        %v816 = vsel %vm790, 0, %v815
        %817 = vst [vmem:[#allocation2 + $0x44] sm:$0x1] %v816
        %v818 = vld [vmem:[#allocation2 + $0x4c] sm:$0x1]
        %v819 = vsel %vm790, 0, %v818
        %820 = vst [vmem:[#allocation2 + $0x4c] sm:$0x1] %v819
        %v821 = vld [vmem:[#allocation2 + $0x54] sm:$0x1]
        %v822 = vsel %vm790, 0, %v821
        %823 = vst [vmem:[#allocation2 + $0x54] sm:$0x1] %v822
        %v824 = vld [vmem:[#allocation2 + $0x5c] sm:$0x1]
        %v825 = vsel %vm790, 0, %v824
        %826 = vst [vmem:[#allocation2 + $0x5c] sm:$0x1] %v825
        %v827 = vld [vmem:[#allocation2 + $0x64] sm:$0x1]
        %v828 = vsel %vm790, 0, %v827
        %829 = vst [vmem:[#allocation2 + $0x64] sm:$0x1] %v828
        %v830 = vld [vmem:[#allocation2 + $0x6c] sm:$0x1]
        %v831 = vsel %vm790, 0, %v830
        %832 = vst [vmem:[#allocation2 + $0x6c] sm:$0x1] %v831
        %v833 = vld [vmem:[#allocation2 + $0x74] sm:$0x1]
        %v834 = vsel %vm790, 0, %v833
        %835 = vst [vmem:[#allocation2 + $0x74] sm:$0x1] %v834
        %v836 = vld [vmem:[#allocation2 + $0x7c] sm:$0x1]
        %v837 = vsel %vm790, 0, %v836
        %838 = vst [vmem:[#allocation2 + $0x7c] sm:$0x1] %v837
        %v839 = vld [vmem:[#allocation2 + $0x84] sm:$0x1]
        %v840 = vsel %vm790, 0, %v839
        %841 = vst [vmem:[#allocation2 + $0x84] sm:$0x1] %v840
        %v842 = vld [vmem:[#allocation2 + $0x8c] sm:$0x1]
        %v843 = vsel %vm790, 0, %v842
        %844 = vst [vmem:[#allocation2 + $0x8c] sm:$0x1] %v843
        %v845 = vld [vmem:[#allocation2 + $0x94] sm:$0x1]
        %v846 = vsel %vm790, 0, %v845
        %847 = vst [vmem:[#allocation2 + $0x94] sm:$0x1] %v846
        %v848 = vld [vmem:[#allocation2 + $0x9c] sm:$0x1]
        %v849 = vsel %vm790, 0, %v848
        %850 = vst [vmem:[#allocation2 + $0x9c] sm:$0x1] %v849
        %v851 = vld [vmem:[#allocation2 + $0xa4] sm:$0x1]
        %v852 = vsel %vm790, 0, %v851
        %853 = vst [vmem:[#allocation2 + $0xa4] sm:$0x1] %v852
        %v854 = vld [vmem:[#allocation2 + $0xac] sm:$0x1]
        %v855 = vsel %vm790, 0, %v854
        %856 = vst [vmem:[#allocation2 + $0xac] sm:$0x1] %v855
        %v857 = vld [vmem:[#allocation2 + $0xb4] sm:$0x1]
        %v858 = vsel %vm790, 0, %v857
        %859 = vst [vmem:[#allocation2 + $0xb4] sm:$0x1] %v858
        %v860 = vld [vmem:[#allocation2 + $0xbc] sm:$0x1]
        %v861 = vsel %vm790, 0, %v860
        %862 = vst [vmem:[#allocation2 + $0xbc] sm:$0x1] %v861
        %v863 = vld [vmem:[#allocation2 + $0xc4] sm:$0x1]
        %v864 = vsel %vm790, 0, %v863
        %865 = vst [vmem:[#allocation2 + $0xc4] sm:$0x1] %v864
        %v866 = vld [vmem:[#allocation2 + $0xcc] sm:$0x1]
        %v867 = vsel %vm790, 0, %v866
        %868 = vst [vmem:[#allocation2 + $0xcc] sm:$0x1] %v867
        %v869 = vld [vmem:[#allocation2 + $0xd4] sm:$0x1]
        %v870 = vsel %vm790, 0, %v869
        %871 = vst [vmem:[#allocation2 + $0xd4] sm:$0x1] %v870
        %v872 = vld [vmem:[#allocation2 + $0xdc] sm:$0x1]
        %v873 = vsel %vm790, 0, %v872
        %874 = vst [vmem:[#allocation2 + $0xdc] sm:$0x1] %v873
        %v875 = vld [vmem:[#allocation2 + $0xe4] sm:$0x1]
        %v876 = vsel %vm790, 0, %v875
        %877 = vst [vmem:[#allocation2 + $0xe4] sm:$0x1] %v876
        %v878 = vld [vmem:[#allocation2 + $0xec] sm:$0x1]
        %v879 = vsel %vm790, 0, %v878
        %880 = vst [vmem:[#allocation2 + $0xec] sm:$0x1] %v879
        %v881 = vld [vmem:[#allocation2 + $0xf4] sm:$0x1]
        %v882 = vsel %vm790, 0, %v881
        %883 = vst [vmem:[#allocation2 + $0xf4] sm:$0x1] %v882
        %v884 = vld [vmem:[#allocation2 + $0xfc] sm:$0x1]
        %v885 = vsel %vm790, 0, %v884
        %886 = vst [vmem:[#allocation2 + $0xfc] sm:$0x1] %v885
        %v887 = vld [vmem:[#allocation2 + $0x104] sm:$0x1]
        %v888 = vsel %vm790, 0, %v887
        %889 = vst [vmem:[#allocation2 + $0x104] sm:$0x1] %v888
        %v890 = vld [vmem:[#allocation2 + $0x10c] sm:$0x1]
        %v891 = vsel %vm790, 0, %v890
        %892 = vst [vmem:[#allocation2 + $0x10c] sm:$0x1] %v891
        %v893 = vld [vmem:[#allocation2 + $0x114] sm:$0x1]
        %v894 = vsel %vm790, 0, %v893
        %895 = vst [vmem:[#allocation2 + $0x114] sm:$0x1] %v894
        %v896 = vld [vmem:[#allocation2 + $0x11c] sm:$0x1]
        %v897 = vsel %vm790, 0, %v896
        %898 = vst [vmem:[#allocation2 + $0x11c] sm:$0x1] %v897
        %v899 = vld [vmem:[#allocation2 + $0x124] sm:$0x1]
        %v900 = vsel %vm790, 0, %v899
        %901 = vst [vmem:[#allocation2 + $0x124] sm:$0x1] %v900
        %v902 = vld [vmem:[#allocation2 + $0x12c] sm:$0x1]
        %v903 = vsel %vm790, 0, %v902
        %904 = vst [vmem:[#allocation2 + $0x12c] sm:$0x1] %v903
        %v905 = vld [vmem:[#allocation2 + $0x134] sm:$0x1]
        %v906 = vsel %vm790, 0, %v905
        %907 = vst [vmem:[#allocation2 + $0x134] sm:$0x1] %v906
        %v908 = vld [vmem:[#allocation2 + $0x13c] sm:$0x1]
        %v909 = vsel %vm790, 0, %v908
        %910 = vst [vmem:[#allocation2 + $0x13c] sm:$0x1] %v909
        %v911 = vld [vmem:[#allocation2 + $0x144] sm:$0x1]
        %v912 = vsel %vm790, 0, %v911
        %913 = vst [vmem:[#allocation2 + $0x144] sm:$0x1] %v912
        %v914 = vld [vmem:[#allocation2 + $0x14c] sm:$0x1]
        %v915 = vsel %vm790, 0, %v914
        %916 = vst [vmem:[#allocation2 + $0x14c] sm:$0x1] %v915
        %v917 = vld [vmem:[#allocation2 + $0x154] sm:$0x1]
        %v918 = vsel %vm790, 0, %v917
        %919 = vst [vmem:[#allocation2 + $0x154] sm:$0x1] %v918
        %v920 = vld [vmem:[#allocation2 + $0x15c] sm:$0x1]
        %v921 = vsel %vm790, 0, %v920
        %922 = vst [vmem:[#allocation2 + $0x15c] sm:$0x1] %v921
        %v923 = vld [vmem:[#allocation2 + $0x164] sm:$0x1]
        %v924 = vsel %vm790, 0, %v923
        %925 = vst [vmem:[#allocation2 + $0x164] sm:$0x1] %v924
        %v926 = vld [vmem:[#allocation2 + $0x16c] sm:$0x1]
        %v927 = vsel %vm790, 0, %v926
        %928 = vst [vmem:[#allocation2 + $0x16c] sm:$0x1] %v927
        %v929 = vld [vmem:[#allocation2 + $0x174] sm:$0x1]
        %v930 = vsel %vm790, 0, %v929
        %931 = vst [vmem:[#allocation2 + $0x174] sm:$0x1] %v930
        %v932 = vld [vmem:[#allocation2 + $0x17c] sm:$0x1]
        %v933 = vsel %vm790, 0, %v932
        %934 = vst [vmem:[#allocation2 + $0x17c] sm:$0x1] %v933
        %v935 = vld [vmem:[#allocation2 + $0x184] sm:$0x1]
        %v936 = vsel %vm790, 0, %v935
        %937 = vst [vmem:[#allocation2 + $0x184] sm:$0x1] %v936
        %v938 = vld [vmem:[#allocation2 + $0x18c] sm:$0x1]
        %v939 = vsel %vm790, 0, %v938
        %940 = vst [vmem:[#allocation2 + $0x18c] sm:$0x1] %v939
        %v941 = vld [vmem:[#allocation2 + $0x194] sm:$0x1]
        %v942 = vsel %vm790, 0, %v941
        %943 = vst [vmem:[#allocation2 + $0x194] sm:$0x1] %v942
        %v944 = vld [vmem:[#allocation2 + $0x19c] sm:$0x1]
        %v945 = vsel %vm790, 0, %v944
        %946 = vst [vmem:[#allocation2 + $0x19c] sm:$0x1] %v945
        %v947 = vld [vmem:[#allocation2 + $0x1a4] sm:$0x1]
        %v948 = vsel %vm790, 0, %v947
        %949 = vst [vmem:[#allocation2 + $0x1a4] sm:$0x1] %v948
        %v950 = vld [vmem:[#allocation2 + $0x1ac] sm:$0x1]
        %v951 = vsel %vm790, 0, %v950
        %952 = vst [vmem:[#allocation2 + $0x1ac] sm:$0x1] %v951
        %v953 = vld [vmem:[#allocation2 + $0x1b4] sm:$0x1]
        %v954 = vsel %vm790, 0, %v953
        %955 = vst [vmem:[#allocation2 + $0x1b4] sm:$0x1] %v954
        %v956 = vld [vmem:[#allocation2 + $0x1bc] sm:$0x1]
        %v957 = vsel %vm790, 0, %v956
        %958 = vst [vmem:[#allocation2 + $0x1bc] sm:$0x1] %v957
        %v959 = vld [vmem:[#allocation2 + $0x1c4] sm:$0x1]
        %v960 = vsel %vm790, 0, %v959
        %961 = vst [vmem:[#allocation2 + $0x1c4] sm:$0x1] %v960
        %v962 = vld [vmem:[#allocation2 + $0x1cc] sm:$0x1]
        %v963 = vsel %vm790, 0, %v962
        %964 = vst [vmem:[#allocation2 + $0x1cc] sm:$0x1] %v963
        %v965 = vld [vmem:[#allocation2 + $0x1d4] sm:$0x1]
        %v966 = vsel %vm790, 0, %v965
        %967 = vst [vmem:[#allocation2 + $0x1d4] sm:$0x1] %v966
        %v968 = vld [vmem:[#allocation2 + $0x1dc] sm:$0x1]
        %v969 = vsel %vm790, 0, %v968
        %970 = vst [vmem:[#allocation2 + $0x1dc] sm:$0x1] %v969
        %p971 = scmp.eq.s32.totalorder %s31, 0
        // Predicated region
        $region69: #{fire_forward.1} parent=67 // pred_check
          %p972 = pneg %p971
        $region70: #{fire_forward.1} parent=67 // pred_check_branch
          %974 = sbr.rel (%p972) target = $region72
        $region71: #{fire_forward.1} parent=67 // pred_region
          %975 = vst.msk [vmem:[#allocation2] sm:$0xf] %vm579, 0
          %976 = vst.msk [vmem:[#allocation2 + $0x4] sm:$0x1] %vm581, 0
          %977 = vst.msk [vmem:[#allocation2 + $0x8] sm:$0xf] %vm579, 0
          %978 = vst.msk [vmem:[#allocation2 + $0xc] sm:$0x1] %vm581, 0
          %979 = vst.msk [vmem:[#allocation2 + $0x10] sm:$0xf] %vm579, 0
          %980 = vst.msk [vmem:[#allocation2 + $0x14] sm:$0x1] %vm581, 0
          %981 = vst.msk [vmem:[#allocation2 + $0x18] sm:$0xf] %vm579, 0
          %982 = vst.msk [vmem:[#allocation2 + $0x1c] sm:$0x1] %vm581, 0
          %983 = vst.msk [vmem:[#allocation2 + $0x20] sm:$0xf] %vm579, 0
          %984 = vst.msk [vmem:[#allocation2 + $0x24] sm:$0x1] %vm581, 0
          %985 = vst.msk [vmem:[#allocation2 + $0x28] sm:$0xf] %vm579, 0
          %986 = vst.msk [vmem:[#allocation2 + $0x2c] sm:$0x1] %vm581, 0
          %987 = vst.msk [vmem:[#allocation2 + $0x30] sm:$0xf] %vm579, 0
          %988 = vst.msk [vmem:[#allocation2 + $0x34] sm:$0x1] %vm581, 0
          %989 = vst.msk [vmem:[#allocation2 + $0x38] sm:$0xf] %vm579, 0
          %990 = vst.msk [vmem:[#allocation2 + $0x3c] sm:$0x1] %vm581, 0
          %991 = vst.msk [vmem:[#allocation2 + $0x40] sm:$0xf] %vm579, 0
          %992 = vst.msk [vmem:[#allocation2 + $0x44] sm:$0x1] %vm581, 0
          %993 = vst.msk [vmem:[#allocation2 + $0x48] sm:$0xf] %vm579, 0
          %994 = vst.msk [vmem:[#allocation2 + $0x4c] sm:$0x1] %vm581, 0
          %s995 = scalar_lea.vmem [#allocation2], 400
          %996 = vst.msk [vmem:[%s995] sm:$0xf] %vm579, 0
          %997 = vst.msk [vmem:[%s995 + $0x4] sm:$0x1] %vm581, 0
          %998 = vst.msk [vmem:[%s995 + $0x8] sm:$0xf] %vm579, 0
          %999 = vst.msk [vmem:[%s995 + $0xc] sm:$0x1] %vm581, 0
          %1000 = vst.msk [vmem:[%s995 + $0x10] sm:$0xf] %vm579, 0
          %1001 = vst.msk [vmem:[%s995 + $0x14] sm:$0x1] %vm581, 0
          %1002 = vst.msk [vmem:[%s995 + $0x18] sm:$0xf] %vm579, 0
          %1003 = vst.msk [vmem:[%s995 + $0x1c] sm:$0x1] %vm581, 0
          %1004 = vst.msk [vmem:[%s995 + $0x20] sm:$0xf] %vm579, 0
          %1005 = vst.msk [vmem:[%s995 + $0x24] sm:$0x1] %vm581, 0
          %1006 = vst.msk [vmem:[%s995 + $0x28] sm:$0xf] %vm579, 0
          %1007 = vst.msk [vmem:[%s995 + $0x2c] sm:$0x1] %vm581, 0
          %1008 = vst.msk [vmem:[%s995 + $0x30] sm:$0xf] %vm579, 0
          %1009 = vst.msk [vmem:[%s995 + $0x34] sm:$0x1] %vm581, 0
          %1010 = vst.msk [vmem:[%s995 + $0x38] sm:$0xf] %vm579, 0
          %1011 = vst.msk [vmem:[%s995 + $0x3c] sm:$0x1] %vm581, 0
          %1012 = vst.msk [vmem:[%s995 + $0x40] sm:$0xf] %vm579, 0
          %1013 = vst.msk [vmem:[%s995 + $0x44] sm:$0x1] %vm581, 0
          %1014 = vst.msk [vmem:[%s995 + $0x48] sm:$0xf] %vm579, 0
          %1015 = vst.msk [vmem:[%s995 + $0x4c] sm:$0x1] %vm581, 0
        $region72: #{fire_forward.1} parent=67 // pred_fallthru
          _
        %v1016 = vld [vmem:[%s533] sm:$0xf]
        %v1017 = vld [vmem:[%s533 + $0x4] sm:$0xf]
        %v1018 = vld [vmem:[%s533 + $0x8] sm:$0xf]
        %v1019 = vld [vmem:[%s533 + $0xc] sm:$0xf]
        %v1020 = vld [vmem:[%s533 + $0x10] sm:$0xf]
        %v1021 = vld [vmem:[%s533 + $0x14] sm:$0xf]
        %v1022 = vld [vmem:[%s533 + $0x18] sm:$0xf]
        %v1023 = vld [vmem:[%s533 + $0x1c] sm:$0xf]
        %v1024 = vld [vmem:[%s533 + $0x20] sm:$0xf]
        %v1025 = vld [vmem:[%s533 + $0x24] sm:$0xf]
        %v1026 = vld [vmem:[%s533 + $0x28] sm:$0xf]
        %v1027 = vld [vmem:[%s533 + $0x2c] sm:$0xf]
        %v1028 = vld [vmem:[%s533 + $0x30] sm:$0xf]
        %v1029 = vld [vmem:[%s533 + $0x34] sm:$0xf]
        %v1030 = vld [vmem:[%s533 + $0x38] sm:$0xf]
        %v1031 = vld [vmem:[%s533 + $0x3c] sm:$0xf]
        %v1032 = vld [vmem:[%s533 + $0x40] sm:$0xf]
        %v1033 = vld [vmem:[%s533 + $0x44] sm:$0xf]
        %v1034 = vld [vmem:[%s533 + $0x48] sm:$0xf]
        %v1035 = vld [vmem:[%s533 + $0x4c] sm:$0xf]
        %v1036 = vld [vmem:[%s533 + $0x50] sm:$0xf]
        %v1037 = vld [vmem:[%s533 + $0x54] sm:$0xf]
        %v1038 = vld [vmem:[%s533 + $0x58] sm:$0xf]
        %v1039 = vld [vmem:[%s533 + $0x5c] sm:$0xf]
        %v1040 = vld [vmem:[%s533 + $0x60] sm:$0xf]
        %v1041 = vld [vmem:[%s533 + $0x64] sm:$0xf]
        %v1042 = vld [vmem:[%s533 + $0x68] sm:$0xf]
        %v1043 = vld [vmem:[%s533 + $0x6c] sm:$0xf]
        %v1044 = vld [vmem:[%s533 + $0x70] sm:$0xf]
        %v1045 = vld [vmem:[%s533 + $0x74] sm:$0xf]
        %v1046 = vld [vmem:[%s533 + $0x78] sm:$0xf]
        %v1047 = vld [vmem:[%s533 + $0x7c] sm:$0xf]
        %v1080 = vunpack.c.l.b16 %v1016
        %v1081 = vunpack.c.l.b16 %v1017
        %v1082 = vunpack.c.l.b16 %v1018
        %v1083 = vunpack.c.l.b16 %v1019
        %v1084 = vunpack.c.l.b16 %v1020
        %v1085 = vunpack.c.l.b16 %v1021
        %v1086 = vunpack.c.l.b16 %v1022
        %v1087 = vunpack.c.l.b16 %v1023
        %v1088 = vunpack.c.l.b16 %v1024
        %v1089 = vunpack.c.l.b16 %v1025
        %v1090 = vunpack.c.l.b16 %v1026
        %v1091 = vunpack.c.l.b16 %v1027
        %v1092 = vunpack.c.l.b16 %v1028
        %v1093 = vunpack.c.l.b16 %v1029
        %v1094 = vunpack.c.l.b16 %v1030
        %v1095 = vunpack.c.l.b16 %v1031
        %v1096 = vunpack.c.l.b16 %v1032
        %v1097 = vunpack.c.l.b16 %v1033
        %v1098 = vunpack.c.l.b16 %v1034
        %v1099 = vunpack.c.l.b16 %v1035
        %v1100 = vunpack.c.l.b16 %v1036
        %v1101 = vunpack.c.l.b16 %v1037
        %v1102 = vunpack.c.l.b16 %v1038
        %v1103 = vunpack.c.l.b16 %v1039
        %v1104 = vunpack.c.l.b16 %v1040
        %v1105 = vunpack.c.l.b16 %v1041
        %v1106 = vunpack.c.l.b16 %v1042
        %v1107 = vunpack.c.l.b16 %v1043
        %v1108 = vunpack.c.l.b16 %v1044
        %v1109 = vunpack.c.l.b16 %v1045
        %v1110 = vunpack.c.l.b16 %v1046
        %v1111 = vunpack.c.l.b16 %v1047
        %v1112 = vpack.c.b16 %v1081, %v1080
        %v1113 = vpack.c.b16 %v1083, %v1082
        %v1114 = vpack.c.b16 %v1085, %v1084
        %v1115 = vpack.c.b16 %v1087, %v1086
        %v1116 = vpack.c.b16 %v1089, %v1088
        %v1117 = vpack.c.b16 %v1091, %v1090
        %v1118 = vpack.c.b16 %v1093, %v1092
        %v1119 = vpack.c.b16 %v1095, %v1094
        %v1120 = vpack.c.b16 %v1097, %v1096
        %v1121 = vpack.c.b16 %v1099, %v1098
        %v1122 = vpack.c.b16 %v1101, %v1100
        %v1123 = vpack.c.b16 %v1103, %v1102
        %v1124 = vpack.c.b16 %v1105, %v1104
        %v1125 = vpack.c.b16 %v1107, %v1106
        %v1126 = vpack.c.b16 %v1109, %v1108
        %v1127 = vpack.c.b16 %v1111, %v1110
        %v1130 = vunpack.c.l.b16 %v571
        %v1131 = vunpack.c.l.b16 %v572
        %v1132 = vpack.c.b16 %v1131, %v1130
        %vm1134 = vcmask 130048
        %v1136 = vsel %vm1134, %v1112, 0
        %v1139 = vsel %vm1134, %v1113, 0
        %v1142 = vsel %vm1134, %v1114, 0
        %v1145 = vsel %vm1134, %v1115, 0
        %v1148 = vsel %vm1134, %v1116, 0
        %v1151 = vsel %vm1134, %v1117, 0
        %v1154 = vsel %vm1134, %v1118, 0
        %v1157 = vsel %vm1134, %v1119, 0
        %v1160 = vsel %vm1134, %v1120, 0
        %v1163 = vsel %vm1134, %v1121, 0
        %v1166 = vsel %vm1134, %v1122, 0
        %v1169 = vsel %vm1134, %v1123, 0
        %v1172 = vsel %vm1134, %v1124, 0
        %v1175 = vsel %vm1134, %v1125, 0
        %v1178 = vsel %vm1134, %v1126, 0
        %v1181 = vsel %vm1134, %v1127, 0
        %1183 = vmatprep.subr.bf16.mxu0 0
        %1184 = vmatpush1.bf16.msra.mxu0 %v1132
        %1185 = vmatprep.subr.bf16.mxu0 0
        %1186 = vmatpush1.bf16.msra.mxu0 0
        %1187 = vmatprep.subr.bf16.mxu0 0
        %1188 = vmatpush1.bf16.msra.mxu0 0
        %1189 = vmatprep.subr.bf16.mxu0 0
        %1190 = vmatpush1.bf16.msra.mxu0 0
        %1191 = vmatprep.subr.bf16.mxu0 0
        %1192 = vmatpush1.bf16.msra.mxu0 0
        %1193 = vmatprep.subr.bf16.mxu0 0
        %1194 = vmatpush1.bf16.msra.mxu0 0
        %1195 = vmatprep.subr.bf16.mxu0 0
        %1196 = vmatpush1.bf16.msra.mxu0 0
        %1197 = vmatprep.subr.bf16.mxu0 0
        %1198 = vmatpush1.bf16.msra.mxu0 0
        %1199 = vmatprep.subr.bf16.mxu0 0
        %1200 = vmatpush1.bf16.msra.mxu0 0
        %1201 = vmatprep.subr.bf16.mxu0 0
        %1202 = vmatpush1.bf16.msra.mxu0 0
        %1203 = vmatprep.subr.bf16.mxu0 0
        %1204 = vmatpush1.bf16.msra.mxu0 0
        %1205 = vmatprep.subr.bf16.mxu0 0
        %1206 = vmatpush1.bf16.msra.mxu0 0
        %1207 = vmatprep.subr.bf16.mxu0 0
        %1208 = vmatpush1.bf16.msra.mxu0 0
        %1209 = vmatprep.subr.bf16.mxu0 0
        %1210 = vmatpush1.bf16.msra.mxu0 0
        %1211 = vmatprep.subr.bf16.mxu0 0
        %1212 = vmatpush1.bf16.msra.mxu0 0
        %1213 = vmatprep.subr.bf16.mxu0 0
        %1214 = vmatpush1.bf16.msra.mxu0 0
        %1215 = vmatprep.mubr.bf16.mxu0 0
        %1216 = vmatmul.mubr.bf16.gmra.mrb[0].mxu0 %v1136
        %v1217 = vpop.f32.mrb[0].mxu0
        %v1218 = vadd.f32 0.0, %v1217
        %v1219 = vpop.f32.mrb[0].mxu0
        %v1220 = vpop.f32.mrb[0].mxu0
        %v1221 = vadd.f32 0.0, %v1220
        %v1222 = vpop.f32.mrb[0].mxu0
        %1223 = vmatprep.mubr.bf16.mxu0 0
        %1224 = vmatmul.mubr.bf16.gmra.mrb[0].mxu0 %v1139
        %v1225 = vpop.f32.mrb[0].mxu0
        %v1226 = vadd.f32 0.0, %v1225
        %v1227 = vpop.f32.mrb[0].mxu0
        %v1228 = vpop.f32.mrb[0].mxu0
        %v1229 = vadd.f32 0.0, %v1228
        %v1230 = vpop.f32.mrb[0].mxu0
        %1231 = vmatprep.mubr.bf16.mxu0 0
        %1232 = vmatmul.mubr.bf16.gmra.mrb[0].mxu0 %v1142
        %v1233 = vpop.f32.mrb[0].mxu0
        %v1234 = vadd.f32 0.0, %v1233
        %v1235 = vpop.f32.mrb[0].mxu0
        %v1236 = vpop.f32.mrb[0].mxu0
        %v1237 = vadd.f32 0.0, %v1236
        %v1238 = vpop.f32.mrb[0].mxu0
        %1239 = vmatprep.mubr.bf16.mxu0 0
        %1240 = vmatmul.mubr.bf16.gmra.mrb[0].mxu0 %v1145
        %v1241 = vpop.f32.mrb[0].mxu0
        %v1242 = vadd.f32 0.0, %v1241
        %v1243 = vpop.f32.mrb[0].mxu0
        %v1244 = vpop.f32.mrb[0].mxu0
        %v1245 = vadd.f32 0.0, %v1244
        %v1246 = vpop.f32.mrb[0].mxu0
        %1247 = vmatprep.mubr.bf16.mxu0 0
        %1248 = vmatmul.mubr.bf16.gmra.mrb[0].mxu0 %v1148
        %v1249 = vpop.f32.mrb[0].mxu0
        %v1250 = vadd.f32 0.0, %v1249
        %v1251 = vpop.f32.mrb[0].mxu0
        %v1252 = vpop.f32.mrb[0].mxu0
        %v1253 = vadd.f32 0.0, %v1252
        %v1254 = vpop.f32.mrb[0].mxu0
        %1255 = vmatprep.mubr.bf16.mxu0 0
        %1256 = vmatmul.mubr.bf16.gmra.mrb[0].mxu0 %v1151
        %v1257 = vpop.f32.mrb[0].mxu0
        %v1258 = vadd.f32 0.0, %v1257
        %v1259 = vpop.f32.mrb[0].mxu0
        %v1260 = vpop.f32.mrb[0].mxu0
        %v1261 = vadd.f32 0.0, %v1260
        %v1262 = vpop.f32.mrb[0].mxu0
        %1263 = vmatprep.mubr.bf16.mxu0 0
        %1264 = vmatmul.mubr.bf16.gmra.mrb[0].mxu0 %v1154
        %v1265 = vpop.f32.mrb[0].mxu0
        %v1266 = vadd.f32 0.0, %v1265
        %v1267 = vpop.f32.mrb[0].mxu0
        %v1268 = vpop.f32.mrb[0].mxu0
        %v1269 = vadd.f32 0.0, %v1268
        %v1270 = vpop.f32.mrb[0].mxu0
        %1271 = vmatprep.mubr.bf16.mxu0 0
        %1272 = vmatmul.mubr.bf16.gmra.mrb[0].mxu0 %v1157
        %v1273 = vpop.f32.mrb[0].mxu0
        %v1274 = vadd.f32 0.0, %v1273
        %v1275 = vpop.f32.mrb[0].mxu0
        %v1276 = vpop.f32.mrb[0].mxu0
        %v1277 = vadd.f32 0.0, %v1276
        %v1278 = vpop.f32.mrb[0].mxu0
        %1279 = vmatprep.mubr.bf16.mxu0 0
        %1280 = vmatmul.mubr.bf16.gmra.mrb[0].mxu0 %v1160
        %v1281 = vpop.f32.mrb[0].mxu0
        %v1282 = vadd.f32 0.0, %v1281
        %v1283 = vpop.f32.mrb[0].mxu0
        %v1284 = vpop.f32.mrb[0].mxu0
        %v1285 = vadd.f32 0.0, %v1284
        %v1286 = vpop.f32.mrb[0].mxu0
        %1287 = vmatprep.mubr.bf16.mxu0 0
        %1288 = vmatmul.mubr.bf16.gmra.mrb[0].mxu0 %v1163
        %v1289 = vpop.f32.mrb[0].mxu0
        %v1290 = vadd.f32 0.0, %v1289
        %v1291 = vpop.f32.mrb[0].mxu0
        %v1292 = vpop.f32.mrb[0].mxu0
        %v1293 = vadd.f32 0.0, %v1292
        %v1294 = vpop.f32.mrb[0].mxu0
        %1295 = vmatprep.mubr.bf16.mxu0 0
        %1296 = vmatmul.mubr.bf16.gmra.mrb[0].mxu0 %v1166
        %v1297 = vpop.f32.mrb[0].mxu0
        %v1298 = vadd.f32 0.0, %v1297
        %v1299 = vpop.f32.mrb[0].mxu0
        %v1300 = vpop.f32.mrb[0].mxu0
        %v1301 = vadd.f32 0.0, %v1300
        %v1302 = vpop.f32.mrb[0].mxu0
        %1303 = vmatprep.mubr.bf16.mxu0 0
        %1304 = vmatmul.mubr.bf16.gmra.mrb[0].mxu0 %v1169
        %v1305 = vpop.f32.mrb[0].mxu0
        %v1306 = vadd.f32 0.0, %v1305
        %v1307 = vpop.f32.mrb[0].mxu0
        %v1308 = vpop.f32.mrb[0].mxu0
        %v1309 = vadd.f32 0.0, %v1308
        %v1310 = vpop.f32.mrb[0].mxu0
        %1311 = vmatprep.mubr.bf16.mxu0 0
        %1312 = vmatmul.mubr.bf16.gmra.mrb[0].mxu0 %v1172
        %v1313 = vpop.f32.mrb[0].mxu0
        %v1314 = vadd.f32 0.0, %v1313
        %v1315 = vpop.f32.mrb[0].mxu0
        %v1316 = vpop.f32.mrb[0].mxu0
        %v1317 = vadd.f32 0.0, %v1316
        %v1318 = vpop.f32.mrb[0].mxu0
        %1319 = vmatprep.mubr.bf16.mxu0 0
        %1320 = vmatmul.mubr.bf16.gmra.mrb[0].mxu0 %v1175
        %v1321 = vpop.f32.mrb[0].mxu0
        %v1322 = vadd.f32 0.0, %v1321
        %v1323 = vpop.f32.mrb[0].mxu0
        %v1324 = vpop.f32.mrb[0].mxu0
        %v1325 = vadd.f32 0.0, %v1324
        %v1326 = vpop.f32.mrb[0].mxu0
        %1327 = vmatprep.mubr.bf16.mxu0 0
        %1328 = vmatmul.mubr.bf16.gmra.mrb[0].mxu0 %v1178
        %v1329 = vpop.f32.mrb[0].mxu0
        %v1330 = vadd.f32 0.0, %v1329
        %v1331 = vpop.f32.mrb[0].mxu0
        %v1332 = vpop.f32.mrb[0].mxu0
        %v1333 = vadd.f32 0.0, %v1332
        %v1334 = vpop.f32.mrb[0].mxu0
        %1335 = vmatprep.mubr.bf16.mxu0 0
        %1336 = vmatmul.mubr.bf16.gmra.mrb[0].mxu0 %v1181
        %v1337 = vpop.f32.mrb[0].mxu0
        %v1338 = vadd.f32 0.0, %v1337
        %v1339 = vpop.f32.mrb[0].mxu0
        %v1340 = vpop.f32.mrb[0].mxu0
        %v1341 = vadd.f32 0.0, %v1340
        %v1342 = vpop.f32.mrb[0].mxu0
        %1343 = vdwg.mxu0
        %v1345 = vlaneseq
        %v1346 = vshrl.u32 %v1345, 7
        %v1347 = vsub.s32 0, %v1346
        %v1348 = vrot.slane %v573, %v1347
        %v1350 = vmul.f32 %v1218, %v1348
        %v1351 = vmul.f32 %v1221, %v1348
        %v1352 = vmul.f32 %v1226, %v1348
        %v1353 = vmul.f32 %v1229, %v1348
        %v1354 = vmul.f32 %v1234, %v1348
        %v1355 = vmul.f32 %v1237, %v1348
        %v1356 = vmul.f32 %v1242, %v1348
        %v1357 = vmul.f32 %v1245, %v1348
        %v1358 = vmul.f32 %v1250, %v1348
        %v1359 = vmul.f32 %v1253, %v1348
        %v1360 = vmul.f32 %v1258, %v1348
        %v1361 = vmul.f32 %v1261, %v1348
        %v1362 = vmul.f32 %v1266, %v1348
        %v1363 = vmul.f32 %v1269, %v1348
        %v1364 = vmul.f32 %v1274, %v1348
        %v1365 = vmul.f32 %v1277, %v1348
        %v1366 = vmul.f32 %v1282, %v1348
        %v1367 = vmul.f32 %v1285, %v1348
        %v1368 = vmul.f32 %v1290, %v1348
        %v1369 = vmul.f32 %v1293, %v1348
        %v1370 = vmul.f32 %v1298, %v1348
        %v1371 = vmul.f32 %v1301, %v1348
        %v1372 = vmul.f32 %v1306, %v1348
        %v1373 = vmul.f32 %v1309, %v1348
        %v1374 = vmul.f32 %v1314, %v1348
        %v1375 = vmul.f32 %v1317, %v1348
        %v1376 = vmul.f32 %v1322, %v1348
        %v1377 = vmul.f32 %v1325, %v1348
        %v1378 = vmul.f32 %v1330, %v1348
        %v1379 = vmul.f32 %v1333, %v1348
        %v1380 = vmul.f32 %v1338, %v1348
        %v1381 = vmul.f32 %v1341, %v1348
        %v1383 = vlaneseq
        %v1384 = vshrl.u32 %v1383, 7
        %v1385 = vsub.s32 0, %v1384
        %v1386 = vrot.slane %v574, %v1385
        %v1388 = vadd.f32 %v1350, %v1386
        %v1389 = vadd.f32 %v1351, %v1386
        %v1390 = vadd.f32 %v1352, %v1386
        %v1391 = vadd.f32 %v1353, %v1386
        %v1392 = vadd.f32 %v1354, %v1386
        %v1393 = vadd.f32 %v1355, %v1386
        %v1394 = vadd.f32 %v1356, %v1386
        %v1395 = vadd.f32 %v1357, %v1386
        %v1396 = vadd.f32 %v1358, %v1386
        %v1397 = vadd.f32 %v1359, %v1386
        %v1398 = vadd.f32 %v1360, %v1386
        %v1399 = vadd.f32 %v1361, %v1386
        %v1400 = vadd.f32 %v1362, %v1386
        %v1401 = vadd.f32 %v1363, %v1386
        %v1402 = vadd.f32 %v1364, %v1386
        %v1403 = vadd.f32 %v1365, %v1386
        %v1404 = vadd.f32 %v1366, %v1386
        %v1405 = vadd.f32 %v1367, %v1386
        %v1406 = vadd.f32 %v1368, %v1386
        %v1407 = vadd.f32 %v1369, %v1386
        %v1408 = vadd.f32 %v1370, %v1386
        %v1409 = vadd.f32 %v1371, %v1386
        %v1410 = vadd.f32 %v1372, %v1386
        %v1411 = vadd.f32 %v1373, %v1386
        %v1412 = vadd.f32 %v1374, %v1386
        %v1413 = vadd.f32 %v1375, %v1386
        %v1414 = vadd.f32 %v1376, %v1386
        %v1415 = vadd.f32 %v1377, %v1386
        %v1416 = vadd.f32 %v1378, %v1386
        %v1417 = vadd.f32 %v1379, %v1386
        %v1418 = vadd.f32 %v1380, %v1386
        %v1419 = vadd.f32 %v1381, %v1386
        %v1420 = vmax.f32 %v1388, 0.0
        %v1421 = vmax.f32 %v1389, 0.0
        %v1422 = vmax.f32 %v1390, 0.0
        %v1423 = vmax.f32 %v1391, 0.0
        %v1424 = vmax.f32 %v1392, 0.0
        %v1425 = vmax.f32 %v1393, 0.0
        %v1426 = vmax.f32 %v1394, 0.0
        %v1427 = vmax.f32 %v1395, 0.0
        %v1428 = vmax.f32 %v1396, 0.0
        %v1429 = vmax.f32 %v1397, 0.0
        %v1430 = vmax.f32 %v1398, 0.0
        %v1431 = vmax.f32 %v1399, 0.0
        %v1432 = vmax.f32 %v1400, 0.0
        %v1433 = vmax.f32 %v1401, 0.0
        %v1434 = vmax.f32 %v1402, 0.0
        %v1435 = vmax.f32 %v1403, 0.0
        %v1436 = vmax.f32 %v1404, 0.0
        %v1437 = vmax.f32 %v1405, 0.0
        %v1438 = vmax.f32 %v1406, 0.0
        %v1439 = vmax.f32 %v1407, 0.0
        %v1440 = vmax.f32 %v1408, 0.0
        %v1441 = vmax.f32 %v1409, 0.0
        %v1442 = vmax.f32 %v1410, 0.0
        %v1443 = vmax.f32 %v1411, 0.0
        %v1444 = vmax.f32 %v1412, 0.0
        %v1445 = vmax.f32 %v1413, 0.0
        %v1446 = vmax.f32 %v1414, 0.0
        %v1447 = vmax.f32 %v1415, 0.0
        %v1448 = vmax.f32 %v1416, 0.0
        %v1449 = vmax.f32 %v1417, 0.0
        %v1450 = vmax.f32 %v1418, 0.0
        %v1451 = vmax.f32 %v1419, 0.0
        %v1452 = vpack.c.bf16 %v1421, %v1420
        %v1453 = vpack.c.bf16 %v1423, %v1422
        %v1454 = vpack.c.bf16 %v1425, %v1424
        %v1455 = vpack.c.bf16 %v1427, %v1426
        %v1456 = vpack.c.bf16 %v1429, %v1428
        %v1457 = vpack.c.bf16 %v1431, %v1430
        %v1458 = vpack.c.bf16 %v1433, %v1432
        %v1459 = vpack.c.bf16 %v1435, %v1434
        %v1460 = vpack.c.bf16 %v1437, %v1436
        %v1461 = vpack.c.bf16 %v1439, %v1438
        %v1462 = vpack.c.bf16 %v1441, %v1440
        %v1463 = vpack.c.bf16 %v1443, %v1442
        %v1464 = vpack.c.bf16 %v1445, %v1444
        %v1465 = vpack.c.bf16 %v1447, %v1446
        %v1466 = vpack.c.bf16 %v1449, %v1448
        %v1467 = vpack.c.bf16 %v1451, %v1450
        %v1484 = vunpack.c.l.b16 %v1452
        %v1485 = vunpack.c.h.b16 %v1452
        %v1486 = vunpack.c.l.b16 %v1453
        %v1487 = vunpack.c.h.b16 %v1453
        %v1488 = vunpack.c.l.b16 %v1454
        %v1489 = vunpack.c.h.b16 %v1454
        %v1490 = vunpack.c.l.b16 %v1455
        %v1491 = vunpack.c.h.b16 %v1455
        %v1492 = vunpack.c.l.b16 %v1456
        %v1493 = vunpack.c.h.b16 %v1456
        %v1494 = vunpack.c.l.b16 %v1457
        %v1495 = vunpack.c.h.b16 %v1457
        %v1496 = vunpack.c.l.b16 %v1458
        %v1497 = vunpack.c.h.b16 %v1458
        %v1498 = vunpack.c.l.b16 %v1459
        %v1499 = vunpack.c.h.b16 %v1459
        %v1500 = vunpack.c.l.b16 %v1460
        %v1501 = vunpack.c.h.b16 %v1460
        %v1502 = vunpack.c.l.b16 %v1461
        %v1503 = vunpack.c.h.b16 %v1461
        %v1504 = vunpack.c.l.b16 %v1462
        %v1505 = vunpack.c.h.b16 %v1462
        %v1506 = vunpack.c.l.b16 %v1463
        %v1507 = vunpack.c.h.b16 %v1463
        %v1508 = vunpack.c.l.b16 %v1464
        %v1509 = vunpack.c.h.b16 %v1464
        %v1510 = vunpack.c.l.b16 %v1465
        %v1511 = vunpack.c.h.b16 %v1465
        %v1512 = vunpack.c.l.b16 %v1466
        %v1513 = vunpack.c.h.b16 %v1466
        %v1514 = vunpack.c.l.b16 %v1467
        %v1515 = vunpack.c.h.b16 %v1467
        %v1516 = vpack.c.b16 %v1484, %v1484
        %v1517 = vpack.c.b16 %v1485, %v1485
        %v1518 = vpack.c.b16 %v1486, %v1486
        %v1519 = vpack.c.b16 %v1487, %v1487
        %v1520 = vpack.c.b16 %v1488, %v1488
        %v1521 = vpack.c.b16 %v1489, %v1489
        %v1522 = vpack.c.b16 %v1490, %v1490
        %v1523 = vpack.c.b16 %v1491, %v1491
        %v1524 = vpack.c.b16 %v1492, %v1492
        %v1525 = vpack.c.b16 %v1493, %v1493
        %v1526 = vpack.c.b16 %v1494, %v1494
        %v1527 = vpack.c.b16 %v1495, %v1495
        %v1528 = vpack.c.b16 %v1496, %v1496
        %v1529 = vpack.c.b16 %v1497, %v1497
        %v1530 = vpack.c.b16 %v1498, %v1498
        %v1531 = vpack.c.b16 %v1499, %v1499
        %v1532 = vpack.c.b16 %v1500, %v1500
        %v1533 = vpack.c.b16 %v1501, %v1501
        %v1534 = vpack.c.b16 %v1502, %v1502
        %v1535 = vpack.c.b16 %v1503, %v1503
        %v1536 = vpack.c.b16 %v1504, %v1504
        %v1537 = vpack.c.b16 %v1505, %v1505
        %v1538 = vpack.c.b16 %v1506, %v1506
        %v1539 = vpack.c.b16 %v1507, %v1507
        %v1540 = vpack.c.b16 %v1508, %v1508
        %v1541 = vpack.c.b16 %v1509, %v1509
        %v1542 = vpack.c.b16 %v1510, %v1510
        %v1543 = vpack.c.b16 %v1511, %v1511
        %v1544 = vpack.c.b16 %v1512, %v1512
        %v1545 = vpack.c.b16 %v1513, %v1513
        %v1546 = vpack.c.b16 %v1514, %v1514
        %v1547 = vpack.c.b16 %v1515, %v1515
        %v1549 = vshrl.u32 %v1516, 16
        %v1551 = vrot.slane %v1549, 7
        %v1552 = vshll.u32 %v1516, 16
        %v1554 = vor.u32 %v1551, %v1552
        %v1555 = vrot.slane %v1551, 4
        %v1557 = vshrl.u32 %v1517, 16
        %v1559 = vrot.slane %v1557, 7
        %v1560 = vshll.u32 %v1517, 16
        %v1562 = vor.u32 %v1559, %v1560
        %v1563 = vrot.slane %v1559, 4
        %v1565 = vshrl.u32 %v1518, 16
        %v1567 = vrot.slane %v1565, 7
        %v1568 = vshll.u32 %v1518, 16
        %v1570 = vor.u32 %v1567, %v1568
        %v1571 = vrot.slane %v1567, 4
        %v1573 = vshrl.u32 %v1519, 16
        %v1575 = vrot.slane %v1573, 7
        %v1576 = vshll.u32 %v1519, 16
        %v1578 = vor.u32 %v1575, %v1576
        %v1579 = vrot.slane %v1575, 4
        %v1581 = vshrl.u32 %v1520, 16
        %v1583 = vrot.slane %v1581, 7
        %v1584 = vshll.u32 %v1520, 16
        %v1586 = vor.u32 %v1583, %v1584
        %v1587 = vrot.slane %v1583, 4
        %v1589 = vshrl.u32 %v1521, 16
        %v1591 = vrot.slane %v1589, 7
        %v1592 = vshll.u32 %v1521, 16
        %v1594 = vor.u32 %v1591, %v1592
        %v1595 = vrot.slane %v1591, 4
        %v1597 = vshrl.u32 %v1522, 16
        %v1599 = vrot.slane %v1597, 7
        %v1600 = vshll.u32 %v1522, 16
        %v1602 = vor.u32 %v1599, %v1600
        %v1603 = vrot.slane %v1599, 4
        %v1605 = vshrl.u32 %v1523, 16
        %v1607 = vrot.slane %v1605, 7
        %v1608 = vshll.u32 %v1523, 16
        %v1610 = vor.u32 %v1607, %v1608
        %v1611 = vrot.slane %v1607, 4
        %v1613 = vshrl.u32 %v1524, 16
        %v1615 = vrot.slane %v1613, 7
        %v1616 = vshll.u32 %v1524, 16
        %v1618 = vor.u32 %v1615, %v1616
        %v1619 = vrot.slane %v1615, 4
        %v1621 = vshrl.u32 %v1525, 16
        %v1623 = vrot.slane %v1621, 7
        %v1624 = vshll.u32 %v1525, 16
        %v1626 = vor.u32 %v1623, %v1624
        %v1627 = vrot.slane %v1623, 4
        %v1629 = vshrl.u32 %v1526, 16
        %v1631 = vrot.slane %v1629, 7
        %v1632 = vshll.u32 %v1526, 16
        %v1634 = vor.u32 %v1631, %v1632
        %v1635 = vrot.slane %v1631, 4
        %v1637 = vshrl.u32 %v1527, 16
        %v1639 = vrot.slane %v1637, 7
        %v1640 = vshll.u32 %v1527, 16
        %v1642 = vor.u32 %v1639, %v1640
        %v1643 = vrot.slane %v1639, 4
        %v1645 = vshrl.u32 %v1528, 16
        %v1647 = vrot.slane %v1645, 7
        %v1648 = vshll.u32 %v1528, 16
        %v1650 = vor.u32 %v1647, %v1648
        %v1651 = vrot.slane %v1647, 4
        %v1653 = vshrl.u32 %v1529, 16
        %v1655 = vrot.slane %v1653, 7
        %v1656 = vshll.u32 %v1529, 16
        %v1658 = vor.u32 %v1655, %v1656
        %v1659 = vrot.slane %v1655, 4
        %v1661 = vshrl.u32 %v1530, 16
        %v1663 = vrot.slane %v1661, 7
        %v1664 = vshll.u32 %v1530, 16
        %v1666 = vor.u32 %v1663, %v1664
        %v1667 = vrot.slane %v1663, 4
        %v1669 = vshrl.u32 %v1531, 16
        %v1671 = vrot.slane %v1669, 7
        %v1672 = vshll.u32 %v1531, 16
        %v1674 = vor.u32 %v1671, %v1672
        %v1675 = vrot.slane %v1671, 4
        %v1677 = vshrl.u32 %v1532, 16
        %v1679 = vrot.slane %v1677, 7
        %v1680 = vshll.u32 %v1532, 16
        %v1682 = vor.u32 %v1679, %v1680
        %v1683 = vrot.slane %v1679, 4
        %v1685 = vshrl.u32 %v1533, 16
        %v1687 = vrot.slane %v1685, 7
        %v1688 = vshll.u32 %v1533, 16
        %v1690 = vor.u32 %v1687, %v1688
        %v1691 = vrot.slane %v1687, 4
        %v1693 = vshrl.u32 %v1534, 16
        %v1695 = vrot.slane %v1693, 7
        %v1696 = vshll.u32 %v1534, 16
        %v1698 = vor.u32 %v1695, %v1696
        %v1699 = vrot.slane %v1695, 4
        %v1701 = vshrl.u32 %v1535, 16
        %v1703 = vrot.slane %v1701, 7
        %v1704 = vshll.u32 %v1535, 16
        %v1706 = vor.u32 %v1703, %v1704
        %v1707 = vrot.slane %v1703, 4
        %v1709 = vshrl.u32 %v1536, 16
        %v1711 = vrot.slane %v1709, 7
        %v1712 = vshll.u32 %v1536, 16
        %v1714 = vor.u32 %v1711, %v1712
        %v1715 = vrot.slane %v1711, 4
        %v1717 = vshrl.u32 %v1537, 16
        %v1719 = vrot.slane %v1717, 7
        %v1720 = vshll.u32 %v1537, 16
        %v1722 = vor.u32 %v1719, %v1720
        %v1723 = vrot.slane %v1719, 4
        %v1725 = vshrl.u32 %v1538, 16
        %v1727 = vrot.slane %v1725, 7
        %v1728 = vshll.u32 %v1538, 16
        %v1730 = vor.u32 %v1727, %v1728
        %v1731 = vrot.slane %v1727, 4
        %v1733 = vshrl.u32 %v1539, 16
        %v1735 = vrot.slane %v1733, 7
        %v1736 = vshll.u32 %v1539, 16
        %v1738 = vor.u32 %v1735, %v1736
        %v1739 = vrot.slane %v1735, 4
        %v1741 = vshrl.u32 %v1540, 16
        %v1743 = vrot.slane %v1741, 7
        %v1744 = vshll.u32 %v1540, 16
        %v1746 = vor.u32 %v1743, %v1744
        %v1747 = vrot.slane %v1743, 4
        %v1749 = vshrl.u32 %v1541, 16
        %v1751 = vrot.slane %v1749, 7
        %v1752 = vshll.u32 %v1541, 16
        %v1754 = vor.u32 %v1751, %v1752
        %v1755 = vrot.slane %v1751, 4
        %v1757 = vshrl.u32 %v1542, 16
        %v1759 = vrot.slane %v1757, 7
        %v1760 = vshll.u32 %v1542, 16
        %v1762 = vor.u32 %v1759, %v1760
        %v1763 = vrot.slane %v1759, 4
        %v1765 = vshrl.u32 %v1543, 16
        %v1767 = vrot.slane %v1765, 7
        %v1768 = vshll.u32 %v1543, 16
        %v1770 = vor.u32 %v1767, %v1768
        %v1771 = vrot.slane %v1767, 4
        %v1773 = vshrl.u32 %v1544, 16
        %v1775 = vrot.slane %v1773, 7
        %v1776 = vshll.u32 %v1544, 16
        %v1778 = vor.u32 %v1775, %v1776
        %v1779 = vrot.slane %v1775, 4
        %v1781 = vshrl.u32 %v1545, 16
        %v1783 = vrot.slane %v1781, 7
        %v1784 = vshll.u32 %v1545, 16
        %v1786 = vor.u32 %v1783, %v1784
        %v1787 = vrot.slane %v1783, 4
        %v1789 = vshrl.u32 %v1546, 16
        %v1791 = vrot.slane %v1789, 7
        %v1792 = vshll.u32 %v1546, 16
        %v1794 = vor.u32 %v1791, %v1792
        %v1795 = vrot.slane %v1791, 4
        %v1797 = vshrl.u32 %v1547, 16
        %v1799 = vrot.slane %v1797, 7
        %v1800 = vshll.u32 %v1547, 16
        %v1802 = vor.u32 %v1799, %v1800
        %v1803 = vrot.slane %v1799, 4
        %s1868 = scalar_lea.vmem [#allocation2], 88
        %vm1869 = vcmask 60416
        %vm1870 = vmand %vm1869, %vm789
        %v1871 = vld [vmem:[%s1868] sm:$0xf]
        %v1872 = vsel %vm1870, %v1554, %v1871
        %1873 = vst [vmem:[%s1868] sm:$0xf] %v1872
        %v1874 = vld [vmem:[%s1868 + $0x4] sm:$0x1]
        %v1875 = vsel %vm608, %v1555, %v1874
        %1876 = vst [vmem:[%s1868 + $0x4] sm:$0x1] %v1875
        %v1877 = vld [vmem:[%s1868 + $0x8] sm:$0xf]
        %v1878 = vsel %vm1870, %v1562, %v1877
        %1879 = vst [vmem:[%s1868 + $0x8] sm:$0xf] %v1878
        %v1880 = vld [vmem:[%s1868 + $0xc] sm:$0x1]
        %v1881 = vsel %vm608, %v1563, %v1880
        %1882 = vst [vmem:[%s1868 + $0xc] sm:$0x1] %v1881
        %v1883 = vld [vmem:[%s1868 + $0x10] sm:$0xf]
        %v1884 = vsel %vm1870, %v1570, %v1883
        %1885 = vst [vmem:[%s1868 + $0x10] sm:$0xf] %v1884
        %v1886 = vld [vmem:[%s1868 + $0x14] sm:$0x1]
        %v1887 = vsel %vm608, %v1571, %v1886
        %1888 = vst [vmem:[%s1868 + $0x14] sm:$0x1] %v1887
        %v1889 = vld [vmem:[%s1868 + $0x18] sm:$0xf]
        %v1890 = vsel %vm1870, %v1578, %v1889
        %1891 = vst [vmem:[%s1868 + $0x18] sm:$0xf] %v1890
        %v1892 = vld [vmem:[%s1868 + $0x1c] sm:$0x1]
        %v1893 = vsel %vm608, %v1579, %v1892
        %1894 = vst [vmem:[%s1868 + $0x1c] sm:$0x1] %v1893
        %v1895 = vld [vmem:[%s1868 + $0x20] sm:$0xf]
        %v1896 = vsel %vm1870, %v1586, %v1895
        %1897 = vst [vmem:[%s1868 + $0x20] sm:$0xf] %v1896
        %v1898 = vld [vmem:[%s1868 + $0x24] sm:$0x1]
        %v1899 = vsel %vm608, %v1587, %v1898
        %1900 = vst [vmem:[%s1868 + $0x24] sm:$0x1] %v1899
        %v1901 = vld [vmem:[%s1868 + $0x28] sm:$0xf]
        %v1902 = vsel %vm1870, %v1594, %v1901
        %1903 = vst [vmem:[%s1868 + $0x28] sm:$0xf] %v1902
        %v1904 = vld [vmem:[%s1868 + $0x2c] sm:$0x1]
        %v1905 = vsel %vm608, %v1595, %v1904
        %1906 = vst [vmem:[%s1868 + $0x2c] sm:$0x1] %v1905
        %v1907 = vld [vmem:[%s1868 + $0x30] sm:$0xf]
        %v1908 = vsel %vm1870, %v1602, %v1907
        %1909 = vst [vmem:[%s1868 + $0x30] sm:$0xf] %v1908
        %v1910 = vld [vmem:[%s1868 + $0x34] sm:$0x1]
        %v1911 = vsel %vm608, %v1603, %v1910
        %1912 = vst [vmem:[%s1868 + $0x34] sm:$0x1] %v1911
        %v1913 = vld [vmem:[%s1868 + $0x38] sm:$0xf]
        %v1914 = vsel %vm1870, %v1610, %v1913
        %1915 = vst [vmem:[%s1868 + $0x38] sm:$0xf] %v1914
        %v1916 = vld [vmem:[%s1868 + $0x3c] sm:$0x1]
        %v1917 = vsel %vm608, %v1611, %v1916
        %1918 = vst [vmem:[%s1868 + $0x3c] sm:$0x1] %v1917
        %v1919 = vld [vmem:[%s1868 + $0x50] sm:$0xf]
        %v1920 = vsel %vm1870, %v1618, %v1919
        %1921 = vst [vmem:[%s1868 + $0x50] sm:$0xf] %v1920
        %v1922 = vld [vmem:[%s1868 + $0x54] sm:$0x1]
        %v1923 = vsel %vm608, %v1619, %v1922
        %1924 = vst [vmem:[%s1868 + $0x54] sm:$0x1] %v1923
        %v1925 = vld [vmem:[%s1868 + $0x58] sm:$0xf]
        %v1926 = vsel %vm1870, %v1626, %v1925
        %1927 = vst [vmem:[%s1868 + $0x58] sm:$0xf] %v1926
        %v1928 = vld [vmem:[%s1868 + $0x5c] sm:$0x1]
        %v1929 = vsel %vm608, %v1627, %v1928
        %1930 = vst [vmem:[%s1868 + $0x5c] sm:$0x1] %v1929
        %v1931 = vld [vmem:[%s1868 + $0x60] sm:$0xf]
        %v1932 = vsel %vm1870, %v1634, %v1931
        %1933 = vst [vmem:[%s1868 + $0x60] sm:$0xf] %v1932
        %v1934 = vld [vmem:[%s1868 + $0x64] sm:$0x1]
        %v1935 = vsel %vm608, %v1635, %v1934
        %1936 = vst [vmem:[%s1868 + $0x64] sm:$0x1] %v1935
        %v1937 = vld [vmem:[%s1868 + $0x68] sm:$0xf]
        %v1938 = vsel %vm1870, %v1642, %v1937
        %1939 = vst [vmem:[%s1868 + $0x68] sm:$0xf] %v1938
        %v1940 = vld [vmem:[%s1868 + $0x6c] sm:$0x1]
        %v1941 = vsel %vm608, %v1643, %v1940
        %1942 = vst [vmem:[%s1868 + $0x6c] sm:$0x1] %v1941
        %v1943 = vld [vmem:[%s1868 + $0x70] sm:$0xf]
        %v1944 = vsel %vm1870, %v1650, %v1943
        %1945 = vst [vmem:[%s1868 + $0x70] sm:$0xf] %v1944
        %v1946 = vld [vmem:[%s1868 + $0x74] sm:$0x1]
        %v1947 = vsel %vm608, %v1651, %v1946
        %1948 = vst [vmem:[%s1868 + $0x74] sm:$0x1] %v1947
        %v1949 = vld [vmem:[%s1868 + $0x78] sm:$0xf]
        %v1950 = vsel %vm1870, %v1658, %v1949
        %1951 = vst [vmem:[%s1868 + $0x78] sm:$0xf] %v1950
        %v1952 = vld [vmem:[%s1868 + $0x7c] sm:$0x1]
        %v1953 = vsel %vm608, %v1659, %v1952
        %1954 = vst [vmem:[%s1868 + $0x7c] sm:$0x1] %v1953
        %v1955 = vld [vmem:[%s1868 + $0x80] sm:$0xf]
        %v1956 = vsel %vm1870, %v1666, %v1955
        %1957 = vst [vmem:[%s1868 + $0x80] sm:$0xf] %v1956
        %v1958 = vld [vmem:[%s1868 + $0x84] sm:$0x1]
        %v1959 = vsel %vm608, %v1667, %v1958
        %1960 = vst [vmem:[%s1868 + $0x84] sm:$0x1] %v1959
        %v1961 = vld [vmem:[%s1868 + $0x88] sm:$0xf]
        %v1962 = vsel %vm1870, %v1674, %v1961
        %1963 = vst [vmem:[%s1868 + $0x88] sm:$0xf] %v1962
        %v1964 = vld [vmem:[%s1868 + $0x8c] sm:$0x1]
        %v1965 = vsel %vm608, %v1675, %v1964
        %1966 = vst [vmem:[%s1868 + $0x8c] sm:$0x1] %v1965
        %v1967 = vld [vmem:[%s1868 + $0xa0] sm:$0xf]
        %v1968 = vsel %vm1870, %v1682, %v1967
        %1969 = vst [vmem:[%s1868 + $0xa0] sm:$0xf] %v1968
        %v1970 = vld [vmem:[%s1868 + $0xa4] sm:$0x1]
        %v1971 = vsel %vm608, %v1683, %v1970
        %1972 = vst [vmem:[%s1868 + $0xa4] sm:$0x1] %v1971
        %v1973 = vld [vmem:[%s1868 + $0xa8] sm:$0xf]
        %v1974 = vsel %vm1870, %v1690, %v1973
        %1975 = vst [vmem:[%s1868 + $0xa8] sm:$0xf] %v1974
        %v1976 = vld [vmem:[%s1868 + $0xac] sm:$0x1]
        %v1977 = vsel %vm608, %v1691, %v1976
        %1978 = vst [vmem:[%s1868 + $0xac] sm:$0x1] %v1977
        %v1979 = vld [vmem:[%s1868 + $0xb0] sm:$0xf]
        %v1980 = vsel %vm1870, %v1698, %v1979
        %1981 = vst [vmem:[%s1868 + $0xb0] sm:$0xf] %v1980
        %v1982 = vld [vmem:[%s1868 + $0xb4] sm:$0x1]
        %v1983 = vsel %vm608, %v1699, %v1982
        %1984 = vst [vmem:[%s1868 + $0xb4] sm:$0x1] %v1983
        %v1985 = vld [vmem:[%s1868 + $0xb8] sm:$0xf]
        %v1986 = vsel %vm1870, %v1706, %v1985
        %1987 = vst [vmem:[%s1868 + $0xb8] sm:$0xf] %v1986
        %v1988 = vld [vmem:[%s1868 + $0xbc] sm:$0x1]
        %v1989 = vsel %vm608, %v1707, %v1988
        %1990 = vst [vmem:[%s1868 + $0xbc] sm:$0x1] %v1989
        %v1991 = vld [vmem:[%s1868 + $0xc0] sm:$0xf]
        %v1992 = vsel %vm1870, %v1714, %v1991
        %1993 = vst [vmem:[%s1868 + $0xc0] sm:$0xf] %v1992
        %v1994 = vld [vmem:[%s1868 + $0xc4] sm:$0x1]
        %v1995 = vsel %vm608, %v1715, %v1994
        %1996 = vst [vmem:[%s1868 + $0xc4] sm:$0x1] %v1995
        %v1997 = vld [vmem:[%s1868 + $0xc8] sm:$0xf]
        %v1998 = vsel %vm1870, %v1722, %v1997
        %1999 = vst [vmem:[%s1868 + $0xc8] sm:$0xf] %v1998
        %v2000 = vld [vmem:[%s1868 + $0xcc] sm:$0x1]
        %v2001 = vsel %vm608, %v1723, %v2000
        %2002 = vst [vmem:[%s1868 + $0xcc] sm:$0x1] %v2001
        %v2003 = vld [vmem:[%s1868 + $0xd0] sm:$0xf]
        %v2004 = vsel %vm1870, %v1730, %v2003
        %2005 = vst [vmem:[%s1868 + $0xd0] sm:$0xf] %v2004
        %v2006 = vld [vmem:[%s1868 + $0xd4] sm:$0x1]
        %v2007 = vsel %vm608, %v1731, %v2006
        %2008 = vst [vmem:[%s1868 + $0xd4] sm:$0x1] %v2007
        %v2009 = vld [vmem:[%s1868 + $0xd8] sm:$0xf]
        %v2010 = vsel %vm1870, %v1738, %v2009
        %2011 = vst [vmem:[%s1868 + $0xd8] sm:$0xf] %v2010
        %v2012 = vld [vmem:[%s1868 + $0xdc] sm:$0x1]
        %v2013 = vsel %vm608, %v1739, %v2012
        %2014 = vst [vmem:[%s1868 + $0xdc] sm:$0x1] %v2013
        %v2015 = vld [vmem:[%s1868 + $0xf0] sm:$0xf]
        %v2016 = vsel %vm1870, %v1746, %v2015
        %2017 = vst [vmem:[%s1868 + $0xf0] sm:$0xf] %v2016
        %v2018 = vld [vmem:[%s1868 + $0xf4] sm:$0x1]
        %v2019 = vsel %vm608, %v1747, %v2018
        %2020 = vst [vmem:[%s1868 + $0xf4] sm:$0x1] %v2019
        %v2021 = vld [vmem:[%s1868 + $0xf8] sm:$0xf]
        %v2022 = vsel %vm1870, %v1754, %v2021
        %2023 = vst [vmem:[%s1868 + $0xf8] sm:$0xf] %v2022
        %v2024 = vld [vmem:[%s1868 + $0xfc] sm:$0x1]
        %v2025 = vsel %vm608, %v1755, %v2024
        %2026 = vst [vmem:[%s1868 + $0xfc] sm:$0x1] %v2025
        %v2027 = vld [vmem:[%s1868 + $0x100] sm:$0xf]
        %v2028 = vsel %vm1870, %v1762, %v2027
        %2029 = vst [vmem:[%s1868 + $0x100] sm:$0xf] %v2028
        %v2030 = vld [vmem:[%s1868 + $0x104] sm:$0x1]
        %v2031 = vsel %vm608, %v1763, %v2030
        %2032 = vst [vmem:[%s1868 + $0x104] sm:$0x1] %v2031
        %v2033 = vld [vmem:[%s1868 + $0x108] sm:$0xf]
        %v2034 = vsel %vm1870, %v1770, %v2033
        %2035 = vst [vmem:[%s1868 + $0x108] sm:$0xf] %v2034
        %v2036 = vld [vmem:[%s1868 + $0x10c] sm:$0x1]
        %v2037 = vsel %vm608, %v1771, %v2036
        %2038 = vst [vmem:[%s1868 + $0x10c] sm:$0x1] %v2037
        %v2039 = vld [vmem:[%s1868 + $0x110] sm:$0xf]
        %v2040 = vsel %vm1870, %v1778, %v2039
        %2041 = vst [vmem:[%s1868 + $0x110] sm:$0xf] %v2040
        %v2042 = vld [vmem:[%s1868 + $0x114] sm:$0x1]
        %v2043 = vsel %vm608, %v1779, %v2042
        %2044 = vst [vmem:[%s1868 + $0x114] sm:$0x1] %v2043
        %v2045 = vld [vmem:[%s1868 + $0x118] sm:$0xf]
        %v2046 = vsel %vm1870, %v1786, %v2045
        %2047 = vst [vmem:[%s1868 + $0x118] sm:$0xf] %v2046
        %v2048 = vld [vmem:[%s1868 + $0x11c] sm:$0x1]
        %v2049 = vsel %vm608, %v1787, %v2048
        %2050 = vst [vmem:[%s1868 + $0x11c] sm:$0x1] %v2049
        %v2051 = vld [vmem:[%s1868 + $0x120] sm:$0xf]
        %v2052 = vsel %vm1870, %v1794, %v2051
        %2053 = vst [vmem:[%s1868 + $0x120] sm:$0xf] %v2052
        %v2054 = vld [vmem:[%s1868 + $0x124] sm:$0x1]
        %v2055 = vsel %vm608, %v1795, %v2054
        %2056 = vst [vmem:[%s1868 + $0x124] sm:$0x1] %v2055
        %v2057 = vld [vmem:[%s1868 + $0x128] sm:$0xf]
        %v2058 = vsel %vm1870, %v1802, %v2057
        %2059 = vst [vmem:[%s1868 + $0x128] sm:$0xf] %v2058
        %v2060 = vld [vmem:[%s1868 + $0x12c] sm:$0x1]
        %v2061 = vsel %vm608, %v1803, %v2060
        %2062 = vst [vmem:[%s1868 + $0x12c] sm:$0x1] %v2061
        %p2063 = scmp.gt.s32.totalorder %s31, 0
        // Predicated region
        $region73: #{fire_forward.1} parent=67 // pred_check
          %p2064 = pneg %p2063
        $region74: #{fire_forward.1} parent=67 // pred_check_branch
          %2066 = sbr.rel (%p2064) target = $region76
        $region75: #{fire_forward.1} parent=67 // pred_region
          %v2067 = vld [vmem:[%s547] sm:$0xf]
          %v2068 = vld [vmem:[%s547 + $0x4] sm:$0xf]
          %v2069 = vld [vmem:[%s547 + $0x8] sm:$0xf]
          %v2070 = vld [vmem:[%s547 + $0xc] sm:$0xf]
          %v2071 = vld [vmem:[%s547 + $0x10] sm:$0xf]
          %v2072 = vld [vmem:[%s547 + $0x14] sm:$0xf]
          %v2073 = vld [vmem:[%s547 + $0x18] sm:$0xf]
          %v2074 = vld [vmem:[%s547 + $0x1c] sm:$0xf]
          %v2083 = vunpack.c.l.b16 %v2067
          %v2084 = vunpack.c.l.b16 %v2068
          %v2085 = vunpack.c.l.b16 %v2069
          %v2086 = vunpack.c.l.b16 %v2070
          %v2087 = vunpack.c.l.b16 %v2071
          %v2088 = vunpack.c.l.b16 %v2072
          %v2089 = vunpack.c.l.b16 %v2073
          %v2090 = vunpack.c.l.b16 %v2074
          %v2091 = vpack.c.b16 %v2084, %v2083
          %v2092 = vpack.c.b16 %v2086, %v2085
          %v2093 = vpack.c.b16 %v2088, %v2087
          %v2094 = vpack.c.b16 %v2090, %v2089
          %v2096 = vsel %vm1134, %v2091, 0
          %v2099 = vsel %vm1134, %v2092, 0
          %v2102 = vsel %vm1134, %v2093, 0
          %v2105 = vsel %vm1134, %v2094, 0
          %2107 = vmatprep.subr.bf16.mxu0 0
          %2108 = vmatpush1.bf16.msra.mxu0 %v1132
          %2109 = vmatprep.subr.bf16.mxu0 0
          %2110 = vmatpush1.bf16.msra.mxu0 0
          %2111 = vmatprep.subr.bf16.mxu0 0
          %2112 = vmatpush1.bf16.msra.mxu0 0
          %2113 = vmatprep.subr.bf16.mxu0 0
          %2114 = vmatpush1.bf16.msra.mxu0 0
          %2115 = vmatprep.subr.bf16.mxu0 0
          %2116 = vmatpush1.bf16.msra.mxu0 0
          %2117 = vmatprep.subr.bf16.mxu0 0
          %2118 = vmatpush1.bf16.msra.mxu0 0
          %2119 = vmatprep.subr.bf16.mxu0 0
          %2120 = vmatpush1.bf16.msra.mxu0 0
          %2121 = vmatprep.subr.bf16.mxu0 0
          %2122 = vmatpush1.bf16.msra.mxu0 0
          %2123 = vmatprep.subr.bf16.mxu0 0
          %2124 = vmatpush1.bf16.msra.mxu0 0
          %2125 = vmatprep.subr.bf16.mxu0 0
          %2126 = vmatpush1.bf16.msra.mxu0 0
          %2127 = vmatprep.subr.bf16.mxu0 0
          %2128 = vmatpush1.bf16.msra.mxu0 0
          %2129 = vmatprep.subr.bf16.mxu0 0
          %2130 = vmatpush1.bf16.msra.mxu0 0
          %2131 = vmatprep.subr.bf16.mxu0 0
          %2132 = vmatpush1.bf16.msra.mxu0 0
          %2133 = vmatprep.subr.bf16.mxu0 0
          %2134 = vmatpush1.bf16.msra.mxu0 0
          %2135 = vmatprep.subr.bf16.mxu0 0
          %2136 = vmatpush1.bf16.msra.mxu0 0
          %2137 = vmatprep.subr.bf16.mxu0 0
          %2138 = vmatpush1.bf16.msra.mxu0 0
          %2139 = vmatprep.mubr.bf16.mxu0 0
          %2140 = vmatmul.mubr.bf16.gmra.mrb[0].mxu0 %v2096
          %v2141 = vpop.f32.mrb[0].mxu0
          %v2142 = vadd.f32 0.0, %v2141
          %v2143 = vpop.f32.mrb[0].mxu0
          %v2144 = vpop.f32.mrb[0].mxu0
          %v2145 = vadd.f32 0.0, %v2144
          %v2146 = vpop.f32.mrb[0].mxu0
          %2147 = vmatprep.mubr.bf16.mxu0 0
          %2148 = vmatmul.mubr.bf16.gmra.mrb[0].mxu0 %v2099
          %v2149 = vpop.f32.mrb[0].mxu0
          %v2150 = vadd.f32 0.0, %v2149
          %v2151 = vpop.f32.mrb[0].mxu0
          %v2152 = vpop.f32.mrb[0].mxu0
          %v2153 = vadd.f32 0.0, %v2152
          %v2154 = vpop.f32.mrb[0].mxu0
          %2155 = vmatprep.mubr.bf16.mxu0 0
          %2156 = vmatmul.mubr.bf16.gmra.mrb[0].mxu0 %v2102
          %v2157 = vpop.f32.mrb[0].mxu0
          %v2158 = vadd.f32 0.0, %v2157
          %v2159 = vpop.f32.mrb[0].mxu0
          %v2160 = vpop.f32.mrb[0].mxu0
          %v2161 = vadd.f32 0.0, %v2160
          %v2162 = vpop.f32.mrb[0].mxu0
          %2163 = vmatprep.mubr.bf16.mxu0 0
          %2164 = vmatmul.mubr.bf16.gmra.mrb[0].mxu0 %v2105
          %v2165 = vpop.f32.mrb[0].mxu0
          %v2166 = vadd.f32 0.0, %v2165
          %v2167 = vpop.f32.mrb[0].mxu0
          %v2168 = vpop.f32.mrb[0].mxu0
          %v2169 = vadd.f32 0.0, %v2168
          %v2170 = vpop.f32.mrb[0].mxu0
          %2171 = vdwg.mxu0
          %v2172 = vmul.f32 %v2142, %v1348
          %v2173 = vmul.f32 %v2145, %v1348
          %v2174 = vmul.f32 %v2150, %v1348
          %v2175 = vmul.f32 %v2153, %v1348
          %v2176 = vmul.f32 %v2158, %v1348
          %v2177 = vmul.f32 %v2161, %v1348
          %v2178 = vmul.f32 %v2166, %v1348
          %v2179 = vmul.f32 %v2169, %v1348
          %v2180 = vadd.f32 %v2172, %v1386
          %v2181 = vadd.f32 %v2173, %v1386
          %v2182 = vadd.f32 %v2174, %v1386
          %v2183 = vadd.f32 %v2175, %v1386
          %v2184 = vadd.f32 %v2176, %v1386
          %v2185 = vadd.f32 %v2177, %v1386
          %v2186 = vadd.f32 %v2178, %v1386
          %v2187 = vadd.f32 %v2179, %v1386
          %v2188 = vmax.f32 %v2180, 0.0
          %v2189 = vmax.f32 %v2181, 0.0
          %v2190 = vmax.f32 %v2182, 0.0
          %v2191 = vmax.f32 %v2183, 0.0
          %v2192 = vmax.f32 %v2184, 0.0
          %v2193 = vmax.f32 %v2185, 0.0
          %v2194 = vmax.f32 %v2186, 0.0
          %v2195 = vmax.f32 %v2187, 0.0
          %v2196 = vpack.c.bf16 %v2189, %v2188
          %v2197 = vpack.c.bf16 %v2191, %v2190
          %v2198 = vpack.c.bf16 %v2193, %v2192
          %v2199 = vpack.c.bf16 %v2195, %v2194
          %v2204 = vunpack.c.l.b16 %v2196
          %v2205 = vunpack.c.h.b16 %v2196
          %v2206 = vunpack.c.l.b16 %v2197
          %v2207 = vunpack.c.h.b16 %v2197
          %v2208 = vunpack.c.l.b16 %v2198
          %v2209 = vunpack.c.h.b16 %v2198
          %v2210 = vunpack.c.l.b16 %v2199
          %v2211 = vunpack.c.h.b16 %v2199
          %v2212 = vpack.c.b16 %v2204, %v2204
          %v2213 = vpack.c.b16 %v2205, %v2205
          %v2214 = vpack.c.b16 %v2206, %v2206
          %v2215 = vpack.c.b16 %v2207, %v2207
          %v2216 = vpack.c.b16 %v2208, %v2208
          %v2217 = vpack.c.b16 %v2209, %v2209
          %v2218 = vpack.c.b16 %v2210, %v2210
          %v2219 = vpack.c.b16 %v2211, %v2211
          %v2221 = vshrl.u32 %v2212, 16
          %v2223 = vrot.slane %v2221, 7
          %v2224 = vshll.u32 %v2212, 16
          %v2226 = vor.u32 %v2223, %v2224
          %v2227 = vrot.slane %v2223, 4
          %v2229 = vshrl.u32 %v2213, 16
          %v2231 = vrot.slane %v2229, 7
          %v2232 = vshll.u32 %v2213, 16
          %v2234 = vor.u32 %v2231, %v2232
          %v2235 = vrot.slane %v2231, 4
          %v2237 = vshrl.u32 %v2214, 16
          %v2239 = vrot.slane %v2237, 7
          %v2240 = vshll.u32 %v2214, 16
          %v2242 = vor.u32 %v2239, %v2240
          %v2243 = vrot.slane %v2239, 4
          %v2245 = vshrl.u32 %v2215, 16
          %v2247 = vrot.slane %v2245, 7
          %v2248 = vshll.u32 %v2215, 16
          %v2250 = vor.u32 %v2247, %v2248
          %v2251 = vrot.slane %v2247, 4
          %v2253 = vshrl.u32 %v2216, 16
          %v2255 = vrot.slane %v2253, 7
          %v2256 = vshll.u32 %v2216, 16
          %v2258 = vor.u32 %v2255, %v2256
          %v2259 = vrot.slane %v2255, 4
          %v2261 = vshrl.u32 %v2217, 16
          %v2263 = vrot.slane %v2261, 7
          %v2264 = vshll.u32 %v2217, 16
          %v2266 = vor.u32 %v2263, %v2264
          %v2267 = vrot.slane %v2263, 4
          %v2269 = vshrl.u32 %v2218, 16
          %v2271 = vrot.slane %v2269, 7
          %v2272 = vshll.u32 %v2218, 16
          %v2274 = vor.u32 %v2271, %v2272
          %v2275 = vrot.slane %v2271, 4
          %v2277 = vshrl.u32 %v2219, 16
          %v2279 = vrot.slane %v2277, 7
          %v2280 = vshll.u32 %v2219, 16
          %v2282 = vor.u32 %v2279, %v2280
          %v2283 = vrot.slane %v2279, 4
          %s2300 = scalar_lea.vmem [#allocation2], 8
          %v2301 = vld [vmem:[%s2300] sm:$0xf]
          %v2302 = vsel %vm1870, %v2226, %v2301
          %2303 = vst [vmem:[%s2300] sm:$0xf] %v2302
          %v2304 = vld [vmem:[%s2300 + $0x4] sm:$0x1]
          %v2305 = vsel %vm608, %v2227, %v2304
          %2306 = vst [vmem:[%s2300 + $0x4] sm:$0x1] %v2305
          %v2307 = vld [vmem:[%s2300 + $0x8] sm:$0xf]
          %v2308 = vsel %vm1870, %v2234, %v2307
          %2309 = vst [vmem:[%s2300 + $0x8] sm:$0xf] %v2308
          %v2310 = vld [vmem:[%s2300 + $0xc] sm:$0x1]
          %v2311 = vsel %vm608, %v2235, %v2310
          %2312 = vst [vmem:[%s2300 + $0xc] sm:$0x1] %v2311
          %v2313 = vld [vmem:[%s2300 + $0x10] sm:$0xf]
          %v2314 = vsel %vm1870, %v2242, %v2313
          %2315 = vst [vmem:[%s2300 + $0x10] sm:$0xf] %v2314
          %v2316 = vld [vmem:[%s2300 + $0x14] sm:$0x1]
          %v2317 = vsel %vm608, %v2243, %v2316
          %2318 = vst [vmem:[%s2300 + $0x14] sm:$0x1] %v2317
          %v2319 = vld [vmem:[%s2300 + $0x18] sm:$0xf]
          %v2320 = vsel %vm1870, %v2250, %v2319
          %2321 = vst [vmem:[%s2300 + $0x18] sm:$0xf] %v2320
          %v2322 = vld [vmem:[%s2300 + $0x1c] sm:$0x1]
          %v2323 = vsel %vm608, %v2251, %v2322
          %2324 = vst [vmem:[%s2300 + $0x1c] sm:$0x1] %v2323
          %v2325 = vld [vmem:[%s2300 + $0x20] sm:$0xf]
          %v2326 = vsel %vm1870, %v2258, %v2325
          %2327 = vst [vmem:[%s2300 + $0x20] sm:$0xf] %v2326
          %v2328 = vld [vmem:[%s2300 + $0x24] sm:$0x1]
          %v2329 = vsel %vm608, %v2259, %v2328
          %2330 = vst [vmem:[%s2300 + $0x24] sm:$0x1] %v2329
          %v2331 = vld [vmem:[%s2300 + $0x28] sm:$0xf]
          %v2332 = vsel %vm1870, %v2266, %v2331
          %2333 = vst [vmem:[%s2300 + $0x28] sm:$0xf] %v2332
          %v2334 = vld [vmem:[%s2300 + $0x2c] sm:$0x1]
          %v2335 = vsel %vm608, %v2267, %v2334
          %2336 = vst [vmem:[%s2300 + $0x2c] sm:$0x1] %v2335
          %v2337 = vld [vmem:[%s2300 + $0x30] sm:$0xf]
          %v2338 = vsel %vm1870, %v2274, %v2337
          %2339 = vst [vmem:[%s2300 + $0x30] sm:$0xf] %v2338
          %v2340 = vld [vmem:[%s2300 + $0x34] sm:$0x1]
          %v2341 = vsel %vm608, %v2275, %v2340
          %2342 = vst [vmem:[%s2300 + $0x34] sm:$0x1] %v2341
          %v2343 = vld [vmem:[%s2300 + $0x38] sm:$0xf]
          %v2344 = vsel %vm1870, %v2282, %v2343
          %2345 = vst [vmem:[%s2300 + $0x38] sm:$0xf] %v2344
          %v2346 = vld [vmem:[%s2300 + $0x3c] sm:$0x1]
          %v2347 = vsel %vm608, %v2283, %v2346
          %2348 = vst [vmem:[%s2300 + $0x3c] sm:$0x1] %v2347
        $region76: #{fire_forward.1} parent=67 // pred_fallthru
          _
        %p2349 = scmp.lt.s32.totalorder %s31, 0
        // Predicated region
        $region77: #{fire_forward.1} parent=67 // pred_check
          %p2350 = pneg %p2349
        $region78: #{fire_forward.1} parent=67 // pred_check_branch
          %2352 = sbr.rel (%p2350) target = $region80
        $region79: #{fire_forward.1} parent=67 // pred_region
          %v2353 = vld [vmem:[%s564] sm:$0xf]
          %v2354 = vld [vmem:[%s564 + $0x4] sm:$0xf]
          %v2355 = vld [vmem:[%s564 + $0x8] sm:$0xf]
          %v2356 = vld [vmem:[%s564 + $0xc] sm:$0xf]
          %v2357 = vld [vmem:[%s564 + $0x10] sm:$0xf]
          %v2358 = vld [vmem:[%s564 + $0x14] sm:$0xf]
          %v2359 = vld [vmem:[%s564 + $0x18] sm:$0xf]
          %v2360 = vld [vmem:[%s564 + $0x1c] sm:$0xf]
          %v2369 = vunpack.c.l.b16 %v2353
          %v2370 = vunpack.c.l.b16 %v2354
          %v2371 = vunpack.c.l.b16 %v2355
          %v2372 = vunpack.c.l.b16 %v2356
          %v2373 = vunpack.c.l.b16 %v2357
          %v2374 = vunpack.c.l.b16 %v2358
          %v2375 = vunpack.c.l.b16 %v2359
          %v2376 = vunpack.c.l.b16 %v2360
          %v2377 = vpack.c.b16 %v2370, %v2369
          %v2378 = vpack.c.b16 %v2372, %v2371
          %v2379 = vpack.c.b16 %v2374, %v2373
          %v2380 = vpack.c.b16 %v2376, %v2375
          %v2382 = vsel %vm1134, %v2377, 0
          %v2385 = vsel %vm1134, %v2378, 0
          %v2388 = vsel %vm1134, %v2379, 0
          %v2391 = vsel %vm1134, %v2380, 0
          %2393 = vmatprep.subr.bf16.mxu0 0
          %2394 = vmatpush1.bf16.msra.mxu0 %v1132
          %2395 = vmatprep.subr.bf16.mxu0 0
          %2396 = vmatpush1.bf16.msra.mxu0 0
          %2397 = vmatprep.subr.bf16.mxu0 0
          %2398 = vmatpush1.bf16.msra.mxu0 0
          %2399 = vmatprep.subr.bf16.mxu0 0
          %2400 = vmatpush1.bf16.msra.mxu0 0
          %2401 = vmatprep.subr.bf16.mxu0 0
          %2402 = vmatpush1.bf16.msra.mxu0 0
          %2403 = vmatprep.subr.bf16.mxu0 0
          %2404 = vmatpush1.bf16.msra.mxu0 0
          %2405 = vmatprep.subr.bf16.mxu0 0
          %2406 = vmatpush1.bf16.msra.mxu0 0
          %2407 = vmatprep.subr.bf16.mxu0 0
          %2408 = vmatpush1.bf16.msra.mxu0 0
          %2409 = vmatprep.subr.bf16.mxu0 0
          %2410 = vmatpush1.bf16.msra.mxu0 0
          %2411 = vmatprep.subr.bf16.mxu0 0
          %2412 = vmatpush1.bf16.msra.mxu0 0
          %2413 = vmatprep.subr.bf16.mxu0 0
          %2414 = vmatpush1.bf16.msra.mxu0 0
          %2415 = vmatprep.subr.bf16.mxu0 0
          %2416 = vmatpush1.bf16.msra.mxu0 0
          %2417 = vmatprep.subr.bf16.mxu0 0
          %2418 = vmatpush1.bf16.msra.mxu0 0
          %2419 = vmatprep.subr.bf16.mxu0 0
          %2420 = vmatpush1.bf16.msra.mxu0 0
          %2421 = vmatprep.subr.bf16.mxu0 0
          %2422 = vmatpush1.bf16.msra.mxu0 0
          %2423 = vmatprep.subr.bf16.mxu0 0
          %2424 = vmatpush1.bf16.msra.mxu0 0
          %2425 = vmatprep.mubr.bf16.mxu0 0
          %2426 = vmatmul.mubr.bf16.gmra.mrb[0].mxu0 %v2382
          %v2427 = vpop.f32.mrb[0].mxu0
          %v2428 = vadd.f32 0.0, %v2427
          %v2429 = vpop.f32.mrb[0].mxu0
          %v2430 = vpop.f32.mrb[0].mxu0
          %v2431 = vadd.f32 0.0, %v2430
          %v2432 = vpop.f32.mrb[0].mxu0
          %2433 = vmatprep.mubr.bf16.mxu0 0
          %2434 = vmatmul.mubr.bf16.gmra.mrb[0].mxu0 %v2385
          %v2435 = vpop.f32.mrb[0].mxu0
          %v2436 = vadd.f32 0.0, %v2435
          %v2437 = vpop.f32.mrb[0].mxu0
          %v2438 = vpop.f32.mrb[0].mxu0
          %v2439 = vadd.f32 0.0, %v2438
          %v2440 = vpop.f32.mrb[0].mxu0
          %2441 = vmatprep.mubr.bf16.mxu0 0
          %2442 = vmatmul.mubr.bf16.gmra.mrb[0].mxu0 %v2388
          %v2443 = vpop.f32.mrb[0].mxu0
          %v2444 = vadd.f32 0.0, %v2443
          %v2445 = vpop.f32.mrb[0].mxu0
          %v2446 = vpop.f32.mrb[0].mxu0
          %v2447 = vadd.f32 0.0, %v2446
          %v2448 = vpop.f32.mrb[0].mxu0
          %2449 = vmatprep.mubr.bf16.mxu0 0
          %2450 = vmatmul.mubr.bf16.gmra.mrb[0].mxu0 %v2391
          %v2451 = vpop.f32.mrb[0].mxu0
          %v2452 = vadd.f32 0.0, %v2451
          %v2453 = vpop.f32.mrb[0].mxu0
          %v2454 = vpop.f32.mrb[0].mxu0
          %v2455 = vadd.f32 0.0, %v2454
          %v2456 = vpop.f32.mrb[0].mxu0
          %2457 = vdwg.mxu0
          %v2458 = vmul.f32 %v2428, %v1348
          %v2459 = vmul.f32 %v2431, %v1348
          %v2460 = vmul.f32 %v2436, %v1348
          %v2461 = vmul.f32 %v2439, %v1348
          %v2462 = vmul.f32 %v2444, %v1348
          %v2463 = vmul.f32 %v2447, %v1348
          %v2464 = vmul.f32 %v2452, %v1348
          %v2465 = vmul.f32 %v2455, %v1348
          %v2466 = vadd.f32 %v2458, %v1386
          %v2467 = vadd.f32 %v2459, %v1386
          %v2468 = vadd.f32 %v2460, %v1386
          %v2469 = vadd.f32 %v2461, %v1386
          %v2470 = vadd.f32 %v2462, %v1386
          %v2471 = vadd.f32 %v2463, %v1386
          %v2472 = vadd.f32 %v2464, %v1386
          %v2473 = vadd.f32 %v2465, %v1386
          %v2474 = vmax.f32 %v2466, 0.0
          %v2475 = vmax.f32 %v2467, 0.0
          %v2476 = vmax.f32 %v2468, 0.0
          %v2477 = vmax.f32 %v2469, 0.0
          %v2478 = vmax.f32 %v2470, 0.0
          %v2479 = vmax.f32 %v2471, 0.0
          %v2480 = vmax.f32 %v2472, 0.0
          %v2481 = vmax.f32 %v2473, 0.0
          %v2482 = vpack.c.bf16 %v2475, %v2474
          %v2483 = vpack.c.bf16 %v2477, %v2476
          %v2484 = vpack.c.bf16 %v2479, %v2478
          %v2485 = vpack.c.bf16 %v2481, %v2480
          %v2490 = vunpack.c.l.b16 %v2482
          %v2491 = vunpack.c.h.b16 %v2482
          %v2492 = vunpack.c.l.b16 %v2483
          %v2493 = vunpack.c.h.b16 %v2483
          %v2494 = vunpack.c.l.b16 %v2484
          %v2495 = vunpack.c.h.b16 %v2484
          %v2496 = vunpack.c.l.b16 %v2485
          %v2497 = vunpack.c.h.b16 %v2485
          %v2498 = vpack.c.b16 %v2490, %v2490
          %v2499 = vpack.c.b16 %v2491, %v2491
          %v2500 = vpack.c.b16 %v2492, %v2492
          %v2501 = vpack.c.b16 %v2493, %v2493
          %v2502 = vpack.c.b16 %v2494, %v2494
          %v2503 = vpack.c.b16 %v2495, %v2495
          %v2504 = vpack.c.b16 %v2496, %v2496
          %v2505 = vpack.c.b16 %v2497, %v2497
          %v2507 = vshrl.u32 %v2498, 16
          %v2509 = vrot.slane %v2507, 7
          %v2510 = vshll.u32 %v2498, 16
          %v2512 = vor.u32 %v2509, %v2510
          %v2513 = vrot.slane %v2509, 4
          %v2515 = vshrl.u32 %v2499, 16
          %v2517 = vrot.slane %v2515, 7
          %v2518 = vshll.u32 %v2499, 16
          %v2520 = vor.u32 %v2517, %v2518
          %v2521 = vrot.slane %v2517, 4
          %v2523 = vshrl.u32 %v2500, 16
          %v2525 = vrot.slane %v2523, 7
          %v2526 = vshll.u32 %v2500, 16
          %v2528 = vor.u32 %v2525, %v2526
          %v2529 = vrot.slane %v2525, 4
          %v2531 = vshrl.u32 %v2501, 16
          %v2533 = vrot.slane %v2531, 7
          %v2534 = vshll.u32 %v2501, 16
          %v2536 = vor.u32 %v2533, %v2534
          %v2537 = vrot.slane %v2533, 4
          %v2539 = vshrl.u32 %v2502, 16
          %v2541 = vrot.slane %v2539, 7
          %v2542 = vshll.u32 %v2502, 16
          %v2544 = vor.u32 %v2541, %v2542
          %v2545 = vrot.slane %v2541, 4
          %v2547 = vshrl.u32 %v2503, 16
          %v2549 = vrot.slane %v2547, 7
          %v2550 = vshll.u32 %v2503, 16
          %v2552 = vor.u32 %v2549, %v2550
          %v2553 = vrot.slane %v2549, 4
          %v2555 = vshrl.u32 %v2504, 16
          %v2557 = vrot.slane %v2555, 7
          %v2558 = vshll.u32 %v2504, 16
          %v2560 = vor.u32 %v2557, %v2558
          %v2561 = vrot.slane %v2557, 4
          %v2563 = vshrl.u32 %v2505, 16
          %v2565 = vrot.slane %v2563, 7
          %v2566 = vshll.u32 %v2505, 16
          %v2568 = vor.u32 %v2565, %v2566
          %v2569 = vrot.slane %v2565, 4
          %s2586 = scalar_lea.vmem [#allocation2], 408
          %v2587 = vld [vmem:[%s2586] sm:$0xf]
          %v2588 = vsel %vm1870, %v2512, %v2587
          %2589 = vst [vmem:[%s2586] sm:$0xf] %v2588
          %v2590 = vld [vmem:[%s2586 + $0x4] sm:$0x1]
          %v2591 = vsel %vm608, %v2513, %v2590
          %2592 = vst [vmem:[%s2586 + $0x4] sm:$0x1] %v2591
          %v2593 = vld [vmem:[%s2586 + $0x8] sm:$0xf]
          %v2594 = vsel %vm1870, %v2520, %v2593
          %2595 = vst [vmem:[%s2586 + $0x8] sm:$0xf] %v2594
          %v2596 = vld [vmem:[%s2586 + $0xc] sm:$0x1]
          %v2597 = vsel %vm608, %v2521, %v2596
          %2598 = vst [vmem:[%s2586 + $0xc] sm:$0x1] %v2597
          %v2599 = vld [vmem:[%s2586 + $0x10] sm:$0xf]
          %v2600 = vsel %vm1870, %v2528, %v2599
          %2601 = vst [vmem:[%s2586 + $0x10] sm:$0xf] %v2600
          %v2602 = vld [vmem:[%s2586 + $0x14] sm:$0x1]
          %v2603 = vsel %vm608, %v2529, %v2602
          %2604 = vst [vmem:[%s2586 + $0x14] sm:$0x1] %v2603
          %v2605 = vld [vmem:[%s2586 + $0x18] sm:$0xf]
          %v2606 = vsel %vm1870, %v2536, %v2605
          %2607 = vst [vmem:[%s2586 + $0x18] sm:$0xf] %v2606
          %v2608 = vld [vmem:[%s2586 + $0x1c] sm:$0x1]
          %v2609 = vsel %vm608, %v2537, %v2608
          %2610 = vst [vmem:[%s2586 + $0x1c] sm:$0x1] %v2609
          %v2611 = vld [vmem:[%s2586 + $0x20] sm:$0xf]
          %v2612 = vsel %vm1870, %v2544, %v2611
          %2613 = vst [vmem:[%s2586 + $0x20] sm:$0xf] %v2612
          %v2614 = vld [vmem:[%s2586 + $0x24] sm:$0x1]
          %v2615 = vsel %vm608, %v2545, %v2614
          %2616 = vst [vmem:[%s2586 + $0x24] sm:$0x1] %v2615
          %v2617 = vld [vmem:[%s2586 + $0x28] sm:$0xf]
          %v2618 = vsel %vm1870, %v2552, %v2617
          %2619 = vst [vmem:[%s2586 + $0x28] sm:$0xf] %v2618
          %v2620 = vld [vmem:[%s2586 + $0x2c] sm:$0x1]
          %v2621 = vsel %vm608, %v2553, %v2620
          %2622 = vst [vmem:[%s2586 + $0x2c] sm:$0x1] %v2621
          %v2623 = vld [vmem:[%s2586 + $0x30] sm:$0xf]
          %v2624 = vsel %vm1870, %v2560, %v2623
          %2625 = vst [vmem:[%s2586 + $0x30] sm:$0xf] %v2624
          %v2626 = vld [vmem:[%s2586 + $0x34] sm:$0x1]
          %v2627 = vsel %vm608, %v2561, %v2626
          %2628 = vst [vmem:[%s2586 + $0x34] sm:$0x1] %v2627
          %v2629 = vld [vmem:[%s2586 + $0x38] sm:$0xf]
          %v2630 = vsel %vm1870, %v2568, %v2629
          %2631 = vst [vmem:[%s2586 + $0x38] sm:$0xf] %v2630
          %v2632 = vld [vmem:[%s2586 + $0x3c] sm:$0x1]
          %v2633 = vsel %vm608, %v2569, %v2632
          %2634 = vst [vmem:[%s2586 + $0x3c] sm:$0x1] %v2633
        $region80: #{fire_forward.1} parent=67 // pred_fallthru
          _
        %v2635 = vld [vmem:[#allocation2] sm:$0xf]
        %v2636 = vld [vmem:[#allocation2 + $0x4] sm:$0x1]
        %v2637 = vld [vmem:[#allocation2 + $0x8] sm:$0xf]
        %v2638 = vld [vmem:[#allocation2 + $0xc] sm:$0x1]
        %v2639 = vld [vmem:[#allocation2 + $0x10] sm:$0xf]
        %v2640 = vld [vmem:[#allocation2 + $0x14] sm:$0x1]
        %v2641 = vld [vmem:[#allocation2 + $0x18] sm:$0xf]
        %v2642 = vld [vmem:[#allocation2 + $0x1c] sm:$0x1]
        %v2643 = vld [vmem:[#allocation2 + $0x20] sm:$0xf]
        %v2644 = vld [vmem:[#allocation2 + $0x24] sm:$0x1]
        %v2645 = vld [vmem:[#allocation2 + $0x28] sm:$0xf]
        %v2646 = vld [vmem:[#allocation2 + $0x2c] sm:$0x1]
        %v2647 = vld [vmem:[#allocation2 + $0x30] sm:$0xf]
        %v2648 = vld [vmem:[#allocation2 + $0x34] sm:$0x1]
        %v2649 = vld [vmem:[#allocation2 + $0x38] sm:$0xf]
        %v2650 = vld [vmem:[#allocation2 + $0x3c] sm:$0x1]
        %v2651 = vld [vmem:[#allocation2 + $0x50] sm:$0xf]
        %v2652 = vld [vmem:[#allocation2 + $0x54] sm:$0x1]
        %v2653 = vld [vmem:[#allocation2 + $0x58] sm:$0xf]
        %v2654 = vld [vmem:[#allocation2 + $0x5c] sm:$0x1]
        %v2655 = vld [vmem:[#allocation2 + $0x60] sm:$0xf]
        %v2656 = vld [vmem:[#allocation2 + $0x64] sm:$0x1]
        %v2657 = vld [vmem:[#allocation2 + $0x68] sm:$0xf]
        %v2658 = vld [vmem:[#allocation2 + $0x6c] sm:$0x1]
        %v2659 = vld [vmem:[#allocation2 + $0x70] sm:$0xf]
        %v2660 = vld [vmem:[#allocation2 + $0x74] sm:$0x1]
        %v2661 = vld [vmem:[#allocation2 + $0x78] sm:$0xf]
        %v2662 = vld [vmem:[#allocation2 + $0x7c] sm:$0x1]
        %v2663 = vld [vmem:[#allocation2 + $0x80] sm:$0xf]
        %v2664 = vld [vmem:[#allocation2 + $0x84] sm:$0x1]
        %v2665 = vld [vmem:[#allocation2 + $0x88] sm:$0xf]
        %v2666 = vld [vmem:[#allocation2 + $0x8c] sm:$0x1]
        %v2667 = vld [vmem:[#allocation2 + $0xa0] sm:$0xf]
        %v2668 = vld [vmem:[#allocation2 + $0xa4] sm:$0x1]
        %v2669 = vld [vmem:[#allocation2 + $0xa8] sm:$0xf]
        %v2670 = vld [vmem:[#allocation2 + $0xac] sm:$0x1]
        %v2671 = vld [vmem:[#allocation2 + $0xb0] sm:$0xf]
        %v2672 = vld [vmem:[#allocation2 + $0xb4] sm:$0x1]
        %v2673 = vld [vmem:[#allocation2 + $0xb8] sm:$0xf]
        %v2674 = vld [vmem:[#allocation2 + $0xbc] sm:$0x1]
        %v2675 = vld [vmem:[#allocation2 + $0xc0] sm:$0xf]
        %v2676 = vld [vmem:[#allocation2 + $0xc4] sm:$0x1]
        %v2677 = vld [vmem:[#allocation2 + $0xc8] sm:$0xf]
        %v2678 = vld [vmem:[#allocation2 + $0xcc] sm:$0x1]
        %v2679 = vld [vmem:[#allocation2 + $0xd0] sm:$0xf]
        %v2680 = vld [vmem:[#allocation2 + $0xd4] sm:$0x1]
        %v2681 = vld [vmem:[#allocation2 + $0xd8] sm:$0xf]
        %v2682 = vld [vmem:[#allocation2 + $0xdc] sm:$0x1]
        %v2683 = vld [vmem:[#allocation2 + $0xf0] sm:$0xf]
        %v2684 = vld [vmem:[#allocation2 + $0xf4] sm:$0x1]
        %v2685 = vld [vmem:[#allocation2 + $0xf8] sm:$0xf]
        %v2686 = vld [vmem:[#allocation2 + $0xfc] sm:$0x1]
        %v2687 = vld [vmem:[#allocation2 + $0x100] sm:$0xf]
        %v2688 = vld [vmem:[#allocation2 + $0x104] sm:$0x1]
        %v2689 = vld [vmem:[#allocation2 + $0x108] sm:$0xf]
        %v2690 = vld [vmem:[#allocation2 + $0x10c] sm:$0x1]
        %v2691 = vld [vmem:[#allocation2 + $0x110] sm:$0xf]
        %v2692 = vld [vmem:[#allocation2 + $0x114] sm:$0x1]
        %v2693 = vld [vmem:[#allocation2 + $0x118] sm:$0xf]
        %v2694 = vld [vmem:[#allocation2 + $0x11c] sm:$0x1]
        %v2695 = vld [vmem:[#allocation2 + $0x120] sm:$0xf]
        %v2696 = vld [vmem:[#allocation2 + $0x124] sm:$0x1]
        %v2697 = vld [vmem:[#allocation2 + $0x128] sm:$0xf]
        %v2698 = vld [vmem:[#allocation2 + $0x12c] sm:$0x1]
        %v2763 = vunpack.c.l.b16 %v2635
        %v2764 = vunpack.c.l.b16 %v2636
        %v2765 = vunpack.c.l.b16 %v2637
        %v2766 = vunpack.c.l.b16 %v2638
        %v2767 = vunpack.c.l.b16 %v2639
        %v2768 = vunpack.c.l.b16 %v2640
        %v2769 = vunpack.c.l.b16 %v2641
        %v2770 = vunpack.c.l.b16 %v2642
        %v2771 = vunpack.c.l.b16 %v2643
        %v2772 = vunpack.c.l.b16 %v2644
        %v2773 = vunpack.c.l.b16 %v2645
        %v2774 = vunpack.c.l.b16 %v2646
        %v2775 = vunpack.c.l.b16 %v2647
        %v2776 = vunpack.c.l.b16 %v2648
        %v2777 = vunpack.c.l.b16 %v2649
        %v2778 = vunpack.c.l.b16 %v2650
        %v2779 = vunpack.c.l.b16 %v2651
        %v2780 = vunpack.c.l.b16 %v2652
        %v2781 = vunpack.c.l.b16 %v2653
        %v2782 = vunpack.c.l.b16 %v2654
        %v2783 = vunpack.c.l.b16 %v2655
        %v2784 = vunpack.c.l.b16 %v2656
        %v2785 = vunpack.c.l.b16 %v2657
        %v2786 = vunpack.c.l.b16 %v2658
        %v2787 = vunpack.c.l.b16 %v2659
        %v2788 = vunpack.c.l.b16 %v2660
        %v2789 = vunpack.c.l.b16 %v2661
        %v2790 = vunpack.c.l.b16 %v2662
        %v2791 = vunpack.c.l.b16 %v2663
        %v2792 = vunpack.c.l.b16 %v2664
        %v2793 = vunpack.c.l.b16 %v2665
        %v2794 = vunpack.c.l.b16 %v2666
        %v2795 = vunpack.c.l.b16 %v2667
        %v2796 = vunpack.c.l.b16 %v2668
        %v2797 = vunpack.c.l.b16 %v2669
        %v2798 = vunpack.c.l.b16 %v2670
        %v2799 = vunpack.c.l.b16 %v2671
        %v2800 = vunpack.c.l.b16 %v2672
        %v2801 = vunpack.c.l.b16 %v2673
        %v2802 = vunpack.c.l.b16 %v2674
        %v2803 = vunpack.c.l.b16 %v2675
        %v2804 = vunpack.c.l.b16 %v2676
        %v2805 = vunpack.c.l.b16 %v2677
        %v2806 = vunpack.c.l.b16 %v2678
        %v2807 = vunpack.c.l.b16 %v2679
        %v2808 = vunpack.c.l.b16 %v2680
        %v2809 = vunpack.c.l.b16 %v2681
        %v2810 = vunpack.c.l.b16 %v2682
        %v2811 = vunpack.c.l.b16 %v2683
        %v2812 = vunpack.c.l.b16 %v2684
        %v2813 = vunpack.c.l.b16 %v2685
        %v2814 = vunpack.c.l.b16 %v2686
        %v2815 = vunpack.c.l.b16 %v2687
        %v2816 = vunpack.c.l.b16 %v2688
        %v2817 = vunpack.c.l.b16 %v2689
        %v2818 = vunpack.c.l.b16 %v2690
        %v2819 = vunpack.c.l.b16 %v2691
        %v2820 = vunpack.c.l.b16 %v2692
        %v2821 = vunpack.c.l.b16 %v2693
        %v2822 = vunpack.c.l.b16 %v2694
        %v2823 = vunpack.c.l.b16 %v2695
        %v2824 = vunpack.c.l.b16 %v2696
        %v2825 = vunpack.c.l.b16 %v2697
        %v2826 = vunpack.c.l.b16 %v2698
        %v2827 = vpack.c.b16 %v2764, %v2763
        %v2828 = vpack.c.b16 %v2766, %v2765
        %v2829 = vpack.c.b16 %v2768, %v2767
        %v2830 = vpack.c.b16 %v2770, %v2769
        %v2831 = vpack.c.b16 %v2772, %v2771
        %v2832 = vpack.c.b16 %v2774, %v2773
        %v2833 = vpack.c.b16 %v2776, %v2775
        %v2834 = vpack.c.b16 %v2778, %v2777
        %v2835 = vpack.c.b16 %v2780, %v2779
        %v2836 = vpack.c.b16 %v2782, %v2781
        %v2837 = vpack.c.b16 %v2784, %v2783
        %v2838 = vpack.c.b16 %v2786, %v2785
        %v2839 = vpack.c.b16 %v2788, %v2787
        %v2840 = vpack.c.b16 %v2790, %v2789
        %v2841 = vpack.c.b16 %v2792, %v2791
        %v2842 = vpack.c.b16 %v2794, %v2793
        %v2843 = vpack.c.b16 %v2796, %v2795
        %v2844 = vpack.c.b16 %v2798, %v2797
        %v2845 = vpack.c.b16 %v2800, %v2799
        %v2846 = vpack.c.b16 %v2802, %v2801
        %v2847 = vpack.c.b16 %v2804, %v2803
        %v2848 = vpack.c.b16 %v2806, %v2805
        %v2849 = vpack.c.b16 %v2808, %v2807
        %v2850 = vpack.c.b16 %v2810, %v2809
        %v2851 = vpack.c.b16 %v2812, %v2811
        %v2852 = vpack.c.b16 %v2814, %v2813
        %v2853 = vpack.c.b16 %v2816, %v2815
        %v2854 = vpack.c.b16 %v2818, %v2817
        %v2855 = vpack.c.b16 %v2820, %v2819
        %v2856 = vpack.c.b16 %v2822, %v2821
        %v2857 = vpack.c.b16 %v2824, %v2823
        %v2858 = vpack.c.b16 %v2826, %v2825
        %v2860 = vshrl.u32 %v2827, 16
        %v2862 = vshll.u32 %v2827, 16
        %v2864 = vrot.slane %v2862, 1
        %v2865 = vor.u32 %v2860, %v2864
        %v2867 = vshrl.u32 %v2828, 16
        %v2869 = vshll.u32 %v2828, 16
        %v2871 = vrot.slane %v2869, 1
        %v2872 = vor.u32 %v2867, %v2871
        %v2874 = vshrl.u32 %v2829, 16
        %v2876 = vshll.u32 %v2829, 16
        %v2878 = vrot.slane %v2876, 1
        %v2879 = vor.u32 %v2874, %v2878
        %v2881 = vshrl.u32 %v2830, 16
        %v2883 = vshll.u32 %v2830, 16
        %v2885 = vrot.slane %v2883, 1
        %v2886 = vor.u32 %v2881, %v2885
        %v2888 = vshrl.u32 %v2831, 16
        %v2890 = vshll.u32 %v2831, 16
        %v2892 = vrot.slane %v2890, 1
        %v2893 = vor.u32 %v2888, %v2892
        %v2895 = vshrl.u32 %v2832, 16
        %v2897 = vshll.u32 %v2832, 16
        %v2899 = vrot.slane %v2897, 1
        %v2900 = vor.u32 %v2895, %v2899
        %v2902 = vshrl.u32 %v2833, 16
        %v2904 = vshll.u32 %v2833, 16
        %v2906 = vrot.slane %v2904, 1
        %v2907 = vor.u32 %v2902, %v2906
        %v2909 = vshrl.u32 %v2834, 16
        %v2911 = vshll.u32 %v2834, 16
        %v2913 = vrot.slane %v2911, 1
        %v2914 = vor.u32 %v2909, %v2913
        %v2916 = vshrl.u32 %v2835, 16
        %v2918 = vshll.u32 %v2835, 16
        %v2920 = vrot.slane %v2918, 1
        %v2921 = vor.u32 %v2916, %v2920
        %v2923 = vshrl.u32 %v2836, 16
        %v2925 = vshll.u32 %v2836, 16
        %v2927 = vrot.slane %v2925, 1
        %v2928 = vor.u32 %v2923, %v2927
        %v2930 = vshrl.u32 %v2837, 16
        %v2932 = vshll.u32 %v2837, 16
        %v2934 = vrot.slane %v2932, 1
        %v2935 = vor.u32 %v2930, %v2934
        %v2937 = vshrl.u32 %v2838, 16
        %v2939 = vshll.u32 %v2838, 16
        %v2941 = vrot.slane %v2939, 1
        %v2942 = vor.u32 %v2937, %v2941
        %v2944 = vshrl.u32 %v2839, 16
        %v2946 = vshll.u32 %v2839, 16
        %v2948 = vrot.slane %v2946, 1
        %v2949 = vor.u32 %v2944, %v2948
        %v2951 = vshrl.u32 %v2840, 16
        %v2953 = vshll.u32 %v2840, 16
        %v2955 = vrot.slane %v2953, 1
        %v2956 = vor.u32 %v2951, %v2955
        %v2958 = vshrl.u32 %v2841, 16
        %v2960 = vshll.u32 %v2841, 16
        %v2962 = vrot.slane %v2960, 1
        %v2963 = vor.u32 %v2958, %v2962
        %v2965 = vshrl.u32 %v2842, 16
        %v2967 = vshll.u32 %v2842, 16
        %v2969 = vrot.slane %v2967, 1
        %v2970 = vor.u32 %v2965, %v2969
        %v2972 = vshrl.u32 %v2843, 16
        %v2974 = vshll.u32 %v2843, 16
        %v2976 = vrot.slane %v2974, 1
        %v2977 = vor.u32 %v2972, %v2976
        %v2979 = vshrl.u32 %v2844, 16
        %v2981 = vshll.u32 %v2844, 16
        %v2983 = vrot.slane %v2981, 1
        %v2984 = vor.u32 %v2979, %v2983
        %v2986 = vshrl.u32 %v2845, 16
        %v2988 = vshll.u32 %v2845, 16
        %v2990 = vrot.slane %v2988, 1
        %v2991 = vor.u32 %v2986, %v2990
        %v2993 = vshrl.u32 %v2846, 16
        %v2995 = vshll.u32 %v2846, 16
        %v2997 = vrot.slane %v2995, 1
        %v2998 = vor.u32 %v2993, %v2997
        %v3000 = vshrl.u32 %v2847, 16
        %v3002 = vshll.u32 %v2847, 16
        %v3004 = vrot.slane %v3002, 1
        %v3005 = vor.u32 %v3000, %v3004
        %v3007 = vshrl.u32 %v2848, 16
        %v3009 = vshll.u32 %v2848, 16
        %v3011 = vrot.slane %v3009, 1
        %v3012 = vor.u32 %v3007, %v3011
        %v3014 = vshrl.u32 %v2849, 16
        %v3016 = vshll.u32 %v2849, 16
        %v3018 = vrot.slane %v3016, 1
        %v3019 = vor.u32 %v3014, %v3018
        %v3021 = vshrl.u32 %v2850, 16
        %v3023 = vshll.u32 %v2850, 16
        %v3025 = vrot.slane %v3023, 1
        %v3026 = vor.u32 %v3021, %v3025
        %v3028 = vshrl.u32 %v2851, 16
        %v3030 = vshll.u32 %v2851, 16
        %v3032 = vrot.slane %v3030, 1
        %v3033 = vor.u32 %v3028, %v3032
        %v3035 = vshrl.u32 %v2852, 16
        %v3037 = vshll.u32 %v2852, 16
        %v3039 = vrot.slane %v3037, 1
        %v3040 = vor.u32 %v3035, %v3039
        %v3042 = vshrl.u32 %v2853, 16
        %v3044 = vshll.u32 %v2853, 16
        %v3046 = vrot.slane %v3044, 1
        %v3047 = vor.u32 %v3042, %v3046
        %v3049 = vshrl.u32 %v2854, 16
        %v3051 = vshll.u32 %v2854, 16
        %v3053 = vrot.slane %v3051, 1
        %v3054 = vor.u32 %v3049, %v3053
        %v3056 = vshrl.u32 %v2855, 16
        %v3058 = vshll.u32 %v2855, 16
        %v3060 = vrot.slane %v3058, 1
        %v3061 = vor.u32 %v3056, %v3060
        %v3063 = vshrl.u32 %v2856, 16
        %v3065 = vshll.u32 %v2856, 16
        %v3067 = vrot.slane %v3065, 1
        %v3068 = vor.u32 %v3063, %v3067
        %v3070 = vshrl.u32 %v2857, 16
        %v3072 = vshll.u32 %v2857, 16
        %v3074 = vrot.slane %v3072, 1
        %v3075 = vor.u32 %v3070, %v3074
        %v3077 = vshrl.u32 %v2858, 16
        %v3079 = vshll.u32 %v2858, 16
        %v3081 = vrot.slane %v3079, 1
        %v3082 = vor.u32 %v3077, %v3081
        %3083 = vrot.lane.b32.xlu0 %v2865, 8
        %v3084 = vpop.permute.xlu0 %3083
        %3085 = vrot.lane.b32.xlu0 %v2872, 8
        %v3086 = vpop.permute.xlu0 %3085
        %3087 = vrot.lane.b32.xlu0 %v2879, 8
        %v3088 = vpop.permute.xlu0 %3087
        %3089 = vrot.lane.b32.xlu0 %v2886, 8
        %v3090 = vpop.permute.xlu0 %3089
        %3091 = vrot.lane.b32.xlu0 %v2893, 8
        %v3092 = vpop.permute.xlu0 %3091
        %3093 = vrot.lane.b32.xlu0 %v2900, 8
        %v3094 = vpop.permute.xlu0 %3093
        %3095 = vrot.lane.b32.xlu0 %v2907, 8
        %v3096 = vpop.permute.xlu0 %3095
        %3097 = vrot.lane.b32.xlu0 %v2914, 8
        %v3098 = vpop.permute.xlu0 %3097
        %3099 = vrot.lane.b32.xlu0 %v2921, 8
        %v3100 = vpop.permute.xlu0 %3099
        %3101 = vrot.lane.b32.xlu0 %v2928, 8
        %v3102 = vpop.permute.xlu0 %3101
        %3103 = vrot.lane.b32.xlu0 %v2935, 8
        %v3104 = vpop.permute.xlu0 %3103
        %3105 = vrot.lane.b32.xlu0 %v2942, 8
        %v3106 = vpop.permute.xlu0 %3105
        %3107 = vrot.lane.b32.xlu0 %v2949, 8
        %v3108 = vpop.permute.xlu0 %3107
        %3109 = vrot.lane.b32.xlu0 %v2956, 8
        %v3110 = vpop.permute.xlu0 %3109
        %3111 = vrot.lane.b32.xlu0 %v2963, 8
        %v3112 = vpop.permute.xlu0 %3111
        %3113 = vrot.lane.b32.xlu0 %v2970, 8
        %v3114 = vpop.permute.xlu0 %3113
        %3115 = vrot.lane.b32.xlu0 %v2977, 8
        %v3116 = vpop.permute.xlu0 %3115
        %3117 = vrot.lane.b32.xlu0 %v2984, 8
        %v3118 = vpop.permute.xlu0 %3117
        %3119 = vrot.lane.b32.xlu0 %v2991, 8
        %v3120 = vpop.permute.xlu0 %3119
        %3121 = vrot.lane.b32.xlu0 %v2998, 8
        %v3122 = vpop.permute.xlu0 %3121
        %3123 = vrot.lane.b32.xlu0 %v3005, 8
        %v3124 = vpop.permute.xlu0 %3123
        %3125 = vrot.lane.b32.xlu0 %v3012, 8
        %v3126 = vpop.permute.xlu0 %3125
        %3127 = vrot.lane.b32.xlu0 %v3019, 8
        %v3128 = vpop.permute.xlu0 %3127
        %3129 = vrot.lane.b32.xlu0 %v3026, 8
        %v3130 = vpop.permute.xlu0 %3129
        %3131 = vrot.lane.b32.xlu0 %v3033, 8
        %v3132 = vpop.permute.xlu0 %3131
        %3133 = vrot.lane.b32.xlu0 %v3040, 8
        %v3134 = vpop.permute.xlu0 %3133
        %3135 = vrot.lane.b32.xlu0 %v3047, 8
        %v3136 = vpop.permute.xlu0 %3135
        %3137 = vrot.lane.b32.xlu0 %v3054, 8
        %v3138 = vpop.permute.xlu0 %3137
        %3139 = vrot.lane.b32.xlu0 %v3061, 8
        %v3140 = vpop.permute.xlu0 %3139
        %3141 = vrot.lane.b32.xlu0 %v3068, 8
        %v3142 = vpop.permute.xlu0 %3141
        %3143 = vrot.lane.b32.xlu0 %v3075, 8
        %v3144 = vpop.permute.xlu0 %3143
        %3145 = vrot.lane.b32.xlu0 %v3082, 8
        %v3146 = vpop.permute.xlu0 %3145
        %v3147 = vrot.slane %v2827, 1
        %v3148 = vrot.slane %v2828, 1
        %v3149 = vrot.slane %v2829, 1
        %v3150 = vrot.slane %v2830, 1
        %v3151 = vrot.slane %v2831, 1
        %v3152 = vrot.slane %v2832, 1
        %v3153 = vrot.slane %v2833, 1
        %v3154 = vrot.slane %v2834, 1
        %v3155 = vrot.slane %v2835, 1
        %v3156 = vrot.slane %v2836, 1
        %v3157 = vrot.slane %v2837, 1
        %v3158 = vrot.slane %v2838, 1
        %v3159 = vrot.slane %v2839, 1
        %v3160 = vrot.slane %v2840, 1
        %v3161 = vrot.slane %v2841, 1
        %v3162 = vrot.slane %v2842, 1
        %v3163 = vrot.slane %v2843, 1
        %v3164 = vrot.slane %v2844, 1
        %v3165 = vrot.slane %v2845, 1
        %v3166 = vrot.slane %v2846, 1
        %v3167 = vrot.slane %v2847, 1
        %v3168 = vrot.slane %v2848, 1
        %v3169 = vrot.slane %v2849, 1
        %v3170 = vrot.slane %v2850, 1
        %v3171 = vrot.slane %v2851, 1
        %v3172 = vrot.slane %v2852, 1
        %v3173 = vrot.slane %v2853, 1
        %v3174 = vrot.slane %v2854, 1
        %v3175 = vrot.slane %v2855, 1
        %v3176 = vrot.slane %v2856, 1
        %v3177 = vrot.slane %v2857, 1
        %v3178 = vrot.slane %v2858, 1
        %3179 = vrot.lane.b32.xlu0 %v3147, 16
        %v3180 = vpop.permute.xlu0 %3179
        %3181 = vrot.lane.b32.xlu0 %v3148, 16
        %v3182 = vpop.permute.xlu0 %3181
        %3183 = vrot.lane.b32.xlu0 %v3149, 16
        %v3184 = vpop.permute.xlu0 %3183
        %3185 = vrot.lane.b32.xlu0 %v3150, 16
        %v3186 = vpop.permute.xlu0 %3185
        %3187 = vrot.lane.b32.xlu0 %v3151, 16
        %v3188 = vpop.permute.xlu0 %3187
        %3189 = vrot.lane.b32.xlu0 %v3152, 16
        %v3190 = vpop.permute.xlu0 %3189
        %3191 = vrot.lane.b32.xlu0 %v3153, 16
        %v3192 = vpop.permute.xlu0 %3191
        %3193 = vrot.lane.b32.xlu0 %v3154, 16
        %v3194 = vpop.permute.xlu0 %3193
        %3195 = vrot.lane.b32.xlu0 %v3155, 16
        %v3196 = vpop.permute.xlu0 %3195
        %3197 = vrot.lane.b32.xlu0 %v3156, 16
        %v3198 = vpop.permute.xlu0 %3197
        %3199 = vrot.lane.b32.xlu0 %v3157, 16
        %v3200 = vpop.permute.xlu0 %3199
        %3201 = vrot.lane.b32.xlu0 %v3158, 16
        %v3202 = vpop.permute.xlu0 %3201
        %3203 = vrot.lane.b32.xlu0 %v3159, 16
        %v3204 = vpop.permute.xlu0 %3203
        %3205 = vrot.lane.b32.xlu0 %v3160, 16
        %v3206 = vpop.permute.xlu0 %3205
        %3207 = vrot.lane.b32.xlu0 %v3161, 16
        %v3208 = vpop.permute.xlu0 %3207
        %3209 = vrot.lane.b32.xlu0 %v3162, 16
        %v3210 = vpop.permute.xlu0 %3209
        %3211 = vrot.lane.b32.xlu0 %v3163, 16
        %v3212 = vpop.permute.xlu0 %3211
        %3213 = vrot.lane.b32.xlu0 %v3164, 16
        %v3214 = vpop.permute.xlu0 %3213
        %3215 = vrot.lane.b32.xlu0 %v3165, 16
        %v3216 = vpop.permute.xlu0 %3215
        %3217 = vrot.lane.b32.xlu0 %v3166, 16
        %v3218 = vpop.permute.xlu0 %3217
        %3219 = vrot.lane.b32.xlu0 %v3167, 16
        %v3220 = vpop.permute.xlu0 %3219
        %3221 = vrot.lane.b32.xlu0 %v3168, 16
        %v3222 = vpop.permute.xlu0 %3221
        %3223 = vrot.lane.b32.xlu0 %v3169, 16
        %v3224 = vpop.permute.xlu0 %3223
        %3225 = vrot.lane.b32.xlu0 %v3170, 16
        %v3226 = vpop.permute.xlu0 %3225
        %3227 = vrot.lane.b32.xlu0 %v3171, 16
        %v3228 = vpop.permute.xlu0 %3227
        %3229 = vrot.lane.b32.xlu0 %v3172, 16
        %v3230 = vpop.permute.xlu0 %3229
        %3231 = vrot.lane.b32.xlu0 %v3173, 16
        %v3232 = vpop.permute.xlu0 %3231
        %3233 = vrot.lane.b32.xlu0 %v3174, 16
        %v3234 = vpop.permute.xlu0 %3233
        %3235 = vrot.lane.b32.xlu0 %v3175, 16
        %v3236 = vpop.permute.xlu0 %3235
        %3237 = vrot.lane.b32.xlu0 %v3176, 16
        %v3238 = vpop.permute.xlu0 %3237
        %3239 = vrot.lane.b32.xlu0 %v3177, 16
        %v3240 = vpop.permute.xlu0 %3239
        %3241 = vrot.lane.b32.xlu0 %v3178, 16
        %v3242 = vpop.permute.xlu0 %3241
        %vm3243 = vcmask 64512
        %v3246 = vsel %vm3243, %v2635, %v3084
        %v3249 = vsel %vm3243, %v2637, %v3086
        %v3252 = vsel %vm3243, %v2639, %v3088
        %v3255 = vsel %vm3243, %v2641, %v3090
        %v3258 = vsel %vm3243, %v2643, %v3092
        %v3261 = vsel %vm3243, %v2645, %v3094
        %v3264 = vsel %vm3243, %v2647, %v3096
        %v3267 = vsel %vm3243, %v2649, %v3098
        %v3270 = vsel %vm3243, %v2651, %v3100
        %v3273 = vsel %vm3243, %v2653, %v3102
        %v3276 = vsel %vm3243, %v2655, %v3104
        %v3279 = vsel %vm3243, %v2657, %v3106
        %v3282 = vsel %vm3243, %v2659, %v3108
        %v3285 = vsel %vm3243, %v2661, %v3110
        %v3288 = vsel %vm3243, %v2663, %v3112
        %v3291 = vsel %vm3243, %v2665, %v3114
        %v3294 = vsel %vm3243, %v2667, %v3116
        %v3297 = vsel %vm3243, %v2669, %v3118
        %v3300 = vsel %vm3243, %v2671, %v3120
        %v3303 = vsel %vm3243, %v2673, %v3122
        %v3306 = vsel %vm3243, %v2675, %v3124
        %v3309 = vsel %vm3243, %v2677, %v3126
        %v3312 = vsel %vm3243, %v2679, %v3128
        %v3315 = vsel %vm3243, %v2681, %v3130
        %v3318 = vsel %vm3243, %v2683, %v3132
        %v3321 = vsel %vm3243, %v2685, %v3134
        %v3324 = vsel %vm3243, %v2687, %v3136
        %v3327 = vsel %vm3243, %v2689, %v3138
        %v3330 = vsel %vm3243, %v2691, %v3140
        %v3333 = vsel %vm3243, %v2693, %v3142
        %v3336 = vsel %vm3243, %v2695, %v3144
        %v3339 = vsel %vm3243, %v2697, %v3146
        %v3341 = vsel %vm1134, %v3246, %v3180
        %v3343 = vsel %vm1134, %v3249, %v3182
        %v3345 = vsel %vm1134, %v3252, %v3184
        %v3347 = vsel %vm1134, %v3255, %v3186
        %v3349 = vsel %vm1134, %v3258, %v3188
        %v3351 = vsel %vm1134, %v3261, %v3190
        %v3353 = vsel %vm1134, %v3264, %v3192
        %v3355 = vsel %vm1134, %v3267, %v3194
        %v3357 = vsel %vm1134, %v3270, %v3196
        %v3359 = vsel %vm1134, %v3273, %v3198
        %v3361 = vsel %vm1134, %v3276, %v3200
        %v3363 = vsel %vm1134, %v3279, %v3202
        %v3365 = vsel %vm1134, %v3282, %v3204
        %v3367 = vsel %vm1134, %v3285, %v3206
        %v3369 = vsel %vm1134, %v3288, %v3208
        %v3371 = vsel %vm1134, %v3291, %v3210
        %v3373 = vsel %vm1134, %v3294, %v3212
        %v3375 = vsel %vm1134, %v3297, %v3214
        %v3377 = vsel %vm1134, %v3300, %v3216
        %v3379 = vsel %vm1134, %v3303, %v3218
        %v3381 = vsel %vm1134, %v3306, %v3220
        %v3383 = vsel %vm1134, %v3309, %v3222
        %v3385 = vsel %vm1134, %v3312, %v3224
        %v3387 = vsel %vm1134, %v3315, %v3226
        %v3389 = vsel %vm1134, %v3318, %v3228
        %v3391 = vsel %vm1134, %v3321, %v3230
        %v3393 = vsel %vm1134, %v3324, %v3232
        %v3395 = vsel %vm1134, %v3327, %v3234
        %v3397 = vsel %vm1134, %v3330, %v3236
        %v3399 = vsel %vm1134, %v3333, %v3238
        %v3401 = vsel %vm1134, %v3336, %v3240
        %v3403 = vsel %vm1134, %v3339, %v3242
        %v3404 = vld [vmem:[%s5] sm:$0xf]
        %v3405 = vld [vmem:[%s5 + $0x4] sm:$0xf]
        %v3406 = vld [vmem:[%s5 + $0x8] sm:$0xf]
        %s3407 = scalar_lea.vmem [#allocation2], 8
        %v3408 = vld [vmem:[%s3407] sm:$0xf]
        %v3409 = vld [vmem:[%s3407 + $0x4] sm:$0x1]
        %v3410 = vld [vmem:[%s3407 + $0x8] sm:$0xf]
        %v3411 = vld [vmem:[%s3407 + $0xc] sm:$0x1]
        %v3412 = vld [vmem:[%s3407 + $0x10] sm:$0xf]
        %v3413 = vld [vmem:[%s3407 + $0x14] sm:$0x1]
        %v3414 = vld [vmem:[%s3407 + $0x18] sm:$0xf]
        %v3415 = vld [vmem:[%s3407 + $0x1c] sm:$0x1]
        %v3416 = vld [vmem:[%s3407 + $0x20] sm:$0xf]
        %v3417 = vld [vmem:[%s3407 + $0x24] sm:$0x1]
        %v3418 = vld [vmem:[%s3407 + $0x28] sm:$0xf]
        %v3419 = vld [vmem:[%s3407 + $0x2c] sm:$0x1]
        %v3420 = vld [vmem:[%s3407 + $0x30] sm:$0xf]
        %v3421 = vld [vmem:[%s3407 + $0x34] sm:$0x1]
        %v3422 = vld [vmem:[%s3407 + $0x38] sm:$0xf]
        %v3423 = vld [vmem:[%s3407 + $0x3c] sm:$0x1]
        %v3424 = vld [vmem:[%s3407 + $0x50] sm:$0xf]
        %v3425 = vld [vmem:[%s3407 + $0x54] sm:$0x1]
        %v3426 = vld [vmem:[%s3407 + $0x58] sm:$0xf]
        %v3427 = vld [vmem:[%s3407 + $0x5c] sm:$0x1]
        %v3428 = vld [vmem:[%s3407 + $0x60] sm:$0xf]
        %v3429 = vld [vmem:[%s3407 + $0x64] sm:$0x1]
        %v3430 = vld [vmem:[%s3407 + $0x68] sm:$0xf]
        %v3431 = vld [vmem:[%s3407 + $0x6c] sm:$0x1]
        %v3432 = vld [vmem:[%s3407 + $0x70] sm:$0xf]
        %v3433 = vld [vmem:[%s3407 + $0x74] sm:$0x1]
        %v3434 = vld [vmem:[%s3407 + $0x78] sm:$0xf]
        %v3435 = vld [vmem:[%s3407 + $0x7c] sm:$0x1]
        %v3436 = vld [vmem:[%s3407 + $0x80] sm:$0xf]
        %v3437 = vld [vmem:[%s3407 + $0x84] sm:$0x1]
        %v3438 = vld [vmem:[%s3407 + $0x88] sm:$0xf]
        %v3439 = vld [vmem:[%s3407 + $0x8c] sm:$0x1]
        %v3440 = vld [vmem:[%s3407 + $0xa0] sm:$0xf]
        %v3441 = vld [vmem:[%s3407 + $0xa4] sm:$0x1]
        %v3442 = vld [vmem:[%s3407 + $0xa8] sm:$0xf]
        %v3443 = vld [vmem:[%s3407 + $0xac] sm:$0x1]
        %v3444 = vld [vmem:[%s3407 + $0xb0] sm:$0xf]
        %v3445 = vld [vmem:[%s3407 + $0xb4] sm:$0x1]
        %v3446 = vld [vmem:[%s3407 + $0xb8] sm:$0xf]
        %v3447 = vld [vmem:[%s3407 + $0xbc] sm:$0x1]
        %v3448 = vld [vmem:[%s3407 + $0xc0] sm:$0xf]
        %v3449 = vld [vmem:[%s3407 + $0xc4] sm:$0x1]
        %v3450 = vld [vmem:[%s3407 + $0xc8] sm:$0xf]
        %v3451 = vld [vmem:[%s3407 + $0xcc] sm:$0x1]
        %v3452 = vld [vmem:[%s3407 + $0xd0] sm:$0xf]
        %v3453 = vld [vmem:[%s3407 + $0xd4] sm:$0x1]
        %v3454 = vld [vmem:[%s3407 + $0xd8] sm:$0xf]
        %v3455 = vld [vmem:[%s3407 + $0xdc] sm:$0x1]
        %v3456 = vld [vmem:[%s3407 + $0xf0] sm:$0xf]
        %v3457 = vld [vmem:[%s3407 + $0xf4] sm:$0x1]
        %v3458 = vld [vmem:[%s3407 + $0xf8] sm:$0xf]
        %v3459 = vld [vmem:[%s3407 + $0xfc] sm:$0x1]
        %v3460 = vld [vmem:[%s3407 + $0x100] sm:$0xf]
        %v3461 = vld [vmem:[%s3407 + $0x104] sm:$0x1]
        %v3462 = vld [vmem:[%s3407 + $0x108] sm:$0xf]
        %v3463 = vld [vmem:[%s3407 + $0x10c] sm:$0x1]
        %v3464 = vld [vmem:[%s3407 + $0x110] sm:$0xf]
        %v3465 = vld [vmem:[%s3407 + $0x114] sm:$0x1]
        %v3466 = vld [vmem:[%s3407 + $0x118] sm:$0xf]
        %v3467 = vld [vmem:[%s3407 + $0x11c] sm:$0x1]
        %v3468 = vld [vmem:[%s3407 + $0x120] sm:$0xf]
        %v3469 = vld [vmem:[%s3407 + $0x124] sm:$0x1]
        %v3470 = vld [vmem:[%s3407 + $0x128] sm:$0xf]
        %v3471 = vld [vmem:[%s3407 + $0x12c] sm:$0x1]
        %v3536 = vunpack.c.l.b16 %v3408
        %v3537 = vunpack.c.l.b16 %v3409
        %v3538 = vunpack.c.l.b16 %v3410
        %v3539 = vunpack.c.l.b16 %v3411
        %v3540 = vunpack.c.l.b16 %v3412
        %v3541 = vunpack.c.l.b16 %v3413
        %v3542 = vunpack.c.l.b16 %v3414
        %v3543 = vunpack.c.l.b16 %v3415
        %v3544 = vunpack.c.l.b16 %v3416
        %v3545 = vunpack.c.l.b16 %v3417
        %v3546 = vunpack.c.l.b16 %v3418
        %v3547 = vunpack.c.l.b16 %v3419
        %v3548 = vunpack.c.l.b16 %v3420
        %v3549 = vunpack.c.l.b16 %v3421
        %v3550 = vunpack.c.l.b16 %v3422
        %v3551 = vunpack.c.l.b16 %v3423
        %v3552 = vunpack.c.l.b16 %v3424
        %v3553 = vunpack.c.l.b16 %v3425
        %v3554 = vunpack.c.l.b16 %v3426
        %v3555 = vunpack.c.l.b16 %v3427
        %v3556 = vunpack.c.l.b16 %v3428
        %v3557 = vunpack.c.l.b16 %v3429
        %v3558 = vunpack.c.l.b16 %v3430
        %v3559 = vunpack.c.l.b16 %v3431
        %v3560 = vunpack.c.l.b16 %v3432
        %v3561 = vunpack.c.l.b16 %v3433
        %v3562 = vunpack.c.l.b16 %v3434
        %v3563 = vunpack.c.l.b16 %v3435
        %v3564 = vunpack.c.l.b16 %v3436
        %v3565 = vunpack.c.l.b16 %v3437
        %v3566 = vunpack.c.l.b16 %v3438
        %v3567 = vunpack.c.l.b16 %v3439
        %v3568 = vunpack.c.l.b16 %v3440
        %v3569 = vunpack.c.l.b16 %v3441
        %v3570 = vunpack.c.l.b16 %v3442
        %v3571 = vunpack.c.l.b16 %v3443
        %v3572 = vunpack.c.l.b16 %v3444
        %v3573 = vunpack.c.l.b16 %v3445
        %v3574 = vunpack.c.l.b16 %v3446
        %v3575 = vunpack.c.l.b16 %v3447
        %v3576 = vunpack.c.l.b16 %v3448
        %v3577 = vunpack.c.l.b16 %v3449
        %v3578 = vunpack.c.l.b16 %v3450
        %v3579 = vunpack.c.l.b16 %v3451
        %v3580 = vunpack.c.l.b16 %v3452
        %v3581 = vunpack.c.l.b16 %v3453
        %v3582 = vunpack.c.l.b16 %v3454
        %v3583 = vunpack.c.l.b16 %v3455
        %v3584 = vunpack.c.l.b16 %v3456
        %v3585 = vunpack.c.l.b16 %v3457
        %v3586 = vunpack.c.l.b16 %v3458
        %v3587 = vunpack.c.l.b16 %v3459
        %v3588 = vunpack.c.l.b16 %v3460
        %v3589 = vunpack.c.l.b16 %v3461
        %v3590 = vunpack.c.l.b16 %v3462
        %v3591 = vunpack.c.l.b16 %v3463
        %v3592 = vunpack.c.l.b16 %v3464
        %v3593 = vunpack.c.l.b16 %v3465
        %v3594 = vunpack.c.l.b16 %v3466
        %v3595 = vunpack.c.l.b16 %v3467
        %v3596 = vunpack.c.l.b16 %v3468
        %v3597 = vunpack.c.l.b16 %v3469
        %v3598 = vunpack.c.l.b16 %v3470
        %v3599 = vunpack.c.l.b16 %v3471
        %v3600 = vpack.c.b16 %v3537, %v3536
        %v3601 = vpack.c.b16 %v3539, %v3538
        %v3602 = vpack.c.b16 %v3541, %v3540
        %v3603 = vpack.c.b16 %v3543, %v3542
        %v3604 = vpack.c.b16 %v3545, %v3544
        %v3605 = vpack.c.b16 %v3547, %v3546
        %v3606 = vpack.c.b16 %v3549, %v3548
        %v3607 = vpack.c.b16 %v3551, %v3550
        %v3608 = vpack.c.b16 %v3553, %v3552
        %v3609 = vpack.c.b16 %v3555, %v3554
        %v3610 = vpack.c.b16 %v3557, %v3556
        %v3611 = vpack.c.b16 %v3559, %v3558
        %v3612 = vpack.c.b16 %v3561, %v3560
        %v3613 = vpack.c.b16 %v3563, %v3562
        %v3614 = vpack.c.b16 %v3565, %v3564
        %v3615 = vpack.c.b16 %v3567, %v3566
        %v3616 = vpack.c.b16 %v3569, %v3568
        %v3617 = vpack.c.b16 %v3571, %v3570
        %v3618 = vpack.c.b16 %v3573, %v3572
        %v3619 = vpack.c.b16 %v3575, %v3574
        %v3620 = vpack.c.b16 %v3577, %v3576
        %v3621 = vpack.c.b16 %v3579, %v3578
        %v3622 = vpack.c.b16 %v3581, %v3580
        %v3623 = vpack.c.b16 %v3583, %v3582
        %v3624 = vpack.c.b16 %v3585, %v3584
        %v3625 = vpack.c.b16 %v3587, %v3586
        %v3626 = vpack.c.b16 %v3589, %v3588
        %v3627 = vpack.c.b16 %v3591, %v3590
        %v3628 = vpack.c.b16 %v3593, %v3592
        %v3629 = vpack.c.b16 %v3595, %v3594
        %v3630 = vpack.c.b16 %v3597, %v3596
        %v3631 = vpack.c.b16 %v3599, %v3598
        %v3633 = vshrl.u32 %v3600, 16
        %v3635 = vshll.u32 %v3600, 16
        %v3637 = vrot.slane %v3635, 1
        %v3638 = vor.u32 %v3633, %v3637
        %v3640 = vshrl.u32 %v3601, 16
        %v3642 = vshll.u32 %v3601, 16
        %v3644 = vrot.slane %v3642, 1
        %v3645 = vor.u32 %v3640, %v3644
        %v3647 = vshrl.u32 %v3602, 16
        %v3649 = vshll.u32 %v3602, 16
        %v3651 = vrot.slane %v3649, 1
        %v3652 = vor.u32 %v3647, %v3651
        %v3654 = vshrl.u32 %v3603, 16
        %v3656 = vshll.u32 %v3603, 16
        %v3658 = vrot.slane %v3656, 1
        %v3659 = vor.u32 %v3654, %v3658
        %v3661 = vshrl.u32 %v3604, 16
        %v3663 = vshll.u32 %v3604, 16
        %v3665 = vrot.slane %v3663, 1
        %v3666 = vor.u32 %v3661, %v3665
        %v3668 = vshrl.u32 %v3605, 16
        %v3670 = vshll.u32 %v3605, 16
        %v3672 = vrot.slane %v3670, 1
        %v3673 = vor.u32 %v3668, %v3672
        %v3675 = vshrl.u32 %v3606, 16
        %v3677 = vshll.u32 %v3606, 16
        %v3679 = vrot.slane %v3677, 1
        %v3680 = vor.u32 %v3675, %v3679
        %v3682 = vshrl.u32 %v3607, 16
        %v3684 = vshll.u32 %v3607, 16
        %v3686 = vrot.slane %v3684, 1
        %v3687 = vor.u32 %v3682, %v3686
        %v3689 = vshrl.u32 %v3608, 16
        %v3691 = vshll.u32 %v3608, 16
        %v3693 = vrot.slane %v3691, 1
        %v3694 = vor.u32 %v3689, %v3693
        %v3696 = vshrl.u32 %v3609, 16
        %v3698 = vshll.u32 %v3609, 16
        %v3700 = vrot.slane %v3698, 1
        %v3701 = vor.u32 %v3696, %v3700
        %v3703 = vshrl.u32 %v3610, 16
        %v3705 = vshll.u32 %v3610, 16
        %v3707 = vrot.slane %v3705, 1
        %v3708 = vor.u32 %v3703, %v3707
        %v3710 = vshrl.u32 %v3611, 16
        %v3712 = vshll.u32 %v3611, 16
        %v3714 = vrot.slane %v3712, 1
        %v3715 = vor.u32 %v3710, %v3714
        %v3717 = vshrl.u32 %v3612, 16
        %v3719 = vshll.u32 %v3612, 16
        %v3721 = vrot.slane %v3719, 1
        %v3722 = vor.u32 %v3717, %v3721
        %v3724 = vshrl.u32 %v3613, 16
        %v3726 = vshll.u32 %v3613, 16
        %v3728 = vrot.slane %v3726, 1
        %v3729 = vor.u32 %v3724, %v3728
        %v3731 = vshrl.u32 %v3614, 16
        %v3733 = vshll.u32 %v3614, 16
        %v3735 = vrot.slane %v3733, 1
        %v3736 = vor.u32 %v3731, %v3735
        %v3738 = vshrl.u32 %v3615, 16
        %v3740 = vshll.u32 %v3615, 16
        %v3742 = vrot.slane %v3740, 1
        %v3743 = vor.u32 %v3738, %v3742
        %v3745 = vshrl.u32 %v3616, 16
        %v3747 = vshll.u32 %v3616, 16
        %v3749 = vrot.slane %v3747, 1
        %v3750 = vor.u32 %v3745, %v3749
        %v3752 = vshrl.u32 %v3617, 16
        %v3754 = vshll.u32 %v3617, 16
        %v3756 = vrot.slane %v3754, 1
        %v3757 = vor.u32 %v3752, %v3756
        %v3759 = vshrl.u32 %v3618, 16
        %v3761 = vshll.u32 %v3618, 16
        %v3763 = vrot.slane %v3761, 1
        %v3764 = vor.u32 %v3759, %v3763
        %v3766 = vshrl.u32 %v3619, 16
        %v3768 = vshll.u32 %v3619, 16
        %v3770 = vrot.slane %v3768, 1
        %v3771 = vor.u32 %v3766, %v3770
        %v3773 = vshrl.u32 %v3620, 16
        %v3775 = vshll.u32 %v3620, 16
        %v3777 = vrot.slane %v3775, 1
        %v3778 = vor.u32 %v3773, %v3777
        %v3780 = vshrl.u32 %v3621, 16
        %v3782 = vshll.u32 %v3621, 16
        %v3784 = vrot.slane %v3782, 1
        %v3785 = vor.u32 %v3780, %v3784
        %v3787 = vshrl.u32 %v3622, 16
        %v3789 = vshll.u32 %v3622, 16
        %v3791 = vrot.slane %v3789, 1
        %v3792 = vor.u32 %v3787, %v3791
        %v3794 = vshrl.u32 %v3623, 16
        %v3796 = vshll.u32 %v3623, 16
        %v3798 = vrot.slane %v3796, 1
        %v3799 = vor.u32 %v3794, %v3798
        %v3801 = vshrl.u32 %v3624, 16
        %v3803 = vshll.u32 %v3624, 16
        %v3805 = vrot.slane %v3803, 1
        %v3806 = vor.u32 %v3801, %v3805
        %v3808 = vshrl.u32 %v3625, 16
        %v3810 = vshll.u32 %v3625, 16
        %v3812 = vrot.slane %v3810, 1
        %v3813 = vor.u32 %v3808, %v3812
        %v3815 = vshrl.u32 %v3626, 16
        %v3817 = vshll.u32 %v3626, 16
        %v3819 = vrot.slane %v3817, 1
        %v3820 = vor.u32 %v3815, %v3819
        %v3822 = vshrl.u32 %v3627, 16
        %v3824 = vshll.u32 %v3627, 16
        %v3826 = vrot.slane %v3824, 1
        %v3827 = vor.u32 %v3822, %v3826
        %v3829 = vshrl.u32 %v3628, 16
        %v3831 = vshll.u32 %v3628, 16
        %v3833 = vrot.slane %v3831, 1
        %v3834 = vor.u32 %v3829, %v3833
        %v3836 = vshrl.u32 %v3629, 16
        %v3838 = vshll.u32 %v3629, 16
        %v3840 = vrot.slane %v3838, 1
        %v3841 = vor.u32 %v3836, %v3840
        %v3843 = vshrl.u32 %v3630, 16
        %v3845 = vshll.u32 %v3630, 16
        %v3847 = vrot.slane %v3845, 1
        %v3848 = vor.u32 %v3843, %v3847
        %v3850 = vshrl.u32 %v3631, 16
        %v3852 = vshll.u32 %v3631, 16
        %v3854 = vrot.slane %v3852, 1
        %v3855 = vor.u32 %v3850, %v3854
        %3856 = vrot.lane.b32.xlu0 %v3638, 8
        %v3857 = vpop.permute.xlu0 %3856
        %3858 = vrot.lane.b32.xlu0 %v3645, 8
        %v3859 = vpop.permute.xlu0 %3858
        %3860 = vrot.lane.b32.xlu0 %v3652, 8
        %v3861 = vpop.permute.xlu0 %3860
        %3862 = vrot.lane.b32.xlu0 %v3659, 8
        %v3863 = vpop.permute.xlu0 %3862
        %3864 = vrot.lane.b32.xlu0 %v3666, 8
        %v3865 = vpop.permute.xlu0 %3864
        %3866 = vrot.lane.b32.xlu0 %v3673, 8
        %v3867 = vpop.permute.xlu0 %3866
        %3868 = vrot.lane.b32.xlu0 %v3680, 8
        %v3869 = vpop.permute.xlu0 %3868
        %3870 = vrot.lane.b32.xlu0 %v3687, 8
        %v3871 = vpop.permute.xlu0 %3870
        %3872 = vrot.lane.b32.xlu0 %v3694, 8
        %v3873 = vpop.permute.xlu0 %3872
        %3874 = vrot.lane.b32.xlu0 %v3701, 8
        %v3875 = vpop.permute.xlu0 %3874
        %3876 = vrot.lane.b32.xlu0 %v3708, 8
        %v3877 = vpop.permute.xlu0 %3876
        %3878 = vrot.lane.b32.xlu0 %v3715, 8
        %v3879 = vpop.permute.xlu0 %3878
        %3880 = vrot.lane.b32.xlu0 %v3722, 8
        %v3881 = vpop.permute.xlu0 %3880
        %3882 = vrot.lane.b32.xlu0 %v3729, 8
        %v3883 = vpop.permute.xlu0 %3882
        %3884 = vrot.lane.b32.xlu0 %v3736, 8
        %v3885 = vpop.permute.xlu0 %3884
        %3886 = vrot.lane.b32.xlu0 %v3743, 8
        %v3887 = vpop.permute.xlu0 %3886
        %3888 = vrot.lane.b32.xlu0 %v3750, 8
        %v3889 = vpop.permute.xlu0 %3888
        %3890 = vrot.lane.b32.xlu0 %v3757, 8
        %v3891 = vpop.permute.xlu0 %3890
        %3892 = vrot.lane.b32.xlu0 %v3764, 8
        %v3893 = vpop.permute.xlu0 %3892
        %3894 = vrot.lane.b32.xlu0 %v3771, 8
        %v3895 = vpop.permute.xlu0 %3894
        %3896 = vrot.lane.b32.xlu0 %v3778, 8
        %v3897 = vpop.permute.xlu0 %3896
        %3898 = vrot.lane.b32.xlu0 %v3785, 8
        %v3899 = vpop.permute.xlu0 %3898
        %3900 = vrot.lane.b32.xlu0 %v3792, 8
        %v3901 = vpop.permute.xlu0 %3900
        %3902 = vrot.lane.b32.xlu0 %v3799, 8
        %v3903 = vpop.permute.xlu0 %3902
        %3904 = vrot.lane.b32.xlu0 %v3806, 8
        %v3905 = vpop.permute.xlu0 %3904
        %3906 = vrot.lane.b32.xlu0 %v3813, 8
        %v3907 = vpop.permute.xlu0 %3906
        %3908 = vrot.lane.b32.xlu0 %v3820, 8
        %v3909 = vpop.permute.xlu0 %3908
        %3910 = vrot.lane.b32.xlu0 %v3827, 8
        %v3911 = vpop.permute.xlu0 %3910
        %3912 = vrot.lane.b32.xlu0 %v3834, 8
        %v3913 = vpop.permute.xlu0 %3912
        %3914 = vrot.lane.b32.xlu0 %v3841, 8
        %v3915 = vpop.permute.xlu0 %3914
        %3916 = vrot.lane.b32.xlu0 %v3848, 8
        %v3917 = vpop.permute.xlu0 %3916
        %3918 = vrot.lane.b32.xlu0 %v3855, 8
        %v3919 = vpop.permute.xlu0 %3918
        %v3920 = vrot.slane %v3600, 1
        %v3921 = vrot.slane %v3601, 1
        %v3922 = vrot.slane %v3602, 1
        %v3923 = vrot.slane %v3603, 1
        %v3924 = vrot.slane %v3604, 1
        %v3925 = vrot.slane %v3605, 1
        %v3926 = vrot.slane %v3606, 1
        %v3927 = vrot.slane %v3607, 1
        %v3928 = vrot.slane %v3608, 1
        %v3929 = vrot.slane %v3609, 1
        %v3930 = vrot.slane %v3610, 1
        %v3931 = vrot.slane %v3611, 1
        %v3932 = vrot.slane %v3612, 1
        %v3933 = vrot.slane %v3613, 1
        %v3934 = vrot.slane %v3614, 1
        %v3935 = vrot.slane %v3615, 1
        %v3936 = vrot.slane %v3616, 1
        %v3937 = vrot.slane %v3617, 1
        %v3938 = vrot.slane %v3618, 1
        %v3939 = vrot.slane %v3619, 1
        %v3940 = vrot.slane %v3620, 1
        %v3941 = vrot.slane %v3621, 1
        %v3942 = vrot.slane %v3622, 1
        %v3943 = vrot.slane %v3623, 1
        %v3944 = vrot.slane %v3624, 1
        %v3945 = vrot.slane %v3625, 1
        %v3946 = vrot.slane %v3626, 1
        %v3947 = vrot.slane %v3627, 1
        %v3948 = vrot.slane %v3628, 1
        %v3949 = vrot.slane %v3629, 1
        %v3950 = vrot.slane %v3630, 1
        %v3951 = vrot.slane %v3631, 1
        %3952 = vrot.lane.b32.xlu0 %v3920, 16
        %v3953 = vpop.permute.xlu0 %3952
        %3954 = vrot.lane.b32.xlu0 %v3921, 16
        %v3955 = vpop.permute.xlu0 %3954
        %3956 = vrot.lane.b32.xlu0 %v3922, 16
        %v3957 = vpop.permute.xlu0 %3956
        %3958 = vrot.lane.b32.xlu0 %v3923, 16
        %v3959 = vpop.permute.xlu0 %3958
        %3960 = vrot.lane.b32.xlu0 %v3924, 16
        %v3961 = vpop.permute.xlu0 %3960
        %3962 = vrot.lane.b32.xlu0 %v3925, 16
        %v3963 = vpop.permute.xlu0 %3962
        %3964 = vrot.lane.b32.xlu0 %v3926, 16
        %v3965 = vpop.permute.xlu0 %3964
        %3966 = vrot.lane.b32.xlu0 %v3927, 16
        %v3967 = vpop.permute.xlu0 %3966
        %3968 = vrot.lane.b32.xlu0 %v3928, 16
        %v3969 = vpop.permute.xlu0 %3968
        %3970 = vrot.lane.b32.xlu0 %v3929, 16
        %v3971 = vpop.permute.xlu0 %3970
        %3972 = vrot.lane.b32.xlu0 %v3930, 16
        %v3973 = vpop.permute.xlu0 %3972
        %3974 = vrot.lane.b32.xlu0 %v3931, 16
        %v3975 = vpop.permute.xlu0 %3974
        %3976 = vrot.lane.b32.xlu0 %v3932, 16
        %v3977 = vpop.permute.xlu0 %3976
        %3978 = vrot.lane.b32.xlu0 %v3933, 16
        %v3979 = vpop.permute.xlu0 %3978
        %3980 = vrot.lane.b32.xlu0 %v3934, 16
        %v3981 = vpop.permute.xlu0 %3980
        %3982 = vrot.lane.b32.xlu0 %v3935, 16
        %v3983 = vpop.permute.xlu0 %3982
        %3984 = vrot.lane.b32.xlu0 %v3936, 16
        %v3985 = vpop.permute.xlu0 %3984
        %3986 = vrot.lane.b32.xlu0 %v3937, 16
        %v3987 = vpop.permute.xlu0 %3986
        %3988 = vrot.lane.b32.xlu0 %v3938, 16
        %v3989 = vpop.permute.xlu0 %3988
        %3990 = vrot.lane.b32.xlu0 %v3939, 16
        %v3991 = vpop.permute.xlu0 %3990
        %3992 = vrot.lane.b32.xlu0 %v3940, 16
        %v3993 = vpop.permute.xlu0 %3992
        %3994 = vrot.lane.b32.xlu0 %v3941, 16
        %v3995 = vpop.permute.xlu0 %3994
        %3996 = vrot.lane.b32.xlu0 %v3942, 16
        %v3997 = vpop.permute.xlu0 %3996
        %3998 = vrot.lane.b32.xlu0 %v3943, 16
        %v3999 = vpop.permute.xlu0 %3998
        %4000 = vrot.lane.b32.xlu0 %v3944, 16
        %v4001 = vpop.permute.xlu0 %4000
        %4002 = vrot.lane.b32.xlu0 %v3945, 16
        %v4003 = vpop.permute.xlu0 %4002
        %4004 = vrot.lane.b32.xlu0 %v3946, 16
        %v4005 = vpop.permute.xlu0 %4004
        %4006 = vrot.lane.b32.xlu0 %v3947, 16
        %v4007 = vpop.permute.xlu0 %4006
        %4008 = vrot.lane.b32.xlu0 %v3948, 16
        %v4009 = vpop.permute.xlu0 %4008
        %4010 = vrot.lane.b32.xlu0 %v3949, 16
        %v4011 = vpop.permute.xlu0 %4010
        %4012 = vrot.lane.b32.xlu0 %v3950, 16
        %v4013 = vpop.permute.xlu0 %4012
        %4014 = vrot.lane.b32.xlu0 %v3951, 16
        %v4015 = vpop.permute.xlu0 %4014
        %v4018 = vsel %vm3243, %v3408, %v3857
        %v4021 = vsel %vm3243, %v3410, %v3859
        %v4024 = vsel %vm3243, %v3412, %v3861
        %v4027 = vsel %vm3243, %v3414, %v3863
        %v4030 = vsel %vm3243, %v3416, %v3865
        %v4033 = vsel %vm3243, %v3418, %v3867
        %v4036 = vsel %vm3243, %v3420, %v3869
        %v4039 = vsel %vm3243, %v3422, %v3871
        %v4042 = vsel %vm3243, %v3424, %v3873
        %v4045 = vsel %vm3243, %v3426, %v3875
        %v4048 = vsel %vm3243, %v3428, %v3877
        %v4051 = vsel %vm3243, %v3430, %v3879
        %v4054 = vsel %vm3243, %v3432, %v3881
        %v4057 = vsel %vm3243, %v3434, %v3883
        %v4060 = vsel %vm3243, %v3436, %v3885
        %v4063 = vsel %vm3243, %v3438, %v3887
        %v4066 = vsel %vm3243, %v3440, %v3889
        %v4069 = vsel %vm3243, %v3442, %v3891
        %v4072 = vsel %vm3243, %v3444, %v3893
        %v4075 = vsel %vm3243, %v3446, %v3895
        %v4078 = vsel %vm3243, %v3448, %v3897
        %v4081 = vsel %vm3243, %v3450, %v3899
        %v4084 = vsel %vm3243, %v3452, %v3901
        %v4087 = vsel %vm3243, %v3454, %v3903
        %v4090 = vsel %vm3243, %v3456, %v3905
        %v4093 = vsel %vm3243, %v3458, %v3907
        %v4096 = vsel %vm3243, %v3460, %v3909
        %v4099 = vsel %vm3243, %v3462, %v3911
        %v4102 = vsel %vm3243, %v3464, %v3913
        %v4105 = vsel %vm3243, %v3466, %v3915
        %v4108 = vsel %vm3243, %v3468, %v3917
        %v4111 = vsel %vm3243, %v3470, %v3919
        %v4113 = vsel %vm1134, %v4018, %v3953
        %v4115 = vsel %vm1134, %v4021, %v3955
        %v4117 = vsel %vm1134, %v4024, %v3957
        %v4119 = vsel %vm1134, %v4027, %v3959
        %v4121 = vsel %vm1134, %v4030, %v3961
        %v4123 = vsel %vm1134, %v4033, %v3963
        %v4125 = vsel %vm1134, %v4036, %v3965
        %v4127 = vsel %vm1134, %v4039, %v3967
        %v4129 = vsel %vm1134, %v4042, %v3969
        %v4131 = vsel %vm1134, %v4045, %v3971
        %v4133 = vsel %vm1134, %v4048, %v3973
        %v4135 = vsel %vm1134, %v4051, %v3975
        %v4137 = vsel %vm1134, %v4054, %v3977
        %v4139 = vsel %vm1134, %v4057, %v3979
        %v4141 = vsel %vm1134, %v4060, %v3981
        %v4143 = vsel %vm1134, %v4063, %v3983
        %v4145 = vsel %vm1134, %v4066, %v3985
        %v4147 = vsel %vm1134, %v4069, %v3987
        %v4149 = vsel %vm1134, %v4072, %v3989
        %v4151 = vsel %vm1134, %v4075, %v3991
        %v4153 = vsel %vm1134, %v4078, %v3993
        %v4155 = vsel %vm1134, %v4081, %v3995
        %v4157 = vsel %vm1134, %v4084, %v3997
        %v4159 = vsel %vm1134, %v4087, %v3999
        %v4161 = vsel %vm1134, %v4090, %v4001
        %v4163 = vsel %vm1134, %v4093, %v4003
        %v4165 = vsel %vm1134, %v4096, %v4005
        %v4167 = vsel %vm1134, %v4099, %v4007
        %v4169 = vsel %vm1134, %v4102, %v4009
        %v4171 = vsel %vm1134, %v4105, %v4011
        %v4173 = vsel %vm1134, %v4108, %v4013
        %v4175 = vsel %vm1134, %v4111, %v4015
        %s4176 = scalar_lea.vmem %s5, 12
        %v4177 = vld [vmem:[%s4176] sm:$0xf]
        %v4178 = vld [vmem:[%s4176 + $0x4] sm:$0xf]
        %v4179 = vld [vmem:[%s4176 + $0x8] sm:$0xf]
        %v4212 = vunpack.c.l.b16 %v4113
        %v4213 = vunpack.c.l.b16 %v4115
        %v4214 = vunpack.c.l.b16 %v4117
        %v4215 = vunpack.c.l.b16 %v4119
        %v4216 = vunpack.c.l.b16 %v4121
        %v4217 = vunpack.c.l.b16 %v4123
        %v4218 = vunpack.c.l.b16 %v4125
        %v4219 = vunpack.c.l.b16 %v4127
        %v4220 = vunpack.c.l.b16 %v4129
        %v4221 = vunpack.c.l.b16 %v4131
        %v4222 = vunpack.c.l.b16 %v4133
        %v4223 = vunpack.c.l.b16 %v4135
        %v4224 = vunpack.c.l.b16 %v4137
        %v4225 = vunpack.c.l.b16 %v4139
        %v4226 = vunpack.c.l.b16 %v4141
        %v4227 = vunpack.c.l.b16 %v4143
        %v4228 = vunpack.c.l.b16 %v4145
        %v4229 = vunpack.c.l.b16 %v4147
        %v4230 = vunpack.c.l.b16 %v4149
        %v4231 = vunpack.c.l.b16 %v4151
        %v4232 = vunpack.c.l.b16 %v4153
        %v4233 = vunpack.c.l.b16 %v4155
        %v4234 = vunpack.c.l.b16 %v4157
        %v4235 = vunpack.c.l.b16 %v4159
        %v4236 = vunpack.c.l.b16 %v4161
        %v4237 = vunpack.c.l.b16 %v4163
        %v4238 = vunpack.c.l.b16 %v4165
        %v4239 = vunpack.c.l.b16 %v4167
        %v4240 = vunpack.c.l.b16 %v4169
        %v4241 = vunpack.c.l.b16 %v4171
        %v4242 = vunpack.c.l.b16 %v4173
        %v4243 = vunpack.c.l.b16 %v4175
        %v4244 = vpack.c.b16 %v4213, %v4212
        %v4245 = vpack.c.b16 %v4215, %v4214
        %v4246 = vpack.c.b16 %v4217, %v4216
        %v4247 = vpack.c.b16 %v4219, %v4218
        %v4248 = vpack.c.b16 %v4221, %v4220
        %v4249 = vpack.c.b16 %v4223, %v4222
        %v4250 = vpack.c.b16 %v4225, %v4224
        %v4251 = vpack.c.b16 %v4227, %v4226
        %v4252 = vpack.c.b16 %v4229, %v4228
        %v4253 = vpack.c.b16 %v4231, %v4230
        %v4254 = vpack.c.b16 %v4233, %v4232
        %v4255 = vpack.c.b16 %v4235, %v4234
        %v4256 = vpack.c.b16 %v4237, %v4236
        %v4257 = vpack.c.b16 %v4239, %v4238
        %v4258 = vpack.c.b16 %v4241, %v4240
        %v4259 = vpack.c.b16 %v4243, %v4242
        %v4263 = vunpack.c.l.b16 %v4177
        %v4264 = vunpack.c.l.b16 %v4178
        %v4265 = vunpack.c.l.b16 %v4179
        %v4266 = vpack.c.b16 %v4264, %v4263
        %v4267 = vpack.c.b16 %v4265, %v4265
        %vm4269 = vcmask 195584
        %v4271 = vsel %vm4269, %v4244, 0
        %v4274 = vsel %vm4269, %v4245, 0
        %v4277 = vsel %vm4269, %v4246, 0
        %v4280 = vsel %vm4269, %v4247, 0
        %v4283 = vsel %vm4269, %v4248, 0
        %v4286 = vsel %vm4269, %v4249, 0
        %v4289 = vsel %vm4269, %v4250, 0
        %v4292 = vsel %vm4269, %v4251, 0
        %v4295 = vsel %vm4269, %v4252, 0
        %v4298 = vsel %vm4269, %v4253, 0
        %v4301 = vsel %vm4269, %v4254, 0
        %v4304 = vsel %vm4269, %v4255, 0
        %v4307 = vsel %vm4269, %v4256, 0
        %v4310 = vsel %vm4269, %v4257, 0
        %v4313 = vsel %vm4269, %v4258, 0
        %v4316 = vsel %vm4269, %v4259, 0
        %vm4318 = vcmask 1043456
        %v4320 = vsel %vm4318, %v4267, 0
        %4322 = vmatprep.subr.bf16.mxu0 0
        %4323 = vmatpush1.bf16.msra.mxu0 %v4266
        %4324 = vmatprep.subr.bf16.mxu0 0
        %4325 = vmatpush1.bf16.msra.mxu0 %v4320
        %4326 = vmatprep.subr.bf16.mxu0 0
        %4327 = vmatpush1.bf16.msra.mxu0 0
        %4328 = vmatprep.subr.bf16.mxu0 0
        %4329 = vmatpush1.bf16.msra.mxu0 0
        %4330 = vmatprep.subr.bf16.mxu0 0
        %4331 = vmatpush1.bf16.msra.mxu0 0
        %4332 = vmatprep.subr.bf16.mxu0 0
        %4333 = vmatpush1.bf16.msra.mxu0 0
        %4334 = vmatprep.subr.bf16.mxu0 0
        %4335 = vmatpush1.bf16.msra.mxu0 0
        %4336 = vmatprep.subr.bf16.mxu0 0
        %4337 = vmatpush1.bf16.msra.mxu0 0
        %4338 = vmatprep.subr.bf16.mxu0 0
        %4339 = vmatpush1.bf16.msra.mxu0 0
        %4340 = vmatprep.subr.bf16.mxu0 0
        %4341 = vmatpush1.bf16.msra.mxu0 0
        %4342 = vmatprep.subr.bf16.mxu0 0
        %4343 = vmatpush1.bf16.msra.mxu0 0
        %4344 = vmatprep.subr.bf16.mxu0 0
        %4345 = vmatpush1.bf16.msra.mxu0 0
        %4346 = vmatprep.subr.bf16.mxu0 0
        %4347 = vmatpush1.bf16.msra.mxu0 0
        %4348 = vmatprep.subr.bf16.mxu0 0
        %4349 = vmatpush1.bf16.msra.mxu0 0
        %4350 = vmatprep.subr.bf16.mxu0 0
        %4351 = vmatpush1.bf16.msra.mxu0 0
        %4352 = vmatprep.subr.bf16.mxu0 0
        %4353 = vmatpush1.bf16.msra.mxu0 0
        %4354 = vmatprep.mubr.bf16.mxu0 0
        %4355 = vmatmul.mubr.bf16.gmra.mrb[0].mxu0 %v4271
        %v4356 = vpop.f32.mrb[0].mxu0
        %v4357 = vadd.f32 0.0, %v4356
        %v4358 = vpop.f32.mrb[0].mxu0
        %v4359 = vpop.f32.mrb[0].mxu0
        %v4360 = vadd.f32 0.0, %v4359
        %v4361 = vpop.f32.mrb[0].mxu0
        %4362 = vmatprep.mubr.bf16.mxu0 0
        %4363 = vmatmul.mubr.bf16.gmra.mrb[0].mxu0 %v4274
        %v4364 = vpop.f32.mrb[0].mxu0
        %v4365 = vadd.f32 0.0, %v4364
        %v4366 = vpop.f32.mrb[0].mxu0
        %v4367 = vpop.f32.mrb[0].mxu0
        %v4368 = vadd.f32 0.0, %v4367
        %v4369 = vpop.f32.mrb[0].mxu0
        %4370 = vmatprep.mubr.bf16.mxu0 0
        %4371 = vmatmul.mubr.bf16.gmra.mrb[0].mxu0 %v4277
        %v4372 = vpop.f32.mrb[0].mxu0
        %v4373 = vadd.f32 0.0, %v4372
        %v4374 = vpop.f32.mrb[0].mxu0
        %v4375 = vpop.f32.mrb[0].mxu0
        %v4376 = vadd.f32 0.0, %v4375
        %v4377 = vpop.f32.mrb[0].mxu0
        %4378 = vmatprep.mubr.bf16.mxu0 0
        %4379 = vmatmul.mubr.bf16.gmra.mrb[0].mxu0 %v4280
        %v4380 = vpop.f32.mrb[0].mxu0
        %v4381 = vadd.f32 0.0, %v4380
        %v4382 = vpop.f32.mrb[0].mxu0
        %v4383 = vpop.f32.mrb[0].mxu0
        %v4384 = vadd.f32 0.0, %v4383
        %v4385 = vpop.f32.mrb[0].mxu0
        %4386 = vmatprep.mubr.bf16.mxu0 0
        %4387 = vmatmul.mubr.bf16.gmra.mrb[0].mxu0 %v4283
        %v4388 = vpop.f32.mrb[0].mxu0
        %v4389 = vadd.f32 0.0, %v4388
        %v4390 = vpop.f32.mrb[0].mxu0
        %v4391 = vpop.f32.mrb[0].mxu0
        %v4392 = vadd.f32 0.0, %v4391
        %v4393 = vpop.f32.mrb[0].mxu0
        %4394 = vmatprep.mubr.bf16.mxu0 0
        %4395 = vmatmul.mubr.bf16.gmra.mrb[0].mxu0 %v4286
        %v4396 = vpop.f32.mrb[0].mxu0
        %v4397 = vadd.f32 0.0, %v4396
        %v4398 = vpop.f32.mrb[0].mxu0
        %v4399 = vpop.f32.mrb[0].mxu0
        %v4400 = vadd.f32 0.0, %v4399
        %v4401 = vpop.f32.mrb[0].mxu0
        %4402 = vmatprep.mubr.bf16.mxu0 0
        %4403 = vmatmul.mubr.bf16.gmra.mrb[0].mxu0 %v4289
        %v4404 = vpop.f32.mrb[0].mxu0
        %v4405 = vadd.f32 0.0, %v4404
        %v4406 = vpop.f32.mrb[0].mxu0
        %v4407 = vpop.f32.mrb[0].mxu0
        %v4408 = vadd.f32 0.0, %v4407
        %v4409 = vpop.f32.mrb[0].mxu0
        %4410 = vmatprep.mubr.bf16.mxu0 0
        %4411 = vmatmul.mubr.bf16.gmra.mrb[0].mxu0 %v4292
        %v4412 = vpop.f32.mrb[0].mxu0
        %v4413 = vadd.f32 0.0, %v4412
        %v4414 = vpop.f32.mrb[0].mxu0
        %v4415 = vpop.f32.mrb[0].mxu0
        %v4416 = vadd.f32 0.0, %v4415
        %v4417 = vpop.f32.mrb[0].mxu0
        %4418 = vmatprep.mubr.bf16.mxu0 0
        %4419 = vmatmul.mubr.bf16.gmra.mrb[0].mxu0 %v4295
        %v4420 = vpop.f32.mrb[0].mxu0
        %v4421 = vadd.f32 0.0, %v4420
        %v4422 = vpop.f32.mrb[0].mxu0
        %v4423 = vpop.f32.mrb[0].mxu0
        %v4424 = vadd.f32 0.0, %v4423
        %v4425 = vpop.f32.mrb[0].mxu0
        %4426 = vmatprep.mubr.bf16.mxu0 0
        %4427 = vmatmul.mubr.bf16.gmra.mrb[0].mxu0 %v4298
        %v4428 = vpop.f32.mrb[0].mxu0
        %v4429 = vadd.f32 0.0, %v4428
        %v4430 = vpop.f32.mrb[0].mxu0
        %v4431 = vpop.f32.mrb[0].mxu0
        %v4432 = vadd.f32 0.0, %v4431
        %v4433 = vpop.f32.mrb[0].mxu0
        %4434 = vmatprep.mubr.bf16.mxu0 0
        %4435 = vmatmul.mubr.bf16.gmra.mrb[0].mxu0 %v4301
        %v4436 = vpop.f32.mrb[0].mxu0
        %v4437 = vadd.f32 0.0, %v4436
        %v4438 = vpop.f32.mrb[0].mxu0
        %v4439 = vpop.f32.mrb[0].mxu0
        %v4440 = vadd.f32 0.0, %v4439
        %v4441 = vpop.f32.mrb[0].mxu0
        %4442 = vmatprep.mubr.bf16.mxu0 0
        %4443 = vmatmul.mubr.bf16.gmra.mrb[0].mxu0 %v4304
        %v4444 = vpop.f32.mrb[0].mxu0
        %v4445 = vadd.f32 0.0, %v4444
        %v4446 = vpop.f32.mrb[0].mxu0
        %v4447 = vpop.f32.mrb[0].mxu0
        %v4448 = vadd.f32 0.0, %v4447
        %v4449 = vpop.f32.mrb[0].mxu0
        %4450 = vmatprep.mubr.bf16.mxu0 0
        %4451 = vmatmul.mubr.bf16.gmra.mrb[0].mxu0 %v4307
        %v4452 = vpop.f32.mrb[0].mxu0
        %v4453 = vadd.f32 0.0, %v4452
        %v4454 = vpop.f32.mrb[0].mxu0
        %v4455 = vpop.f32.mrb[0].mxu0
        %v4456 = vadd.f32 0.0, %v4455
        %v4457 = vpop.f32.mrb[0].mxu0
        %4458 = vmatprep.mubr.bf16.mxu0 0
        %4459 = vmatmul.mubr.bf16.gmra.mrb[0].mxu0 %v4310
        %v4460 = vpop.f32.mrb[0].mxu0
        %v4461 = vadd.f32 0.0, %v4460
        %v4462 = vpop.f32.mrb[0].mxu0
        %v4463 = vpop.f32.mrb[0].mxu0
        %v4464 = vadd.f32 0.0, %v4463
        %v4465 = vpop.f32.mrb[0].mxu0
        %4466 = vmatprep.mubr.bf16.mxu0 0
        %4467 = vmatmul.mubr.bf16.gmra.mrb[0].mxu0 %v4313
        %v4468 = vpop.f32.mrb[0].mxu0
        %v4469 = vadd.f32 0.0, %v4468
        %v4470 = vpop.f32.mrb[0].mxu0
        %v4471 = vpop.f32.mrb[0].mxu0
        %v4472 = vadd.f32 0.0, %v4471
        %v4473 = vpop.f32.mrb[0].mxu0
        %4474 = vmatprep.mubr.bf16.mxu0 0
        %4475 = vmatmul.mubr.bf16.gmra.mrb[0].mxu0 %v4316
        %v4476 = vpop.f32.mrb[0].mxu0
        %v4477 = vadd.f32 0.0, %v4476
        %v4478 = vpop.f32.mrb[0].mxu0
        %v4479 = vpop.f32.mrb[0].mxu0
        %v4480 = vadd.f32 0.0, %v4479
        %v4481 = vpop.f32.mrb[0].mxu0
        %4482 = vdwg.mxu0
        %v4515 = vunpack.c.l.b16 %v3341
        %v4516 = vunpack.c.l.b16 %v3343
        %v4517 = vunpack.c.l.b16 %v3345
        %v4518 = vunpack.c.l.b16 %v3347
        %v4519 = vunpack.c.l.b16 %v3349
        %v4520 = vunpack.c.l.b16 %v3351
        %v4521 = vunpack.c.l.b16 %v3353
        %v4522 = vunpack.c.l.b16 %v3355
        %v4523 = vunpack.c.l.b16 %v3357
        %v4524 = vunpack.c.l.b16 %v3359
        %v4525 = vunpack.c.l.b16 %v3361
        %v4526 = vunpack.c.l.b16 %v3363
        %v4527 = vunpack.c.l.b16 %v3365
        %v4528 = vunpack.c.l.b16 %v3367
        %v4529 = vunpack.c.l.b16 %v3369
        %v4530 = vunpack.c.l.b16 %v3371
        %v4531 = vunpack.c.l.b16 %v3373
        %v4532 = vunpack.c.l.b16 %v3375
        %v4533 = vunpack.c.l.b16 %v3377
        %v4534 = vunpack.c.l.b16 %v3379
        %v4535 = vunpack.c.l.b16 %v3381
        %v4536 = vunpack.c.l.b16 %v3383
        %v4537 = vunpack.c.l.b16 %v3385
        %v4538 = vunpack.c.l.b16 %v3387
        %v4539 = vunpack.c.l.b16 %v3389
        %v4540 = vunpack.c.l.b16 %v3391
        %v4541 = vunpack.c.l.b16 %v3393
        %v4542 = vunpack.c.l.b16 %v3395
        %v4543 = vunpack.c.l.b16 %v3397
        %v4544 = vunpack.c.l.b16 %v3399
        %v4545 = vunpack.c.l.b16 %v3401
        %v4546 = vunpack.c.l.b16 %v3403
        %v4547 = vpack.c.b16 %v4516, %v4515
        %v4548 = vpack.c.b16 %v4518, %v4517
        %v4549 = vpack.c.b16 %v4520, %v4519
        %v4550 = vpack.c.b16 %v4522, %v4521
        %v4551 = vpack.c.b16 %v4524, %v4523
        %v4552 = vpack.c.b16 %v4526, %v4525
        %v4553 = vpack.c.b16 %v4528, %v4527
        %v4554 = vpack.c.b16 %v4530, %v4529
        %v4555 = vpack.c.b16 %v4532, %v4531
        %v4556 = vpack.c.b16 %v4534, %v4533
        %v4557 = vpack.c.b16 %v4536, %v4535
        %v4558 = vpack.c.b16 %v4538, %v4537
        %v4559 = vpack.c.b16 %v4540, %v4539
        %v4560 = vpack.c.b16 %v4542, %v4541
        %v4561 = vpack.c.b16 %v4544, %v4543
        %v4562 = vpack.c.b16 %v4546, %v4545
        %v4566 = vunpack.c.l.b16 %v3404
        %v4567 = vunpack.c.l.b16 %v3405
        %v4568 = vunpack.c.l.b16 %v3406
        %v4569 = vpack.c.b16 %v4567, %v4566
        %v4570 = vpack.c.b16 %v4568, %v4568
        %v4573 = vsel %vm4269, %v4547, 0
        %v4576 = vsel %vm4269, %v4548, 0
        %v4579 = vsel %vm4269, %v4549, 0
        %v4582 = vsel %vm4269, %v4550, 0
        %v4585 = vsel %vm4269, %v4551, 0
        %v4588 = vsel %vm4269, %v4552, 0
        %v4591 = vsel %vm4269, %v4553, 0
        %v4594 = vsel %vm4269, %v4554, 0
        %v4597 = vsel %vm4269, %v4555, 0
        %v4600 = vsel %vm4269, %v4556, 0
        %v4603 = vsel %vm4269, %v4557, 0
        %v4606 = vsel %vm4269, %v4558, 0
        %v4609 = vsel %vm4269, %v4559, 0
        %v4612 = vsel %vm4269, %v4560, 0
        %v4615 = vsel %vm4269, %v4561, 0
        %v4618 = vsel %vm4269, %v4562, 0
        %v4621 = vsel %vm4318, %v4570, 0
        %4623 = vmatprep.subr.bf16.mxu0 0
        %4624 = vmatpush1.bf16.msra.mxu0 %v4569
        %4625 = vmatprep.subr.bf16.mxu0 0
        %4626 = vmatpush1.bf16.msra.mxu0 %v4621
        %4627 = vmatprep.subr.bf16.mxu0 0
        %4628 = vmatpush1.bf16.msra.mxu0 0
        %4629 = vmatprep.subr.bf16.mxu0 0
        %4630 = vmatpush1.bf16.msra.mxu0 0
        %4631 = vmatprep.subr.bf16.mxu0 0
        %4632 = vmatpush1.bf16.msra.mxu0 0
        %4633 = vmatprep.subr.bf16.mxu0 0
        %4634 = vmatpush1.bf16.msra.mxu0 0
        %4635 = vmatprep.subr.bf16.mxu0 0
        %4636 = vmatpush1.bf16.msra.mxu0 0
        %4637 = vmatprep.subr.bf16.mxu0 0
        %4638 = vmatpush1.bf16.msra.mxu0 0
        %4639 = vmatprep.subr.bf16.mxu0 0
        %4640 = vmatpush1.bf16.msra.mxu0 0
        %4641 = vmatprep.subr.bf16.mxu0 0
        %4642 = vmatpush1.bf16.msra.mxu0 0
        %4643 = vmatprep.subr.bf16.mxu0 0
        %4644 = vmatpush1.bf16.msra.mxu0 0
        %4645 = vmatprep.subr.bf16.mxu0 0
        %4646 = vmatpush1.bf16.msra.mxu0 0
        %4647 = vmatprep.subr.bf16.mxu0 0
        %4648 = vmatpush1.bf16.msra.mxu0 0
        %4649 = vmatprep.subr.bf16.mxu0 0
        %4650 = vmatpush1.bf16.msra.mxu0 0
        %4651 = vmatprep.subr.bf16.mxu0 0
        %4652 = vmatpush1.bf16.msra.mxu0 0
        %4653 = vmatprep.subr.bf16.mxu0 0
        %4654 = vmatpush1.bf16.msra.mxu0 0
        %4655 = vmatprep.mubr.bf16.mxu0 0
        %4656 = vmatmul.mubr.bf16.gmra.mrb[0].mxu0 %v4573
        %v4657 = vpop.f32.mrb[0].mxu0
        %v4658 = vadd.f32 %v4357, %v4657
        %v4659 = vpop.f32.mrb[0].mxu0
        %v4660 = vpop.f32.mrb[0].mxu0
        %v4661 = vadd.f32 %v4360, %v4660
        %v4662 = vpop.f32.mrb[0].mxu0
        %4663 = vmatprep.mubr.bf16.mxu0 0
        %4664 = vmatmul.mubr.bf16.gmra.mrb[0].mxu0 %v4576
        %v4665 = vpop.f32.mrb[0].mxu0
        %v4666 = vadd.f32 %v4365, %v4665
        %v4667 = vpop.f32.mrb[0].mxu0
        %v4668 = vpop.f32.mrb[0].mxu0
        %v4669 = vadd.f32 %v4368, %v4668
        %v4670 = vpop.f32.mrb[0].mxu0
        %4671 = vmatprep.mubr.bf16.mxu0 0
        %4672 = vmatmul.mubr.bf16.gmra.mrb[0].mxu0 %v4579
        %v4673 = vpop.f32.mrb[0].mxu0
        %v4674 = vadd.f32 %v4373, %v4673
        %v4675 = vpop.f32.mrb[0].mxu0
        %v4676 = vpop.f32.mrb[0].mxu0
        %v4677 = vadd.f32 %v4376, %v4676
        %v4678 = vpop.f32.mrb[0].mxu0
        %4679 = vmatprep.mubr.bf16.mxu0 0
        %4680 = vmatmul.mubr.bf16.gmra.mrb[0].mxu0 %v4582
        %v4681 = vpop.f32.mrb[0].mxu0
        %v4682 = vadd.f32 %v4381, %v4681
        %v4683 = vpop.f32.mrb[0].mxu0
        %v4684 = vpop.f32.mrb[0].mxu0
        %v4685 = vadd.f32 %v4384, %v4684
        %v4686 = vpop.f32.mrb[0].mxu0
        %4687 = vmatprep.mubr.bf16.mxu0 0
        %4688 = vmatmul.mubr.bf16.gmra.mrb[0].mxu0 %v4585
        %v4689 = vpop.f32.mrb[0].mxu0
        %v4690 = vadd.f32 %v4389, %v4689
        %v4691 = vpop.f32.mrb[0].mxu0
        %v4692 = vpop.f32.mrb[0].mxu0
        %v4693 = vadd.f32 %v4392, %v4692
        %v4694 = vpop.f32.mrb[0].mxu0
        %4695 = vmatprep.mubr.bf16.mxu0 0
        %4696 = vmatmul.mubr.bf16.gmra.mrb[0].mxu0 %v4588
        %v4697 = vpop.f32.mrb[0].mxu0
        %v4698 = vadd.f32 %v4397, %v4697
        %v4699 = vpop.f32.mrb[0].mxu0
        %v4700 = vpop.f32.mrb[0].mxu0
        %v4701 = vadd.f32 %v4400, %v4700
        %v4702 = vpop.f32.mrb[0].mxu0
        %4703 = vmatprep.mubr.bf16.mxu0 0
        %4704 = vmatmul.mubr.bf16.gmra.mrb[0].mxu0 %v4591
        %v4705 = vpop.f32.mrb[0].mxu0
        %v4706 = vadd.f32 %v4405, %v4705
        %v4707 = vpop.f32.mrb[0].mxu0
        %v4708 = vpop.f32.mrb[0].mxu0
        %v4709 = vadd.f32 %v4408, %v4708
        %v4710 = vpop.f32.mrb[0].mxu0
        %4711 = vmatprep.mubr.bf16.mxu0 0
        %4712 = vmatmul.mubr.bf16.gmra.mrb[0].mxu0 %v4594
        %v4713 = vpop.f32.mrb[0].mxu0
        %v4714 = vadd.f32 %v4413, %v4713
        %v4715 = vpop.f32.mrb[0].mxu0
        %v4716 = vpop.f32.mrb[0].mxu0
        %v4717 = vadd.f32 %v4416, %v4716
        %v4718 = vpop.f32.mrb[0].mxu0
        %4719 = vmatprep.mubr.bf16.mxu0 0
        %4720 = vmatmul.mubr.bf16.gmra.mrb[0].mxu0 %v4597
        %v4721 = vpop.f32.mrb[0].mxu0
        %v4722 = vadd.f32 %v4421, %v4721
        %v4723 = vpop.f32.mrb[0].mxu0
        %v4724 = vpop.f32.mrb[0].mxu0
        %v4725 = vadd.f32 %v4424, %v4724
        %v4726 = vpop.f32.mrb[0].mxu0
        %4727 = vmatprep.mubr.bf16.mxu0 0
        %4728 = vmatmul.mubr.bf16.gmra.mrb[0].mxu0 %v4600
        %v4729 = vpop.f32.mrb[0].mxu0
        %v4730 = vadd.f32 %v4429, %v4729
        %v4731 = vpop.f32.mrb[0].mxu0
        %v4732 = vpop.f32.mrb[0].mxu0
        %v4733 = vadd.f32 %v4432, %v4732
        %v4734 = vpop.f32.mrb[0].mxu0
        %4735 = vmatprep.mubr.bf16.mxu0 0
        %4736 = vmatmul.mubr.bf16.gmra.mrb[0].mxu0 %v4603
        %v4737 = vpop.f32.mrb[0].mxu0
        %v4738 = vadd.f32 %v4437, %v4737
        %v4739 = vpop.f32.mrb[0].mxu0
        %v4740 = vpop.f32.mrb[0].mxu0
        %v4741 = vadd.f32 %v4440, %v4740
        %v4742 = vpop.f32.mrb[0].mxu0
        %4743 = vmatprep.mubr.bf16.mxu0 0
        %4744 = vmatmul.mubr.bf16.gmra.mrb[0].mxu0 %v4606
        %v4745 = vpop.f32.mrb[0].mxu0
        %v4746 = vadd.f32 %v4445, %v4745
        %v4747 = vpop.f32.mrb[0].mxu0
        %v4748 = vpop.f32.mrb[0].mxu0
        %v4749 = vadd.f32 %v4448, %v4748
        %v4750 = vpop.f32.mrb[0].mxu0
        %4751 = vmatprep.mubr.bf16.mxu0 0
        %4752 = vmatmul.mubr.bf16.gmra.mrb[0].mxu0 %v4609
        %v4753 = vpop.f32.mrb[0].mxu0
        %v4754 = vadd.f32 %v4453, %v4753
        %v4755 = vpop.f32.mrb[0].mxu0
        %v4756 = vpop.f32.mrb[0].mxu0
        %v4757 = vadd.f32 %v4456, %v4756
        %v4758 = vpop.f32.mrb[0].mxu0
        %4759 = vmatprep.mubr.bf16.mxu0 0
        %4760 = vmatmul.mubr.bf16.gmra.mrb[0].mxu0 %v4612
        %v4761 = vpop.f32.mrb[0].mxu0
        %v4762 = vadd.f32 %v4461, %v4761
        %v4763 = vpop.f32.mrb[0].mxu0
        %v4764 = vpop.f32.mrb[0].mxu0
        %v4765 = vadd.f32 %v4464, %v4764
        %v4766 = vpop.f32.mrb[0].mxu0
        %4767 = vmatprep.mubr.bf16.mxu0 0
        %4768 = vmatmul.mubr.bf16.gmra.mrb[0].mxu0 %v4615
        %v4769 = vpop.f32.mrb[0].mxu0
        %v4770 = vadd.f32 %v4469, %v4769
        %v4771 = vpop.f32.mrb[0].mxu0
        %v4772 = vpop.f32.mrb[0].mxu0
        %v4773 = vadd.f32 %v4472, %v4772
        %v4774 = vpop.f32.mrb[0].mxu0
        %4775 = vmatprep.mubr.bf16.mxu0 0
        %4776 = vmatmul.mubr.bf16.gmra.mrb[0].mxu0 %v4618
        %v4777 = vpop.f32.mrb[0].mxu0
        %v4778 = vadd.f32 %v4477, %v4777
        %v4779 = vpop.f32.mrb[0].mxu0
        %v4780 = vpop.f32.mrb[0].mxu0
        %v4781 = vadd.f32 %v4480, %v4780
        %v4782 = vpop.f32.mrb[0].mxu0
        %4783 = vdwg.mxu0
        %s4784 = scalar_lea.vmem [#allocation2], 16
        %v4785 = vld [vmem:[%s4784] sm:$0xf]
        %v4786 = vld [vmem:[%s4784 + $0x4] sm:$0x1]
        %v4787 = vld [vmem:[%s4784 + $0x8] sm:$0xf]
        %v4788 = vld [vmem:[%s4784 + $0xc] sm:$0x1]
        %v4789 = vld [vmem:[%s4784 + $0x10] sm:$0xf]
        %v4790 = vld [vmem:[%s4784 + $0x14] sm:$0x1]
        %v4791 = vld [vmem:[%s4784 + $0x18] sm:$0xf]
        %v4792 = vld [vmem:[%s4784 + $0x1c] sm:$0x1]
        %v4793 = vld [vmem:[%s4784 + $0x20] sm:$0xf]
        %v4794 = vld [vmem:[%s4784 + $0x24] sm:$0x1]
        %v4795 = vld [vmem:[%s4784 + $0x28] sm:$0xf]
        %v4796 = vld [vmem:[%s4784 + $0x2c] sm:$0x1]
        %v4797 = vld [vmem:[%s4784 + $0x30] sm:$0xf]
        %v4798 = vld [vmem:[%s4784 + $0x34] sm:$0x1]
        %v4799 = vld [vmem:[%s4784 + $0x38] sm:$0xf]
        %v4800 = vld [vmem:[%s4784 + $0x3c] sm:$0x1]
        %v4801 = vld [vmem:[%s4784 + $0x50] sm:$0xf]
        %v4802 = vld [vmem:[%s4784 + $0x54] sm:$0x1]
        %v4803 = vld [vmem:[%s4784 + $0x58] sm:$0xf]
        %v4804 = vld [vmem:[%s4784 + $0x5c] sm:$0x1]
        %v4805 = vld [vmem:[%s4784 + $0x60] sm:$0xf]
        %v4806 = vld [vmem:[%s4784 + $0x64] sm:$0x1]
        %v4807 = vld [vmem:[%s4784 + $0x68] sm:$0xf]
        %v4808 = vld [vmem:[%s4784 + $0x6c] sm:$0x1]
        %v4809 = vld [vmem:[%s4784 + $0x70] sm:$0xf]
        %v4810 = vld [vmem:[%s4784 + $0x74] sm:$0x1]
        %v4811 = vld [vmem:[%s4784 + $0x78] sm:$0xf]
        %v4812 = vld [vmem:[%s4784 + $0x7c] sm:$0x1]
        %v4813 = vld [vmem:[%s4784 + $0x80] sm:$0xf]
        %v4814 = vld [vmem:[%s4784 + $0x84] sm:$0x1]
        %v4815 = vld [vmem:[%s4784 + $0x88] sm:$0xf]
        %v4816 = vld [vmem:[%s4784 + $0x8c] sm:$0x1]
        %v4817 = vld [vmem:[%s4784 + $0xa0] sm:$0xf]
        %v4818 = vld [vmem:[%s4784 + $0xa4] sm:$0x1]
        %v4819 = vld [vmem:[%s4784 + $0xa8] sm:$0xf]
        %v4820 = vld [vmem:[%s4784 + $0xac] sm:$0x1]
        %v4821 = vld [vmem:[%s4784 + $0xb0] sm:$0xf]
        %v4822 = vld [vmem:[%s4784 + $0xb4] sm:$0x1]
        %v4823 = vld [vmem:[%s4784 + $0xb8] sm:$0xf]
        %v4824 = vld [vmem:[%s4784 + $0xbc] sm:$0x1]
        %v4825 = vld [vmem:[%s4784 + $0xc0] sm:$0xf]
        %v4826 = vld [vmem:[%s4784 + $0xc4] sm:$0x1]
        %v4827 = vld [vmem:[%s4784 + $0xc8] sm:$0xf]
        %v4828 = vld [vmem:[%s4784 + $0xcc] sm:$0x1]
        %v4829 = vld [vmem:[%s4784 + $0xd0] sm:$0xf]
        %v4830 = vld [vmem:[%s4784 + $0xd4] sm:$0x1]
        %v4831 = vld [vmem:[%s4784 + $0xd8] sm:$0xf]
        %v4832 = vld [vmem:[%s4784 + $0xdc] sm:$0x1]
        %v4833 = vld [vmem:[%s4784 + $0xf0] sm:$0xf]
        %v4834 = vld [vmem:[%s4784 + $0xf4] sm:$0x1]
        %v4835 = vld [vmem:[%s4784 + $0xf8] sm:$0xf]
        %v4836 = vld [vmem:[%s4784 + $0xfc] sm:$0x1]
        %v4837 = vld [vmem:[%s4784 + $0x100] sm:$0xf]
        %v4838 = vld [vmem:[%s4784 + $0x104] sm:$0x1]
        %v4839 = vld [vmem:[%s4784 + $0x108] sm:$0xf]
        %v4840 = vld [vmem:[%s4784 + $0x10c] sm:$0x1]
        %v4841 = vld [vmem:[%s4784 + $0x110] sm:$0xf]
        %v4842 = vld [vmem:[%s4784 + $0x114] sm:$0x1]
        %v4843 = vld [vmem:[%s4784 + $0x118] sm:$0xf]
        %v4844 = vld [vmem:[%s4784 + $0x11c] sm:$0x1]
        %v4845 = vld [vmem:[%s4784 + $0x120] sm:$0xf]
        %v4846 = vld [vmem:[%s4784 + $0x124] sm:$0x1]
        %v4847 = vld [vmem:[%s4784 + $0x128] sm:$0xf]
        %v4848 = vld [vmem:[%s4784 + $0x12c] sm:$0x1]
        %v4913 = vunpack.c.l.b16 %v4785
        %v4914 = vunpack.c.l.b16 %v4786
        %v4915 = vunpack.c.l.b16 %v4787
        %v4916 = vunpack.c.l.b16 %v4788
        %v4917 = vunpack.c.l.b16 %v4789
        %v4918 = vunpack.c.l.b16 %v4790
        %v4919 = vunpack.c.l.b16 %v4791
        %v4920 = vunpack.c.l.b16 %v4792
        %v4921 = vunpack.c.l.b16 %v4793
        %v4922 = vunpack.c.l.b16 %v4794
        %v4923 = vunpack.c.l.b16 %v4795
        %v4924 = vunpack.c.l.b16 %v4796
        %v4925 = vunpack.c.l.b16 %v4797
        %v4926 = vunpack.c.l.b16 %v4798
        %v4927 = vunpack.c.l.b16 %v4799
        %v4928 = vunpack.c.l.b16 %v4800
        %v4929 = vunpack.c.l.b16 %v4801
        %v4930 = vunpack.c.l.b16 %v4802
        %v4931 = vunpack.c.l.b16 %v4803
        %v4932 = vunpack.c.l.b16 %v4804
        %v4933 = vunpack.c.l.b16 %v4805
        %v4934 = vunpack.c.l.b16 %v4806
        %v4935 = vunpack.c.l.b16 %v4807
        %v4936 = vunpack.c.l.b16 %v4808
        %v4937 = vunpack.c.l.b16 %v4809
        %v4938 = vunpack.c.l.b16 %v4810
        %v4939 = vunpack.c.l.b16 %v4811
        %v4940 = vunpack.c.l.b16 %v4812
        %v4941 = vunpack.c.l.b16 %v4813
        %v4942 = vunpack.c.l.b16 %v4814
        %v4943 = vunpack.c.l.b16 %v4815
        %v4944 = vunpack.c.l.b16 %v4816
        %v4945 = vunpack.c.l.b16 %v4817
        %v4946 = vunpack.c.l.b16 %v4818
        %v4947 = vunpack.c.l.b16 %v4819
        %v4948 = vunpack.c.l.b16 %v4820
        %v4949 = vunpack.c.l.b16 %v4821
        %v4950 = vunpack.c.l.b16 %v4822
        %v4951 = vunpack.c.l.b16 %v4823
        %v4952 = vunpack.c.l.b16 %v4824
        %v4953 = vunpack.c.l.b16 %v4825
        %v4954 = vunpack.c.l.b16 %v4826
        %v4955 = vunpack.c.l.b16 %v4827
        %v4956 = vunpack.c.l.b16 %v4828
        %v4957 = vunpack.c.l.b16 %v4829
        %v4958 = vunpack.c.l.b16 %v4830
        %v4959 = vunpack.c.l.b16 %v4831
        %v4960 = vunpack.c.l.b16 %v4832
        %v4961 = vunpack.c.l.b16 %v4833
        %v4962 = vunpack.c.l.b16 %v4834
        %v4963 = vunpack.c.l.b16 %v4835
        %v4964 = vunpack.c.l.b16 %v4836
        %v4965 = vunpack.c.l.b16 %v4837
        %v4966 = vunpack.c.l.b16 %v4838
        %v4967 = vunpack.c.l.b16 %v4839
        %v4968 = vunpack.c.l.b16 %v4840
        %v4969 = vunpack.c.l.b16 %v4841
        %v4970 = vunpack.c.l.b16 %v4842
        %v4971 = vunpack.c.l.b16 %v4843
        %v4972 = vunpack.c.l.b16 %v4844
        %v4973 = vunpack.c.l.b16 %v4845
        %v4974 = vunpack.c.l.b16 %v4846
        %v4975 = vunpack.c.l.b16 %v4847
        %v4976 = vunpack.c.l.b16 %v4848
        %v4977 = vpack.c.b16 %v4914, %v4913
        %v4978 = vpack.c.b16 %v4916, %v4915
        %v4979 = vpack.c.b16 %v4918, %v4917
        %v4980 = vpack.c.b16 %v4920, %v4919
        %v4981 = vpack.c.b16 %v4922, %v4921
        %v4982 = vpack.c.b16 %v4924, %v4923
        %v4983 = vpack.c.b16 %v4926, %v4925
        %v4984 = vpack.c.b16 %v4928, %v4927
        %v4985 = vpack.c.b16 %v4930, %v4929
        %v4986 = vpack.c.b16 %v4932, %v4931
        %v4987 = vpack.c.b16 %v4934, %v4933
        %v4988 = vpack.c.b16 %v4936, %v4935
        %v4989 = vpack.c.b16 %v4938, %v4937
        %v4990 = vpack.c.b16 %v4940, %v4939
        %v4991 = vpack.c.b16 %v4942, %v4941
        %v4992 = vpack.c.b16 %v4944, %v4943
        %v4993 = vpack.c.b16 %v4946, %v4945
        %v4994 = vpack.c.b16 %v4948, %v4947
        %v4995 = vpack.c.b16 %v4950, %v4949
        %v4996 = vpack.c.b16 %v4952, %v4951
        %v4997 = vpack.c.b16 %v4954, %v4953
        %v4998 = vpack.c.b16 %v4956, %v4955
        %v4999 = vpack.c.b16 %v4958, %v4957
        %v5000 = vpack.c.b16 %v4960, %v4959
        %v5001 = vpack.c.b16 %v4962, %v4961
        %v5002 = vpack.c.b16 %v4964, %v4963
        %v5003 = vpack.c.b16 %v4966, %v4965
        %v5004 = vpack.c.b16 %v4968, %v4967
        %v5005 = vpack.c.b16 %v4970, %v4969
        %v5006 = vpack.c.b16 %v4972, %v4971
        %v5007 = vpack.c.b16 %v4974, %v4973
        %v5008 = vpack.c.b16 %v4976, %v4975
        %v5010 = vshrl.u32 %v4977, 16
        %v5012 = vshll.u32 %v4977, 16
        %v5014 = vrot.slane %v5012, 1
        %v5015 = vor.u32 %v5010, %v5014
        %v5017 = vshrl.u32 %v4978, 16
        %v5019 = vshll.u32 %v4978, 16
        %v5021 = vrot.slane %v5019, 1
        %v5022 = vor.u32 %v5017, %v5021
        %v5024 = vshrl.u32 %v4979, 16
        %v5026 = vshll.u32 %v4979, 16
        %v5028 = vrot.slane %v5026, 1
        %v5029 = vor.u32 %v5024, %v5028
        %v5031 = vshrl.u32 %v4980, 16
        %v5033 = vshll.u32 %v4980, 16
        %v5035 = vrot.slane %v5033, 1
        %v5036 = vor.u32 %v5031, %v5035
        %v5038 = vshrl.u32 %v4981, 16
        %v5040 = vshll.u32 %v4981, 16
        %v5042 = vrot.slane %v5040, 1
        %v5043 = vor.u32 %v5038, %v5042
        %v5045 = vshrl.u32 %v4982, 16
        %v5047 = vshll.u32 %v4982, 16
        %v5049 = vrot.slane %v5047, 1
        %v5050 = vor.u32 %v5045, %v5049
        %v5052 = vshrl.u32 %v4983, 16
        %v5054 = vshll.u32 %v4983, 16
        %v5056 = vrot.slane %v5054, 1
        %v5057 = vor.u32 %v5052, %v5056
        %v5059 = vshrl.u32 %v4984, 16
        %v5061 = vshll.u32 %v4984, 16
        %v5063 = vrot.slane %v5061, 1
        %v5064 = vor.u32 %v5059, %v5063
        %v5066 = vshrl.u32 %v4985, 16
        %v5068 = vshll.u32 %v4985, 16
        %v5070 = vrot.slane %v5068, 1
        %v5071 = vor.u32 %v5066, %v5070
        %v5073 = vshrl.u32 %v4986, 16
        %v5075 = vshll.u32 %v4986, 16
        %v5077 = vrot.slane %v5075, 1
        %v5078 = vor.u32 %v5073, %v5077
        %v5080 = vshrl.u32 %v4987, 16
        %v5082 = vshll.u32 %v4987, 16
        %v5084 = vrot.slane %v5082, 1
        %v5085 = vor.u32 %v5080, %v5084
        %v5087 = vshrl.u32 %v4988, 16
        %v5089 = vshll.u32 %v4988, 16
        %v5091 = vrot.slane %v5089, 1
        %v5092 = vor.u32 %v5087, %v5091
        %v5094 = vshrl.u32 %v4989, 16
        %v5096 = vshll.u32 %v4989, 16
        %v5098 = vrot.slane %v5096, 1
        %v5099 = vor.u32 %v5094, %v5098
        %v5101 = vshrl.u32 %v4990, 16
        %v5103 = vshll.u32 %v4990, 16
        %v5105 = vrot.slane %v5103, 1
        %v5106 = vor.u32 %v5101, %v5105
        %v5108 = vshrl.u32 %v4991, 16
        %v5110 = vshll.u32 %v4991, 16
        %v5112 = vrot.slane %v5110, 1
        %v5113 = vor.u32 %v5108, %v5112
        %v5115 = vshrl.u32 %v4992, 16
        %v5117 = vshll.u32 %v4992, 16
        %v5119 = vrot.slane %v5117, 1
        %v5120 = vor.u32 %v5115, %v5119
        %v5122 = vshrl.u32 %v4993, 16
        %v5124 = vshll.u32 %v4993, 16
        %v5126 = vrot.slane %v5124, 1
        %v5127 = vor.u32 %v5122, %v5126
        %v5129 = vshrl.u32 %v4994, 16
        %v5131 = vshll.u32 %v4994, 16
        %v5133 = vrot.slane %v5131, 1
        %v5134 = vor.u32 %v5129, %v5133
        %v5136 = vshrl.u32 %v4995, 16
        %v5138 = vshll.u32 %v4995, 16
        %v5140 = vrot.slane %v5138, 1
        %v5141 = vor.u32 %v5136, %v5140
        %v5143 = vshrl.u32 %v4996, 16
        %v5145 = vshll.u32 %v4996, 16
        %v5147 = vrot.slane %v5145, 1
        %v5148 = vor.u32 %v5143, %v5147
        %v5150 = vshrl.u32 %v4997, 16
        %v5152 = vshll.u32 %v4997, 16
        %v5154 = vrot.slane %v5152, 1
        %v5155 = vor.u32 %v5150, %v5154
        %v5157 = vshrl.u32 %v4998, 16
        %v5159 = vshll.u32 %v4998, 16
        %v5161 = vrot.slane %v5159, 1
        %v5162 = vor.u32 %v5157, %v5161
        %v5164 = vshrl.u32 %v4999, 16
        %v5166 = vshll.u32 %v4999, 16
        %v5168 = vrot.slane %v5166, 1
        %v5169 = vor.u32 %v5164, %v5168
        %v5171 = vshrl.u32 %v5000, 16
        %v5173 = vshll.u32 %v5000, 16
        %v5175 = vrot.slane %v5173, 1
        %v5176 = vor.u32 %v5171, %v5175
        %v5178 = vshrl.u32 %v5001, 16
        %v5180 = vshll.u32 %v5001, 16
        %v5182 = vrot.slane %v5180, 1
        %v5183 = vor.u32 %v5178, %v5182
        %v5185 = vshrl.u32 %v5002, 16
        %v5187 = vshll.u32 %v5002, 16
        %v5189 = vrot.slane %v5187, 1
        %v5190 = vor.u32 %v5185, %v5189
        %v5192 = vshrl.u32 %v5003, 16
        %v5194 = vshll.u32 %v5003, 16
        %v5196 = vrot.slane %v5194, 1
        %v5197 = vor.u32 %v5192, %v5196
        %v5199 = vshrl.u32 %v5004, 16
        %v5201 = vshll.u32 %v5004, 16
        %v5203 = vrot.slane %v5201, 1
        %v5204 = vor.u32 %v5199, %v5203
        %v5206 = vshrl.u32 %v5005, 16
        %v5208 = vshll.u32 %v5005, 16
        %v5210 = vrot.slane %v5208, 1
        %v5211 = vor.u32 %v5206, %v5210
        %v5213 = vshrl.u32 %v5006, 16
        %v5215 = vshll.u32 %v5006, 16
        %v5217 = vrot.slane %v5215, 1
        %v5218 = vor.u32 %v5213, %v5217
        %v5220 = vshrl.u32 %v5007, 16
        %v5222 = vshll.u32 %v5007, 16
        %v5224 = vrot.slane %v5222, 1
        %v5225 = vor.u32 %v5220, %v5224
        %v5227 = vshrl.u32 %v5008, 16
        %v5229 = vshll.u32 %v5008, 16
        %v5231 = vrot.slane %v5229, 1
        %v5232 = vor.u32 %v5227, %v5231
        %5233 = vrot.lane.b32.xlu0 %v5015, 8
        %v5234 = vpop.permute.xlu0 %5233
        %5235 = vrot.lane.b32.xlu0 %v5022, 8
        %v5236 = vpop.permute.xlu0 %5235
        %5237 = vrot.lane.b32.xlu0 %v5029, 8
        %v5238 = vpop.permute.xlu0 %5237
        %5239 = vrot.lane.b32.xlu0 %v5036, 8
        %v5240 = vpop.permute.xlu0 %5239
        %5241 = vrot.lane.b32.xlu0 %v5043, 8
        %v5242 = vpop.permute.xlu0 %5241
        %5243 = vrot.lane.b32.xlu0 %v5050, 8
        %v5244 = vpop.permute.xlu0 %5243
        %5245 = vrot.lane.b32.xlu0 %v5057, 8
        %v5246 = vpop.permute.xlu0 %5245
        %5247 = vrot.lane.b32.xlu0 %v5064, 8
        %v5248 = vpop.permute.xlu0 %5247
        %5249 = vrot.lane.b32.xlu0 %v5071, 8
        %v5250 = vpop.permute.xlu0 %5249
        %5251 = vrot.lane.b32.xlu0 %v5078, 8
        %v5252 = vpop.permute.xlu0 %5251
        %5253 = vrot.lane.b32.xlu0 %v5085, 8
        %v5254 = vpop.permute.xlu0 %5253
        %5255 = vrot.lane.b32.xlu0 %v5092, 8
        %v5256 = vpop.permute.xlu0 %5255
        %5257 = vrot.lane.b32.xlu0 %v5099, 8
        %v5258 = vpop.permute.xlu0 %5257
        %5259 = vrot.lane.b32.xlu0 %v5106, 8
        %v5260 = vpop.permute.xlu0 %5259
        %5261 = vrot.lane.b32.xlu0 %v5113, 8
        %v5262 = vpop.permute.xlu0 %5261
        %5263 = vrot.lane.b32.xlu0 %v5120, 8
        %v5264 = vpop.permute.xlu0 %5263
        %5265 = vrot.lane.b32.xlu0 %v5127, 8
        %v5266 = vpop.permute.xlu0 %5265
        %5267 = vrot.lane.b32.xlu0 %v5134, 8
        %v5268 = vpop.permute.xlu0 %5267
        %5269 = vrot.lane.b32.xlu0 %v5141, 8
        %v5270 = vpop.permute.xlu0 %5269
        %5271 = vrot.lane.b32.xlu0 %v5148, 8
        %v5272 = vpop.permute.xlu0 %5271
        %5273 = vrot.lane.b32.xlu0 %v5155, 8
        %v5274 = vpop.permute.xlu0 %5273
        %5275 = vrot.lane.b32.xlu0 %v5162, 8
        %v5276 = vpop.permute.xlu0 %5275
        %5277 = vrot.lane.b32.xlu0 %v5169, 8
        %v5278 = vpop.permute.xlu0 %5277
        %5279 = vrot.lane.b32.xlu0 %v5176, 8
        %v5280 = vpop.permute.xlu0 %5279
        %5281 = vrot.lane.b32.xlu0 %v5183, 8
        %v5282 = vpop.permute.xlu0 %5281
        %5283 = vrot.lane.b32.xlu0 %v5190, 8
        %v5284 = vpop.permute.xlu0 %5283
        %5285 = vrot.lane.b32.xlu0 %v5197, 8
        %v5286 = vpop.permute.xlu0 %5285
        %5287 = vrot.lane.b32.xlu0 %v5204, 8
        %v5288 = vpop.permute.xlu0 %5287
        %5289 = vrot.lane.b32.xlu0 %v5211, 8
        %v5290 = vpop.permute.xlu0 %5289
        %5291 = vrot.lane.b32.xlu0 %v5218, 8
        %v5292 = vpop.permute.xlu0 %5291
        %5293 = vrot.lane.b32.xlu0 %v5225, 8
        %v5294 = vpop.permute.xlu0 %5293
        %5295 = vrot.lane.b32.xlu0 %v5232, 8
        %v5296 = vpop.permute.xlu0 %5295
        %v5297 = vrot.slane %v4977, 1
        %v5298 = vrot.slane %v4978, 1
        %v5299 = vrot.slane %v4979, 1
        %v5300 = vrot.slane %v4980, 1
        %v5301 = vrot.slane %v4981, 1
        %v5302 = vrot.slane %v4982, 1
        %v5303 = vrot.slane %v4983, 1
        %v5304 = vrot.slane %v4984, 1
        %v5305 = vrot.slane %v4985, 1
        %v5306 = vrot.slane %v4986, 1
        %v5307 = vrot.slane %v4987, 1
        %v5308 = vrot.slane %v4988, 1
        %v5309 = vrot.slane %v4989, 1
        %v5310 = vrot.slane %v4990, 1
        %v5311 = vrot.slane %v4991, 1
        %v5312 = vrot.slane %v4992, 1
        %v5313 = vrot.slane %v4993, 1
        %v5314 = vrot.slane %v4994, 1
        %v5315 = vrot.slane %v4995, 1
        %v5316 = vrot.slane %v4996, 1
        %v5317 = vrot.slane %v4997, 1
        %v5318 = vrot.slane %v4998, 1
        %v5319 = vrot.slane %v4999, 1
        %v5320 = vrot.slane %v5000, 1
        %v5321 = vrot.slane %v5001, 1
        %v5322 = vrot.slane %v5002, 1
        %v5323 = vrot.slane %v5003, 1
        %v5324 = vrot.slane %v5004, 1
        %v5325 = vrot.slane %v5005, 1
        %v5326 = vrot.slane %v5006, 1
        %v5327 = vrot.slane %v5007, 1
        %v5328 = vrot.slane %v5008, 1
        %5329 = vrot.lane.b32.xlu0 %v5297, 16
        %v5330 = vpop.permute.xlu0 %5329
        %5331 = vrot.lane.b32.xlu0 %v5298, 16
        %v5332 = vpop.permute.xlu0 %5331
        %5333 = vrot.lane.b32.xlu0 %v5299, 16
        %v5334 = vpop.permute.xlu0 %5333
        %5335 = vrot.lane.b32.xlu0 %v5300, 16
        %v5336 = vpop.permute.xlu0 %5335
        %5337 = vrot.lane.b32.xlu0 %v5301, 16
        %v5338 = vpop.permute.xlu0 %5337
        %5339 = vrot.lane.b32.xlu0 %v5302, 16
        %v5340 = vpop.permute.xlu0 %5339
        %5341 = vrot.lane.b32.xlu0 %v5303, 16
        %v5342 = vpop.permute.xlu0 %5341
        %5343 = vrot.lane.b32.xlu0 %v5304, 16
        %v5344 = vpop.permute.xlu0 %5343
        %5345 = vrot.lane.b32.xlu0 %v5305, 16
        %v5346 = vpop.permute.xlu0 %5345
        %5347 = vrot.lane.b32.xlu0 %v5306, 16
        %v5348 = vpop.permute.xlu0 %5347
        %5349 = vrot.lane.b32.xlu0 %v5307, 16
        %v5350 = vpop.permute.xlu0 %5349
        %5351 = vrot.lane.b32.xlu0 %v5308, 16
        %v5352 = vpop.permute.xlu0 %5351
        %5353 = vrot.lane.b32.xlu0 %v5309, 16
        %v5354 = vpop.permute.xlu0 %5353
        %5355 = vrot.lane.b32.xlu0 %v5310, 16
        %v5356 = vpop.permute.xlu0 %5355
        %5357 = vrot.lane.b32.xlu0 %v5311, 16
        %v5358 = vpop.permute.xlu0 %5357
        %5359 = vrot.lane.b32.xlu0 %v5312, 16
        %v5360 = vpop.permute.xlu0 %5359
        %5361 = vrot.lane.b32.xlu0 %v5313, 16
        %v5362 = vpop.permute.xlu0 %5361
        %5363 = vrot.lane.b32.xlu0 %v5314, 16
        %v5364 = vpop.permute.xlu0 %5363
        %5365 = vrot.lane.b32.xlu0 %v5315, 16
        %v5366 = vpop.permute.xlu0 %5365
        %5367 = vrot.lane.b32.xlu0 %v5316, 16
        %v5368 = vpop.permute.xlu0 %5367
        %5369 = vrot.lane.b32.xlu0 %v5317, 16
        %v5370 = vpop.permute.xlu0 %5369
        %5371 = vrot.lane.b32.xlu0 %v5318, 16
        %v5372 = vpop.permute.xlu0 %5371
        %5373 = vrot.lane.b32.xlu0 %v5319, 16
        %v5374 = vpop.permute.xlu0 %5373
        %5375 = vrot.lane.b32.xlu0 %v5320, 16
        %v5376 = vpop.permute.xlu0 %5375
        %5377 = vrot.lane.b32.xlu0 %v5321, 16
        %v5378 = vpop.permute.xlu0 %5377
        %5379 = vrot.lane.b32.xlu0 %v5322, 16
        %v5380 = vpop.permute.xlu0 %5379
        %5381 = vrot.lane.b32.xlu0 %v5323, 16
        %v5382 = vpop.permute.xlu0 %5381
        %5383 = vrot.lane.b32.xlu0 %v5324, 16
        %v5384 = vpop.permute.xlu0 %5383
        %5385 = vrot.lane.b32.xlu0 %v5325, 16
        %v5386 = vpop.permute.xlu0 %5385
        %5387 = vrot.lane.b32.xlu0 %v5326, 16
        %v5388 = vpop.permute.xlu0 %5387
        %5389 = vrot.lane.b32.xlu0 %v5327, 16
        %v5390 = vpop.permute.xlu0 %5389
        %5391 = vrot.lane.b32.xlu0 %v5328, 16
        %v5392 = vpop.permute.xlu0 %5391
        %v5395 = vsel %vm3243, %v4785, %v5234
        %v5398 = vsel %vm3243, %v4787, %v5236
        %v5401 = vsel %vm3243, %v4789, %v5238
        %v5404 = vsel %vm3243, %v4791, %v5240
        %v5407 = vsel %vm3243, %v4793, %v5242
        %v5410 = vsel %vm3243, %v4795, %v5244
        %v5413 = vsel %vm3243, %v4797, %v5246
        %v5416 = vsel %vm3243, %v4799, %v5248
        %v5419 = vsel %vm3243, %v4801, %v5250
        %v5422 = vsel %vm3243, %v4803, %v5252
        %v5425 = vsel %vm3243, %v4805, %v5254
        %v5428 = vsel %vm3243, %v4807, %v5256
        %v5431 = vsel %vm3243, %v4809, %v5258
        %v5434 = vsel %vm3243, %v4811, %v5260
        %v5437 = vsel %vm3243, %v4813, %v5262
        %v5440 = vsel %vm3243, %v4815, %v5264
        %v5443 = vsel %vm3243, %v4817, %v5266
        %v5446 = vsel %vm3243, %v4819, %v5268
        %v5449 = vsel %vm3243, %v4821, %v5270
        %v5452 = vsel %vm3243, %v4823, %v5272
        %v5455 = vsel %vm3243, %v4825, %v5274
        %v5458 = vsel %vm3243, %v4827, %v5276
        %v5461 = vsel %vm3243, %v4829, %v5278
        %v5464 = vsel %vm3243, %v4831, %v5280
        %v5467 = vsel %vm3243, %v4833, %v5282
        %v5470 = vsel %vm3243, %v4835, %v5284
        %v5473 = vsel %vm3243, %v4837, %v5286
        %v5476 = vsel %vm3243, %v4839, %v5288
        %v5479 = vsel %vm3243, %v4841, %v5290
        %v5482 = vsel %vm3243, %v4843, %v5292
        %v5485 = vsel %vm3243, %v4845, %v5294
        %v5488 = vsel %vm3243, %v4847, %v5296
        %v5490 = vsel %vm1134, %v5395, %v5330
        %v5492 = vsel %vm1134, %v5398, %v5332
        %v5494 = vsel %vm1134, %v5401, %v5334
        %v5496 = vsel %vm1134, %v5404, %v5336
        %v5498 = vsel %vm1134, %v5407, %v5338
        %v5500 = vsel %vm1134, %v5410, %v5340
        %v5502 = vsel %vm1134, %v5413, %v5342
        %v5504 = vsel %vm1134, %v5416, %v5344
        %v5506 = vsel %vm1134, %v5419, %v5346
        %v5508 = vsel %vm1134, %v5422, %v5348
        %v5510 = vsel %vm1134, %v5425, %v5350
        %v5512 = vsel %vm1134, %v5428, %v5352
        %v5514 = vsel %vm1134, %v5431, %v5354
        %v5516 = vsel %vm1134, %v5434, %v5356
        %v5518 = vsel %vm1134, %v5437, %v5358
        %v5520 = vsel %vm1134, %v5440, %v5360
        %v5522 = vsel %vm1134, %v5443, %v5362
        %v5524 = vsel %vm1134, %v5446, %v5364
        %v5526 = vsel %vm1134, %v5449, %v5366
        %v5528 = vsel %vm1134, %v5452, %v5368
        %v5530 = vsel %vm1134, %v5455, %v5370
        %v5532 = vsel %vm1134, %v5458, %v5372
        %v5534 = vsel %vm1134, %v5461, %v5374
        %v5536 = vsel %vm1134, %v5464, %v5376
        %v5538 = vsel %vm1134, %v5467, %v5378
        %v5540 = vsel %vm1134, %v5470, %v5380
        %v5542 = vsel %vm1134, %v5473, %v5382
        %v5544 = vsel %vm1134, %v5476, %v5384
        %v5546 = vsel %vm1134, %v5479, %v5386
        %v5548 = vsel %vm1134, %v5482, %v5388
        %v5550 = vsel %vm1134, %v5485, %v5390
        %v5552 = vsel %vm1134, %v5488, %v5392
        %s5553 = scalar_lea.vmem %s5, 24
        %v5554 = vld [vmem:[%s5553] sm:$0xf]
        %v5555 = vld [vmem:[%s5553 + $0x4] sm:$0xf]
        %v5556 = vld [vmem:[%s5553 + $0x8] sm:$0xf]
        %v5589 = vunpack.c.l.b16 %v5490
        %v5590 = vunpack.c.l.b16 %v5492
        %v5591 = vunpack.c.l.b16 %v5494
        %v5592 = vunpack.c.l.b16 %v5496
        %v5593 = vunpack.c.l.b16 %v5498
        %v5594 = vunpack.c.l.b16 %v5500
        %v5595 = vunpack.c.l.b16 %v5502
        %v5596 = vunpack.c.l.b16 %v5504
        %v5597 = vunpack.c.l.b16 %v5506
        %v5598 = vunpack.c.l.b16 %v5508
        %v5599 = vunpack.c.l.b16 %v5510
        %v5600 = vunpack.c.l.b16 %v5512
        %v5601 = vunpack.c.l.b16 %v5514
        %v5602 = vunpack.c.l.b16 %v5516
        %v5603 = vunpack.c.l.b16 %v5518
        %v5604 = vunpack.c.l.b16 %v5520
        %v5605 = vunpack.c.l.b16 %v5522
        %v5606 = vunpack.c.l.b16 %v5524
        %v5607 = vunpack.c.l.b16 %v5526
        %v5608 = vunpack.c.l.b16 %v5528
        %v5609 = vunpack.c.l.b16 %v5530
        %v5610 = vunpack.c.l.b16 %v5532
        %v5611 = vunpack.c.l.b16 %v5534
        %v5612 = vunpack.c.l.b16 %v5536
        %v5613 = vunpack.c.l.b16 %v5538
        %v5614 = vunpack.c.l.b16 %v5540
        %v5615 = vunpack.c.l.b16 %v5542
        %v5616 = vunpack.c.l.b16 %v5544
        %v5617 = vunpack.c.l.b16 %v5546
        %v5618 = vunpack.c.l.b16 %v5548
        %v5619 = vunpack.c.l.b16 %v5550
        %v5620 = vunpack.c.l.b16 %v5552
        %v5621 = vpack.c.b16 %v5590, %v5589
        %v5622 = vpack.c.b16 %v5592, %v5591
        %v5623 = vpack.c.b16 %v5594, %v5593
        %v5624 = vpack.c.b16 %v5596, %v5595
        %v5625 = vpack.c.b16 %v5598, %v5597
        %v5626 = vpack.c.b16 %v5600, %v5599
        %v5627 = vpack.c.b16 %v5602, %v5601
        %v5628 = vpack.c.b16 %v5604, %v5603
        %v5629 = vpack.c.b16 %v5606, %v5605
        %v5630 = vpack.c.b16 %v5608, %v5607
        %v5631 = vpack.c.b16 %v5610, %v5609
        %v5632 = vpack.c.b16 %v5612, %v5611
        %v5633 = vpack.c.b16 %v5614, %v5613
        %v5634 = vpack.c.b16 %v5616, %v5615
        %v5635 = vpack.c.b16 %v5618, %v5617
        %v5636 = vpack.c.b16 %v5620, %v5619
        %v5640 = vunpack.c.l.b16 %v5554
        %v5641 = vunpack.c.l.b16 %v5555
        %v5642 = vunpack.c.l.b16 %v5556
        %v5643 = vpack.c.b16 %v5641, %v5640
        %v5644 = vpack.c.b16 %v5642, %v5642
        %v5647 = vsel %vm4269, %v5621, 0
        %v5650 = vsel %vm4269, %v5622, 0
        %v5653 = vsel %vm4269, %v5623, 0
        %v5656 = vsel %vm4269, %v5624, 0
        %v5659 = vsel %vm4269, %v5625, 0
        %v5662 = vsel %vm4269, %v5626, 0
        %v5665 = vsel %vm4269, %v5627, 0
        %v5668 = vsel %vm4269, %v5628, 0
        %v5671 = vsel %vm4269, %v5629, 0
        %v5674 = vsel %vm4269, %v5630, 0
        %v5677 = vsel %vm4269, %v5631, 0
        %v5680 = vsel %vm4269, %v5632, 0
        %v5683 = vsel %vm4269, %v5633, 0
        %v5686 = vsel %vm4269, %v5634, 0
        %v5689 = vsel %vm4269, %v5635, 0
        %v5692 = vsel %vm4269, %v5636, 0
        %v5695 = vsel %vm4318, %v5644, 0
        %5697 = vmatprep.subr.bf16.mxu0 0
        %5698 = vmatpush1.bf16.msra.mxu0 %v5643
        %5699 = vmatprep.subr.bf16.mxu0 0
        %5700 = vmatpush1.bf16.msra.mxu0 %v5695
        %5701 = vmatprep.subr.bf16.mxu0 0
        %5702 = vmatpush1.bf16.msra.mxu0 0
        %5703 = vmatprep.subr.bf16.mxu0 0
        %5704 = vmatpush1.bf16.msra.mxu0 0
        %5705 = vmatprep.subr.bf16.mxu0 0
        %5706 = vmatpush1.bf16.msra.mxu0 0
        %5707 = vmatprep.subr.bf16.mxu0 0
        %5708 = vmatpush1.bf16.msra.mxu0 0
        %5709 = vmatprep.subr.bf16.mxu0 0
        %5710 = vmatpush1.bf16.msra.mxu0 0
        %5711 = vmatprep.subr.bf16.mxu0 0
        %5712 = vmatpush1.bf16.msra.mxu0 0
        %5713 = vmatprep.subr.bf16.mxu0 0
        %5714 = vmatpush1.bf16.msra.mxu0 0
        %5715 = vmatprep.subr.bf16.mxu0 0
        %5716 = vmatpush1.bf16.msra.mxu0 0
        %5717 = vmatprep.subr.bf16.mxu0 0
        %5718 = vmatpush1.bf16.msra.mxu0 0
        %5719 = vmatprep.subr.bf16.mxu0 0
        %5720 = vmatpush1.bf16.msra.mxu0 0
        %5721 = vmatprep.subr.bf16.mxu0 0
        %5722 = vmatpush1.bf16.msra.mxu0 0
        %5723 = vmatprep.subr.bf16.mxu0 0
        %5724 = vmatpush1.bf16.msra.mxu0 0
        %5725 = vmatprep.subr.bf16.mxu0 0
        %5726 = vmatpush1.bf16.msra.mxu0 0
        %5727 = vmatprep.subr.bf16.mxu0 0
        %5728 = vmatpush1.bf16.msra.mxu0 0
        %5729 = vmatprep.mubr.bf16.mxu0 0
        %5730 = vmatmul.mubr.bf16.gmra.mrb[0].mxu0 %v5647
        %v5731 = vpop.f32.mrb[0].mxu0
        %v5732 = vadd.f32 0.0, %v5731
        %v5733 = vpop.f32.mrb[0].mxu0
        %v5734 = vpop.f32.mrb[0].mxu0
        %v5735 = vadd.f32 0.0, %v5734
        %v5736 = vpop.f32.mrb[0].mxu0
        %5737 = vmatprep.mubr.bf16.mxu0 0
        %5738 = vmatmul.mubr.bf16.gmra.mrb[0].mxu0 %v5650
        %v5739 = vpop.f32.mrb[0].mxu0
        %v5740 = vadd.f32 0.0, %v5739
        %v5741 = vpop.f32.mrb[0].mxu0
        %v5742 = vpop.f32.mrb[0].mxu0
        %v5743 = vadd.f32 0.0, %v5742
        %v5744 = vpop.f32.mrb[0].mxu0
        %5745 = vmatprep.mubr.bf16.mxu0 0
        %5746 = vmatmul.mubr.bf16.gmra.mrb[0].mxu0 %v5653
        %v5747 = vpop.f32.mrb[0].mxu0
        %v5748 = vadd.f32 0.0, %v5747
        %v5749 = vpop.f32.mrb[0].mxu0
        %v5750 = vpop.f32.mrb[0].mxu0
        %v5751 = vadd.f32 0.0, %v5750
        %v5752 = vpop.f32.mrb[0].mxu0
        %5753 = vmatprep.mubr.bf16.mxu0 0
        %5754 = vmatmul.mubr.bf16.gmra.mrb[0].mxu0 %v5656
        %v5755 = vpop.f32.mrb[0].mxu0
        %v5756 = vadd.f32 0.0, %v5755
        %v5757 = vpop.f32.mrb[0].mxu0
        %v5758 = vpop.f32.mrb[0].mxu0
        %v5759 = vadd.f32 0.0, %v5758
        %v5760 = vpop.f32.mrb[0].mxu0
        %5761 = vmatprep.mubr.bf16.mxu0 0
        %5762 = vmatmul.mubr.bf16.gmra.mrb[0].mxu0 %v5659
        %v5763 = vpop.f32.mrb[0].mxu0
        %v5764 = vadd.f32 0.0, %v5763
        %v5765 = vpop.f32.mrb[0].mxu0
        %v5766 = vpop.f32.mrb[0].mxu0
        %v5767 = vadd.f32 0.0, %v5766
        %v5768 = vpop.f32.mrb[0].mxu0
        %5769 = vmatprep.mubr.bf16.mxu0 0
        %5770 = vmatmul.mubr.bf16.gmra.mrb[0].mxu0 %v5662
        %v5771 = vpop.f32.mrb[0].mxu0
        %v5772 = vadd.f32 0.0, %v5771
        %v5773 = vpop.f32.mrb[0].mxu0
        %v5774 = vpop.f32.mrb[0].mxu0
        %v5775 = vadd.f32 0.0, %v5774
        %v5776 = vpop.f32.mrb[0].mxu0
        %5777 = vmatprep.mubr.bf16.mxu0 0
        %5778 = vmatmul.mubr.bf16.gmra.mrb[0].mxu0 %v5665
        %v5779 = vpop.f32.mrb[0].mxu0
        %v5780 = vadd.f32 0.0, %v5779
        %v5781 = vpop.f32.mrb[0].mxu0
        %v5782 = vpop.f32.mrb[0].mxu0
        %v5783 = vadd.f32 0.0, %v5782
        %v5784 = vpop.f32.mrb[0].mxu0
        %5785 = vmatprep.mubr.bf16.mxu0 0
        %5786 = vmatmul.mubr.bf16.gmra.mrb[0].mxu0 %v5668
        %v5787 = vpop.f32.mrb[0].mxu0
        %v5788 = vadd.f32 0.0, %v5787
        %v5789 = vpop.f32.mrb[0].mxu0
        %v5790 = vpop.f32.mrb[0].mxu0
        %v5791 = vadd.f32 0.0, %v5790
        %v5792 = vpop.f32.mrb[0].mxu0
        %5793 = vmatprep.mubr.bf16.mxu0 0
        %5794 = vmatmul.mubr.bf16.gmra.mrb[0].mxu0 %v5671
        %v5795 = vpop.f32.mrb[0].mxu0
        %v5796 = vadd.f32 0.0, %v5795
        %v5797 = vpop.f32.mrb[0].mxu0
        %v5798 = vpop.f32.mrb[0].mxu0
        %v5799 = vadd.f32 0.0, %v5798
        %v5800 = vpop.f32.mrb[0].mxu0
        %5801 = vmatprep.mubr.bf16.mxu0 0
        %5802 = vmatmul.mubr.bf16.gmra.mrb[0].mxu0 %v5674
        %v5803 = vpop.f32.mrb[0].mxu0
        %v5804 = vadd.f32 0.0, %v5803
        %v5805 = vpop.f32.mrb[0].mxu0
        %v5806 = vpop.f32.mrb[0].mxu0
        %v5807 = vadd.f32 0.0, %v5806
        %v5808 = vpop.f32.mrb[0].mxu0
        %5809 = vmatprep.mubr.bf16.mxu0 0
        %5810 = vmatmul.mubr.bf16.gmra.mrb[0].mxu0 %v5677
        %v5811 = vpop.f32.mrb[0].mxu0
        %v5812 = vadd.f32 0.0, %v5811
        %v5813 = vpop.f32.mrb[0].mxu0
        %v5814 = vpop.f32.mrb[0].mxu0
        %v5815 = vadd.f32 0.0, %v5814
        %v5816 = vpop.f32.mrb[0].mxu0
        %5817 = vmatprep.mubr.bf16.mxu0 0
        %5818 = vmatmul.mubr.bf16.gmra.mrb[0].mxu0 %v5680
        %v5819 = vpop.f32.mrb[0].mxu0
        %v5820 = vadd.f32 0.0, %v5819
        %v5821 = vpop.f32.mrb[0].mxu0
        %v5822 = vpop.f32.mrb[0].mxu0
        %v5823 = vadd.f32 0.0, %v5822
        %v5824 = vpop.f32.mrb[0].mxu0
        %5825 = vmatprep.mubr.bf16.mxu0 0
        %5826 = vmatmul.mubr.bf16.gmra.mrb[0].mxu0 %v5683
        %v5827 = vpop.f32.mrb[0].mxu0
        %v5828 = vadd.f32 0.0, %v5827
        %v5829 = vpop.f32.mrb[0].mxu0
        %v5830 = vpop.f32.mrb[0].mxu0
        %v5831 = vadd.f32 0.0, %v5830
        %v5832 = vpop.f32.mrb[0].mxu0
        %5833 = vmatprep.mubr.bf16.mxu0 0
        %5834 = vmatmul.mubr.bf16.gmra.mrb[0].mxu0 %v5686
        %v5835 = vpop.f32.mrb[0].mxu0
        %v5836 = vadd.f32 0.0, %v5835
        %v5837 = vpop.f32.mrb[0].mxu0
        %v5838 = vpop.f32.mrb[0].mxu0
        %v5839 = vadd.f32 0.0, %v5838
        %v5840 = vpop.f32.mrb[0].mxu0
        %5841 = vmatprep.mubr.bf16.mxu0 0
        %5842 = vmatmul.mubr.bf16.gmra.mrb[0].mxu0 %v5689
        %v5843 = vpop.f32.mrb[0].mxu0
        %v5844 = vadd.f32 0.0, %v5843
        %v5845 = vpop.f32.mrb[0].mxu0
        %v5846 = vpop.f32.mrb[0].mxu0
        %v5847 = vadd.f32 0.0, %v5846
        %v5848 = vpop.f32.mrb[0].mxu0
        %5849 = vmatprep.mubr.bf16.mxu0 0
        %5850 = vmatmul.mubr.bf16.gmra.mrb[0].mxu0 %v5692
        %v5851 = vpop.f32.mrb[0].mxu0
        %v5852 = vadd.f32 0.0, %v5851
        %v5853 = vpop.f32.mrb[0].mxu0
        %v5854 = vpop.f32.mrb[0].mxu0
        %v5855 = vadd.f32 0.0, %v5854
        %v5856 = vpop.f32.mrb[0].mxu0
        %5857 = vdwg.mxu0
        %v5858 = vadd.f32 %v4658, %v5732
        %v5859 = vadd.f32 %v4661, %v5735
        %v5860 = vadd.f32 %v4666, %v5740
        %v5861 = vadd.f32 %v4669, %v5743
        %v5862 = vadd.f32 %v4674, %v5748
        %v5863 = vadd.f32 %v4677, %v5751
        %v5864 = vadd.f32 %v4682, %v5756
        %v5865 = vadd.f32 %v4685, %v5759
        %v5866 = vadd.f32 %v4690, %v5764
        %v5867 = vadd.f32 %v4693, %v5767
        %v5868 = vadd.f32 %v4698, %v5772
        %v5869 = vadd.f32 %v4701, %v5775
        %v5870 = vadd.f32 %v4706, %v5780
        %v5871 = vadd.f32 %v4709, %v5783
        %v5872 = vadd.f32 %v4714, %v5788
        %v5873 = vadd.f32 %v4717, %v5791
        %v5874 = vadd.f32 %v4722, %v5796
        %v5875 = vadd.f32 %v4725, %v5799
        %v5876 = vadd.f32 %v4730, %v5804
        %v5877 = vadd.f32 %v4733, %v5807
        %v5878 = vadd.f32 %v4738, %v5812
        %v5879 = vadd.f32 %v4741, %v5815
        %v5880 = vadd.f32 %v4746, %v5820
        %v5881 = vadd.f32 %v4749, %v5823
        %v5882 = vadd.f32 %v4754, %v5828
        %v5883 = vadd.f32 %v4757, %v5831
        %v5884 = vadd.f32 %v4762, %v5836
        %v5885 = vadd.f32 %v4765, %v5839
        %v5886 = vadd.f32 %v4770, %v5844
        %v5887 = vadd.f32 %v4773, %v5847
        %v5888 = vadd.f32 %v4778, %v5852
        %v5889 = vadd.f32 %v4781, %v5855
        %s5890 = scalar_lea.vmem [#allocation2], 80
        %v5891 = vld [vmem:[%s5890] sm:$0xf]
        %v5892 = vld [vmem:[%s5890 + $0x4] sm:$0x1]
        %v5893 = vld [vmem:[%s5890 + $0x8] sm:$0xf]
        %v5894 = vld [vmem:[%s5890 + $0xc] sm:$0x1]
        %v5895 = vld [vmem:[%s5890 + $0x10] sm:$0xf]
        %v5896 = vld [vmem:[%s5890 + $0x14] sm:$0x1]
        %v5897 = vld [vmem:[%s5890 + $0x18] sm:$0xf]
        %v5898 = vld [vmem:[%s5890 + $0x1c] sm:$0x1]
        %v5899 = vld [vmem:[%s5890 + $0x20] sm:$0xf]
        %v5900 = vld [vmem:[%s5890 + $0x24] sm:$0x1]
        %v5901 = vld [vmem:[%s5890 + $0x28] sm:$0xf]
        %v5902 = vld [vmem:[%s5890 + $0x2c] sm:$0x1]
        %v5903 = vld [vmem:[%s5890 + $0x30] sm:$0xf]
        %v5904 = vld [vmem:[%s5890 + $0x34] sm:$0x1]
        %v5905 = vld [vmem:[%s5890 + $0x38] sm:$0xf]
        %v5906 = vld [vmem:[%s5890 + $0x3c] sm:$0x1]
        %v5907 = vld [vmem:[%s5890 + $0x50] sm:$0xf]
        %v5908 = vld [vmem:[%s5890 + $0x54] sm:$0x1]
        %v5909 = vld [vmem:[%s5890 + $0x58] sm:$0xf]
        %v5910 = vld [vmem:[%s5890 + $0x5c] sm:$0x1]
        %v5911 = vld [vmem:[%s5890 + $0x60] sm:$0xf]
        %v5912 = vld [vmem:[%s5890 + $0x64] sm:$0x1]
        %v5913 = vld [vmem:[%s5890 + $0x68] sm:$0xf]
        %v5914 = vld [vmem:[%s5890 + $0x6c] sm:$0x1]
        %v5915 = vld [vmem:[%s5890 + $0x70] sm:$0xf]
        %v5916 = vld [vmem:[%s5890 + $0x74] sm:$0x1]
        %v5917 = vld [vmem:[%s5890 + $0x78] sm:$0xf]
        %v5918 = vld [vmem:[%s5890 + $0x7c] sm:$0x1]
        %v5919 = vld [vmem:[%s5890 + $0x80] sm:$0xf]
        %v5920 = vld [vmem:[%s5890 + $0x84] sm:$0x1]
        %v5921 = vld [vmem:[%s5890 + $0x88] sm:$0xf]
        %v5922 = vld [vmem:[%s5890 + $0x8c] sm:$0x1]
        %v5923 = vld [vmem:[%s5890 + $0xa0] sm:$0xf]
        %v5924 = vld [vmem:[%s5890 + $0xa4] sm:$0x1]
        %v5925 = vld [vmem:[%s5890 + $0xa8] sm:$0xf]
        %v5926 = vld [vmem:[%s5890 + $0xac] sm:$0x1]
        %v5927 = vld [vmem:[%s5890 + $0xb0] sm:$0xf]
        %v5928 = vld [vmem:[%s5890 + $0xb4] sm:$0x1]
        %v5929 = vld [vmem:[%s5890 + $0xb8] sm:$0xf]
        %v5930 = vld [vmem:[%s5890 + $0xbc] sm:$0x1]
        %v5931 = vld [vmem:[%s5890 + $0xc0] sm:$0xf]
        %v5932 = vld [vmem:[%s5890 + $0xc4] sm:$0x1]
        %v5933 = vld [vmem:[%s5890 + $0xc8] sm:$0xf]
        %v5934 = vld [vmem:[%s5890 + $0xcc] sm:$0x1]
        %v5935 = vld [vmem:[%s5890 + $0xd0] sm:$0xf]
        %v5936 = vld [vmem:[%s5890 + $0xd4] sm:$0x1]
        %v5937 = vld [vmem:[%s5890 + $0xd8] sm:$0xf]
        %v5938 = vld [vmem:[%s5890 + $0xdc] sm:$0x1]
        %v5939 = vld [vmem:[%s5890 + $0xf0] sm:$0xf]
        %v5940 = vld [vmem:[%s5890 + $0xf4] sm:$0x1]
        %v5941 = vld [vmem:[%s5890 + $0xf8] sm:$0xf]
        %v5942 = vld [vmem:[%s5890 + $0xfc] sm:$0x1]
        %v5943 = vld [vmem:[%s5890 + $0x100] sm:$0xf]
        %v5944 = vld [vmem:[%s5890 + $0x104] sm:$0x1]
        %v5945 = vld [vmem:[%s5890 + $0x108] sm:$0xf]
        %v5946 = vld [vmem:[%s5890 + $0x10c] sm:$0x1]
        %v5947 = vld [vmem:[%s5890 + $0x110] sm:$0xf]
        %v5948 = vld [vmem:[%s5890 + $0x114] sm:$0x1]
        %v5949 = vld [vmem:[%s5890 + $0x118] sm:$0xf]
        %v5950 = vld [vmem:[%s5890 + $0x11c] sm:$0x1]
        %v5951 = vld [vmem:[%s5890 + $0x120] sm:$0xf]
        %v5952 = vld [vmem:[%s5890 + $0x124] sm:$0x1]
        %v5953 = vld [vmem:[%s5890 + $0x128] sm:$0xf]
        %v5954 = vld [vmem:[%s5890 + $0x12c] sm:$0x1]
        %v6019 = vunpack.c.l.b16 %v5891
        %v6020 = vunpack.c.l.b16 %v5892
        %v6021 = vunpack.c.l.b16 %v5893
        %v6022 = vunpack.c.l.b16 %v5894
        %v6023 = vunpack.c.l.b16 %v5895
        %v6024 = vunpack.c.l.b16 %v5896
        %v6025 = vunpack.c.l.b16 %v5897
        %v6026 = vunpack.c.l.b16 %v5898
        %v6027 = vunpack.c.l.b16 %v5899
        %v6028 = vunpack.c.l.b16 %v5900
        %v6029 = vunpack.c.l.b16 %v5901
        %v6030 = vunpack.c.l.b16 %v5902
        %v6031 = vunpack.c.l.b16 %v5903
        %v6032 = vunpack.c.l.b16 %v5904
        %v6033 = vunpack.c.l.b16 %v5905
        %v6034 = vunpack.c.l.b16 %v5906
        %v6035 = vunpack.c.l.b16 %v5907
        %v6036 = vunpack.c.l.b16 %v5908
        %v6037 = vunpack.c.l.b16 %v5909
        %v6038 = vunpack.c.l.b16 %v5910
        %v6039 = vunpack.c.l.b16 %v5911
        %v6040 = vunpack.c.l.b16 %v5912
        %v6041 = vunpack.c.l.b16 %v5913
        %v6042 = vunpack.c.l.b16 %v5914
        %v6043 = vunpack.c.l.b16 %v5915
        %v6044 = vunpack.c.l.b16 %v5916
        %v6045 = vunpack.c.l.b16 %v5917
        %v6046 = vunpack.c.l.b16 %v5918
        %v6047 = vunpack.c.l.b16 %v5919
        %v6048 = vunpack.c.l.b16 %v5920
        %v6049 = vunpack.c.l.b16 %v5921
        %v6050 = vunpack.c.l.b16 %v5922
        %v6051 = vunpack.c.l.b16 %v5923
        %v6052 = vunpack.c.l.b16 %v5924
        %v6053 = vunpack.c.l.b16 %v5925
        %v6054 = vunpack.c.l.b16 %v5926
        %v6055 = vunpack.c.l.b16 %v5927
        %v6056 = vunpack.c.l.b16 %v5928
        %v6057 = vunpack.c.l.b16 %v5929
        %v6058 = vunpack.c.l.b16 %v5930
        %v6059 = vunpack.c.l.b16 %v5931
        %v6060 = vunpack.c.l.b16 %v5932
        %v6061 = vunpack.c.l.b16 %v5933
        %v6062 = vunpack.c.l.b16 %v5934
        %v6063 = vunpack.c.l.b16 %v5935
        %v6064 = vunpack.c.l.b16 %v5936
        %v6065 = vunpack.c.l.b16 %v5937
        %v6066 = vunpack.c.l.b16 %v5938
        %v6067 = vunpack.c.l.b16 %v5939
        %v6068 = vunpack.c.l.b16 %v5940
        %v6069 = vunpack.c.l.b16 %v5941
        %v6070 = vunpack.c.l.b16 %v5942
        %v6071 = vunpack.c.l.b16 %v5943
        %v6072 = vunpack.c.l.b16 %v5944
        %v6073 = vunpack.c.l.b16 %v5945
        %v6074 = vunpack.c.l.b16 %v5946
        %v6075 = vunpack.c.l.b16 %v5947
        %v6076 = vunpack.c.l.b16 %v5948
        %v6077 = vunpack.c.l.b16 %v5949
        %v6078 = vunpack.c.l.b16 %v5950
        %v6079 = vunpack.c.l.b16 %v5951
        %v6080 = vunpack.c.l.b16 %v5952
        %v6081 = vunpack.c.l.b16 %v5953
        %v6082 = vunpack.c.l.b16 %v5954
        %v6083 = vpack.c.b16 %v6020, %v6019
        %v6084 = vpack.c.b16 %v6022, %v6021
        %v6085 = vpack.c.b16 %v6024, %v6023
        %v6086 = vpack.c.b16 %v6026, %v6025
        %v6087 = vpack.c.b16 %v6028, %v6027
        %v6088 = vpack.c.b16 %v6030, %v6029
        %v6089 = vpack.c.b16 %v6032, %v6031
        %v6090 = vpack.c.b16 %v6034, %v6033
        %v6091 = vpack.c.b16 %v6036, %v6035
        %v6092 = vpack.c.b16 %v6038, %v6037
        %v6093 = vpack.c.b16 %v6040, %v6039
        %v6094 = vpack.c.b16 %v6042, %v6041
        %v6095 = vpack.c.b16 %v6044, %v6043
        %v6096 = vpack.c.b16 %v6046, %v6045
        %v6097 = vpack.c.b16 %v6048, %v6047
        %v6098 = vpack.c.b16 %v6050, %v6049
        %v6099 = vpack.c.b16 %v6052, %v6051
        %v6100 = vpack.c.b16 %v6054, %v6053
        %v6101 = vpack.c.b16 %v6056, %v6055
        %v6102 = vpack.c.b16 %v6058, %v6057
        %v6103 = vpack.c.b16 %v6060, %v6059
        %v6104 = vpack.c.b16 %v6062, %v6061
        %v6105 = vpack.c.b16 %v6064, %v6063
        %v6106 = vpack.c.b16 %v6066, %v6065
        %v6107 = vpack.c.b16 %v6068, %v6067
        %v6108 = vpack.c.b16 %v6070, %v6069
        %v6109 = vpack.c.b16 %v6072, %v6071
        %v6110 = vpack.c.b16 %v6074, %v6073
        %v6111 = vpack.c.b16 %v6076, %v6075
        %v6112 = vpack.c.b16 %v6078, %v6077
        %v6113 = vpack.c.b16 %v6080, %v6079
        %v6114 = vpack.c.b16 %v6082, %v6081
        %v6116 = vshrl.u32 %v6083, 16
        %v6118 = vshll.u32 %v6083, 16
        %v6120 = vrot.slane %v6118, 1
        %v6121 = vor.u32 %v6116, %v6120
        %v6123 = vshrl.u32 %v6084, 16
        %v6125 = vshll.u32 %v6084, 16
        %v6127 = vrot.slane %v6125, 1
        %v6128 = vor.u32 %v6123, %v6127
        %v6130 = vshrl.u32 %v6085, 16
        %v6132 = vshll.u32 %v6085, 16
        %v6134 = vrot.slane %v6132, 1
        %v6135 = vor.u32 %v6130, %v6134
        %v6137 = vshrl.u32 %v6086, 16
        %v6139 = vshll.u32 %v6086, 16
        %v6141 = vrot.slane %v6139, 1
        %v6142 = vor.u32 %v6137, %v6141
        %v6144 = vshrl.u32 %v6087, 16
        %v6146 = vshll.u32 %v6087, 16
        %v6148 = vrot.slane %v6146, 1
        %v6149 = vor.u32 %v6144, %v6148
        %v6151 = vshrl.u32 %v6088, 16
        %v6153 = vshll.u32 %v6088, 16
        %v6155 = vrot.slane %v6153, 1
        %v6156 = vor.u32 %v6151, %v6155
        %v6158 = vshrl.u32 %v6089, 16
        %v6160 = vshll.u32 %v6089, 16
        %v6162 = vrot.slane %v6160, 1
        %v6163 = vor.u32 %v6158, %v6162
        %v6165 = vshrl.u32 %v6090, 16
        %v6167 = vshll.u32 %v6090, 16
        %v6169 = vrot.slane %v6167, 1
        %v6170 = vor.u32 %v6165, %v6169
        %v6172 = vshrl.u32 %v6091, 16
        %v6174 = vshll.u32 %v6091, 16
        %v6176 = vrot.slane %v6174, 1
        %v6177 = vor.u32 %v6172, %v6176
        %v6179 = vshrl.u32 %v6092, 16
        %v6181 = vshll.u32 %v6092, 16
        %v6183 = vrot.slane %v6181, 1
        %v6184 = vor.u32 %v6179, %v6183
        %v6186 = vshrl.u32 %v6093, 16
        %v6188 = vshll.u32 %v6093, 16
        %v6190 = vrot.slane %v6188, 1
        %v6191 = vor.u32 %v6186, %v6190
        %v6193 = vshrl.u32 %v6094, 16
        %v6195 = vshll.u32 %v6094, 16
        %v6197 = vrot.slane %v6195, 1
        %v6198 = vor.u32 %v6193, %v6197
        %v6200 = vshrl.u32 %v6095, 16
        %v6202 = vshll.u32 %v6095, 16
        %v6204 = vrot.slane %v6202, 1
        %v6205 = vor.u32 %v6200, %v6204
        %v6207 = vshrl.u32 %v6096, 16
        %v6209 = vshll.u32 %v6096, 16
        %v6211 = vrot.slane %v6209, 1
        %v6212 = vor.u32 %v6207, %v6211
        %v6214 = vshrl.u32 %v6097, 16
        %v6216 = vshll.u32 %v6097, 16
        %v6218 = vrot.slane %v6216, 1
        %v6219 = vor.u32 %v6214, %v6218
        %v6221 = vshrl.u32 %v6098, 16
        %v6223 = vshll.u32 %v6098, 16
        %v6225 = vrot.slane %v6223, 1
        %v6226 = vor.u32 %v6221, %v6225
        %v6228 = vshrl.u32 %v6099, 16
        %v6230 = vshll.u32 %v6099, 16
        %v6232 = vrot.slane %v6230, 1
        %v6233 = vor.u32 %v6228, %v6232
        %v6235 = vshrl.u32 %v6100, 16
        %v6237 = vshll.u32 %v6100, 16
        %v6239 = vrot.slane %v6237, 1
        %v6240 = vor.u32 %v6235, %v6239
        %v6242 = vshrl.u32 %v6101, 16
        %v6244 = vshll.u32 %v6101, 16
        %v6246 = vrot.slane %v6244, 1
        %v6247 = vor.u32 %v6242, %v6246
        %v6249 = vshrl.u32 %v6102, 16
        %v6251 = vshll.u32 %v6102, 16
        %v6253 = vrot.slane %v6251, 1
        %v6254 = vor.u32 %v6249, %v6253
        %v6256 = vshrl.u32 %v6103, 16
        %v6258 = vshll.u32 %v6103, 16
        %v6260 = vrot.slane %v6258, 1
        %v6261 = vor.u32 %v6256, %v6260
        %v6263 = vshrl.u32 %v6104, 16
        %v6265 = vshll.u32 %v6104, 16
        %v6267 = vrot.slane %v6265, 1
        %v6268 = vor.u32 %v6263, %v6267
        %v6270 = vshrl.u32 %v6105, 16
        %v6272 = vshll.u32 %v6105, 16
        %v6274 = vrot.slane %v6272, 1
        %v6275 = vor.u32 %v6270, %v6274
        %v6277 = vshrl.u32 %v6106, 16
        %v6279 = vshll.u32 %v6106, 16
        %v6281 = vrot.slane %v6279, 1
        %v6282 = vor.u32 %v6277, %v6281
        %v6284 = vshrl.u32 %v6107, 16
        %v6286 = vshll.u32 %v6107, 16
        %v6288 = vrot.slane %v6286, 1
        %v6289 = vor.u32 %v6284, %v6288
        %v6291 = vshrl.u32 %v6108, 16
        %v6293 = vshll.u32 %v6108, 16
        %v6295 = vrot.slane %v6293, 1
        %v6296 = vor.u32 %v6291, %v6295
        %v6298 = vshrl.u32 %v6109, 16
        %v6300 = vshll.u32 %v6109, 16
        %v6302 = vrot.slane %v6300, 1
        %v6303 = vor.u32 %v6298, %v6302
        %v6305 = vshrl.u32 %v6110, 16
        %v6307 = vshll.u32 %v6110, 16
        %v6309 = vrot.slane %v6307, 1
        %v6310 = vor.u32 %v6305, %v6309
        %v6312 = vshrl.u32 %v6111, 16
        %v6314 = vshll.u32 %v6111, 16
        %v6316 = vrot.slane %v6314, 1
        %v6317 = vor.u32 %v6312, %v6316
        %v6319 = vshrl.u32 %v6112, 16
        %v6321 = vshll.u32 %v6112, 16
        %v6323 = vrot.slane %v6321, 1
        %v6324 = vor.u32 %v6319, %v6323
        %v6326 = vshrl.u32 %v6113, 16
        %v6328 = vshll.u32 %v6113, 16
        %v6330 = vrot.slane %v6328, 1
        %v6331 = vor.u32 %v6326, %v6330
        %v6333 = vshrl.u32 %v6114, 16
        %v6335 = vshll.u32 %v6114, 16
        %v6337 = vrot.slane %v6335, 1
        %v6338 = vor.u32 %v6333, %v6337
        %6339 = vrot.lane.b32.xlu0 %v6121, 8
        %v6340 = vpop.permute.xlu0 %6339
        %6341 = vrot.lane.b32.xlu0 %v6128, 8
        %v6342 = vpop.permute.xlu0 %6341
        %6343 = vrot.lane.b32.xlu0 %v6135, 8
        %v6344 = vpop.permute.xlu0 %6343
        %6345 = vrot.lane.b32.xlu0 %v6142, 8
        %v6346 = vpop.permute.xlu0 %6345
        %6347 = vrot.lane.b32.xlu0 %v6149, 8
        %v6348 = vpop.permute.xlu0 %6347
        %6349 = vrot.lane.b32.xlu0 %v6156, 8
        %v6350 = vpop.permute.xlu0 %6349
        %6351 = vrot.lane.b32.xlu0 %v6163, 8
        %v6352 = vpop.permute.xlu0 %6351
        %6353 = vrot.lane.b32.xlu0 %v6170, 8
        %v6354 = vpop.permute.xlu0 %6353
        %6355 = vrot.lane.b32.xlu0 %v6177, 8
        %v6356 = vpop.permute.xlu0 %6355
        %6357 = vrot.lane.b32.xlu0 %v6184, 8
        %v6358 = vpop.permute.xlu0 %6357
        %6359 = vrot.lane.b32.xlu0 %v6191, 8
        %v6360 = vpop.permute.xlu0 %6359
        %6361 = vrot.lane.b32.xlu0 %v6198, 8
        %v6362 = vpop.permute.xlu0 %6361
        %6363 = vrot.lane.b32.xlu0 %v6205, 8
        %v6364 = vpop.permute.xlu0 %6363
        %6365 = vrot.lane.b32.xlu0 %v6212, 8
        %v6366 = vpop.permute.xlu0 %6365
        %6367 = vrot.lane.b32.xlu0 %v6219, 8
        %v6368 = vpop.permute.xlu0 %6367
        %6369 = vrot.lane.b32.xlu0 %v6226, 8
        %v6370 = vpop.permute.xlu0 %6369
        %6371 = vrot.lane.b32.xlu0 %v6233, 8
        %v6372 = vpop.permute.xlu0 %6371
        %6373 = vrot.lane.b32.xlu0 %v6240, 8
        %v6374 = vpop.permute.xlu0 %6373
        %6375 = vrot.lane.b32.xlu0 %v6247, 8
        %v6376 = vpop.permute.xlu0 %6375
        %6377 = vrot.lane.b32.xlu0 %v6254, 8
        %v6378 = vpop.permute.xlu0 %6377
        %6379 = vrot.lane.b32.xlu0 %v6261, 8
        %v6380 = vpop.permute.xlu0 %6379
        %6381 = vrot.lane.b32.xlu0 %v6268, 8
        %v6382 = vpop.permute.xlu0 %6381
        %6383 = vrot.lane.b32.xlu0 %v6275, 8
        %v6384 = vpop.permute.xlu0 %6383
        %6385 = vrot.lane.b32.xlu0 %v6282, 8
        %v6386 = vpop.permute.xlu0 %6385
        %6387 = vrot.lane.b32.xlu0 %v6289, 8
        %v6388 = vpop.permute.xlu0 %6387
        %6389 = vrot.lane.b32.xlu0 %v6296, 8
        %v6390 = vpop.permute.xlu0 %6389
        %6391 = vrot.lane.b32.xlu0 %v6303, 8
        %v6392 = vpop.permute.xlu0 %6391
        %6393 = vrot.lane.b32.xlu0 %v6310, 8
        %v6394 = vpop.permute.xlu0 %6393
        %6395 = vrot.lane.b32.xlu0 %v6317, 8
        %v6396 = vpop.permute.xlu0 %6395
        %6397 = vrot.lane.b32.xlu0 %v6324, 8
        %v6398 = vpop.permute.xlu0 %6397
        %6399 = vrot.lane.b32.xlu0 %v6331, 8
        %v6400 = vpop.permute.xlu0 %6399
        %6401 = vrot.lane.b32.xlu0 %v6338, 8
        %v6402 = vpop.permute.xlu0 %6401
        %v6403 = vrot.slane %v6083, 1
        %v6404 = vrot.slane %v6084, 1
        %v6405 = vrot.slane %v6085, 1
        %v6406 = vrot.slane %v6086, 1
        %v6407 = vrot.slane %v6087, 1
        %v6408 = vrot.slane %v6088, 1
        %v6409 = vrot.slane %v6089, 1
        %v6410 = vrot.slane %v6090, 1
        %v6411 = vrot.slane %v6091, 1
        %v6412 = vrot.slane %v6092, 1
        %v6413 = vrot.slane %v6093, 1
        %v6414 = vrot.slane %v6094, 1
        %v6415 = vrot.slane %v6095, 1
        %v6416 = vrot.slane %v6096, 1
        %v6417 = vrot.slane %v6097, 1
        %v6418 = vrot.slane %v6098, 1
        %v6419 = vrot.slane %v6099, 1
        %v6420 = vrot.slane %v6100, 1
        %v6421 = vrot.slane %v6101, 1
        %v6422 = vrot.slane %v6102, 1
        %v6423 = vrot.slane %v6103, 1
        %v6424 = vrot.slane %v6104, 1
        %v6425 = vrot.slane %v6105, 1
        %v6426 = vrot.slane %v6106, 1
        %v6427 = vrot.slane %v6107, 1
        %v6428 = vrot.slane %v6108, 1
        %v6429 = vrot.slane %v6109, 1
        %v6430 = vrot.slane %v6110, 1
        %v6431 = vrot.slane %v6111, 1
        %v6432 = vrot.slane %v6112, 1
        %v6433 = vrot.slane %v6113, 1
        %v6434 = vrot.slane %v6114, 1
        %6435 = vrot.lane.b32.xlu0 %v6403, 16
        %v6436 = vpop.permute.xlu0 %6435
        %6437 = vrot.lane.b32.xlu0 %v6404, 16
        %v6438 = vpop.permute.xlu0 %6437
        %6439 = vrot.lane.b32.xlu0 %v6405, 16
        %v6440 = vpop.permute.xlu0 %6439
        %6441 = vrot.lane.b32.xlu0 %v6406, 16
        %v6442 = vpop.permute.xlu0 %6441
        %6443 = vrot.lane.b32.xlu0 %v6407, 16
        %v6444 = vpop.permute.xlu0 %6443
        %6445 = vrot.lane.b32.xlu0 %v6408, 16
        %v6446 = vpop.permute.xlu0 %6445
        %6447 = vrot.lane.b32.xlu0 %v6409, 16
        %v6448 = vpop.permute.xlu0 %6447
        %6449 = vrot.lane.b32.xlu0 %v6410, 16
        %v6450 = vpop.permute.xlu0 %6449
        %6451 = vrot.lane.b32.xlu0 %v6411, 16
        %v6452 = vpop.permute.xlu0 %6451
        %6453 = vrot.lane.b32.xlu0 %v6412, 16
        %v6454 = vpop.permute.xlu0 %6453
        %6455 = vrot.lane.b32.xlu0 %v6413, 16
        %v6456 = vpop.permute.xlu0 %6455
        %6457 = vrot.lane.b32.xlu0 %v6414, 16
        %v6458 = vpop.permute.xlu0 %6457
        %6459 = vrot.lane.b32.xlu0 %v6415, 16
        %v6460 = vpop.permute.xlu0 %6459
        %6461 = vrot.lane.b32.xlu0 %v6416, 16
        %v6462 = vpop.permute.xlu0 %6461
        %6463 = vrot.lane.b32.xlu0 %v6417, 16
        %v6464 = vpop.permute.xlu0 %6463
        %6465 = vrot.lane.b32.xlu0 %v6418, 16
        %v6466 = vpop.permute.xlu0 %6465
        %6467 = vrot.lane.b32.xlu0 %v6419, 16
        %v6468 = vpop.permute.xlu0 %6467
        %6469 = vrot.lane.b32.xlu0 %v6420, 16
        %v6470 = vpop.permute.xlu0 %6469
        %6471 = vrot.lane.b32.xlu0 %v6421, 16
        %v6472 = vpop.permute.xlu0 %6471
        %6473 = vrot.lane.b32.xlu0 %v6422, 16
        %v6474 = vpop.permute.xlu0 %6473
        %6475 = vrot.lane.b32.xlu0 %v6423, 16
        %v6476 = vpop.permute.xlu0 %6475
        %6477 = vrot.lane.b32.xlu0 %v6424, 16
        %v6478 = vpop.permute.xlu0 %6477
        %6479 = vrot.lane.b32.xlu0 %v6425, 16
        %v6480 = vpop.permute.xlu0 %6479
        %6481 = vrot.lane.b32.xlu0 %v6426, 16
        %v6482 = vpop.permute.xlu0 %6481
        %6483 = vrot.lane.b32.xlu0 %v6427, 16
        %v6484 = vpop.permute.xlu0 %6483
        %6485 = vrot.lane.b32.xlu0 %v6428, 16
        %v6486 = vpop.permute.xlu0 %6485
        %6487 = vrot.lane.b32.xlu0 %v6429, 16
        %v6488 = vpop.permute.xlu0 %6487
        %6489 = vrot.lane.b32.xlu0 %v6430, 16
        %v6490 = vpop.permute.xlu0 %6489
        %6491 = vrot.lane.b32.xlu0 %v6431, 16
        %v6492 = vpop.permute.xlu0 %6491
        %6493 = vrot.lane.b32.xlu0 %v6432, 16
        %v6494 = vpop.permute.xlu0 %6493
        %6495 = vrot.lane.b32.xlu0 %v6433, 16
        %v6496 = vpop.permute.xlu0 %6495
        %6497 = vrot.lane.b32.xlu0 %v6434, 16
        %v6498 = vpop.permute.xlu0 %6497
        %v6501 = vsel %vm3243, %v5891, %v6340
        %v6504 = vsel %vm3243, %v5893, %v6342
        %v6507 = vsel %vm3243, %v5895, %v6344
        %v6510 = vsel %vm3243, %v5897, %v6346
        %v6513 = vsel %vm3243, %v5899, %v6348
        %v6516 = vsel %vm3243, %v5901, %v6350
        %v6519 = vsel %vm3243, %v5903, %v6352
        %v6522 = vsel %vm3243, %v5905, %v6354
        %v6525 = vsel %vm3243, %v5907, %v6356
        %v6528 = vsel %vm3243, %v5909, %v6358
        %v6531 = vsel %vm3243, %v5911, %v6360
        %v6534 = vsel %vm3243, %v5913, %v6362
        %v6537 = vsel %vm3243, %v5915, %v6364
        %v6540 = vsel %vm3243, %v5917, %v6366
        %v6543 = vsel %vm3243, %v5919, %v6368
        %v6546 = vsel %vm3243, %v5921, %v6370
        %v6549 = vsel %vm3243, %v5923, %v6372
        %v6552 = vsel %vm3243, %v5925, %v6374
        %v6555 = vsel %vm3243, %v5927, %v6376
        %v6558 = vsel %vm3243, %v5929, %v6378
        %v6561 = vsel %vm3243, %v5931, %v6380
        %v6564 = vsel %vm3243, %v5933, %v6382
        %v6567 = vsel %vm3243, %v5935, %v6384
        %v6570 = vsel %vm3243, %v5937, %v6386
        %v6573 = vsel %vm3243, %v5939, %v6388
        %v6576 = vsel %vm3243, %v5941, %v6390
        %v6579 = vsel %vm3243, %v5943, %v6392
        %v6582 = vsel %vm3243, %v5945, %v6394
        %v6585 = vsel %vm3243, %v5947, %v6396
        %v6588 = vsel %vm3243, %v5949, %v6398
        %v6591 = vsel %vm3243, %v5951, %v6400
        %v6594 = vsel %vm3243, %v5953, %v6402
        %v6596 = vsel %vm1134, %v6501, %v6436
        %v6598 = vsel %vm1134, %v6504, %v6438
        %v6600 = vsel %vm1134, %v6507, %v6440
        %v6602 = vsel %vm1134, %v6510, %v6442
        %v6604 = vsel %vm1134, %v6513, %v6444
        %v6606 = vsel %vm1134, %v6516, %v6446
        %v6608 = vsel %vm1134, %v6519, %v6448
        %v6610 = vsel %vm1134, %v6522, %v6450
        %v6612 = vsel %vm1134, %v6525, %v6452
        %v6614 = vsel %vm1134, %v6528, %v6454
        %v6616 = vsel %vm1134, %v6531, %v6456
        %v6618 = vsel %vm1134, %v6534, %v6458
        %v6620 = vsel %vm1134, %v6537, %v6460
        %v6622 = vsel %vm1134, %v6540, %v6462
        %v6624 = vsel %vm1134, %v6543, %v6464
        %v6626 = vsel %vm1134, %v6546, %v6466
        %v6628 = vsel %vm1134, %v6549, %v6468
        %v6630 = vsel %vm1134, %v6552, %v6470
        %v6632 = vsel %vm1134, %v6555, %v6472
        %v6634 = vsel %vm1134, %v6558, %v6474
        %v6636 = vsel %vm1134, %v6561, %v6476
        %v6638 = vsel %vm1134, %v6564, %v6478
        %v6640 = vsel %vm1134, %v6567, %v6480
        %v6642 = vsel %vm1134, %v6570, %v6482
        %v6644 = vsel %vm1134, %v6573, %v6484
        %v6646 = vsel %vm1134, %v6576, %v6486
        %v6648 = vsel %vm1134, %v6579, %v6488
        %v6650 = vsel %vm1134, %v6582, %v6490
        %v6652 = vsel %vm1134, %v6585, %v6492
        %v6654 = vsel %vm1134, %v6588, %v6494
        %v6656 = vsel %vm1134, %v6591, %v6496
        %v6658 = vsel %vm1134, %v6594, %v6498
        %s6659 = scalar_lea.vmem %s5, 36
        %v6660 = vld [vmem:[%s6659] sm:$0xf]
        %v6661 = vld [vmem:[%s6659 + $0x4] sm:$0xf]
        %v6662 = vld [vmem:[%s6659 + $0x8] sm:$0xf]
        %v6695 = vunpack.c.l.b16 %v6596
        %v6696 = vunpack.c.l.b16 %v6598
        %v6697 = vunpack.c.l.b16 %v6600
        %v6698 = vunpack.c.l.b16 %v6602
        %v6699 = vunpack.c.l.b16 %v6604
        %v6700 = vunpack.c.l.b16 %v6606
        %v6701 = vunpack.c.l.b16 %v6608
        %v6702 = vunpack.c.l.b16 %v6610
        %v6703 = vunpack.c.l.b16 %v6612
        %v6704 = vunpack.c.l.b16 %v6614
        %v6705 = vunpack.c.l.b16 %v6616
        %v6706 = vunpack.c.l.b16 %v6618
        %v6707 = vunpack.c.l.b16 %v6620
        %v6708 = vunpack.c.l.b16 %v6622
        %v6709 = vunpack.c.l.b16 %v6624
        %v6710 = vunpack.c.l.b16 %v6626
        %v6711 = vunpack.c.l.b16 %v6628
        %v6712 = vunpack.c.l.b16 %v6630
        %v6713 = vunpack.c.l.b16 %v6632
        %v6714 = vunpack.c.l.b16 %v6634
        %v6715 = vunpack.c.l.b16 %v6636
        %v6716 = vunpack.c.l.b16 %v6638
        %v6717 = vunpack.c.l.b16 %v6640
        %v6718 = vunpack.c.l.b16 %v6642
        %v6719 = vunpack.c.l.b16 %v6644
        %v6720 = vunpack.c.l.b16 %v6646
        %v6721 = vunpack.c.l.b16 %v6648
        %v6722 = vunpack.c.l.b16 %v6650
        %v6723 = vunpack.c.l.b16 %v6652
        %v6724 = vunpack.c.l.b16 %v6654
        %v6725 = vunpack.c.l.b16 %v6656
        %v6726 = vunpack.c.l.b16 %v6658
        %v6727 = vpack.c.b16 %v6696, %v6695
        %v6728 = vpack.c.b16 %v6698, %v6697
        %v6729 = vpack.c.b16 %v6700, %v6699
        %v6730 = vpack.c.b16 %v6702, %v6701
        %v6731 = vpack.c.b16 %v6704, %v6703
        %v6732 = vpack.c.b16 %v6706, %v6705
        %v6733 = vpack.c.b16 %v6708, %v6707
        %v6734 = vpack.c.b16 %v6710, %v6709
        %v6735 = vpack.c.b16 %v6712, %v6711
        %v6736 = vpack.c.b16 %v6714, %v6713
        %v6737 = vpack.c.b16 %v6716, %v6715
        %v6738 = vpack.c.b16 %v6718, %v6717
        %v6739 = vpack.c.b16 %v6720, %v6719
        %v6740 = vpack.c.b16 %v6722, %v6721
        %v6741 = vpack.c.b16 %v6724, %v6723
        %v6742 = vpack.c.b16 %v6726, %v6725
        %v6746 = vunpack.c.l.b16 %v6660
        %v6747 = vunpack.c.l.b16 %v6661
        %v6748 = vunpack.c.l.b16 %v6662
        %v6749 = vpack.c.b16 %v6747, %v6746
        %v6750 = vpack.c.b16 %v6748, %v6748
        %v6753 = vsel %vm4269, %v6727, 0
        %v6756 = vsel %vm4269, %v6728, 0
        %v6759 = vsel %vm4269, %v6729, 0
        %v6762 = vsel %vm4269, %v6730, 0
        %v6765 = vsel %vm4269, %v6731, 0
        %v6768 = vsel %vm4269, %v6732, 0
        %v6771 = vsel %vm4269, %v6733, 0
        %v6774 = vsel %vm4269, %v6734, 0
        %v6777 = vsel %vm4269, %v6735, 0
        %v6780 = vsel %vm4269, %v6736, 0
        %v6783 = vsel %vm4269, %v6737, 0
        %v6786 = vsel %vm4269, %v6738, 0
        %v6789 = vsel %vm4269, %v6739, 0
        %v6792 = vsel %vm4269, %v6740, 0
        %v6795 = vsel %vm4269, %v6741, 0
        %v6798 = vsel %vm4269, %v6742, 0
        %v6801 = vsel %vm4318, %v6750, 0
        %6803 = vmatprep.subr.bf16.mxu0 0
        %6804 = vmatpush1.bf16.msra.mxu0 %v6749
        %6805 = vmatprep.subr.bf16.mxu0 0
        %6806 = vmatpush1.bf16.msra.mxu0 %v6801
        %6807 = vmatprep.subr.bf16.mxu0 0
        %6808 = vmatpush1.bf16.msra.mxu0 0
        %6809 = vmatprep.subr.bf16.mxu0 0
        %6810 = vmatpush1.bf16.msra.mxu0 0
        %6811 = vmatprep.subr.bf16.mxu0 0
        %6812 = vmatpush1.bf16.msra.mxu0 0
        %6813 = vmatprep.subr.bf16.mxu0 0
        %6814 = vmatpush1.bf16.msra.mxu0 0
        %6815 = vmatprep.subr.bf16.mxu0 0
        %6816 = vmatpush1.bf16.msra.mxu0 0
        %6817 = vmatprep.subr.bf16.mxu0 0
        %6818 = vmatpush1.bf16.msra.mxu0 0
        %6819 = vmatprep.subr.bf16.mxu0 0
        %6820 = vmatpush1.bf16.msra.mxu0 0
        %6821 = vmatprep.subr.bf16.mxu0 0
        %6822 = vmatpush1.bf16.msra.mxu0 0
        %6823 = vmatprep.subr.bf16.mxu0 0
        %6824 = vmatpush1.bf16.msra.mxu0 0
        %6825 = vmatprep.subr.bf16.mxu0 0
        %6826 = vmatpush1.bf16.msra.mxu0 0
        %6827 = vmatprep.subr.bf16.mxu0 0
        %6828 = vmatpush1.bf16.msra.mxu0 0
        %6829 = vmatprep.subr.bf16.mxu0 0
        %6830 = vmatpush1.bf16.msra.mxu0 0
        %6831 = vmatprep.subr.bf16.mxu0 0
        %6832 = vmatpush1.bf16.msra.mxu0 0
        %6833 = vmatprep.subr.bf16.mxu0 0
        %6834 = vmatpush1.bf16.msra.mxu0 0
        %6835 = vmatprep.mubr.bf16.mxu0 0
        %6836 = vmatmul.mubr.bf16.gmra.mrb[0].mxu0 %v6753
        %v6837 = vpop.f32.mrb[0].mxu0
        %v6838 = vadd.f32 0.0, %v6837
        %v6839 = vpop.f32.mrb[0].mxu0
        %v6840 = vpop.f32.mrb[0].mxu0
        %v6841 = vadd.f32 0.0, %v6840
        %v6842 = vpop.f32.mrb[0].mxu0
        %6843 = vmatprep.mubr.bf16.mxu0 0
        %6844 = vmatmul.mubr.bf16.gmra.mrb[0].mxu0 %v6756
        %v6845 = vpop.f32.mrb[0].mxu0
        %v6846 = vadd.f32 0.0, %v6845
        %v6847 = vpop.f32.mrb[0].mxu0
        %v6848 = vpop.f32.mrb[0].mxu0
        %v6849 = vadd.f32 0.0, %v6848
        %v6850 = vpop.f32.mrb[0].mxu0
        %6851 = vmatprep.mubr.bf16.mxu0 0
        %6852 = vmatmul.mubr.bf16.gmra.mrb[0].mxu0 %v6759
        %v6853 = vpop.f32.mrb[0].mxu0
        %v6854 = vadd.f32 0.0, %v6853
        %v6855 = vpop.f32.mrb[0].mxu0
        %v6856 = vpop.f32.mrb[0].mxu0
        %v6857 = vadd.f32 0.0, %v6856
        %v6858 = vpop.f32.mrb[0].mxu0
        %6859 = vmatprep.mubr.bf16.mxu0 0
        %6860 = vmatmul.mubr.bf16.gmra.mrb[0].mxu0 %v6762
        %v6861 = vpop.f32.mrb[0].mxu0
        %v6862 = vadd.f32 0.0, %v6861
        %v6863 = vpop.f32.mrb[0].mxu0
        %v6864 = vpop.f32.mrb[0].mxu0
        %v6865 = vadd.f32 0.0, %v6864
        %v6866 = vpop.f32.mrb[0].mxu0
        %6867 = vmatprep.mubr.bf16.mxu0 0
        %6868 = vmatmul.mubr.bf16.gmra.mrb[0].mxu0 %v6765
        %v6869 = vpop.f32.mrb[0].mxu0
        %v6870 = vadd.f32 0.0, %v6869
        %v6871 = vpop.f32.mrb[0].mxu0
        %v6872 = vpop.f32.mrb[0].mxu0
        %v6873 = vadd.f32 0.0, %v6872
        %v6874 = vpop.f32.mrb[0].mxu0
        %6875 = vmatprep.mubr.bf16.mxu0 0
        %6876 = vmatmul.mubr.bf16.gmra.mrb[0].mxu0 %v6768
        %v6877 = vpop.f32.mrb[0].mxu0
        %v6878 = vadd.f32 0.0, %v6877
        %v6879 = vpop.f32.mrb[0].mxu0
        %v6880 = vpop.f32.mrb[0].mxu0
        %v6881 = vadd.f32 0.0, %v6880
        %v6882 = vpop.f32.mrb[0].mxu0
        %6883 = vmatprep.mubr.bf16.mxu0 0
        %6884 = vmatmul.mubr.bf16.gmra.mrb[0].mxu0 %v6771
        %v6885 = vpop.f32.mrb[0].mxu0
        %v6886 = vadd.f32 0.0, %v6885
        %v6887 = vpop.f32.mrb[0].mxu0
        %v6888 = vpop.f32.mrb[0].mxu0
        %v6889 = vadd.f32 0.0, %v6888
        %v6890 = vpop.f32.mrb[0].mxu0
        %6891 = vmatprep.mubr.bf16.mxu0 0
        %6892 = vmatmul.mubr.bf16.gmra.mrb[0].mxu0 %v6774
        %v6893 = vpop.f32.mrb[0].mxu0
        %v6894 = vadd.f32 0.0, %v6893
        %v6895 = vpop.f32.mrb[0].mxu0
        %v6896 = vpop.f32.mrb[0].mxu0
        %v6897 = vadd.f32 0.0, %v6896
        %v6898 = vpop.f32.mrb[0].mxu0
        %6899 = vmatprep.mubr.bf16.mxu0 0
        %6900 = vmatmul.mubr.bf16.gmra.mrb[0].mxu0 %v6777
        %v6901 = vpop.f32.mrb[0].mxu0
        %v6902 = vadd.f32 0.0, %v6901
        %v6903 = vpop.f32.mrb[0].mxu0
        %v6904 = vpop.f32.mrb[0].mxu0
        %v6905 = vadd.f32 0.0, %v6904
        %v6906 = vpop.f32.mrb[0].mxu0
        %6907 = vmatprep.mubr.bf16.mxu0 0
        %6908 = vmatmul.mubr.bf16.gmra.mrb[0].mxu0 %v6780
        %v6909 = vpop.f32.mrb[0].mxu0
        %v6910 = vadd.f32 0.0, %v6909
        %v6911 = vpop.f32.mrb[0].mxu0
        %v6912 = vpop.f32.mrb[0].mxu0
        %v6913 = vadd.f32 0.0, %v6912
        %v6914 = vpop.f32.mrb[0].mxu0
        %6915 = vmatprep.mubr.bf16.mxu0 0
        %6916 = vmatmul.mubr.bf16.gmra.mrb[0].mxu0 %v6783
        %v6917 = vpop.f32.mrb[0].mxu0
        %v6918 = vadd.f32 0.0, %v6917
        %v6919 = vpop.f32.mrb[0].mxu0
        %v6920 = vpop.f32.mrb[0].mxu0
        %v6921 = vadd.f32 0.0, %v6920
        %v6922 = vpop.f32.mrb[0].mxu0
        %6923 = vmatprep.mubr.bf16.mxu0 0
        %6924 = vmatmul.mubr.bf16.gmra.mrb[0].mxu0 %v6786
        %v6925 = vpop.f32.mrb[0].mxu0
        %v6926 = vadd.f32 0.0, %v6925
        %v6927 = vpop.f32.mrb[0].mxu0
        %v6928 = vpop.f32.mrb[0].mxu0
        %v6929 = vadd.f32 0.0, %v6928
        %v6930 = vpop.f32.mrb[0].mxu0
        %6931 = vmatprep.mubr.bf16.mxu0 0
        %6932 = vmatmul.mubr.bf16.gmra.mrb[0].mxu0 %v6789
        %v6933 = vpop.f32.mrb[0].mxu0
        %v6934 = vadd.f32 0.0, %v6933
        %v6935 = vpop.f32.mrb[0].mxu0
        %v6936 = vpop.f32.mrb[0].mxu0
        %v6937 = vadd.f32 0.0, %v6936
        %v6938 = vpop.f32.mrb[0].mxu0
        %6939 = vmatprep.mubr.bf16.mxu0 0
        %6940 = vmatmul.mubr.bf16.gmra.mrb[0].mxu0 %v6792
        %v6941 = vpop.f32.mrb[0].mxu0
        %v6942 = vadd.f32 0.0, %v6941
        %v6943 = vpop.f32.mrb[0].mxu0
        %v6944 = vpop.f32.mrb[0].mxu0
        %v6945 = vadd.f32 0.0, %v6944
        %v6946 = vpop.f32.mrb[0].mxu0
        %6947 = vmatprep.mubr.bf16.mxu0 0
        %6948 = vmatmul.mubr.bf16.gmra.mrb[0].mxu0 %v6795
        %v6949 = vpop.f32.mrb[0].mxu0
        %v6950 = vadd.f32 0.0, %v6949
        %v6951 = vpop.f32.mrb[0].mxu0
        %v6952 = vpop.f32.mrb[0].mxu0
        %v6953 = vadd.f32 0.0, %v6952
        %v6954 = vpop.f32.mrb[0].mxu0
        %6955 = vmatprep.mubr.bf16.mxu0 0
        %6956 = vmatmul.mubr.bf16.gmra.mrb[0].mxu0 %v6798
        %v6957 = vpop.f32.mrb[0].mxu0
        %v6958 = vadd.f32 0.0, %v6957
        %v6959 = vpop.f32.mrb[0].mxu0
        %v6960 = vpop.f32.mrb[0].mxu0
        %v6961 = vadd.f32 0.0, %v6960
        %v6962 = vpop.f32.mrb[0].mxu0
        %6963 = vdwg.mxu0
        %v6964 = vadd.f32 %v5858, %v6838
        %v6965 = vadd.f32 %v5859, %v6841
        %v6966 = vadd.f32 %v5860, %v6846
        %v6967 = vadd.f32 %v5861, %v6849
        %v6968 = vadd.f32 %v5862, %v6854
        %v6969 = vadd.f32 %v5863, %v6857
        %v6970 = vadd.f32 %v5864, %v6862
        %v6971 = vadd.f32 %v5865, %v6865
        %v6972 = vadd.f32 %v5866, %v6870
        %v6973 = vadd.f32 %v5867, %v6873
        %v6974 = vadd.f32 %v5868, %v6878
        %v6975 = vadd.f32 %v5869, %v6881
        %v6976 = vadd.f32 %v5870, %v6886
        %v6977 = vadd.f32 %v5871, %v6889
        %v6978 = vadd.f32 %v5872, %v6894
        %v6979 = vadd.f32 %v5873, %v6897
        %v6980 = vadd.f32 %v5874, %v6902
        %v6981 = vadd.f32 %v5875, %v6905
        %v6982 = vadd.f32 %v5876, %v6910
        %v6983 = vadd.f32 %v5877, %v6913
        %v6984 = vadd.f32 %v5878, %v6918
        %v6985 = vadd.f32 %v5879, %v6921
        %v6986 = vadd.f32 %v5880, %v6926
        %v6987 = vadd.f32 %v5881, %v6929
        %v6988 = vadd.f32 %v5882, %v6934
        %v6989 = vadd.f32 %v5883, %v6937
        %v6990 = vadd.f32 %v5884, %v6942
        %v6991 = vadd.f32 %v5885, %v6945
        %v6992 = vadd.f32 %v5886, %v6950
        %v6993 = vadd.f32 %v5887, %v6953
        %v6994 = vadd.f32 %v5888, %v6958
        %v6995 = vadd.f32 %v5889, %v6961
        %v6996 = vld [vmem:[%s1868] sm:$0xf]
        %v6997 = vld [vmem:[%s1868 + $0x4] sm:$0x1]
        %v6998 = vld [vmem:[%s1868 + $0x8] sm:$0xf]
        %v6999 = vld [vmem:[%s1868 + $0xc] sm:$0x1]
        %v7000 = vld [vmem:[%s1868 + $0x10] sm:$0xf]
        %v7001 = vld [vmem:[%s1868 + $0x14] sm:$0x1]
        %v7002 = vld [vmem:[%s1868 + $0x18] sm:$0xf]
        %v7003 = vld [vmem:[%s1868 + $0x1c] sm:$0x1]
        %v7004 = vld [vmem:[%s1868 + $0x20] sm:$0xf]
        %v7005 = vld [vmem:[%s1868 + $0x24] sm:$0x1]
        %v7006 = vld [vmem:[%s1868 + $0x28] sm:$0xf]
        %v7007 = vld [vmem:[%s1868 + $0x2c] sm:$0x1]
        %v7008 = vld [vmem:[%s1868 + $0x30] sm:$0xf]
        %v7009 = vld [vmem:[%s1868 + $0x34] sm:$0x1]
        %v7010 = vld [vmem:[%s1868 + $0x38] sm:$0xf]
        %v7011 = vld [vmem:[%s1868 + $0x3c] sm:$0x1]
        %v7012 = vld [vmem:[%s1868 + $0x50] sm:$0xf]
        %v7013 = vld [vmem:[%s1868 + $0x54] sm:$0x1]
        %v7014 = vld [vmem:[%s1868 + $0x58] sm:$0xf]
        %v7015 = vld [vmem:[%s1868 + $0x5c] sm:$0x1]
        %v7016 = vld [vmem:[%s1868 + $0x60] sm:$0xf]
        %v7017 = vld [vmem:[%s1868 + $0x64] sm:$0x1]
        %v7018 = vld [vmem:[%s1868 + $0x68] sm:$0xf]
        %v7019 = vld [vmem:[%s1868 + $0x6c] sm:$0x1]
        %v7020 = vld [vmem:[%s1868 + $0x70] sm:$0xf]
        %v7021 = vld [vmem:[%s1868 + $0x74] sm:$0x1]
        %v7022 = vld [vmem:[%s1868 + $0x78] sm:$0xf]
        %v7023 = vld [vmem:[%s1868 + $0x7c] sm:$0x1]
        %v7024 = vld [vmem:[%s1868 + $0x80] sm:$0xf]
        %v7025 = vld [vmem:[%s1868 + $0x84] sm:$0x1]
        %v7026 = vld [vmem:[%s1868 + $0x88] sm:$0xf]
        %v7027 = vld [vmem:[%s1868 + $0x8c] sm:$0x1]
        %v7028 = vld [vmem:[%s1868 + $0xa0] sm:$0xf]
        %v7029 = vld [vmem:[%s1868 + $0xa4] sm:$0x1]
        %v7030 = vld [vmem:[%s1868 + $0xa8] sm:$0xf]
        %v7031 = vld [vmem:[%s1868 + $0xac] sm:$0x1]
        %v7032 = vld [vmem:[%s1868 + $0xb0] sm:$0xf]
        %v7033 = vld [vmem:[%s1868 + $0xb4] sm:$0x1]
        %v7034 = vld [vmem:[%s1868 + $0xb8] sm:$0xf]
        %v7035 = vld [vmem:[%s1868 + $0xbc] sm:$0x1]
        %v7036 = vld [vmem:[%s1868 + $0xc0] sm:$0xf]
        %v7037 = vld [vmem:[%s1868 + $0xc4] sm:$0x1]
        %v7038 = vld [vmem:[%s1868 + $0xc8] sm:$0xf]
        %v7039 = vld [vmem:[%s1868 + $0xcc] sm:$0x1]
        %v7040 = vld [vmem:[%s1868 + $0xd0] sm:$0xf]
        %v7041 = vld [vmem:[%s1868 + $0xd4] sm:$0x1]
        %v7042 = vld [vmem:[%s1868 + $0xd8] sm:$0xf]
        %v7043 = vld [vmem:[%s1868 + $0xdc] sm:$0x1]
        %v7044 = vld [vmem:[%s1868 + $0xf0] sm:$0xf]
        %v7045 = vld [vmem:[%s1868 + $0xf4] sm:$0x1]
        %v7046 = vld [vmem:[%s1868 + $0xf8] sm:$0xf]
        %v7047 = vld [vmem:[%s1868 + $0xfc] sm:$0x1]
        %v7048 = vld [vmem:[%s1868 + $0x100] sm:$0xf]
        %v7049 = vld [vmem:[%s1868 + $0x104] sm:$0x1]
        %v7050 = vld [vmem:[%s1868 + $0x108] sm:$0xf]
        %v7051 = vld [vmem:[%s1868 + $0x10c] sm:$0x1]
        %v7052 = vld [vmem:[%s1868 + $0x110] sm:$0xf]
        %v7053 = vld [vmem:[%s1868 + $0x114] sm:$0x1]
        %v7054 = vld [vmem:[%s1868 + $0x118] sm:$0xf]
        %v7055 = vld [vmem:[%s1868 + $0x11c] sm:$0x1]
        %v7056 = vld [vmem:[%s1868 + $0x120] sm:$0xf]
        %v7057 = vld [vmem:[%s1868 + $0x124] sm:$0x1]
        %v7058 = vld [vmem:[%s1868 + $0x128] sm:$0xf]
        %v7059 = vld [vmem:[%s1868 + $0x12c] sm:$0x1]
        %v7124 = vunpack.c.l.b16 %v6996
        %v7125 = vunpack.c.l.b16 %v6997
        %v7126 = vunpack.c.l.b16 %v6998
        %v7127 = vunpack.c.l.b16 %v6999
        %v7128 = vunpack.c.l.b16 %v7000
        %v7129 = vunpack.c.l.b16 %v7001
        %v7130 = vunpack.c.l.b16 %v7002
        %v7131 = vunpack.c.l.b16 %v7003
        %v7132 = vunpack.c.l.b16 %v7004
        %v7133 = vunpack.c.l.b16 %v7005
        %v7134 = vunpack.c.l.b16 %v7006
        %v7135 = vunpack.c.l.b16 %v7007
        %v7136 = vunpack.c.l.b16 %v7008
        %v7137 = vunpack.c.l.b16 %v7009
        %v7138 = vunpack.c.l.b16 %v7010
        %v7139 = vunpack.c.l.b16 %v7011
        %v7140 = vunpack.c.l.b16 %v7012
        %v7141 = vunpack.c.l.b16 %v7013
        %v7142 = vunpack.c.l.b16 %v7014
        %v7143 = vunpack.c.l.b16 %v7015
        %v7144 = vunpack.c.l.b16 %v7016
        %v7145 = vunpack.c.l.b16 %v7017
        %v7146 = vunpack.c.l.b16 %v7018
        %v7147 = vunpack.c.l.b16 %v7019
        %v7148 = vunpack.c.l.b16 %v7020
        %v7149 = vunpack.c.l.b16 %v7021
        %v7150 = vunpack.c.l.b16 %v7022
        %v7151 = vunpack.c.l.b16 %v7023
        %v7152 = vunpack.c.l.b16 %v7024
        %v7153 = vunpack.c.l.b16 %v7025
        %v7154 = vunpack.c.l.b16 %v7026
        %v7155 = vunpack.c.l.b16 %v7027
        %v7156 = vunpack.c.l.b16 %v7028
        %v7157 = vunpack.c.l.b16 %v7029
        %v7158 = vunpack.c.l.b16 %v7030
        %v7159 = vunpack.c.l.b16 %v7031
        %v7160 = vunpack.c.l.b16 %v7032
        %v7161 = vunpack.c.l.b16 %v7033
        %v7162 = vunpack.c.l.b16 %v7034
        %v7163 = vunpack.c.l.b16 %v7035
        %v7164 = vunpack.c.l.b16 %v7036
        %v7165 = vunpack.c.l.b16 %v7037
        %v7166 = vunpack.c.l.b16 %v7038
        %v7167 = vunpack.c.l.b16 %v7039
        %v7168 = vunpack.c.l.b16 %v7040
        %v7169 = vunpack.c.l.b16 %v7041
        %v7170 = vunpack.c.l.b16 %v7042
        %v7171 = vunpack.c.l.b16 %v7043
        %v7172 = vunpack.c.l.b16 %v7044
        %v7173 = vunpack.c.l.b16 %v7045
        %v7174 = vunpack.c.l.b16 %v7046
        %v7175 = vunpack.c.l.b16 %v7047
        %v7176 = vunpack.c.l.b16 %v7048
        %v7177 = vunpack.c.l.b16 %v7049
        %v7178 = vunpack.c.l.b16 %v7050
        %v7179 = vunpack.c.l.b16 %v7051
        %v7180 = vunpack.c.l.b16 %v7052
        %v7181 = vunpack.c.l.b16 %v7053
        %v7182 = vunpack.c.l.b16 %v7054
        %v7183 = vunpack.c.l.b16 %v7055
        %v7184 = vunpack.c.l.b16 %v7056
        %v7185 = vunpack.c.l.b16 %v7057
        %v7186 = vunpack.c.l.b16 %v7058
        %v7187 = vunpack.c.l.b16 %v7059
        %v7188 = vpack.c.b16 %v7125, %v7124
        %v7189 = vpack.c.b16 %v7127, %v7126
        %v7190 = vpack.c.b16 %v7129, %v7128
        %v7191 = vpack.c.b16 %v7131, %v7130
        %v7192 = vpack.c.b16 %v7133, %v7132
        %v7193 = vpack.c.b16 %v7135, %v7134
        %v7194 = vpack.c.b16 %v7137, %v7136
        %v7195 = vpack.c.b16 %v7139, %v7138
        %v7196 = vpack.c.b16 %v7141, %v7140
        %v7197 = vpack.c.b16 %v7143, %v7142
        %v7198 = vpack.c.b16 %v7145, %v7144
        %v7199 = vpack.c.b16 %v7147, %v7146
        %v7200 = vpack.c.b16 %v7149, %v7148
        %v7201 = vpack.c.b16 %v7151, %v7150
        %v7202 = vpack.c.b16 %v7153, %v7152
        %v7203 = vpack.c.b16 %v7155, %v7154
        %v7204 = vpack.c.b16 %v7157, %v7156
        %v7205 = vpack.c.b16 %v7159, %v7158
        %v7206 = vpack.c.b16 %v7161, %v7160
        %v7207 = vpack.c.b16 %v7163, %v7162
        %v7208 = vpack.c.b16 %v7165, %v7164
        %v7209 = vpack.c.b16 %v7167, %v7166
        %v7210 = vpack.c.b16 %v7169, %v7168
        %v7211 = vpack.c.b16 %v7171, %v7170
        %v7212 = vpack.c.b16 %v7173, %v7172
        %v7213 = vpack.c.b16 %v7175, %v7174
        %v7214 = vpack.c.b16 %v7177, %v7176
        %v7215 = vpack.c.b16 %v7179, %v7178
        %v7216 = vpack.c.b16 %v7181, %v7180
        %v7217 = vpack.c.b16 %v7183, %v7182
        %v7218 = vpack.c.b16 %v7185, %v7184
        %v7219 = vpack.c.b16 %v7187, %v7186
        %v7221 = vshrl.u32 %v7188, 16
        %v7223 = vshll.u32 %v7188, 16
        %v7225 = vrot.slane %v7223, 1
        %v7226 = vor.u32 %v7221, %v7225
        %v7228 = vshrl.u32 %v7189, 16
        %v7230 = vshll.u32 %v7189, 16
        %v7232 = vrot.slane %v7230, 1
        %v7233 = vor.u32 %v7228, %v7232
        %v7235 = vshrl.u32 %v7190, 16
        %v7237 = vshll.u32 %v7190, 16
        %v7239 = vrot.slane %v7237, 1
        %v7240 = vor.u32 %v7235, %v7239
        %v7242 = vshrl.u32 %v7191, 16
        %v7244 = vshll.u32 %v7191, 16
        %v7246 = vrot.slane %v7244, 1
        %v7247 = vor.u32 %v7242, %v7246
        %v7249 = vshrl.u32 %v7192, 16
        %v7251 = vshll.u32 %v7192, 16
        %v7253 = vrot.slane %v7251, 1
        %v7254 = vor.u32 %v7249, %v7253
        %v7256 = vshrl.u32 %v7193, 16
        %v7258 = vshll.u32 %v7193, 16
        %v7260 = vrot.slane %v7258, 1
        %v7261 = vor.u32 %v7256, %v7260
        %v7263 = vshrl.u32 %v7194, 16
        %v7265 = vshll.u32 %v7194, 16
        %v7267 = vrot.slane %v7265, 1
        %v7268 = vor.u32 %v7263, %v7267
        %v7270 = vshrl.u32 %v7195, 16
        %v7272 = vshll.u32 %v7195, 16
        %v7274 = vrot.slane %v7272, 1
        %v7275 = vor.u32 %v7270, %v7274
        %v7277 = vshrl.u32 %v7196, 16
        %v7279 = vshll.u32 %v7196, 16
        %v7281 = vrot.slane %v7279, 1
        %v7282 = vor.u32 %v7277, %v7281
        %v7284 = vshrl.u32 %v7197, 16
        %v7286 = vshll.u32 %v7197, 16
        %v7288 = vrot.slane %v7286, 1
        %v7289 = vor.u32 %v7284, %v7288
        %v7291 = vshrl.u32 %v7198, 16
        %v7293 = vshll.u32 %v7198, 16
        %v7295 = vrot.slane %v7293, 1
        %v7296 = vor.u32 %v7291, %v7295
        %v7298 = vshrl.u32 %v7199, 16
        %v7300 = vshll.u32 %v7199, 16
        %v7302 = vrot.slane %v7300, 1
        %v7303 = vor.u32 %v7298, %v7302
        %v7305 = vshrl.u32 %v7200, 16
        %v7307 = vshll.u32 %v7200, 16
        %v7309 = vrot.slane %v7307, 1
        %v7310 = vor.u32 %v7305, %v7309
        %v7312 = vshrl.u32 %v7201, 16
        %v7314 = vshll.u32 %v7201, 16
        %v7316 = vrot.slane %v7314, 1
        %v7317 = vor.u32 %v7312, %v7316
        %v7319 = vshrl.u32 %v7202, 16
        %v7321 = vshll.u32 %v7202, 16
        %v7323 = vrot.slane %v7321, 1
        %v7324 = vor.u32 %v7319, %v7323
        %v7326 = vshrl.u32 %v7203, 16
        %v7328 = vshll.u32 %v7203, 16
        %v7330 = vrot.slane %v7328, 1
        %v7331 = vor.u32 %v7326, %v7330
        %v7333 = vshrl.u32 %v7204, 16
        %v7335 = vshll.u32 %v7204, 16
        %v7337 = vrot.slane %v7335, 1
        %v7338 = vor.u32 %v7333, %v7337
        %v7340 = vshrl.u32 %v7205, 16
        %v7342 = vshll.u32 %v7205, 16
        %v7344 = vrot.slane %v7342, 1
        %v7345 = vor.u32 %v7340, %v7344
        %v7347 = vshrl.u32 %v7206, 16
        %v7349 = vshll.u32 %v7206, 16
        %v7351 = vrot.slane %v7349, 1
        %v7352 = vor.u32 %v7347, %v7351
        %v7354 = vshrl.u32 %v7207, 16
        %v7356 = vshll.u32 %v7207, 16
        %v7358 = vrot.slane %v7356, 1
        %v7359 = vor.u32 %v7354, %v7358
        %v7361 = vshrl.u32 %v7208, 16
        %v7363 = vshll.u32 %v7208, 16
        %v7365 = vrot.slane %v7363, 1
        %v7366 = vor.u32 %v7361, %v7365
        %v7368 = vshrl.u32 %v7209, 16
        %v7370 = vshll.u32 %v7209, 16
        %v7372 = vrot.slane %v7370, 1
        %v7373 = vor.u32 %v7368, %v7372
        %v7375 = vshrl.u32 %v7210, 16
        %v7377 = vshll.u32 %v7210, 16
        %v7379 = vrot.slane %v7377, 1
        %v7380 = vor.u32 %v7375, %v7379
        %v7382 = vshrl.u32 %v7211, 16
        %v7384 = vshll.u32 %v7211, 16
        %v7386 = vrot.slane %v7384, 1
        %v7387 = vor.u32 %v7382, %v7386
        %v7389 = vshrl.u32 %v7212, 16
        %v7391 = vshll.u32 %v7212, 16
        %v7393 = vrot.slane %v7391, 1
        %v7394 = vor.u32 %v7389, %v7393
        %v7396 = vshrl.u32 %v7213, 16
        %v7398 = vshll.u32 %v7213, 16
        %v7400 = vrot.slane %v7398, 1
        %v7401 = vor.u32 %v7396, %v7400
        %v7403 = vshrl.u32 %v7214, 16
        %v7405 = vshll.u32 %v7214, 16
        %v7407 = vrot.slane %v7405, 1
        %v7408 = vor.u32 %v7403, %v7407
        %v7410 = vshrl.u32 %v7215, 16
        %v7412 = vshll.u32 %v7215, 16
        %v7414 = vrot.slane %v7412, 1
        %v7415 = vor.u32 %v7410, %v7414
        %v7417 = vshrl.u32 %v7216, 16
        %v7419 = vshll.u32 %v7216, 16
        %v7421 = vrot.slane %v7419, 1
        %v7422 = vor.u32 %v7417, %v7421
        %v7424 = vshrl.u32 %v7217, 16
        %v7426 = vshll.u32 %v7217, 16
        %v7428 = vrot.slane %v7426, 1
        %v7429 = vor.u32 %v7424, %v7428
        %v7431 = vshrl.u32 %v7218, 16
        %v7433 = vshll.u32 %v7218, 16
        %v7435 = vrot.slane %v7433, 1
        %v7436 = vor.u32 %v7431, %v7435
        %v7438 = vshrl.u32 %v7219, 16
        %v7440 = vshll.u32 %v7219, 16
        %v7442 = vrot.slane %v7440, 1
        %v7443 = vor.u32 %v7438, %v7442
        %7444 = vrot.lane.b32.xlu0 %v7226, 8
        %v7445 = vpop.permute.xlu0 %7444
        %7446 = vrot.lane.b32.xlu0 %v7233, 8
        %v7447 = vpop.permute.xlu0 %7446
        %7448 = vrot.lane.b32.xlu0 %v7240, 8
        %v7449 = vpop.permute.xlu0 %7448
        %7450 = vrot.lane.b32.xlu0 %v7247, 8
        %v7451 = vpop.permute.xlu0 %7450
        %7452 = vrot.lane.b32.xlu0 %v7254, 8
        %v7453 = vpop.permute.xlu0 %7452
        %7454 = vrot.lane.b32.xlu0 %v7261, 8
        %v7455 = vpop.permute.xlu0 %7454
        %7456 = vrot.lane.b32.xlu0 %v7268, 8
        %v7457 = vpop.permute.xlu0 %7456
        %7458 = vrot.lane.b32.xlu0 %v7275, 8
        %v7459 = vpop.permute.xlu0 %7458
        %7460 = vrot.lane.b32.xlu0 %v7282, 8
        %v7461 = vpop.permute.xlu0 %7460
        %7462 = vrot.lane.b32.xlu0 %v7289, 8
        %v7463 = vpop.permute.xlu0 %7462
        %7464 = vrot.lane.b32.xlu0 %v7296, 8
        %v7465 = vpop.permute.xlu0 %7464
        %7466 = vrot.lane.b32.xlu0 %v7303, 8
        %v7467 = vpop.permute.xlu0 %7466
        %7468 = vrot.lane.b32.xlu0 %v7310, 8
        %v7469 = vpop.permute.xlu0 %7468
        %7470 = vrot.lane.b32.xlu0 %v7317, 8
        %v7471 = vpop.permute.xlu0 %7470
        %7472 = vrot.lane.b32.xlu0 %v7324, 8
        %v7473 = vpop.permute.xlu0 %7472
        %7474 = vrot.lane.b32.xlu0 %v7331, 8
        %v7475 = vpop.permute.xlu0 %7474
        %7476 = vrot.lane.b32.xlu0 %v7338, 8
        %v7477 = vpop.permute.xlu0 %7476
        %7478 = vrot.lane.b32.xlu0 %v7345, 8
        %v7479 = vpop.permute.xlu0 %7478
        %7480 = vrot.lane.b32.xlu0 %v7352, 8
        %v7481 = vpop.permute.xlu0 %7480
        %7482 = vrot.lane.b32.xlu0 %v7359, 8
        %v7483 = vpop.permute.xlu0 %7482
        %7484 = vrot.lane.b32.xlu0 %v7366, 8
        %v7485 = vpop.permute.xlu0 %7484
        %7486 = vrot.lane.b32.xlu0 %v7373, 8
        %v7487 = vpop.permute.xlu0 %7486
        %7488 = vrot.lane.b32.xlu0 %v7380, 8
        %v7489 = vpop.permute.xlu0 %7488
        %7490 = vrot.lane.b32.xlu0 %v7387, 8
        %v7491 = vpop.permute.xlu0 %7490
        %7492 = vrot.lane.b32.xlu0 %v7394, 8
        %v7493 = vpop.permute.xlu0 %7492
        %7494 = vrot.lane.b32.xlu0 %v7401, 8
        %v7495 = vpop.permute.xlu0 %7494
        %7496 = vrot.lane.b32.xlu0 %v7408, 8
        %v7497 = vpop.permute.xlu0 %7496
        %7498 = vrot.lane.b32.xlu0 %v7415, 8
        %v7499 = vpop.permute.xlu0 %7498
        %7500 = vrot.lane.b32.xlu0 %v7422, 8
        %v7501 = vpop.permute.xlu0 %7500
        %7502 = vrot.lane.b32.xlu0 %v7429, 8
        %v7503 = vpop.permute.xlu0 %7502
        %7504 = vrot.lane.b32.xlu0 %v7436, 8
        %v7505 = vpop.permute.xlu0 %7504
        %7506 = vrot.lane.b32.xlu0 %v7443, 8
        %v7507 = vpop.permute.xlu0 %7506
        %v7508 = vrot.slane %v7188, 1
        %v7509 = vrot.slane %v7189, 1
        %v7510 = vrot.slane %v7190, 1
        %v7511 = vrot.slane %v7191, 1
        %v7512 = vrot.slane %v7192, 1
        %v7513 = vrot.slane %v7193, 1
        %v7514 = vrot.slane %v7194, 1
        %v7515 = vrot.slane %v7195, 1
        %v7516 = vrot.slane %v7196, 1
        %v7517 = vrot.slane %v7197, 1
        %v7518 = vrot.slane %v7198, 1
        %v7519 = vrot.slane %v7199, 1
        %v7520 = vrot.slane %v7200, 1
        %v7521 = vrot.slane %v7201, 1
        %v7522 = vrot.slane %v7202, 1
        %v7523 = vrot.slane %v7203, 1
        %v7524 = vrot.slane %v7204, 1
        %v7525 = vrot.slane %v7205, 1
        %v7526 = vrot.slane %v7206, 1
        %v7527 = vrot.slane %v7207, 1
        %v7528 = vrot.slane %v7208, 1
        %v7529 = vrot.slane %v7209, 1
        %v7530 = vrot.slane %v7210, 1
        %v7531 = vrot.slane %v7211, 1
        %v7532 = vrot.slane %v7212, 1
        %v7533 = vrot.slane %v7213, 1
        %v7534 = vrot.slane %v7214, 1
        %v7535 = vrot.slane %v7215, 1
        %v7536 = vrot.slane %v7216, 1
        %v7537 = vrot.slane %v7217, 1
        %v7538 = vrot.slane %v7218, 1
        %v7539 = vrot.slane %v7219, 1
        %7540 = vrot.lane.b32.xlu0 %v7508, 16
        %v7541 = vpop.permute.xlu0 %7540
        %7542 = vrot.lane.b32.xlu0 %v7509, 16
        %v7543 = vpop.permute.xlu0 %7542
        %7544 = vrot.lane.b32.xlu0 %v7510, 16
        %v7545 = vpop.permute.xlu0 %7544
        %7546 = vrot.lane.b32.xlu0 %v7511, 16
        %v7547 = vpop.permute.xlu0 %7546
        %7548 = vrot.lane.b32.xlu0 %v7512, 16
        %v7549 = vpop.permute.xlu0 %7548
        %7550 = vrot.lane.b32.xlu0 %v7513, 16
        %v7551 = vpop.permute.xlu0 %7550
        %7552 = vrot.lane.b32.xlu0 %v7514, 16
        %v7553 = vpop.permute.xlu0 %7552
        %7554 = vrot.lane.b32.xlu0 %v7515, 16
        %v7555 = vpop.permute.xlu0 %7554
        %7556 = vrot.lane.b32.xlu0 %v7516, 16
        %v7557 = vpop.permute.xlu0 %7556
        %7558 = vrot.lane.b32.xlu0 %v7517, 16
        %v7559 = vpop.permute.xlu0 %7558
        %7560 = vrot.lane.b32.xlu0 %v7518, 16
        %v7561 = vpop.permute.xlu0 %7560
        %7562 = vrot.lane.b32.xlu0 %v7519, 16
        %v7563 = vpop.permute.xlu0 %7562
        %7564 = vrot.lane.b32.xlu0 %v7520, 16
        %v7565 = vpop.permute.xlu0 %7564
        %7566 = vrot.lane.b32.xlu0 %v7521, 16
        %v7567 = vpop.permute.xlu0 %7566
        %7568 = vrot.lane.b32.xlu0 %v7522, 16
        %v7569 = vpop.permute.xlu0 %7568
        %7570 = vrot.lane.b32.xlu0 %v7523, 16
        %v7571 = vpop.permute.xlu0 %7570
        %7572 = vrot.lane.b32.xlu0 %v7524, 16
        %v7573 = vpop.permute.xlu0 %7572
        %7574 = vrot.lane.b32.xlu0 %v7525, 16
        %v7575 = vpop.permute.xlu0 %7574
        %7576 = vrot.lane.b32.xlu0 %v7526, 16
        %v7577 = vpop.permute.xlu0 %7576
        %7578 = vrot.lane.b32.xlu0 %v7527, 16
        %v7579 = vpop.permute.xlu0 %7578
        %7580 = vrot.lane.b32.xlu0 %v7528, 16
        %v7581 = vpop.permute.xlu0 %7580
        %7582 = vrot.lane.b32.xlu0 %v7529, 16
        %v7583 = vpop.permute.xlu0 %7582
        %7584 = vrot.lane.b32.xlu0 %v7530, 16
        %v7585 = vpop.permute.xlu0 %7584
        %7586 = vrot.lane.b32.xlu0 %v7531, 16
        %v7587 = vpop.permute.xlu0 %7586
        %7588 = vrot.lane.b32.xlu0 %v7532, 16
        %v7589 = vpop.permute.xlu0 %7588
        %7590 = vrot.lane.b32.xlu0 %v7533, 16
        %v7591 = vpop.permute.xlu0 %7590
        %7592 = vrot.lane.b32.xlu0 %v7534, 16
        %v7593 = vpop.permute.xlu0 %7592
        %7594 = vrot.lane.b32.xlu0 %v7535, 16
        %v7595 = vpop.permute.xlu0 %7594
        %7596 = vrot.lane.b32.xlu0 %v7536, 16
        %v7597 = vpop.permute.xlu0 %7596
        %7598 = vrot.lane.b32.xlu0 %v7537, 16
        %v7599 = vpop.permute.xlu0 %7598
        %7600 = vrot.lane.b32.xlu0 %v7538, 16
        %v7601 = vpop.permute.xlu0 %7600
        %7602 = vrot.lane.b32.xlu0 %v7539, 16
        %v7603 = vpop.permute.xlu0 %7602
        %v7606 = vsel %vm3243, %v6996, %v7445
        %v7609 = vsel %vm3243, %v6998, %v7447
        %v7612 = vsel %vm3243, %v7000, %v7449
        %v7615 = vsel %vm3243, %v7002, %v7451
        %v7618 = vsel %vm3243, %v7004, %v7453
        %v7621 = vsel %vm3243, %v7006, %v7455
        %v7624 = vsel %vm3243, %v7008, %v7457
        %v7627 = vsel %vm3243, %v7010, %v7459
        %v7630 = vsel %vm3243, %v7012, %v7461
        %v7633 = vsel %vm3243, %v7014, %v7463
        %v7636 = vsel %vm3243, %v7016, %v7465
        %v7639 = vsel %vm3243, %v7018, %v7467
        %v7642 = vsel %vm3243, %v7020, %v7469
        %v7645 = vsel %vm3243, %v7022, %v7471
        %v7648 = vsel %vm3243, %v7024, %v7473
        %v7651 = vsel %vm3243, %v7026, %v7475
        %v7654 = vsel %vm3243, %v7028, %v7477
        %v7657 = vsel %vm3243, %v7030, %v7479
        %v7660 = vsel %vm3243, %v7032, %v7481
        %v7663 = vsel %vm3243, %v7034, %v7483
        %v7666 = vsel %vm3243, %v7036, %v7485
        %v7669 = vsel %vm3243, %v7038, %v7487
        %v7672 = vsel %vm3243, %v7040, %v7489
        %v7675 = vsel %vm3243, %v7042, %v7491
        %v7678 = vsel %vm3243, %v7044, %v7493
        %v7681 = vsel %vm3243, %v7046, %v7495
        %v7684 = vsel %vm3243, %v7048, %v7497
        %v7687 = vsel %vm3243, %v7050, %v7499
        %v7690 = vsel %vm3243, %v7052, %v7501
        %v7693 = vsel %vm3243, %v7054, %v7503
        %v7696 = vsel %vm3243, %v7056, %v7505
        %v7699 = vsel %vm3243, %v7058, %v7507
        %v7701 = vsel %vm1134, %v7606, %v7541
        %v7703 = vsel %vm1134, %v7609, %v7543
        %v7705 = vsel %vm1134, %v7612, %v7545
        %v7707 = vsel %vm1134, %v7615, %v7547
        %v7709 = vsel %vm1134, %v7618, %v7549
        %v7711 = vsel %vm1134, %v7621, %v7551
        %v7713 = vsel %vm1134, %v7624, %v7553
        %v7715 = vsel %vm1134, %v7627, %v7555
        %v7717 = vsel %vm1134, %v7630, %v7557
        %v7719 = vsel %vm1134, %v7633, %v7559
        %v7721 = vsel %vm1134, %v7636, %v7561
        %v7723 = vsel %vm1134, %v7639, %v7563
        %v7725 = vsel %vm1134, %v7642, %v7565
        %v7727 = vsel %vm1134, %v7645, %v7567
        %v7729 = vsel %vm1134, %v7648, %v7569
        %v7731 = vsel %vm1134, %v7651, %v7571
        %v7733 = vsel %vm1134, %v7654, %v7573
        %v7735 = vsel %vm1134, %v7657, %v7575
        %v7737 = vsel %vm1134, %v7660, %v7577
        %v7739 = vsel %vm1134, %v7663, %v7579
        %v7741 = vsel %vm1134, %v7666, %v7581
        %v7743 = vsel %vm1134, %v7669, %v7583
        %v7745 = vsel %vm1134, %v7672, %v7585
        %v7747 = vsel %vm1134, %v7675, %v7587
        %v7749 = vsel %vm1134, %v7678, %v7589
        %v7751 = vsel %vm1134, %v7681, %v7591
        %v7753 = vsel %vm1134, %v7684, %v7593
        %v7755 = vsel %vm1134, %v7687, %v7595
        %v7757 = vsel %vm1134, %v7690, %v7597
        %v7759 = vsel %vm1134, %v7693, %v7599
        %v7761 = vsel %vm1134, %v7696, %v7601
        %v7763 = vsel %vm1134, %v7699, %v7603
        %s7764 = scalar_lea.vmem %s5, 48
        %v7765 = vld [vmem:[%s7764] sm:$0xf]
        %v7766 = vld [vmem:[%s7764 + $0x4] sm:$0xf]
        %v7767 = vld [vmem:[%s7764 + $0x8] sm:$0xf]
        %v7800 = vunpack.c.l.b16 %v7701
        %v7801 = vunpack.c.l.b16 %v7703
        %v7802 = vunpack.c.l.b16 %v7705
        %v7803 = vunpack.c.l.b16 %v7707
        %v7804 = vunpack.c.l.b16 %v7709
        %v7805 = vunpack.c.l.b16 %v7711
        %v7806 = vunpack.c.l.b16 %v7713
        %v7807 = vunpack.c.l.b16 %v7715
        %v7808 = vunpack.c.l.b16 %v7717
        %v7809 = vunpack.c.l.b16 %v7719
        %v7810 = vunpack.c.l.b16 %v7721
        %v7811 = vunpack.c.l.b16 %v7723
        %v7812 = vunpack.c.l.b16 %v7725
        %v7813 = vunpack.c.l.b16 %v7727
        %v7814 = vunpack.c.l.b16 %v7729
        %v7815 = vunpack.c.l.b16 %v7731
        %v7816 = vunpack.c.l.b16 %v7733
        %v7817 = vunpack.c.l.b16 %v7735
        %v7818 = vunpack.c.l.b16 %v7737
        %v7819 = vunpack.c.l.b16 %v7739
        %v7820 = vunpack.c.l.b16 %v7741
        %v7821 = vunpack.c.l.b16 %v7743
        %v7822 = vunpack.c.l.b16 %v7745
        %v7823 = vunpack.c.l.b16 %v7747
        %v7824 = vunpack.c.l.b16 %v7749
        %v7825 = vunpack.c.l.b16 %v7751
        %v7826 = vunpack.c.l.b16 %v7753
        %v7827 = vunpack.c.l.b16 %v7755
        %v7828 = vunpack.c.l.b16 %v7757
        %v7829 = vunpack.c.l.b16 %v7759
        %v7830 = vunpack.c.l.b16 %v7761
        %v7831 = vunpack.c.l.b16 %v7763
        %v7832 = vpack.c.b16 %v7801, %v7800
        %v7833 = vpack.c.b16 %v7803, %v7802
        %v7834 = vpack.c.b16 %v7805, %v7804
        %v7835 = vpack.c.b16 %v7807, %v7806
        %v7836 = vpack.c.b16 %v7809, %v7808
        %v7837 = vpack.c.b16 %v7811, %v7810
        %v7838 = vpack.c.b16 %v7813, %v7812
        %v7839 = vpack.c.b16 %v7815, %v7814
        %v7840 = vpack.c.b16 %v7817, %v7816
        %v7841 = vpack.c.b16 %v7819, %v7818
        %v7842 = vpack.c.b16 %v7821, %v7820
        %v7843 = vpack.c.b16 %v7823, %v7822
        %v7844 = vpack.c.b16 %v7825, %v7824
        %v7845 = vpack.c.b16 %v7827, %v7826
        %v7846 = vpack.c.b16 %v7829, %v7828
        %v7847 = vpack.c.b16 %v7831, %v7830
        %v7851 = vunpack.c.l.b16 %v7765
        %v7852 = vunpack.c.l.b16 %v7766
        %v7853 = vunpack.c.l.b16 %v7767
        %v7854 = vpack.c.b16 %v7852, %v7851
        %v7855 = vpack.c.b16 %v7853, %v7853
        %v7858 = vsel %vm4269, %v7832, 0
        %v7861 = vsel %vm4269, %v7833, 0
        %v7864 = vsel %vm4269, %v7834, 0
        %v7867 = vsel %vm4269, %v7835, 0
        %v7870 = vsel %vm4269, %v7836, 0
        %v7873 = vsel %vm4269, %v7837, 0
        %v7876 = vsel %vm4269, %v7838, 0
        %v7879 = vsel %vm4269, %v7839, 0
        %v7882 = vsel %vm4269, %v7840, 0
        %v7885 = vsel %vm4269, %v7841, 0
        %v7888 = vsel %vm4269, %v7842, 0
        %v7891 = vsel %vm4269, %v7843, 0
        %v7894 = vsel %vm4269, %v7844, 0
        %v7897 = vsel %vm4269, %v7845, 0
        %v7900 = vsel %vm4269, %v7846, 0
        %v7903 = vsel %vm4269, %v7847, 0
        %v7906 = vsel %vm4318, %v7855, 0
        %7908 = vmatprep.subr.bf16.mxu0 0
        %7909 = vmatpush1.bf16.msra.mxu0 %v7854
        %7910 = vmatprep.subr.bf16.mxu0 0
        %7911 = vmatpush1.bf16.msra.mxu0 %v7906
        %7912 = vmatprep.subr.bf16.mxu0 0
        %7913 = vmatpush1.bf16.msra.mxu0 0
        %7914 = vmatprep.subr.bf16.mxu0 0
        %7915 = vmatpush1.bf16.msra.mxu0 0
        %7916 = vmatprep.subr.bf16.mxu0 0
        %7917 = vmatpush1.bf16.msra.mxu0 0
        %7918 = vmatprep.subr.bf16.mxu0 0
        %7919 = vmatpush1.bf16.msra.mxu0 0
        %7920 = vmatprep.subr.bf16.mxu0 0
        %7921 = vmatpush1.bf16.msra.mxu0 0
        %7922 = vmatprep.subr.bf16.mxu0 0
        %7923 = vmatpush1.bf16.msra.mxu0 0
        %7924 = vmatprep.subr.bf16.mxu0 0
        %7925 = vmatpush1.bf16.msra.mxu0 0
        %7926 = vmatprep.subr.bf16.mxu0 0
        %7927 = vmatpush1.bf16.msra.mxu0 0
        %7928 = vmatprep.subr.bf16.mxu0 0
        %7929 = vmatpush1.bf16.msra.mxu0 0
        %7930 = vmatprep.subr.bf16.mxu0 0
        %7931 = vmatpush1.bf16.msra.mxu0 0
        %7932 = vmatprep.subr.bf16.mxu0 0
        %7933 = vmatpush1.bf16.msra.mxu0 0
        %7934 = vmatprep.subr.bf16.mxu0 0
        %7935 = vmatpush1.bf16.msra.mxu0 0
        %7936 = vmatprep.subr.bf16.mxu0 0
        %7937 = vmatpush1.bf16.msra.mxu0 0
        %7938 = vmatprep.subr.bf16.mxu0 0
        %7939 = vmatpush1.bf16.msra.mxu0 0
        %7940 = vmatprep.mubr.bf16.mxu0 0
        %7941 = vmatmul.mubr.bf16.gmra.mrb[0].mxu0 %v7858
        %v7942 = vpop.f32.mrb[0].mxu0
        %v7943 = vadd.f32 0.0, %v7942
        %v7944 = vpop.f32.mrb[0].mxu0
        %v7945 = vpop.f32.mrb[0].mxu0
        %v7946 = vadd.f32 0.0, %v7945
        %v7947 = vpop.f32.mrb[0].mxu0
        %7948 = vmatprep.mubr.bf16.mxu0 0
        %7949 = vmatmul.mubr.bf16.gmra.mrb[0].mxu0 %v7861
        %v7950 = vpop.f32.mrb[0].mxu0
        %v7951 = vadd.f32 0.0, %v7950
        %v7952 = vpop.f32.mrb[0].mxu0
        %v7953 = vpop.f32.mrb[0].mxu0
        %v7954 = vadd.f32 0.0, %v7953
        %v7955 = vpop.f32.mrb[0].mxu0
        %7956 = vmatprep.mubr.bf16.mxu0 0
        %7957 = vmatmul.mubr.bf16.gmra.mrb[0].mxu0 %v7864
        %v7958 = vpop.f32.mrb[0].mxu0
        %v7959 = vadd.f32 0.0, %v7958
        %v7960 = vpop.f32.mrb[0].mxu0
        %v7961 = vpop.f32.mrb[0].mxu0
        %v7962 = vadd.f32 0.0, %v7961
        %v7963 = vpop.f32.mrb[0].mxu0
        %7964 = vmatprep.mubr.bf16.mxu0 0
        %7965 = vmatmul.mubr.bf16.gmra.mrb[0].mxu0 %v7867
        %v7966 = vpop.f32.mrb[0].mxu0
        %v7967 = vadd.f32 0.0, %v7966
        %v7968 = vpop.f32.mrb[0].mxu0
        %v7969 = vpop.f32.mrb[0].mxu0
        %v7970 = vadd.f32 0.0, %v7969
        %v7971 = vpop.f32.mrb[0].mxu0
        %7972 = vmatprep.mubr.bf16.mxu0 0
        %7973 = vmatmul.mubr.bf16.gmra.mrb[0].mxu0 %v7870
        %v7974 = vpop.f32.mrb[0].mxu0
        %v7975 = vadd.f32 0.0, %v7974
        %v7976 = vpop.f32.mrb[0].mxu0
        %v7977 = vpop.f32.mrb[0].mxu0
        %v7978 = vadd.f32 0.0, %v7977
        %v7979 = vpop.f32.mrb[0].mxu0
        %7980 = vmatprep.mubr.bf16.mxu0 0
        %7981 = vmatmul.mubr.bf16.gmra.mrb[0].mxu0 %v7873
        %v7982 = vpop.f32.mrb[0].mxu0
        %v7983 = vadd.f32 0.0, %v7982
        %v7984 = vpop.f32.mrb[0].mxu0
        %v7985 = vpop.f32.mrb[0].mxu0
        %v7986 = vadd.f32 0.0, %v7985
        %v7987 = vpop.f32.mrb[0].mxu0
        %7988 = vmatprep.mubr.bf16.mxu0 0
        %7989 = vmatmul.mubr.bf16.gmra.mrb[0].mxu0 %v7876
        %v7990 = vpop.f32.mrb[0].mxu0
        %v7991 = vadd.f32 0.0, %v7990
        %v7992 = vpop.f32.mrb[0].mxu0
        %v7993 = vpop.f32.mrb[0].mxu0
        %v7994 = vadd.f32 0.0, %v7993
        %v7995 = vpop.f32.mrb[0].mxu0
        %7996 = vmatprep.mubr.bf16.mxu0 0
        %7997 = vmatmul.mubr.bf16.gmra.mrb[0].mxu0 %v7879
        %v7998 = vpop.f32.mrb[0].mxu0
        %v7999 = vadd.f32 0.0, %v7998
        %v8000 = vpop.f32.mrb[0].mxu0
        %v8001 = vpop.f32.mrb[0].mxu0
        %v8002 = vadd.f32 0.0, %v8001
        %v8003 = vpop.f32.mrb[0].mxu0
        %8004 = vmatprep.mubr.bf16.mxu0 0
        %8005 = vmatmul.mubr.bf16.gmra.mrb[0].mxu0 %v7882
        %v8006 = vpop.f32.mrb[0].mxu0
        %v8007 = vadd.f32 0.0, %v8006
        %v8008 = vpop.f32.mrb[0].mxu0
        %v8009 = vpop.f32.mrb[0].mxu0
        %v8010 = vadd.f32 0.0, %v8009
        %v8011 = vpop.f32.mrb[0].mxu0
        %8012 = vmatprep.mubr.bf16.mxu0 0
        %8013 = vmatmul.mubr.bf16.gmra.mrb[0].mxu0 %v7885
        %v8014 = vpop.f32.mrb[0].mxu0
        %v8015 = vadd.f32 0.0, %v8014
        %v8016 = vpop.f32.mrb[0].mxu0
        %v8017 = vpop.f32.mrb[0].mxu0
        %v8018 = vadd.f32 0.0, %v8017
        %v8019 = vpop.f32.mrb[0].mxu0
        %8020 = vmatprep.mubr.bf16.mxu0 0
        %8021 = vmatmul.mubr.bf16.gmra.mrb[0].mxu0 %v7888
        %v8022 = vpop.f32.mrb[0].mxu0
        %v8023 = vadd.f32 0.0, %v8022
        %v8024 = vpop.f32.mrb[0].mxu0
        %v8025 = vpop.f32.mrb[0].mxu0
        %v8026 = vadd.f32 0.0, %v8025
        %v8027 = vpop.f32.mrb[0].mxu0
        %8028 = vmatprep.mubr.bf16.mxu0 0
        %8029 = vmatmul.mubr.bf16.gmra.mrb[0].mxu0 %v7891
        %v8030 = vpop.f32.mrb[0].mxu0
        %v8031 = vadd.f32 0.0, %v8030
        %v8032 = vpop.f32.mrb[0].mxu0
        %v8033 = vpop.f32.mrb[0].mxu0
        %v8034 = vadd.f32 0.0, %v8033
        %v8035 = vpop.f32.mrb[0].mxu0
        %8036 = vmatprep.mubr.bf16.mxu0 0
        %8037 = vmatmul.mubr.bf16.gmra.mrb[0].mxu0 %v7894
        %v8038 = vpop.f32.mrb[0].mxu0
        %v8039 = vadd.f32 0.0, %v8038
        %v8040 = vpop.f32.mrb[0].mxu0
        %v8041 = vpop.f32.mrb[0].mxu0
        %v8042 = vadd.f32 0.0, %v8041
        %v8043 = vpop.f32.mrb[0].mxu0
        %8044 = vmatprep.mubr.bf16.mxu0 0
        %8045 = vmatmul.mubr.bf16.gmra.mrb[0].mxu0 %v7897
        %v8046 = vpop.f32.mrb[0].mxu0
        %v8047 = vadd.f32 0.0, %v8046
        %v8048 = vpop.f32.mrb[0].mxu0
        %v8049 = vpop.f32.mrb[0].mxu0
        %v8050 = vadd.f32 0.0, %v8049
        %v8051 = vpop.f32.mrb[0].mxu0
        %8052 = vmatprep.mubr.bf16.mxu0 0
        %8053 = vmatmul.mubr.bf16.gmra.mrb[0].mxu0 %v7900
        %v8054 = vpop.f32.mrb[0].mxu0
        %v8055 = vadd.f32 0.0, %v8054
        %v8056 = vpop.f32.mrb[0].mxu0
        %v8057 = vpop.f32.mrb[0].mxu0
        %v8058 = vadd.f32 0.0, %v8057
        %v8059 = vpop.f32.mrb[0].mxu0
        %8060 = vmatprep.mubr.bf16.mxu0 0
        %8061 = vmatmul.mubr.bf16.gmra.mrb[0].mxu0 %v7903
        %v8062 = vpop.f32.mrb[0].mxu0
        %v8063 = vadd.f32 0.0, %v8062
        %v8064 = vpop.f32.mrb[0].mxu0
        %v8065 = vpop.f32.mrb[0].mxu0
        %v8066 = vadd.f32 0.0, %v8065
        %v8067 = vpop.f32.mrb[0].mxu0
        %8068 = vdwg.mxu0
        %v8069 = vadd.f32 %v6964, %v7943
        %v8070 = vadd.f32 %v6965, %v7946
        %v8071 = vadd.f32 %v6966, %v7951
        %v8072 = vadd.f32 %v6967, %v7954
        %v8073 = vadd.f32 %v6968, %v7959
        %v8074 = vadd.f32 %v6969, %v7962
        %v8075 = vadd.f32 %v6970, %v7967
        %v8076 = vadd.f32 %v6971, %v7970
        %v8077 = vadd.f32 %v6972, %v7975
        %v8078 = vadd.f32 %v6973, %v7978
        %v8079 = vadd.f32 %v6974, %v7983
        %v8080 = vadd.f32 %v6975, %v7986
        %v8081 = vadd.f32 %v6976, %v7991
        %v8082 = vadd.f32 %v6977, %v7994
        %v8083 = vadd.f32 %v6978, %v7999
        %v8084 = vadd.f32 %v6979, %v8002
        %v8085 = vadd.f32 %v6980, %v8007
        %v8086 = vadd.f32 %v6981, %v8010
        %v8087 = vadd.f32 %v6982, %v8015
        %v8088 = vadd.f32 %v6983, %v8018
        %v8089 = vadd.f32 %v6984, %v8023
        %v8090 = vadd.f32 %v6985, %v8026
        %v8091 = vadd.f32 %v6986, %v8031
        %v8092 = vadd.f32 %v6987, %v8034
        %v8093 = vadd.f32 %v6988, %v8039
        %v8094 = vadd.f32 %v6989, %v8042
        %v8095 = vadd.f32 %v6990, %v8047
        %v8096 = vadd.f32 %v6991, %v8050
        %v8097 = vadd.f32 %v6992, %v8055
        %v8098 = vadd.f32 %v6993, %v8058
        %v8099 = vadd.f32 %v6994, %v8063
        %v8100 = vadd.f32 %v6995, %v8066
        %s8101 = scalar_lea.vmem [#allocation2], 96
        %v8102 = vld [vmem:[%s8101] sm:$0xf]
        %v8103 = vld [vmem:[%s8101 + $0x4] sm:$0x1]
        %v8104 = vld [vmem:[%s8101 + $0x8] sm:$0xf]
        %v8105 = vld [vmem:[%s8101 + $0xc] sm:$0x1]
        %v8106 = vld [vmem:[%s8101 + $0x10] sm:$0xf]
        %v8107 = vld [vmem:[%s8101 + $0x14] sm:$0x1]
        %v8108 = vld [vmem:[%s8101 + $0x18] sm:$0xf]
        %v8109 = vld [vmem:[%s8101 + $0x1c] sm:$0x1]
        %v8110 = vld [vmem:[%s8101 + $0x20] sm:$0xf]
        %v8111 = vld [vmem:[%s8101 + $0x24] sm:$0x1]
        %v8112 = vld [vmem:[%s8101 + $0x28] sm:$0xf]
        %v8113 = vld [vmem:[%s8101 + $0x2c] sm:$0x1]
        %v8114 = vld [vmem:[%s8101 + $0x30] sm:$0xf]
        %v8115 = vld [vmem:[%s8101 + $0x34] sm:$0x1]
        %v8116 = vld [vmem:[%s8101 + $0x38] sm:$0xf]
        %v8117 = vld [vmem:[%s8101 + $0x3c] sm:$0x1]
        %v8118 = vld [vmem:[%s8101 + $0x50] sm:$0xf]
        %v8119 = vld [vmem:[%s8101 + $0x54] sm:$0x1]
        %v8120 = vld [vmem:[%s8101 + $0x58] sm:$0xf]
        %v8121 = vld [vmem:[%s8101 + $0x5c] sm:$0x1]
        %v8122 = vld [vmem:[%s8101 + $0x60] sm:$0xf]
        %v8123 = vld [vmem:[%s8101 + $0x64] sm:$0x1]
        %v8124 = vld [vmem:[%s8101 + $0x68] sm:$0xf]
        %v8125 = vld [vmem:[%s8101 + $0x6c] sm:$0x1]
        %v8126 = vld [vmem:[%s8101 + $0x70] sm:$0xf]
        %v8127 = vld [vmem:[%s8101 + $0x74] sm:$0x1]
        %v8128 = vld [vmem:[%s8101 + $0x78] sm:$0xf]
        %v8129 = vld [vmem:[%s8101 + $0x7c] sm:$0x1]
        %v8130 = vld [vmem:[%s8101 + $0x80] sm:$0xf]
        %v8131 = vld [vmem:[%s8101 + $0x84] sm:$0x1]
        %v8132 = vld [vmem:[%s8101 + $0x88] sm:$0xf]
        %v8133 = vld [vmem:[%s8101 + $0x8c] sm:$0x1]
        %v8134 = vld [vmem:[%s8101 + $0xa0] sm:$0xf]
        %v8135 = vld [vmem:[%s8101 + $0xa4] sm:$0x1]
        %v8136 = vld [vmem:[%s8101 + $0xa8] sm:$0xf]
        %v8137 = vld [vmem:[%s8101 + $0xac] sm:$0x1]
        %v8138 = vld [vmem:[%s8101 + $0xb0] sm:$0xf]
        %v8139 = vld [vmem:[%s8101 + $0xb4] sm:$0x1]
        %v8140 = vld [vmem:[%s8101 + $0xb8] sm:$0xf]
        %v8141 = vld [vmem:[%s8101 + $0xbc] sm:$0x1]
        %v8142 = vld [vmem:[%s8101 + $0xc0] sm:$0xf]
        %v8143 = vld [vmem:[%s8101 + $0xc4] sm:$0x1]
        %v8144 = vld [vmem:[%s8101 + $0xc8] sm:$0xf]
        %v8145 = vld [vmem:[%s8101 + $0xcc] sm:$0x1]
        %v8146 = vld [vmem:[%s8101 + $0xd0] sm:$0xf]
        %v8147 = vld [vmem:[%s8101 + $0xd4] sm:$0x1]
        %v8148 = vld [vmem:[%s8101 + $0xd8] sm:$0xf]
        %v8149 = vld [vmem:[%s8101 + $0xdc] sm:$0x1]
        %v8150 = vld [vmem:[%s8101 + $0xf0] sm:$0xf]
        %v8151 = vld [vmem:[%s8101 + $0xf4] sm:$0x1]
        %v8152 = vld [vmem:[%s8101 + $0xf8] sm:$0xf]
        %v8153 = vld [vmem:[%s8101 + $0xfc] sm:$0x1]
        %v8154 = vld [vmem:[%s8101 + $0x100] sm:$0xf]
        %v8155 = vld [vmem:[%s8101 + $0x104] sm:$0x1]
        %v8156 = vld [vmem:[%s8101 + $0x108] sm:$0xf]
        %v8157 = vld [vmem:[%s8101 + $0x10c] sm:$0x1]
        %v8158 = vld [vmem:[%s8101 + $0x110] sm:$0xf]
        %v8159 = vld [vmem:[%s8101 + $0x114] sm:$0x1]
        %v8160 = vld [vmem:[%s8101 + $0x118] sm:$0xf]
        %v8161 = vld [vmem:[%s8101 + $0x11c] sm:$0x1]
        %v8162 = vld [vmem:[%s8101 + $0x120] sm:$0xf]
        %v8163 = vld [vmem:[%s8101 + $0x124] sm:$0x1]
        %v8164 = vld [vmem:[%s8101 + $0x128] sm:$0xf]
        %v8165 = vld [vmem:[%s8101 + $0x12c] sm:$0x1]
        %v8230 = vunpack.c.l.b16 %v8102
        %v8231 = vunpack.c.l.b16 %v8103
        %v8232 = vunpack.c.l.b16 %v8104
        %v8233 = vunpack.c.l.b16 %v8105
        %v8234 = vunpack.c.l.b16 %v8106
        %v8235 = vunpack.c.l.b16 %v8107
        %v8236 = vunpack.c.l.b16 %v8108
        %v8237 = vunpack.c.l.b16 %v8109
        %v8238 = vunpack.c.l.b16 %v8110
        %v8239 = vunpack.c.l.b16 %v8111
        %v8240 = vunpack.c.l.b16 %v8112
        %v8241 = vunpack.c.l.b16 %v8113
        %v8242 = vunpack.c.l.b16 %v8114
        %v8243 = vunpack.c.l.b16 %v8115
        %v8244 = vunpack.c.l.b16 %v8116
        %v8245 = vunpack.c.l.b16 %v8117
        %v8246 = vunpack.c.l.b16 %v8118
        %v8247 = vunpack.c.l.b16 %v8119
        %v8248 = vunpack.c.l.b16 %v8120
        %v8249 = vunpack.c.l.b16 %v8121
        %v8250 = vunpack.c.l.b16 %v8122
        %v8251 = vunpack.c.l.b16 %v8123
        %v8252 = vunpack.c.l.b16 %v8124
        %v8253 = vunpack.c.l.b16 %v8125
        %v8254 = vunpack.c.l.b16 %v8126
        %v8255 = vunpack.c.l.b16 %v8127
        %v8256 = vunpack.c.l.b16 %v8128
        %v8257 = vunpack.c.l.b16 %v8129
        %v8258 = vunpack.c.l.b16 %v8130
        %v8259 = vunpack.c.l.b16 %v8131
        %v8260 = vunpack.c.l.b16 %v8132
        %v8261 = vunpack.c.l.b16 %v8133
        %v8262 = vunpack.c.l.b16 %v8134
        %v8263 = vunpack.c.l.b16 %v8135
        %v8264 = vunpack.c.l.b16 %v8136
        %v8265 = vunpack.c.l.b16 %v8137
        %v8266 = vunpack.c.l.b16 %v8138
        %v8267 = vunpack.c.l.b16 %v8139
        %v8268 = vunpack.c.l.b16 %v8140
        %v8269 = vunpack.c.l.b16 %v8141
        %v8270 = vunpack.c.l.b16 %v8142
        %v8271 = vunpack.c.l.b16 %v8143
        %v8272 = vunpack.c.l.b16 %v8144
        %v8273 = vunpack.c.l.b16 %v8145
        %v8274 = vunpack.c.l.b16 %v8146
        %v8275 = vunpack.c.l.b16 %v8147
        %v8276 = vunpack.c.l.b16 %v8148
        %v8277 = vunpack.c.l.b16 %v8149
        %v8278 = vunpack.c.l.b16 %v8150
        %v8279 = vunpack.c.l.b16 %v8151
        %v8280 = vunpack.c.l.b16 %v8152
        %v8281 = vunpack.c.l.b16 %v8153
        %v8282 = vunpack.c.l.b16 %v8154
        %v8283 = vunpack.c.l.b16 %v8155
        %v8284 = vunpack.c.l.b16 %v8156
        %v8285 = vunpack.c.l.b16 %v8157
        %v8286 = vunpack.c.l.b16 %v8158
        %v8287 = vunpack.c.l.b16 %v8159
        %v8288 = vunpack.c.l.b16 %v8160
        %v8289 = vunpack.c.l.b16 %v8161
        %v8290 = vunpack.c.l.b16 %v8162
        %v8291 = vunpack.c.l.b16 %v8163
        %v8292 = vunpack.c.l.b16 %v8164
        %v8293 = vunpack.c.l.b16 %v8165
        %v8294 = vpack.c.b16 %v8231, %v8230
        %v8295 = vpack.c.b16 %v8233, %v8232
        %v8296 = vpack.c.b16 %v8235, %v8234
        %v8297 = vpack.c.b16 %v8237, %v8236
        %v8298 = vpack.c.b16 %v8239, %v8238
        %v8299 = vpack.c.b16 %v8241, %v8240
        %v8300 = vpack.c.b16 %v8243, %v8242
        %v8301 = vpack.c.b16 %v8245, %v8244
        %v8302 = vpack.c.b16 %v8247, %v8246
        %v8303 = vpack.c.b16 %v8249, %v8248
        %v8304 = vpack.c.b16 %v8251, %v8250
        %v8305 = vpack.c.b16 %v8253, %v8252
        %v8306 = vpack.c.b16 %v8255, %v8254
        %v8307 = vpack.c.b16 %v8257, %v8256
        %v8308 = vpack.c.b16 %v8259, %v8258
        %v8309 = vpack.c.b16 %v8261, %v8260
        %v8310 = vpack.c.b16 %v8263, %v8262
        %v8311 = vpack.c.b16 %v8265, %v8264
        %v8312 = vpack.c.b16 %v8267, %v8266
        %v8313 = vpack.c.b16 %v8269, %v8268
        %v8314 = vpack.c.b16 %v8271, %v8270
        %v8315 = vpack.c.b16 %v8273, %v8272
        %v8316 = vpack.c.b16 %v8275, %v8274
        %v8317 = vpack.c.b16 %v8277, %v8276
        %v8318 = vpack.c.b16 %v8279, %v8278
        %v8319 = vpack.c.b16 %v8281, %v8280
        %v8320 = vpack.c.b16 %v8283, %v8282
        %v8321 = vpack.c.b16 %v8285, %v8284
        %v8322 = vpack.c.b16 %v8287, %v8286
        %v8323 = vpack.c.b16 %v8289, %v8288
        %v8324 = vpack.c.b16 %v8291, %v8290
        %v8325 = vpack.c.b16 %v8293, %v8292
        %v8327 = vshrl.u32 %v8294, 16
        %v8329 = vshll.u32 %v8294, 16
        %v8331 = vrot.slane %v8329, 1
        %v8332 = vor.u32 %v8327, %v8331
        %v8334 = vshrl.u32 %v8295, 16
        %v8336 = vshll.u32 %v8295, 16
        %v8338 = vrot.slane %v8336, 1
        %v8339 = vor.u32 %v8334, %v8338
        %v8341 = vshrl.u32 %v8296, 16
        %v8343 = vshll.u32 %v8296, 16
        %v8345 = vrot.slane %v8343, 1
        %v8346 = vor.u32 %v8341, %v8345
        %v8348 = vshrl.u32 %v8297, 16
        %v8350 = vshll.u32 %v8297, 16
        %v8352 = vrot.slane %v8350, 1
        %v8353 = vor.u32 %v8348, %v8352
        %v8355 = vshrl.u32 %v8298, 16
        %v8357 = vshll.u32 %v8298, 16
        %v8359 = vrot.slane %v8357, 1
        %v8360 = vor.u32 %v8355, %v8359
        %v8362 = vshrl.u32 %v8299, 16
        %v8364 = vshll.u32 %v8299, 16
        %v8366 = vrot.slane %v8364, 1
        %v8367 = vor.u32 %v8362, %v8366
        %v8369 = vshrl.u32 %v8300, 16
        %v8371 = vshll.u32 %v8300, 16
        %v8373 = vrot.slane %v8371, 1
        %v8374 = vor.u32 %v8369, %v8373
        %v8376 = vshrl.u32 %v8301, 16
        %v8378 = vshll.u32 %v8301, 16
        %v8380 = vrot.slane %v8378, 1
        %v8381 = vor.u32 %v8376, %v8380
        %v8383 = vshrl.u32 %v8302, 16
        %v8385 = vshll.u32 %v8302, 16
        %v8387 = vrot.slane %v8385, 1
        %v8388 = vor.u32 %v8383, %v8387
        %v8390 = vshrl.u32 %v8303, 16
        %v8392 = vshll.u32 %v8303, 16
        %v8394 = vrot.slane %v8392, 1
        %v8395 = vor.u32 %v8390, %v8394
        %v8397 = vshrl.u32 %v8304, 16
        %v8399 = vshll.u32 %v8304, 16
        %v8401 = vrot.slane %v8399, 1
        %v8402 = vor.u32 %v8397, %v8401
        %v8404 = vshrl.u32 %v8305, 16
        %v8406 = vshll.u32 %v8305, 16
        %v8408 = vrot.slane %v8406, 1
        %v8409 = vor.u32 %v8404, %v8408
        %v8411 = vshrl.u32 %v8306, 16
        %v8413 = vshll.u32 %v8306, 16
        %v8415 = vrot.slane %v8413, 1
        %v8416 = vor.u32 %v8411, %v8415
        %v8418 = vshrl.u32 %v8307, 16
        %v8420 = vshll.u32 %v8307, 16
        %v8422 = vrot.slane %v8420, 1
        %v8423 = vor.u32 %v8418, %v8422
        %v8425 = vshrl.u32 %v8308, 16
        %v8427 = vshll.u32 %v8308, 16
        %v8429 = vrot.slane %v8427, 1
        %v8430 = vor.u32 %v8425, %v8429
        %v8432 = vshrl.u32 %v8309, 16
        %v8434 = vshll.u32 %v8309, 16
        %v8436 = vrot.slane %v8434, 1
        %v8437 = vor.u32 %v8432, %v8436
        %v8439 = vshrl.u32 %v8310, 16
        %v8441 = vshll.u32 %v8310, 16
        %v8443 = vrot.slane %v8441, 1
        %v8444 = vor.u32 %v8439, %v8443
        %v8446 = vshrl.u32 %v8311, 16
        %v8448 = vshll.u32 %v8311, 16
        %v8450 = vrot.slane %v8448, 1
        %v8451 = vor.u32 %v8446, %v8450
        %v8453 = vshrl.u32 %v8312, 16
        %v8455 = vshll.u32 %v8312, 16
        %v8457 = vrot.slane %v8455, 1
        %v8458 = vor.u32 %v8453, %v8457
        %v8460 = vshrl.u32 %v8313, 16
        %v8462 = vshll.u32 %v8313, 16
        %v8464 = vrot.slane %v8462, 1
        %v8465 = vor.u32 %v8460, %v8464
        %v8467 = vshrl.u32 %v8314, 16
        %v8469 = vshll.u32 %v8314, 16
        %v8471 = vrot.slane %v8469, 1
        %v8472 = vor.u32 %v8467, %v8471
        %v8474 = vshrl.u32 %v8315, 16
        %v8476 = vshll.u32 %v8315, 16
        %v8478 = vrot.slane %v8476, 1
        %v8479 = vor.u32 %v8474, %v8478
        %v8481 = vshrl.u32 %v8316, 16
        %v8483 = vshll.u32 %v8316, 16
        %v8485 = vrot.slane %v8483, 1
        %v8486 = vor.u32 %v8481, %v8485
        %v8488 = vshrl.u32 %v8317, 16
        %v8490 = vshll.u32 %v8317, 16
        %v8492 = vrot.slane %v8490, 1
        %v8493 = vor.u32 %v8488, %v8492
        %v8495 = vshrl.u32 %v8318, 16
        %v8497 = vshll.u32 %v8318, 16
        %v8499 = vrot.slane %v8497, 1
        %v8500 = vor.u32 %v8495, %v8499
        %v8502 = vshrl.u32 %v8319, 16
        %v8504 = vshll.u32 %v8319, 16
        %v8506 = vrot.slane %v8504, 1
        %v8507 = vor.u32 %v8502, %v8506
        %v8509 = vshrl.u32 %v8320, 16
        %v8511 = vshll.u32 %v8320, 16
        %v8513 = vrot.slane %v8511, 1
        %v8514 = vor.u32 %v8509, %v8513
        %v8516 = vshrl.u32 %v8321, 16
        %v8518 = vshll.u32 %v8321, 16
        %v8520 = vrot.slane %v8518, 1
        %v8521 = vor.u32 %v8516, %v8520
        %v8523 = vshrl.u32 %v8322, 16
        %v8525 = vshll.u32 %v8322, 16
        %v8527 = vrot.slane %v8525, 1
        %v8528 = vor.u32 %v8523, %v8527
        %v8530 = vshrl.u32 %v8323, 16
        %v8532 = vshll.u32 %v8323, 16
        %v8534 = vrot.slane %v8532, 1
        %v8535 = vor.u32 %v8530, %v8534
        %v8537 = vshrl.u32 %v8324, 16
        %v8539 = vshll.u32 %v8324, 16
        %v8541 = vrot.slane %v8539, 1
        %v8542 = vor.u32 %v8537, %v8541
        %v8544 = vshrl.u32 %v8325, 16
        %v8546 = vshll.u32 %v8325, 16
        %v8548 = vrot.slane %v8546, 1
        %v8549 = vor.u32 %v8544, %v8548
        %8550 = vrot.lane.b32.xlu0 %v8332, 8
        %v8551 = vpop.permute.xlu0 %8550
        %8552 = vrot.lane.b32.xlu0 %v8339, 8
        %v8553 = vpop.permute.xlu0 %8552
        %8554 = vrot.lane.b32.xlu0 %v8346, 8
        %v8555 = vpop.permute.xlu0 %8554
        %8556 = vrot.lane.b32.xlu0 %v8353, 8
        %v8557 = vpop.permute.xlu0 %8556
        %8558 = vrot.lane.b32.xlu0 %v8360, 8
        %v8559 = vpop.permute.xlu0 %8558
        %8560 = vrot.lane.b32.xlu0 %v8367, 8
        %v8561 = vpop.permute.xlu0 %8560
        %8562 = vrot.lane.b32.xlu0 %v8374, 8
        %v8563 = vpop.permute.xlu0 %8562
        %8564 = vrot.lane.b32.xlu0 %v8381, 8
        %v8565 = vpop.permute.xlu0 %8564
        %8566 = vrot.lane.b32.xlu0 %v8388, 8
        %v8567 = vpop.permute.xlu0 %8566
        %8568 = vrot.lane.b32.xlu0 %v8395, 8
        %v8569 = vpop.permute.xlu0 %8568
        %8570 = vrot.lane.b32.xlu0 %v8402, 8
        %v8571 = vpop.permute.xlu0 %8570
        %8572 = vrot.lane.b32.xlu0 %v8409, 8
        %v8573 = vpop.permute.xlu0 %8572
        %8574 = vrot.lane.b32.xlu0 %v8416, 8
        %v8575 = vpop.permute.xlu0 %8574
        %8576 = vrot.lane.b32.xlu0 %v8423, 8
        %v8577 = vpop.permute.xlu0 %8576
        %8578 = vrot.lane.b32.xlu0 %v8430, 8
        %v8579 = vpop.permute.xlu0 %8578
        %8580 = vrot.lane.b32.xlu0 %v8437, 8
        %v8581 = vpop.permute.xlu0 %8580
        %8582 = vrot.lane.b32.xlu0 %v8444, 8
        %v8583 = vpop.permute.xlu0 %8582
        %8584 = vrot.lane.b32.xlu0 %v8451, 8
        %v8585 = vpop.permute.xlu0 %8584
        %8586 = vrot.lane.b32.xlu0 %v8458, 8
        %v8587 = vpop.permute.xlu0 %8586
        %8588 = vrot.lane.b32.xlu0 %v8465, 8
        %v8589 = vpop.permute.xlu0 %8588
        %8590 = vrot.lane.b32.xlu0 %v8472, 8
        %v8591 = vpop.permute.xlu0 %8590
        %8592 = vrot.lane.b32.xlu0 %v8479, 8
        %v8593 = vpop.permute.xlu0 %8592
        %8594 = vrot.lane.b32.xlu0 %v8486, 8
        %v8595 = vpop.permute.xlu0 %8594
        %8596 = vrot.lane.b32.xlu0 %v8493, 8
        %v8597 = vpop.permute.xlu0 %8596
        %8598 = vrot.lane.b32.xlu0 %v8500, 8
        %v8599 = vpop.permute.xlu0 %8598
        %8600 = vrot.lane.b32.xlu0 %v8507, 8
        %v8601 = vpop.permute.xlu0 %8600
        %8602 = vrot.lane.b32.xlu0 %v8514, 8
        %v8603 = vpop.permute.xlu0 %8602
        %8604 = vrot.lane.b32.xlu0 %v8521, 8
        %v8605 = vpop.permute.xlu0 %8604
        %8606 = vrot.lane.b32.xlu0 %v8528, 8
        %v8607 = vpop.permute.xlu0 %8606
        %8608 = vrot.lane.b32.xlu0 %v8535, 8
        %v8609 = vpop.permute.xlu0 %8608
        %8610 = vrot.lane.b32.xlu0 %v8542, 8
        %v8611 = vpop.permute.xlu0 %8610
        %8612 = vrot.lane.b32.xlu0 %v8549, 8
        %v8613 = vpop.permute.xlu0 %8612
        %v8614 = vrot.slane %v8294, 1
        %v8615 = vrot.slane %v8295, 1
        %v8616 = vrot.slane %v8296, 1
        %v8617 = vrot.slane %v8297, 1
        %v8618 = vrot.slane %v8298, 1
        %v8619 = vrot.slane %v8299, 1
        %v8620 = vrot.slane %v8300, 1
        %v8621 = vrot.slane %v8301, 1
        %v8622 = vrot.slane %v8302, 1
        %v8623 = vrot.slane %v8303, 1
        %v8624 = vrot.slane %v8304, 1
        %v8625 = vrot.slane %v8305, 1
        %v8626 = vrot.slane %v8306, 1
        %v8627 = vrot.slane %v8307, 1
        %v8628 = vrot.slane %v8308, 1
        %v8629 = vrot.slane %v8309, 1
        %v8630 = vrot.slane %v8310, 1
        %v8631 = vrot.slane %v8311, 1
        %v8632 = vrot.slane %v8312, 1
        %v8633 = vrot.slane %v8313, 1
        %v8634 = vrot.slane %v8314, 1
        %v8635 = vrot.slane %v8315, 1
        %v8636 = vrot.slane %v8316, 1
        %v8637 = vrot.slane %v8317, 1
        %v8638 = vrot.slane %v8318, 1
        %v8639 = vrot.slane %v8319, 1
        %v8640 = vrot.slane %v8320, 1
        %v8641 = vrot.slane %v8321, 1
        %v8642 = vrot.slane %v8322, 1
        %v8643 = vrot.slane %v8323, 1
        %v8644 = vrot.slane %v8324, 1
        %v8645 = vrot.slane %v8325, 1
        %8646 = vrot.lane.b32.xlu0 %v8614, 16
        %v8647 = vpop.permute.xlu0 %8646
        %8648 = vrot.lane.b32.xlu0 %v8615, 16
        %v8649 = vpop.permute.xlu0 %8648
        %8650 = vrot.lane.b32.xlu0 %v8616, 16
        %v8651 = vpop.permute.xlu0 %8650
        %8652 = vrot.lane.b32.xlu0 %v8617, 16
        %v8653 = vpop.permute.xlu0 %8652
        %8654 = vrot.lane.b32.xlu0 %v8618, 16
        %v8655 = vpop.permute.xlu0 %8654
        %8656 = vrot.lane.b32.xlu0 %v8619, 16
        %v8657 = vpop.permute.xlu0 %8656
        %8658 = vrot.lane.b32.xlu0 %v8620, 16
        %v8659 = vpop.permute.xlu0 %8658
        %8660 = vrot.lane.b32.xlu0 %v8621, 16
        %v8661 = vpop.permute.xlu0 %8660
        %8662 = vrot.lane.b32.xlu0 %v8622, 16
        %v8663 = vpop.permute.xlu0 %8662
        %8664 = vrot.lane.b32.xlu0 %v8623, 16
        %v8665 = vpop.permute.xlu0 %8664
        %8666 = vrot.lane.b32.xlu0 %v8624, 16
        %v8667 = vpop.permute.xlu0 %8666
        %8668 = vrot.lane.b32.xlu0 %v8625, 16
        %v8669 = vpop.permute.xlu0 %8668
        %8670 = vrot.lane.b32.xlu0 %v8626, 16
        %v8671 = vpop.permute.xlu0 %8670
        %8672 = vrot.lane.b32.xlu0 %v8627, 16
        %v8673 = vpop.permute.xlu0 %8672
        %8674 = vrot.lane.b32.xlu0 %v8628, 16
        %v8675 = vpop.permute.xlu0 %8674
        %8676 = vrot.lane.b32.xlu0 %v8629, 16
        %v8677 = vpop.permute.xlu0 %8676
        %8678 = vrot.lane.b32.xlu0 %v8630, 16
        %v8679 = vpop.permute.xlu0 %8678
        %8680 = vrot.lane.b32.xlu0 %v8631, 16
        %v8681 = vpop.permute.xlu0 %8680
        %8682 = vrot.lane.b32.xlu0 %v8632, 16
        %v8683 = vpop.permute.xlu0 %8682
        %8684 = vrot.lane.b32.xlu0 %v8633, 16
        %v8685 = vpop.permute.xlu0 %8684
        %8686 = vrot.lane.b32.xlu0 %v8634, 16
        %v8687 = vpop.permute.xlu0 %8686
        %8688 = vrot.lane.b32.xlu0 %v8635, 16
        %v8689 = vpop.permute.xlu0 %8688
        %8690 = vrot.lane.b32.xlu0 %v8636, 16
        %v8691 = vpop.permute.xlu0 %8690
        %8692 = vrot.lane.b32.xlu0 %v8637, 16
        %v8693 = vpop.permute.xlu0 %8692
        %8694 = vrot.lane.b32.xlu0 %v8638, 16
        %v8695 = vpop.permute.xlu0 %8694
        %8696 = vrot.lane.b32.xlu0 %v8639, 16
        %v8697 = vpop.permute.xlu0 %8696
        %8698 = vrot.lane.b32.xlu0 %v8640, 16
        %v8699 = vpop.permute.xlu0 %8698
        %8700 = vrot.lane.b32.xlu0 %v8641, 16
        %v8701 = vpop.permute.xlu0 %8700
        %8702 = vrot.lane.b32.xlu0 %v8642, 16
        %v8703 = vpop.permute.xlu0 %8702
        %8704 = vrot.lane.b32.xlu0 %v8643, 16
        %v8705 = vpop.permute.xlu0 %8704
        %8706 = vrot.lane.b32.xlu0 %v8644, 16
        %v8707 = vpop.permute.xlu0 %8706
        %8708 = vrot.lane.b32.xlu0 %v8645, 16
        %v8709 = vpop.permute.xlu0 %8708
        %v8712 = vsel %vm3243, %v8102, %v8551
        %v8715 = vsel %vm3243, %v8104, %v8553
        %v8718 = vsel %vm3243, %v8106, %v8555
        %v8721 = vsel %vm3243, %v8108, %v8557
        %v8724 = vsel %vm3243, %v8110, %v8559
        %v8727 = vsel %vm3243, %v8112, %v8561
        %v8730 = vsel %vm3243, %v8114, %v8563
        %v8733 = vsel %vm3243, %v8116, %v8565
        %v8736 = vsel %vm3243, %v8118, %v8567
        %v8739 = vsel %vm3243, %v8120, %v8569
        %v8742 = vsel %vm3243, %v8122, %v8571
        %v8745 = vsel %vm3243, %v8124, %v8573
        %v8748 = vsel %vm3243, %v8126, %v8575
        %v8751 = vsel %vm3243, %v8128, %v8577
        %v8754 = vsel %vm3243, %v8130, %v8579
        %v8757 = vsel %vm3243, %v8132, %v8581
        %v8760 = vsel %vm3243, %v8134, %v8583
        %v8763 = vsel %vm3243, %v8136, %v8585
        %v8766 = vsel %vm3243, %v8138, %v8587
        %v8769 = vsel %vm3243, %v8140, %v8589
        %v8772 = vsel %vm3243, %v8142, %v8591
        %v8775 = vsel %vm3243, %v8144, %v8593
        %v8778 = vsel %vm3243, %v8146, %v8595
        %v8781 = vsel %vm3243, %v8148, %v8597
        %v8784 = vsel %vm3243, %v8150, %v8599
        %v8787 = vsel %vm3243, %v8152, %v8601
        %v8790 = vsel %vm3243, %v8154, %v8603
        %v8793 = vsel %vm3243, %v8156, %v8605
        %v8796 = vsel %vm3243, %v8158, %v8607
        %v8799 = vsel %vm3243, %v8160, %v8609
        %v8802 = vsel %vm3243, %v8162, %v8611
        %v8805 = vsel %vm3243, %v8164, %v8613
        %v8807 = vsel %vm1134, %v8712, %v8647
        %v8809 = vsel %vm1134, %v8715, %v8649
        %v8811 = vsel %vm1134, %v8718, %v8651
        %v8813 = vsel %vm1134, %v8721, %v8653
        %v8815 = vsel %vm1134, %v8724, %v8655
        %v8817 = vsel %vm1134, %v8727, %v8657
        %v8819 = vsel %vm1134, %v8730, %v8659
        %v8821 = vsel %vm1134, %v8733, %v8661
        %v8823 = vsel %vm1134, %v8736, %v8663
        %v8825 = vsel %vm1134, %v8739, %v8665
        %v8827 = vsel %vm1134, %v8742, %v8667
        %v8829 = vsel %vm1134, %v8745, %v8669
        %v8831 = vsel %vm1134, %v8748, %v8671
        %v8833 = vsel %vm1134, %v8751, %v8673
        %v8835 = vsel %vm1134, %v8754, %v8675
        %v8837 = vsel %vm1134, %v8757, %v8677
        %v8839 = vsel %vm1134, %v8760, %v8679
        %v8841 = vsel %vm1134, %v8763, %v8681
        %v8843 = vsel %vm1134, %v8766, %v8683
        %v8845 = vsel %vm1134, %v8769, %v8685
        %v8847 = vsel %vm1134, %v8772, %v8687
        %v8849 = vsel %vm1134, %v8775, %v8689
        %v8851 = vsel %vm1134, %v8778, %v8691
        %v8853 = vsel %vm1134, %v8781, %v8693
        %v8855 = vsel %vm1134, %v8784, %v8695
        %v8857 = vsel %vm1134, %v8787, %v8697
        %v8859 = vsel %vm1134, %v8790, %v8699
        %v8861 = vsel %vm1134, %v8793, %v8701
        %v8863 = vsel %vm1134, %v8796, %v8703
        %v8865 = vsel %vm1134, %v8799, %v8705
        %v8867 = vsel %vm1134, %v8802, %v8707
        %v8869 = vsel %vm1134, %v8805, %v8709
        %s8870 = scalar_lea.vmem %s5, 60
        %v8871 = vld [vmem:[%s8870] sm:$0xf]
        %v8872 = vld [vmem:[%s8870 + $0x4] sm:$0xf]
        %v8873 = vld [vmem:[%s8870 + $0x8] sm:$0xf]
        %v8906 = vunpack.c.l.b16 %v8807
        %v8907 = vunpack.c.l.b16 %v8809
        %v8908 = vunpack.c.l.b16 %v8811
        %v8909 = vunpack.c.l.b16 %v8813
        %v8910 = vunpack.c.l.b16 %v8815
        %v8911 = vunpack.c.l.b16 %v8817
        %v8912 = vunpack.c.l.b16 %v8819
        %v8913 = vunpack.c.l.b16 %v8821
        %v8914 = vunpack.c.l.b16 %v8823
        %v8915 = vunpack.c.l.b16 %v8825
        %v8916 = vunpack.c.l.b16 %v8827
        %v8917 = vunpack.c.l.b16 %v8829
        %v8918 = vunpack.c.l.b16 %v8831
        %v8919 = vunpack.c.l.b16 %v8833
        %v8920 = vunpack.c.l.b16 %v8835
        %v8921 = vunpack.c.l.b16 %v8837
        %v8922 = vunpack.c.l.b16 %v8839
        %v8923 = vunpack.c.l.b16 %v8841
        %v8924 = vunpack.c.l.b16 %v8843
        %v8925 = vunpack.c.l.b16 %v8845
        %v8926 = vunpack.c.l.b16 %v8847
        %v8927 = vunpack.c.l.b16 %v8849
        %v8928 = vunpack.c.l.b16 %v8851
        %v8929 = vunpack.c.l.b16 %v8853
        %v8930 = vunpack.c.l.b16 %v8855
        %v8931 = vunpack.c.l.b16 %v8857
        %v8932 = vunpack.c.l.b16 %v8859
        %v8933 = vunpack.c.l.b16 %v8861
        %v8934 = vunpack.c.l.b16 %v8863
        %v8935 = vunpack.c.l.b16 %v8865
        %v8936 = vunpack.c.l.b16 %v8867
        %v8937 = vunpack.c.l.b16 %v8869
        %v8938 = vpack.c.b16 %v8907, %v8906
        %v8939 = vpack.c.b16 %v8909, %v8908
        %v8940 = vpack.c.b16 %v8911, %v8910
        %v8941 = vpack.c.b16 %v8913, %v8912
        %v8942 = vpack.c.b16 %v8915, %v8914
        %v8943 = vpack.c.b16 %v8917, %v8916
        %v8944 = vpack.c.b16 %v8919, %v8918
        %v8945 = vpack.c.b16 %v8921, %v8920
        %v8946 = vpack.c.b16 %v8923, %v8922
        %v8947 = vpack.c.b16 %v8925, %v8924
        %v8948 = vpack.c.b16 %v8927, %v8926
        %v8949 = vpack.c.b16 %v8929, %v8928
        %v8950 = vpack.c.b16 %v8931, %v8930
        %v8951 = vpack.c.b16 %v8933, %v8932
        %v8952 = vpack.c.b16 %v8935, %v8934
        %v8953 = vpack.c.b16 %v8937, %v8936
        %v8957 = vunpack.c.l.b16 %v8871
        %v8958 = vunpack.c.l.b16 %v8872
        %v8959 = vunpack.c.l.b16 %v8873
        %v8960 = vpack.c.b16 %v8958, %v8957
        %v8961 = vpack.c.b16 %v8959, %v8959
        %v8964 = vsel %vm4269, %v8938, 0
        %v8967 = vsel %vm4269, %v8939, 0
        %v8970 = vsel %vm4269, %v8940, 0
        %v8973 = vsel %vm4269, %v8941, 0
        %v8976 = vsel %vm4269, %v8942, 0
        %v8979 = vsel %vm4269, %v8943, 0
        %v8982 = vsel %vm4269, %v8944, 0
        %v8985 = vsel %vm4269, %v8945, 0
        %v8988 = vsel %vm4269, %v8946, 0
        %v8991 = vsel %vm4269, %v8947, 0
        %v8994 = vsel %vm4269, %v8948, 0
        %v8997 = vsel %vm4269, %v8949, 0
        %v9000 = vsel %vm4269, %v8950, 0
        %v9003 = vsel %vm4269, %v8951, 0
        %v9006 = vsel %vm4269, %v8952, 0
        %v9009 = vsel %vm4269, %v8953, 0
        %v9012 = vsel %vm4318, %v8961, 0
        %9014 = vmatprep.subr.bf16.mxu0 0
        %9015 = vmatpush1.bf16.msra.mxu0 %v8960
        %9016 = vmatprep.subr.bf16.mxu0 0
        %9017 = vmatpush1.bf16.msra.mxu0 %v9012
        %9018 = vmatprep.subr.bf16.mxu0 0
        %9019 = vmatpush1.bf16.msra.mxu0 0
        %9020 = vmatprep.subr.bf16.mxu0 0
        %9021 = vmatpush1.bf16.msra.mxu0 0
        %9022 = vmatprep.subr.bf16.mxu0 0
        %9023 = vmatpush1.bf16.msra.mxu0 0
        %9024 = vmatprep.subr.bf16.mxu0 0
        %9025 = vmatpush1.bf16.msra.mxu0 0
        %9026 = vmatprep.subr.bf16.mxu0 0
        %9027 = vmatpush1.bf16.msra.mxu0 0
        %9028 = vmatprep.subr.bf16.mxu0 0
        %9029 = vmatpush1.bf16.msra.mxu0 0
        %9030 = vmatprep.subr.bf16.mxu0 0
        %9031 = vmatpush1.bf16.msra.mxu0 0
        %9032 = vmatprep.subr.bf16.mxu0 0
        %9033 = vmatpush1.bf16.msra.mxu0 0
        %9034 = vmatprep.subr.bf16.mxu0 0
        %9035 = vmatpush1.bf16.msra.mxu0 0
        %9036 = vmatprep.subr.bf16.mxu0 0
        %9037 = vmatpush1.bf16.msra.mxu0 0
        %9038 = vmatprep.subr.bf16.mxu0 0
        %9039 = vmatpush1.bf16.msra.mxu0 0
        %9040 = vmatprep.subr.bf16.mxu0 0
        %9041 = vmatpush1.bf16.msra.mxu0 0
        %9042 = vmatprep.subr.bf16.mxu0 0
        %9043 = vmatpush1.bf16.msra.mxu0 0
        %9044 = vmatprep.subr.bf16.mxu0 0
        %9045 = vmatpush1.bf16.msra.mxu0 0
        %9046 = vmatprep.mubr.bf16.mxu0 0
        %9047 = vmatmul.mubr.bf16.gmra.mrb[0].mxu0 %v8964
        %v9048 = vpop.f32.mrb[0].mxu0
        %v9049 = vadd.f32 0.0, %v9048
        %v9050 = vpop.f32.mrb[0].mxu0
        %v9051 = vpop.f32.mrb[0].mxu0
        %v9052 = vadd.f32 0.0, %v9051
        %v9053 = vpop.f32.mrb[0].mxu0
        %9054 = vmatprep.mubr.bf16.mxu0 0
        %9055 = vmatmul.mubr.bf16.gmra.mrb[0].mxu0 %v8967
        %v9056 = vpop.f32.mrb[0].mxu0
        %v9057 = vadd.f32 0.0, %v9056
        %v9058 = vpop.f32.mrb[0].mxu0
        %v9059 = vpop.f32.mrb[0].mxu0
        %v9060 = vadd.f32 0.0, %v9059
        %v9061 = vpop.f32.mrb[0].mxu0
        %9062 = vmatprep.mubr.bf16.mxu0 0
        %9063 = vmatmul.mubr.bf16.gmra.mrb[0].mxu0 %v8970
        %v9064 = vpop.f32.mrb[0].mxu0
        %v9065 = vadd.f32 0.0, %v9064
        %v9066 = vpop.f32.mrb[0].mxu0
        %v9067 = vpop.f32.mrb[0].mxu0
        %v9068 = vadd.f32 0.0, %v9067
        %v9069 = vpop.f32.mrb[0].mxu0
        %9070 = vmatprep.mubr.bf16.mxu0 0
        %9071 = vmatmul.mubr.bf16.gmra.mrb[0].mxu0 %v8973
        %v9072 = vpop.f32.mrb[0].mxu0
        %v9073 = vadd.f32 0.0, %v9072
        %v9074 = vpop.f32.mrb[0].mxu0
        %v9075 = vpop.f32.mrb[0].mxu0
        %v9076 = vadd.f32 0.0, %v9075
        %v9077 = vpop.f32.mrb[0].mxu0
        %9078 = vmatprep.mubr.bf16.mxu0 0
        %9079 = vmatmul.mubr.bf16.gmra.mrb[0].mxu0 %v8976
        %v9080 = vpop.f32.mrb[0].mxu0
        %v9081 = vadd.f32 0.0, %v9080
        %v9082 = vpop.f32.mrb[0].mxu0
        %v9083 = vpop.f32.mrb[0].mxu0
        %v9084 = vadd.f32 0.0, %v9083
        %v9085 = vpop.f32.mrb[0].mxu0
        %9086 = vmatprep.mubr.bf16.mxu0 0
        %9087 = vmatmul.mubr.bf16.gmra.mrb[0].mxu0 %v8979
        %v9088 = vpop.f32.mrb[0].mxu0
        %v9089 = vadd.f32 0.0, %v9088
        %v9090 = vpop.f32.mrb[0].mxu0
        %v9091 = vpop.f32.mrb[0].mxu0
        %v9092 = vadd.f32 0.0, %v9091
        %v9093 = vpop.f32.mrb[0].mxu0
        %9094 = vmatprep.mubr.bf16.mxu0 0
        %9095 = vmatmul.mubr.bf16.gmra.mrb[0].mxu0 %v8982
        %v9096 = vpop.f32.mrb[0].mxu0
        %v9097 = vadd.f32 0.0, %v9096
        %v9098 = vpop.f32.mrb[0].mxu0
        %v9099 = vpop.f32.mrb[0].mxu0
        %v9100 = vadd.f32 0.0, %v9099
        %v9101 = vpop.f32.mrb[0].mxu0
        %9102 = vmatprep.mubr.bf16.mxu0 0
        %9103 = vmatmul.mubr.bf16.gmra.mrb[0].mxu0 %v8985
        %v9104 = vpop.f32.mrb[0].mxu0
        %v9105 = vadd.f32 0.0, %v9104
        %v9106 = vpop.f32.mrb[0].mxu0
        %v9107 = vpop.f32.mrb[0].mxu0
        %v9108 = vadd.f32 0.0, %v9107
        %v9109 = vpop.f32.mrb[0].mxu0
        %9110 = vmatprep.mubr.bf16.mxu0 0
        %9111 = vmatmul.mubr.bf16.gmra.mrb[0].mxu0 %v8988
        %v9112 = vpop.f32.mrb[0].mxu0
        %v9113 = vadd.f32 0.0, %v9112
        %v9114 = vpop.f32.mrb[0].mxu0
        %v9115 = vpop.f32.mrb[0].mxu0
        %v9116 = vadd.f32 0.0, %v9115
        %v9117 = vpop.f32.mrb[0].mxu0
        %9118 = vmatprep.mubr.bf16.mxu0 0
        %9119 = vmatmul.mubr.bf16.gmra.mrb[0].mxu0 %v8991
        %v9120 = vpop.f32.mrb[0].mxu0
        %v9121 = vadd.f32 0.0, %v9120
        %v9122 = vpop.f32.mrb[0].mxu0
        %v9123 = vpop.f32.mrb[0].mxu0
        %v9124 = vadd.f32 0.0, %v9123
        %v9125 = vpop.f32.mrb[0].mxu0
        %9126 = vmatprep.mubr.bf16.mxu0 0
        %9127 = vmatmul.mubr.bf16.gmra.mrb[0].mxu0 %v8994
        %v9128 = vpop.f32.mrb[0].mxu0
        %v9129 = vadd.f32 0.0, %v9128
        %v9130 = vpop.f32.mrb[0].mxu0
        %v9131 = vpop.f32.mrb[0].mxu0
        %v9132 = vadd.f32 0.0, %v9131
        %v9133 = vpop.f32.mrb[0].mxu0
        %9134 = vmatprep.mubr.bf16.mxu0 0
        %9135 = vmatmul.mubr.bf16.gmra.mrb[0].mxu0 %v8997
        %v9136 = vpop.f32.mrb[0].mxu0
        %v9137 = vadd.f32 0.0, %v9136
        %v9138 = vpop.f32.mrb[0].mxu0
        %v9139 = vpop.f32.mrb[0].mxu0
        %v9140 = vadd.f32 0.0, %v9139
        %v9141 = vpop.f32.mrb[0].mxu0
        %9142 = vmatprep.mubr.bf16.mxu0 0
        %9143 = vmatmul.mubr.bf16.gmra.mrb[0].mxu0 %v9000
        %v9144 = vpop.f32.mrb[0].mxu0
        %v9145 = vadd.f32 0.0, %v9144
        %v9146 = vpop.f32.mrb[0].mxu0
        %v9147 = vpop.f32.mrb[0].mxu0
        %v9148 = vadd.f32 0.0, %v9147
        %v9149 = vpop.f32.mrb[0].mxu0
        %9150 = vmatprep.mubr.bf16.mxu0 0
        %9151 = vmatmul.mubr.bf16.gmra.mrb[0].mxu0 %v9003
        %v9152 = vpop.f32.mrb[0].mxu0
        %v9153 = vadd.f32 0.0, %v9152
        %v9154 = vpop.f32.mrb[0].mxu0
        %v9155 = vpop.f32.mrb[0].mxu0
        %v9156 = vadd.f32 0.0, %v9155
        %v9157 = vpop.f32.mrb[0].mxu0
        %9158 = vmatprep.mubr.bf16.mxu0 0
        %9159 = vmatmul.mubr.bf16.gmra.mrb[0].mxu0 %v9006
        %v9160 = vpop.f32.mrb[0].mxu0
        %v9161 = vadd.f32 0.0, %v9160
        %v9162 = vpop.f32.mrb[0].mxu0
        %v9163 = vpop.f32.mrb[0].mxu0
        %v9164 = vadd.f32 0.0, %v9163
        %v9165 = vpop.f32.mrb[0].mxu0
        %9166 = vmatprep.mubr.bf16.mxu0 0
        %9167 = vmatmul.mubr.bf16.gmra.mrb[0].mxu0 %v9009
        %v9168 = vpop.f32.mrb[0].mxu0
        %v9169 = vadd.f32 0.0, %v9168
        %v9170 = vpop.f32.mrb[0].mxu0
        %v9171 = vpop.f32.mrb[0].mxu0
        %v9172 = vadd.f32 0.0, %v9171
        %v9173 = vpop.f32.mrb[0].mxu0
        %9174 = vdwg.mxu0
        %v9175 = vadd.f32 %v8069, %v9049
        %v9176 = vadd.f32 %v8070, %v9052
        %v9177 = vadd.f32 %v8071, %v9057
        %v9178 = vadd.f32 %v8072, %v9060
        %v9179 = vadd.f32 %v8073, %v9065
        %v9180 = vadd.f32 %v8074, %v9068
        %v9181 = vadd.f32 %v8075, %v9073
        %v9182 = vadd.f32 %v8076, %v9076
        %v9183 = vadd.f32 %v8077, %v9081
        %v9184 = vadd.f32 %v8078, %v9084
        %v9185 = vadd.f32 %v8079, %v9089
        %v9186 = vadd.f32 %v8080, %v9092
        %v9187 = vadd.f32 %v8081, %v9097
        %v9188 = vadd.f32 %v8082, %v9100
        %v9189 = vadd.f32 %v8083, %v9105
        %v9190 = vadd.f32 %v8084, %v9108
        %v9191 = vadd.f32 %v8085, %v9113
        %v9192 = vadd.f32 %v8086, %v9116
        %v9193 = vadd.f32 %v8087, %v9121
        %v9194 = vadd.f32 %v8088, %v9124
        %v9195 = vadd.f32 %v8089, %v9129
        %v9196 = vadd.f32 %v8090, %v9132
        %v9197 = vadd.f32 %v8091, %v9137
        %v9198 = vadd.f32 %v8092, %v9140
        %v9199 = vadd.f32 %v8093, %v9145
        %v9200 = vadd.f32 %v8094, %v9148
        %v9201 = vadd.f32 %v8095, %v9153
        %v9202 = vadd.f32 %v8096, %v9156
        %v9203 = vadd.f32 %v8097, %v9161
        %v9204 = vadd.f32 %v8098, %v9164
        %v9205 = vadd.f32 %v8099, %v9169
        %v9206 = vadd.f32 %v8100, %v9172
        %s9207 = scalar_lea.vmem [#allocation2], 160
        %v9208 = vld [vmem:[%s9207] sm:$0xf]
        %v9209 = vld [vmem:[%s9207 + $0x4] sm:$0x1]
        %v9210 = vld [vmem:[%s9207 + $0x8] sm:$0xf]
        %v9211 = vld [vmem:[%s9207 + $0xc] sm:$0x1]
        %v9212 = vld [vmem:[%s9207 + $0x10] sm:$0xf]
        %v9213 = vld [vmem:[%s9207 + $0x14] sm:$0x1]
        %v9214 = vld [vmem:[%s9207 + $0x18] sm:$0xf]
        %v9215 = vld [vmem:[%s9207 + $0x1c] sm:$0x1]
        %v9216 = vld [vmem:[%s9207 + $0x20] sm:$0xf]
        %v9217 = vld [vmem:[%s9207 + $0x24] sm:$0x1]
        %v9218 = vld [vmem:[%s9207 + $0x28] sm:$0xf]
        %v9219 = vld [vmem:[%s9207 + $0x2c] sm:$0x1]
        %v9220 = vld [vmem:[%s9207 + $0x30] sm:$0xf]
        %v9221 = vld [vmem:[%s9207 + $0x34] sm:$0x1]
        %v9222 = vld [vmem:[%s9207 + $0x38] sm:$0xf]
        %v9223 = vld [vmem:[%s9207 + $0x3c] sm:$0x1]
        %v9224 = vld [vmem:[%s9207 + $0x50] sm:$0xf]
        %v9225 = vld [vmem:[%s9207 + $0x54] sm:$0x1]
        %v9226 = vld [vmem:[%s9207 + $0x58] sm:$0xf]
        %v9227 = vld [vmem:[%s9207 + $0x5c] sm:$0x1]
        %v9228 = vld [vmem:[%s9207 + $0x60] sm:$0xf]
        %v9229 = vld [vmem:[%s9207 + $0x64] sm:$0x1]
        %v9230 = vld [vmem:[%s9207 + $0x68] sm:$0xf]
        %v9231 = vld [vmem:[%s9207 + $0x6c] sm:$0x1]
        %v9232 = vld [vmem:[%s9207 + $0x70] sm:$0xf]
        %v9233 = vld [vmem:[%s9207 + $0x74] sm:$0x1]
        %v9234 = vld [vmem:[%s9207 + $0x78] sm:$0xf]
        %v9235 = vld [vmem:[%s9207 + $0x7c] sm:$0x1]
        %v9236 = vld [vmem:[%s9207 + $0x80] sm:$0xf]
        %v9237 = vld [vmem:[%s9207 + $0x84] sm:$0x1]
        %v9238 = vld [vmem:[%s9207 + $0x88] sm:$0xf]
        %v9239 = vld [vmem:[%s9207 + $0x8c] sm:$0x1]
        %v9240 = vld [vmem:[%s9207 + $0xa0] sm:$0xf]
        %v9241 = vld [vmem:[%s9207 + $0xa4] sm:$0x1]
        %v9242 = vld [vmem:[%s9207 + $0xa8] sm:$0xf]
        %v9243 = vld [vmem:[%s9207 + $0xac] sm:$0x1]
        %v9244 = vld [vmem:[%s9207 + $0xb0] sm:$0xf]
        %v9245 = vld [vmem:[%s9207 + $0xb4] sm:$0x1]
        %v9246 = vld [vmem:[%s9207 + $0xb8] sm:$0xf]
        %v9247 = vld [vmem:[%s9207 + $0xbc] sm:$0x1]
        %v9248 = vld [vmem:[%s9207 + $0xc0] sm:$0xf]
        %v9249 = vld [vmem:[%s9207 + $0xc4] sm:$0x1]
        %v9250 = vld [vmem:[%s9207 + $0xc8] sm:$0xf]
        %v9251 = vld [vmem:[%s9207 + $0xcc] sm:$0x1]
        %v9252 = vld [vmem:[%s9207 + $0xd0] sm:$0xf]
        %v9253 = vld [vmem:[%s9207 + $0xd4] sm:$0x1]
        %v9254 = vld [vmem:[%s9207 + $0xd8] sm:$0xf]
        %v9255 = vld [vmem:[%s9207 + $0xdc] sm:$0x1]
        %v9256 = vld [vmem:[%s9207 + $0xf0] sm:$0xf]
        %v9257 = vld [vmem:[%s9207 + $0xf4] sm:$0x1]
        %v9258 = vld [vmem:[%s9207 + $0xf8] sm:$0xf]
        %v9259 = vld [vmem:[%s9207 + $0xfc] sm:$0x1]
        %v9260 = vld [vmem:[%s9207 + $0x100] sm:$0xf]
        %v9261 = vld [vmem:[%s9207 + $0x104] sm:$0x1]
        %v9262 = vld [vmem:[%s9207 + $0x108] sm:$0xf]
        %v9263 = vld [vmem:[%s9207 + $0x10c] sm:$0x1]
        %v9264 = vld [vmem:[%s9207 + $0x110] sm:$0xf]
        %v9265 = vld [vmem:[%s9207 + $0x114] sm:$0x1]
        %v9266 = vld [vmem:[%s9207 + $0x118] sm:$0xf]
        %v9267 = vld [vmem:[%s9207 + $0x11c] sm:$0x1]
        %v9268 = vld [vmem:[%s9207 + $0x120] sm:$0xf]
        %v9269 = vld [vmem:[%s9207 + $0x124] sm:$0x1]
        %v9270 = vld [vmem:[%s9207 + $0x128] sm:$0xf]
        %v9271 = vld [vmem:[%s9207 + $0x12c] sm:$0x1]
        %v9336 = vunpack.c.l.b16 %v9208
        %v9337 = vunpack.c.l.b16 %v9209
        %v9338 = vunpack.c.l.b16 %v9210
        %v9339 = vunpack.c.l.b16 %v9211
        %v9340 = vunpack.c.l.b16 %v9212
        %v9341 = vunpack.c.l.b16 %v9213
        %v9342 = vunpack.c.l.b16 %v9214
        %v9343 = vunpack.c.l.b16 %v9215
        %v9344 = vunpack.c.l.b16 %v9216
        %v9345 = vunpack.c.l.b16 %v9217
        %v9346 = vunpack.c.l.b16 %v9218
        %v9347 = vunpack.c.l.b16 %v9219
        %v9348 = vunpack.c.l.b16 %v9220
        %v9349 = vunpack.c.l.b16 %v9221
        %v9350 = vunpack.c.l.b16 %v9222
        %v9351 = vunpack.c.l.b16 %v9223
        %v9352 = vunpack.c.l.b16 %v9224
        %v9353 = vunpack.c.l.b16 %v9225
        %v9354 = vunpack.c.l.b16 %v9226
        %v9355 = vunpack.c.l.b16 %v9227
        %v9356 = vunpack.c.l.b16 %v9228
        %v9357 = vunpack.c.l.b16 %v9229
        %v9358 = vunpack.c.l.b16 %v9230
        %v9359 = vunpack.c.l.b16 %v9231
        %v9360 = vunpack.c.l.b16 %v9232
        %v9361 = vunpack.c.l.b16 %v9233
        %v9362 = vunpack.c.l.b16 %v9234
        %v9363 = vunpack.c.l.b16 %v9235
        %v9364 = vunpack.c.l.b16 %v9236
        %v9365 = vunpack.c.l.b16 %v9237
        %v9366 = vunpack.c.l.b16 %v9238
        %v9367 = vunpack.c.l.b16 %v9239
        %v9368 = vunpack.c.l.b16 %v9240
        %v9369 = vunpack.c.l.b16 %v9241
        %v9370 = vunpack.c.l.b16 %v9242
        %v9371 = vunpack.c.l.b16 %v9243
        %v9372 = vunpack.c.l.b16 %v9244
        %v9373 = vunpack.c.l.b16 %v9245
        %v9374 = vunpack.c.l.b16 %v9246
        %v9375 = vunpack.c.l.b16 %v9247
        %v9376 = vunpack.c.l.b16 %v9248
        %v9377 = vunpack.c.l.b16 %v9249
        %v9378 = vunpack.c.l.b16 %v9250
        %v9379 = vunpack.c.l.b16 %v9251
        %v9380 = vunpack.c.l.b16 %v9252
        %v9381 = vunpack.c.l.b16 %v9253
        %v9382 = vunpack.c.l.b16 %v9254
        %v9383 = vunpack.c.l.b16 %v9255
        %v9384 = vunpack.c.l.b16 %v9256
        %v9385 = vunpack.c.l.b16 %v9257
        %v9386 = vunpack.c.l.b16 %v9258
        %v9387 = vunpack.c.l.b16 %v9259
        %v9388 = vunpack.c.l.b16 %v9260
        %v9389 = vunpack.c.l.b16 %v9261
        %v9390 = vunpack.c.l.b16 %v9262
        %v9391 = vunpack.c.l.b16 %v9263
        %v9392 = vunpack.c.l.b16 %v9264
        %v9393 = vunpack.c.l.b16 %v9265
        %v9394 = vunpack.c.l.b16 %v9266
        %v9395 = vunpack.c.l.b16 %v9267
        %v9396 = vunpack.c.l.b16 %v9268
        %v9397 = vunpack.c.l.b16 %v9269
        %v9398 = vunpack.c.l.b16 %v9270
        %v9399 = vunpack.c.l.b16 %v9271
        %v9400 = vpack.c.b16 %v9337, %v9336
        %v9401 = vpack.c.b16 %v9339, %v9338
        %v9402 = vpack.c.b16 %v9341, %v9340
        %v9403 = vpack.c.b16 %v9343, %v9342
        %v9404 = vpack.c.b16 %v9345, %v9344
        %v9405 = vpack.c.b16 %v9347, %v9346
        %v9406 = vpack.c.b16 %v9349, %v9348
        %v9407 = vpack.c.b16 %v9351, %v9350
        %v9408 = vpack.c.b16 %v9353, %v9352
        %v9409 = vpack.c.b16 %v9355, %v9354
        %v9410 = vpack.c.b16 %v9357, %v9356
        %v9411 = vpack.c.b16 %v9359, %v9358
        %v9412 = vpack.c.b16 %v9361, %v9360
        %v9413 = vpack.c.b16 %v9363, %v9362
        %v9414 = vpack.c.b16 %v9365, %v9364
        %v9415 = vpack.c.b16 %v9367, %v9366
        %v9416 = vpack.c.b16 %v9369, %v9368
        %v9417 = vpack.c.b16 %v9371, %v9370
        %v9418 = vpack.c.b16 %v9373, %v9372
        %v9419 = vpack.c.b16 %v9375, %v9374
        %v9420 = vpack.c.b16 %v9377, %v9376
        %v9421 = vpack.c.b16 %v9379, %v9378
        %v9422 = vpack.c.b16 %v9381, %v9380
        %v9423 = vpack.c.b16 %v9383, %v9382
        %v9424 = vpack.c.b16 %v9385, %v9384
        %v9425 = vpack.c.b16 %v9387, %v9386
        %v9426 = vpack.c.b16 %v9389, %v9388
        %v9427 = vpack.c.b16 %v9391, %v9390
        %v9428 = vpack.c.b16 %v9393, %v9392
        %v9429 = vpack.c.b16 %v9395, %v9394
        %v9430 = vpack.c.b16 %v9397, %v9396
        %v9431 = vpack.c.b16 %v9399, %v9398
        %v9433 = vshrl.u32 %v9400, 16
        %v9435 = vshll.u32 %v9400, 16
        %v9437 = vrot.slane %v9435, 1
        %v9438 = vor.u32 %v9433, %v9437
        %v9440 = vshrl.u32 %v9401, 16
        %v9442 = vshll.u32 %v9401, 16
        %v9444 = vrot.slane %v9442, 1
        %v9445 = vor.u32 %v9440, %v9444
        %v9447 = vshrl.u32 %v9402, 16
        %v9449 = vshll.u32 %v9402, 16
        %v9451 = vrot.slane %v9449, 1
        %v9452 = vor.u32 %v9447, %v9451
        %v9454 = vshrl.u32 %v9403, 16
        %v9456 = vshll.u32 %v9403, 16
        %v9458 = vrot.slane %v9456, 1
        %v9459 = vor.u32 %v9454, %v9458
        %v9461 = vshrl.u32 %v9404, 16
        %v9463 = vshll.u32 %v9404, 16
        %v9465 = vrot.slane %v9463, 1
        %v9466 = vor.u32 %v9461, %v9465
        %v9468 = vshrl.u32 %v9405, 16
        %v9470 = vshll.u32 %v9405, 16
        %v9472 = vrot.slane %v9470, 1
        %v9473 = vor.u32 %v9468, %v9472
        %v9475 = vshrl.u32 %v9406, 16
        %v9477 = vshll.u32 %v9406, 16
        %v9479 = vrot.slane %v9477, 1
        %v9480 = vor.u32 %v9475, %v9479
        %v9482 = vshrl.u32 %v9407, 16
        %v9484 = vshll.u32 %v9407, 16
        %v9486 = vrot.slane %v9484, 1
        %v9487 = vor.u32 %v9482, %v9486
        %v9489 = vshrl.u32 %v9408, 16
        %v9491 = vshll.u32 %v9408, 16
        %v9493 = vrot.slane %v9491, 1
        %v9494 = vor.u32 %v9489, %v9493
        %v9496 = vshrl.u32 %v9409, 16
        %v9498 = vshll.u32 %v9409, 16
        %v9500 = vrot.slane %v9498, 1
        %v9501 = vor.u32 %v9496, %v9500
        %v9503 = vshrl.u32 %v9410, 16
        %v9505 = vshll.u32 %v9410, 16
        %v9507 = vrot.slane %v9505, 1
        %v9508 = vor.u32 %v9503, %v9507
        %v9510 = vshrl.u32 %v9411, 16
        %v9512 = vshll.u32 %v9411, 16
        %v9514 = vrot.slane %v9512, 1
        %v9515 = vor.u32 %v9510, %v9514
        %v9517 = vshrl.u32 %v9412, 16
        %v9519 = vshll.u32 %v9412, 16
        %v9521 = vrot.slane %v9519, 1
        %v9522 = vor.u32 %v9517, %v9521
        %v9524 = vshrl.u32 %v9413, 16
        %v9526 = vshll.u32 %v9413, 16
        %v9528 = vrot.slane %v9526, 1
        %v9529 = vor.u32 %v9524, %v9528
        %v9531 = vshrl.u32 %v9414, 16
        %v9533 = vshll.u32 %v9414, 16
        %v9535 = vrot.slane %v9533, 1
        %v9536 = vor.u32 %v9531, %v9535
        %v9538 = vshrl.u32 %v9415, 16
        %v9540 = vshll.u32 %v9415, 16
        %v9542 = vrot.slane %v9540, 1
        %v9543 = vor.u32 %v9538, %v9542
        %v9545 = vshrl.u32 %v9416, 16
        %v9547 = vshll.u32 %v9416, 16
        %v9549 = vrot.slane %v9547, 1
        %v9550 = vor.u32 %v9545, %v9549
        %v9552 = vshrl.u32 %v9417, 16
        %v9554 = vshll.u32 %v9417, 16
        %v9556 = vrot.slane %v9554, 1
        %v9557 = vor.u32 %v9552, %v9556
        %v9559 = vshrl.u32 %v9418, 16
        %v9561 = vshll.u32 %v9418, 16
        %v9563 = vrot.slane %v9561, 1
        %v9564 = vor.u32 %v9559, %v9563
        %v9566 = vshrl.u32 %v9419, 16
        %v9568 = vshll.u32 %v9419, 16
        %v9570 = vrot.slane %v9568, 1
        %v9571 = vor.u32 %v9566, %v9570
        %v9573 = vshrl.u32 %v9420, 16
        %v9575 = vshll.u32 %v9420, 16
        %v9577 = vrot.slane %v9575, 1
        %v9578 = vor.u32 %v9573, %v9577
        %v9580 = vshrl.u32 %v9421, 16
        %v9582 = vshll.u32 %v9421, 16
        %v9584 = vrot.slane %v9582, 1
        %v9585 = vor.u32 %v9580, %v9584
        %v9587 = vshrl.u32 %v9422, 16
        %v9589 = vshll.u32 %v9422, 16
        %v9591 = vrot.slane %v9589, 1
        %v9592 = vor.u32 %v9587, %v9591
        %v9594 = vshrl.u32 %v9423, 16
        %v9596 = vshll.u32 %v9423, 16
        %v9598 = vrot.slane %v9596, 1
        %v9599 = vor.u32 %v9594, %v9598
        %v9601 = vshrl.u32 %v9424, 16
        %v9603 = vshll.u32 %v9424, 16
        %v9605 = vrot.slane %v9603, 1
        %v9606 = vor.u32 %v9601, %v9605
        %v9608 = vshrl.u32 %v9425, 16
        %v9610 = vshll.u32 %v9425, 16
        %v9612 = vrot.slane %v9610, 1
        %v9613 = vor.u32 %v9608, %v9612
        %v9615 = vshrl.u32 %v9426, 16
        %v9617 = vshll.u32 %v9426, 16
        %v9619 = vrot.slane %v9617, 1
        %v9620 = vor.u32 %v9615, %v9619
        %v9622 = vshrl.u32 %v9427, 16
        %v9624 = vshll.u32 %v9427, 16
        %v9626 = vrot.slane %v9624, 1
        %v9627 = vor.u32 %v9622, %v9626
        %v9629 = vshrl.u32 %v9428, 16
        %v9631 = vshll.u32 %v9428, 16
        %v9633 = vrot.slane %v9631, 1
        %v9634 = vor.u32 %v9629, %v9633
        %v9636 = vshrl.u32 %v9429, 16
        %v9638 = vshll.u32 %v9429, 16
        %v9640 = vrot.slane %v9638, 1
        %v9641 = vor.u32 %v9636, %v9640
        %v9643 = vshrl.u32 %v9430, 16
        %v9645 = vshll.u32 %v9430, 16
        %v9647 = vrot.slane %v9645, 1
        %v9648 = vor.u32 %v9643, %v9647
        %v9650 = vshrl.u32 %v9431, 16
        %v9652 = vshll.u32 %v9431, 16
        %v9654 = vrot.slane %v9652, 1
        %v9655 = vor.u32 %v9650, %v9654
        %9656 = vrot.lane.b32.xlu0 %v9438, 8
        %v9657 = vpop.permute.xlu0 %9656
        %9658 = vrot.lane.b32.xlu0 %v9445, 8
        %v9659 = vpop.permute.xlu0 %9658
        %9660 = vrot.lane.b32.xlu0 %v9452, 8
        %v9661 = vpop.permute.xlu0 %9660
        %9662 = vrot.lane.b32.xlu0 %v9459, 8
        %v9663 = vpop.permute.xlu0 %9662
        %9664 = vrot.lane.b32.xlu0 %v9466, 8
        %v9665 = vpop.permute.xlu0 %9664
        %9666 = vrot.lane.b32.xlu0 %v9473, 8
        %v9667 = vpop.permute.xlu0 %9666
        %9668 = vrot.lane.b32.xlu0 %v9480, 8
        %v9669 = vpop.permute.xlu0 %9668
        %9670 = vrot.lane.b32.xlu0 %v9487, 8
        %v9671 = vpop.permute.xlu0 %9670
        %9672 = vrot.lane.b32.xlu0 %v9494, 8
        %v9673 = vpop.permute.xlu0 %9672
        %9674 = vrot.lane.b32.xlu0 %v9501, 8
        %v9675 = vpop.permute.xlu0 %9674
        %9676 = vrot.lane.b32.xlu0 %v9508, 8
        %v9677 = vpop.permute.xlu0 %9676
        %9678 = vrot.lane.b32.xlu0 %v9515, 8
        %v9679 = vpop.permute.xlu0 %9678
        %9680 = vrot.lane.b32.xlu0 %v9522, 8
        %v9681 = vpop.permute.xlu0 %9680
        %9682 = vrot.lane.b32.xlu0 %v9529, 8
        %v9683 = vpop.permute.xlu0 %9682
        %9684 = vrot.lane.b32.xlu0 %v9536, 8
        %v9685 = vpop.permute.xlu0 %9684
        %9686 = vrot.lane.b32.xlu0 %v9543, 8
        %v9687 = vpop.permute.xlu0 %9686
        %9688 = vrot.lane.b32.xlu0 %v9550, 8
        %v9689 = vpop.permute.xlu0 %9688
        %9690 = vrot.lane.b32.xlu0 %v9557, 8
        %v9691 = vpop.permute.xlu0 %9690
        %9692 = vrot.lane.b32.xlu0 %v9564, 8
        %v9693 = vpop.permute.xlu0 %9692
        %9694 = vrot.lane.b32.xlu0 %v9571, 8
        %v9695 = vpop.permute.xlu0 %9694
        %9696 = vrot.lane.b32.xlu0 %v9578, 8
        %v9697 = vpop.permute.xlu0 %9696
        %9698 = vrot.lane.b32.xlu0 %v9585, 8
        %v9699 = vpop.permute.xlu0 %9698
        %9700 = vrot.lane.b32.xlu0 %v9592, 8
        %v9701 = vpop.permute.xlu0 %9700
        %9702 = vrot.lane.b32.xlu0 %v9599, 8
        %v9703 = vpop.permute.xlu0 %9702
        %9704 = vrot.lane.b32.xlu0 %v9606, 8
        %v9705 = vpop.permute.xlu0 %9704
        %9706 = vrot.lane.b32.xlu0 %v9613, 8
        %v9707 = vpop.permute.xlu0 %9706
        %9708 = vrot.lane.b32.xlu0 %v9620, 8
        %v9709 = vpop.permute.xlu0 %9708
        %9710 = vrot.lane.b32.xlu0 %v9627, 8
        %v9711 = vpop.permute.xlu0 %9710
        %9712 = vrot.lane.b32.xlu0 %v9634, 8
        %v9713 = vpop.permute.xlu0 %9712
        %9714 = vrot.lane.b32.xlu0 %v9641, 8
        %v9715 = vpop.permute.xlu0 %9714
        %9716 = vrot.lane.b32.xlu0 %v9648, 8
        %v9717 = vpop.permute.xlu0 %9716
        %9718 = vrot.lane.b32.xlu0 %v9655, 8
        %v9719 = vpop.permute.xlu0 %9718
        %v9720 = vrot.slane %v9400, 1
        %v9721 = vrot.slane %v9401, 1
        %v9722 = vrot.slane %v9402, 1
        %v9723 = vrot.slane %v9403, 1
        %v9724 = vrot.slane %v9404, 1
        %v9725 = vrot.slane %v9405, 1
        %v9726 = vrot.slane %v9406, 1
        %v9727 = vrot.slane %v9407, 1
        %v9728 = vrot.slane %v9408, 1
        %v9729 = vrot.slane %v9409, 1
        %v9730 = vrot.slane %v9410, 1
        %v9731 = vrot.slane %v9411, 1
        %v9732 = vrot.slane %v9412, 1
        %v9733 = vrot.slane %v9413, 1
        %v9734 = vrot.slane %v9414, 1
        %v9735 = vrot.slane %v9415, 1
        %v9736 = vrot.slane %v9416, 1
        %v9737 = vrot.slane %v9417, 1
        %v9738 = vrot.slane %v9418, 1
        %v9739 = vrot.slane %v9419, 1
        %v9740 = vrot.slane %v9420, 1
        %v9741 = vrot.slane %v9421, 1
        %v9742 = vrot.slane %v9422, 1
        %v9743 = vrot.slane %v9423, 1
        %v9744 = vrot.slane %v9424, 1
        %v9745 = vrot.slane %v9425, 1
        %v9746 = vrot.slane %v9426, 1
        %v9747 = vrot.slane %v9427, 1
        %v9748 = vrot.slane %v9428, 1
        %v9749 = vrot.slane %v9429, 1
        %v9750 = vrot.slane %v9430, 1
        %v9751 = vrot.slane %v9431, 1
        %9752 = vrot.lane.b32.xlu0 %v9720, 16
        %v9753 = vpop.permute.xlu0 %9752
        %9754 = vrot.lane.b32.xlu0 %v9721, 16
        %v9755 = vpop.permute.xlu0 %9754
        %9756 = vrot.lane.b32.xlu0 %v9722, 16
        %v9757 = vpop.permute.xlu0 %9756
        %9758 = vrot.lane.b32.xlu0 %v9723, 16
        %v9759 = vpop.permute.xlu0 %9758
        %9760 = vrot.lane.b32.xlu0 %v9724, 16
        %v9761 = vpop.permute.xlu0 %9760
        %9762 = vrot.lane.b32.xlu0 %v9725, 16
        %v9763 = vpop.permute.xlu0 %9762
        %9764 = vrot.lane.b32.xlu0 %v9726, 16
        %v9765 = vpop.permute.xlu0 %9764
        %9766 = vrot.lane.b32.xlu0 %v9727, 16
        %v9767 = vpop.permute.xlu0 %9766
        %9768 = vrot.lane.b32.xlu0 %v9728, 16
        %v9769 = vpop.permute.xlu0 %9768
        %9770 = vrot.lane.b32.xlu0 %v9729, 16
        %v9771 = vpop.permute.xlu0 %9770
        %9772 = vrot.lane.b32.xlu0 %v9730, 16
        %v9773 = vpop.permute.xlu0 %9772
        %9774 = vrot.lane.b32.xlu0 %v9731, 16
        %v9775 = vpop.permute.xlu0 %9774
        %9776 = vrot.lane.b32.xlu0 %v9732, 16
        %v9777 = vpop.permute.xlu0 %9776
        %9778 = vrot.lane.b32.xlu0 %v9733, 16
        %v9779 = vpop.permute.xlu0 %9778
        %9780 = vrot.lane.b32.xlu0 %v9734, 16
        %v9781 = vpop.permute.xlu0 %9780
        %9782 = vrot.lane.b32.xlu0 %v9735, 16
        %v9783 = vpop.permute.xlu0 %9782
        %9784 = vrot.lane.b32.xlu0 %v9736, 16
        %v9785 = vpop.permute.xlu0 %9784
        %9786 = vrot.lane.b32.xlu0 %v9737, 16
        %v9787 = vpop.permute.xlu0 %9786
        %9788 = vrot.lane.b32.xlu0 %v9738, 16
        %v9789 = vpop.permute.xlu0 %9788
        %9790 = vrot.lane.b32.xlu0 %v9739, 16
        %v9791 = vpop.permute.xlu0 %9790
        %9792 = vrot.lane.b32.xlu0 %v9740, 16
        %v9793 = vpop.permute.xlu0 %9792
        %9794 = vrot.lane.b32.xlu0 %v9741, 16
        %v9795 = vpop.permute.xlu0 %9794
        %9796 = vrot.lane.b32.xlu0 %v9742, 16
        %v9797 = vpop.permute.xlu0 %9796
        %9798 = vrot.lane.b32.xlu0 %v9743, 16
        %v9799 = vpop.permute.xlu0 %9798
        %9800 = vrot.lane.b32.xlu0 %v9744, 16
        %v9801 = vpop.permute.xlu0 %9800
        %9802 = vrot.lane.b32.xlu0 %v9745, 16
        %v9803 = vpop.permute.xlu0 %9802
        %9804 = vrot.lane.b32.xlu0 %v9746, 16
        %v9805 = vpop.permute.xlu0 %9804
        %9806 = vrot.lane.b32.xlu0 %v9747, 16
        %v9807 = vpop.permute.xlu0 %9806
        %9808 = vrot.lane.b32.xlu0 %v9748, 16
        %v9809 = vpop.permute.xlu0 %9808
        %9810 = vrot.lane.b32.xlu0 %v9749, 16
        %v9811 = vpop.permute.xlu0 %9810
        %9812 = vrot.lane.b32.xlu0 %v9750, 16
        %v9813 = vpop.permute.xlu0 %9812
        %9814 = vrot.lane.b32.xlu0 %v9751, 16
        %v9815 = vpop.permute.xlu0 %9814
        %v9818 = vsel %vm3243, %v9208, %v9657
        %v9821 = vsel %vm3243, %v9210, %v9659
        %v9824 = vsel %vm3243, %v9212, %v9661
        %v9827 = vsel %vm3243, %v9214, %v9663
        %v9830 = vsel %vm3243, %v9216, %v9665
        %v9833 = vsel %vm3243, %v9218, %v9667
        %v9836 = vsel %vm3243, %v9220, %v9669
        %v9839 = vsel %vm3243, %v9222, %v9671
        %v9842 = vsel %vm3243, %v9224, %v9673
        %v9845 = vsel %vm3243, %v9226, %v9675
        %v9848 = vsel %vm3243, %v9228, %v9677
        %v9851 = vsel %vm3243, %v9230, %v9679
        %v9854 = vsel %vm3243, %v9232, %v9681
        %v9857 = vsel %vm3243, %v9234, %v9683
        %v9860 = vsel %vm3243, %v9236, %v9685
        %v9863 = vsel %vm3243, %v9238, %v9687
        %v9866 = vsel %vm3243, %v9240, %v9689
        %v9869 = vsel %vm3243, %v9242, %v9691
        %v9872 = vsel %vm3243, %v9244, %v9693
        %v9875 = vsel %vm3243, %v9246, %v9695
        %v9878 = vsel %vm3243, %v9248, %v9697
        %v9881 = vsel %vm3243, %v9250, %v9699
        %v9884 = vsel %vm3243, %v9252, %v9701
        %v9887 = vsel %vm3243, %v9254, %v9703
        %v9890 = vsel %vm3243, %v9256, %v9705
        %v9893 = vsel %vm3243, %v9258, %v9707
        %v9896 = vsel %vm3243, %v9260, %v9709
        %v9899 = vsel %vm3243, %v9262, %v9711
        %v9902 = vsel %vm3243, %v9264, %v9713
        %v9905 = vsel %vm3243, %v9266, %v9715
        %v9908 = vsel %vm3243, %v9268, %v9717
        %v9911 = vsel %vm3243, %v9270, %v9719
        %v9913 = vsel %vm1134, %v9818, %v9753
        %v9915 = vsel %vm1134, %v9821, %v9755
        %v9917 = vsel %vm1134, %v9824, %v9757
        %v9919 = vsel %vm1134, %v9827, %v9759
        %v9921 = vsel %vm1134, %v9830, %v9761
        %v9923 = vsel %vm1134, %v9833, %v9763
        %v9925 = vsel %vm1134, %v9836, %v9765
        %v9927 = vsel %vm1134, %v9839, %v9767
        %v9929 = vsel %vm1134, %v9842, %v9769
        %v9931 = vsel %vm1134, %v9845, %v9771
        %v9933 = vsel %vm1134, %v9848, %v9773
        %v9935 = vsel %vm1134, %v9851, %v9775
        %v9937 = vsel %vm1134, %v9854, %v9777
        %v9939 = vsel %vm1134, %v9857, %v9779
        %v9941 = vsel %vm1134, %v9860, %v9781
        %v9943 = vsel %vm1134, %v9863, %v9783
        %v9945 = vsel %vm1134, %v9866, %v9785
        %v9947 = vsel %vm1134, %v9869, %v9787
        %v9949 = vsel %vm1134, %v9872, %v9789
        %v9951 = vsel %vm1134, %v9875, %v9791
        %v9953 = vsel %vm1134, %v9878, %v9793
        %v9955 = vsel %vm1134, %v9881, %v9795
        %v9957 = vsel %vm1134, %v9884, %v9797
        %v9959 = vsel %vm1134, %v9887, %v9799
        %v9961 = vsel %vm1134, %v9890, %v9801
        %v9963 = vsel %vm1134, %v9893, %v9803
        %v9965 = vsel %vm1134, %v9896, %v9805
        %v9967 = vsel %vm1134, %v9899, %v9807
        %v9969 = vsel %vm1134, %v9902, %v9809
        %v9971 = vsel %vm1134, %v9905, %v9811
        %v9973 = vsel %vm1134, %v9908, %v9813
        %v9975 = vsel %vm1134, %v9911, %v9815
        %s9976 = scalar_lea.vmem %s5, 72
        %v9977 = vld [vmem:[%s9976] sm:$0xf]
        %v9978 = vld [vmem:[%s9976 + $0x4] sm:$0xf]
        %v9979 = vld [vmem:[%s9976 + $0x8] sm:$0xf]
        %v10012 = vunpack.c.l.b16 %v9913
        %v10013 = vunpack.c.l.b16 %v9915
        %v10014 = vunpack.c.l.b16 %v9917
        %v10015 = vunpack.c.l.b16 %v9919
        %v10016 = vunpack.c.l.b16 %v9921
        %v10017 = vunpack.c.l.b16 %v9923
        %v10018 = vunpack.c.l.b16 %v9925
        %v10019 = vunpack.c.l.b16 %v9927
        %v10020 = vunpack.c.l.b16 %v9929
        %v10021 = vunpack.c.l.b16 %v9931
        %v10022 = vunpack.c.l.b16 %v9933
        %v10023 = vunpack.c.l.b16 %v9935
        %v10024 = vunpack.c.l.b16 %v9937
        %v10025 = vunpack.c.l.b16 %v9939
        %v10026 = vunpack.c.l.b16 %v9941
        %v10027 = vunpack.c.l.b16 %v9943
        %v10028 = vunpack.c.l.b16 %v9945
        %v10029 = vunpack.c.l.b16 %v9947
        %v10030 = vunpack.c.l.b16 %v9949
        %v10031 = vunpack.c.l.b16 %v9951
        %v10032 = vunpack.c.l.b16 %v9953
        %v10033 = vunpack.c.l.b16 %v9955
        %v10034 = vunpack.c.l.b16 %v9957
        %v10035 = vunpack.c.l.b16 %v9959
        %v10036 = vunpack.c.l.b16 %v9961
        %v10037 = vunpack.c.l.b16 %v9963
        %v10038 = vunpack.c.l.b16 %v9965
        %v10039 = vunpack.c.l.b16 %v9967
        %v10040 = vunpack.c.l.b16 %v9969
        %v10041 = vunpack.c.l.b16 %v9971
        %v10042 = vunpack.c.l.b16 %v9973
        %v10043 = vunpack.c.l.b16 %v9975
        %v10044 = vpack.c.b16 %v10013, %v10012
        %v10045 = vpack.c.b16 %v10015, %v10014
        %v10046 = vpack.c.b16 %v10017, %v10016
        %v10047 = vpack.c.b16 %v10019, %v10018
        %v10048 = vpack.c.b16 %v10021, %v10020
        %v10049 = vpack.c.b16 %v10023, %v10022
        %v10050 = vpack.c.b16 %v10025, %v10024
        %v10051 = vpack.c.b16 %v10027, %v10026
        %v10052 = vpack.c.b16 %v10029, %v10028
        %v10053 = vpack.c.b16 %v10031, %v10030
        %v10054 = vpack.c.b16 %v10033, %v10032
        %v10055 = vpack.c.b16 %v10035, %v10034
        %v10056 = vpack.c.b16 %v10037, %v10036
        %v10057 = vpack.c.b16 %v10039, %v10038
        %v10058 = vpack.c.b16 %v10041, %v10040
        %v10059 = vpack.c.b16 %v10043, %v10042
        %v10063 = vunpack.c.l.b16 %v9977
        %v10064 = vunpack.c.l.b16 %v9978
        %v10065 = vunpack.c.l.b16 %v9979
        %v10066 = vpack.c.b16 %v10064, %v10063
        %v10067 = vpack.c.b16 %v10065, %v10065
        %v10070 = vsel %vm4269, %v10044, 0
        %v10073 = vsel %vm4269, %v10045, 0
        %v10076 = vsel %vm4269, %v10046, 0
        %v10079 = vsel %vm4269, %v10047, 0
        %v10082 = vsel %vm4269, %v10048, 0
        %v10085 = vsel %vm4269, %v10049, 0
        %v10088 = vsel %vm4269, %v10050, 0
        %v10091 = vsel %vm4269, %v10051, 0
        %v10094 = vsel %vm4269, %v10052, 0
        %v10097 = vsel %vm4269, %v10053, 0
        %v10100 = vsel %vm4269, %v10054, 0
        %v10103 = vsel %vm4269, %v10055, 0
        %v10106 = vsel %vm4269, %v10056, 0
        %v10109 = vsel %vm4269, %v10057, 0
        %v10112 = vsel %vm4269, %v10058, 0
        %v10115 = vsel %vm4269, %v10059, 0
        %v10118 = vsel %vm4318, %v10067, 0
        %10120 = vmatprep.subr.bf16.mxu0 0
        %10121 = vmatpush1.bf16.msra.mxu0 %v10066
        %10122 = vmatprep.subr.bf16.mxu0 0
        %10123 = vmatpush1.bf16.msra.mxu0 %v10118
        %10124 = vmatprep.subr.bf16.mxu0 0
        %10125 = vmatpush1.bf16.msra.mxu0 0
        %10126 = vmatprep.subr.bf16.mxu0 0
        %10127 = vmatpush1.bf16.msra.mxu0 0
        %10128 = vmatprep.subr.bf16.mxu0 0
        %10129 = vmatpush1.bf16.msra.mxu0 0
        %10130 = vmatprep.subr.bf16.mxu0 0
        %10131 = vmatpush1.bf16.msra.mxu0 0
        %10132 = vmatprep.subr.bf16.mxu0 0
        %10133 = vmatpush1.bf16.msra.mxu0 0
        %10134 = vmatprep.subr.bf16.mxu0 0
        %10135 = vmatpush1.bf16.msra.mxu0 0
        %10136 = vmatprep.subr.bf16.mxu0 0
        %10137 = vmatpush1.bf16.msra.mxu0 0
        %10138 = vmatprep.subr.bf16.mxu0 0
        %10139 = vmatpush1.bf16.msra.mxu0 0
        %10140 = vmatprep.subr.bf16.mxu0 0
        %10141 = vmatpush1.bf16.msra.mxu0 0
        %10142 = vmatprep.subr.bf16.mxu0 0
        %10143 = vmatpush1.bf16.msra.mxu0 0
        %10144 = vmatprep.subr.bf16.mxu0 0
        %10145 = vmatpush1.bf16.msra.mxu0 0
        %10146 = vmatprep.subr.bf16.mxu0 0
        %10147 = vmatpush1.bf16.msra.mxu0 0
        %10148 = vmatprep.subr.bf16.mxu0 0
        %10149 = vmatpush1.bf16.msra.mxu0 0
        %10150 = vmatprep.subr.bf16.mxu0 0
        %10151 = vmatpush1.bf16.msra.mxu0 0
        %10152 = vmatprep.mubr.bf16.mxu0 0
        %10153 = vmatmul.mubr.bf16.gmra.mrb[0].mxu0 %v10070
        %v10154 = vpop.f32.mrb[0].mxu0
        %v10155 = vadd.f32 0.0, %v10154
        %v10156 = vpop.f32.mrb[0].mxu0
        %v10157 = vpop.f32.mrb[0].mxu0
        %v10158 = vadd.f32 0.0, %v10157
        %v10159 = vpop.f32.mrb[0].mxu0
        %10160 = vmatprep.mubr.bf16.mxu0 0
        %10161 = vmatmul.mubr.bf16.gmra.mrb[0].mxu0 %v10073
        %v10162 = vpop.f32.mrb[0].mxu0
        %v10163 = vadd.f32 0.0, %v10162
        %v10164 = vpop.f32.mrb[0].mxu0
        %v10165 = vpop.f32.mrb[0].mxu0
        %v10166 = vadd.f32 0.0, %v10165
        %v10167 = vpop.f32.mrb[0].mxu0
        %10168 = vmatprep.mubr.bf16.mxu0 0
        %10169 = vmatmul.mubr.bf16.gmra.mrb[0].mxu0 %v10076
        %v10170 = vpop.f32.mrb[0].mxu0
        %v10171 = vadd.f32 0.0, %v10170
        %v10172 = vpop.f32.mrb[0].mxu0
        %v10173 = vpop.f32.mrb[0].mxu0
        %v10174 = vadd.f32 0.0, %v10173
        %v10175 = vpop.f32.mrb[0].mxu0
        %10176 = vmatprep.mubr.bf16.mxu0 0
        %10177 = vmatmul.mubr.bf16.gmra.mrb[0].mxu0 %v10079
        %v10178 = vpop.f32.mrb[0].mxu0
        %v10179 = vadd.f32 0.0, %v10178
        %v10180 = vpop.f32.mrb[0].mxu0
        %v10181 = vpop.f32.mrb[0].mxu0
        %v10182 = vadd.f32 0.0, %v10181
        %v10183 = vpop.f32.mrb[0].mxu0
        %10184 = vmatprep.mubr.bf16.mxu0 0
        %10185 = vmatmul.mubr.bf16.gmra.mrb[0].mxu0 %v10082
        %v10186 = vpop.f32.mrb[0].mxu0
        %v10187 = vadd.f32 0.0, %v10186
        %v10188 = vpop.f32.mrb[0].mxu0
        %v10189 = vpop.f32.mrb[0].mxu0
        %v10190 = vadd.f32 0.0, %v10189
        %v10191 = vpop.f32.mrb[0].mxu0
        %10192 = vmatprep.mubr.bf16.mxu0 0
        %10193 = vmatmul.mubr.bf16.gmra.mrb[0].mxu0 %v10085
        %v10194 = vpop.f32.mrb[0].mxu0
        %v10195 = vadd.f32 0.0, %v10194
        %v10196 = vpop.f32.mrb[0].mxu0
        %v10197 = vpop.f32.mrb[0].mxu0
        %v10198 = vadd.f32 0.0, %v10197
        %v10199 = vpop.f32.mrb[0].mxu0
        %10200 = vmatprep.mubr.bf16.mxu0 0
        %10201 = vmatmul.mubr.bf16.gmra.mrb[0].mxu0 %v10088
        %v10202 = vpop.f32.mrb[0].mxu0
        %v10203 = vadd.f32 0.0, %v10202
        %v10204 = vpop.f32.mrb[0].mxu0
        %v10205 = vpop.f32.mrb[0].mxu0
        %v10206 = vadd.f32 0.0, %v10205
        %v10207 = vpop.f32.mrb[0].mxu0
        %10208 = vmatprep.mubr.bf16.mxu0 0
        %10209 = vmatmul.mubr.bf16.gmra.mrb[0].mxu0 %v10091
        %v10210 = vpop.f32.mrb[0].mxu0
        %v10211 = vadd.f32 0.0, %v10210
        %v10212 = vpop.f32.mrb[0].mxu0
        %v10213 = vpop.f32.mrb[0].mxu0
        %v10214 = vadd.f32 0.0, %v10213
        %v10215 = vpop.f32.mrb[0].mxu0
        %10216 = vmatprep.mubr.bf16.mxu0 0
        %10217 = vmatmul.mubr.bf16.gmra.mrb[0].mxu0 %v10094
        %v10218 = vpop.f32.mrb[0].mxu0
        %v10219 = vadd.f32 0.0, %v10218
        %v10220 = vpop.f32.mrb[0].mxu0
        %v10221 = vpop.f32.mrb[0].mxu0
        %v10222 = vadd.f32 0.0, %v10221
        %v10223 = vpop.f32.mrb[0].mxu0
        %10224 = vmatprep.mubr.bf16.mxu0 0
        %10225 = vmatmul.mubr.bf16.gmra.mrb[0].mxu0 %v10097
        %v10226 = vpop.f32.mrb[0].mxu0
        %v10227 = vadd.f32 0.0, %v10226
        %v10228 = vpop.f32.mrb[0].mxu0
        %v10229 = vpop.f32.mrb[0].mxu0
        %v10230 = vadd.f32 0.0, %v10229
        %v10231 = vpop.f32.mrb[0].mxu0
        %10232 = vmatprep.mubr.bf16.mxu0 0
        %10233 = vmatmul.mubr.bf16.gmra.mrb[0].mxu0 %v10100
        %v10234 = vpop.f32.mrb[0].mxu0
        %v10235 = vadd.f32 0.0, %v10234
        %v10236 = vpop.f32.mrb[0].mxu0
        %v10237 = vpop.f32.mrb[0].mxu0
        %v10238 = vadd.f32 0.0, %v10237
        %v10239 = vpop.f32.mrb[0].mxu0
        %10240 = vmatprep.mubr.bf16.mxu0 0
        %10241 = vmatmul.mubr.bf16.gmra.mrb[0].mxu0 %v10103
        %v10242 = vpop.f32.mrb[0].mxu0
        %v10243 = vadd.f32 0.0, %v10242
        %v10244 = vpop.f32.mrb[0].mxu0
        %v10245 = vpop.f32.mrb[0].mxu0
        %v10246 = vadd.f32 0.0, %v10245
        %v10247 = vpop.f32.mrb[0].mxu0
        %10248 = vmatprep.mubr.bf16.mxu0 0
        %10249 = vmatmul.mubr.bf16.gmra.mrb[0].mxu0 %v10106
        %v10250 = vpop.f32.mrb[0].mxu0
        %v10251 = vadd.f32 0.0, %v10250
        %v10252 = vpop.f32.mrb[0].mxu0
        %v10253 = vpop.f32.mrb[0].mxu0
        %v10254 = vadd.f32 0.0, %v10253
        %v10255 = vpop.f32.mrb[0].mxu0
        %10256 = vmatprep.mubr.bf16.mxu0 0
        %10257 = vmatmul.mubr.bf16.gmra.mrb[0].mxu0 %v10109
        %v10258 = vpop.f32.mrb[0].mxu0
        %v10259 = vadd.f32 0.0, %v10258
        %v10260 = vpop.f32.mrb[0].mxu0
        %v10261 = vpop.f32.mrb[0].mxu0
        %v10262 = vadd.f32 0.0, %v10261
        %v10263 = vpop.f32.mrb[0].mxu0
        %10264 = vmatprep.mubr.bf16.mxu0 0
        %10265 = vmatmul.mubr.bf16.gmra.mrb[0].mxu0 %v10112
        %v10266 = vpop.f32.mrb[0].mxu0
        %v10267 = vadd.f32 0.0, %v10266
        %v10268 = vpop.f32.mrb[0].mxu0
        %v10269 = vpop.f32.mrb[0].mxu0
        %v10270 = vadd.f32 0.0, %v10269
        %v10271 = vpop.f32.mrb[0].mxu0
        %10272 = vmatprep.mubr.bf16.mxu0 0
        %10273 = vmatmul.mubr.bf16.gmra.mrb[0].mxu0 %v10115
        %v10274 = vpop.f32.mrb[0].mxu0
        %v10275 = vadd.f32 0.0, %v10274
        %v10276 = vpop.f32.mrb[0].mxu0
        %v10277 = vpop.f32.mrb[0].mxu0
        %v10278 = vadd.f32 0.0, %v10277
        %v10279 = vpop.f32.mrb[0].mxu0
        %10280 = vdwg.mxu0
        %v10281 = vadd.f32 %v9175, %v10155
        %v10282 = vadd.f32 %v9176, %v10158
        %v10283 = vadd.f32 %v9177, %v10163
        %v10284 = vadd.f32 %v9178, %v10166
        %v10285 = vadd.f32 %v9179, %v10171
        %v10286 = vadd.f32 %v9180, %v10174
        %v10287 = vadd.f32 %v9181, %v10179
        %v10288 = vadd.f32 %v9182, %v10182
        %v10289 = vadd.f32 %v9183, %v10187
        %v10290 = vadd.f32 %v9184, %v10190
        %v10291 = vadd.f32 %v9185, %v10195
        %v10292 = vadd.f32 %v9186, %v10198
        %v10293 = vadd.f32 %v9187, %v10203
        %v10294 = vadd.f32 %v9188, %v10206
        %v10295 = vadd.f32 %v9189, %v10211
        %v10296 = vadd.f32 %v9190, %v10214
        %v10297 = vadd.f32 %v9191, %v10219
        %v10298 = vadd.f32 %v9192, %v10222
        %v10299 = vadd.f32 %v9193, %v10227
        %v10300 = vadd.f32 %v9194, %v10230
        %v10301 = vadd.f32 %v9195, %v10235
        %v10302 = vadd.f32 %v9196, %v10238
        %v10303 = vadd.f32 %v9197, %v10243
        %v10304 = vadd.f32 %v9198, %v10246
        %v10305 = vadd.f32 %v9199, %v10251
        %v10306 = vadd.f32 %v9200, %v10254
        %v10307 = vadd.f32 %v9201, %v10259
        %v10308 = vadd.f32 %v9202, %v10262
        %v10309 = vadd.f32 %v9203, %v10267
        %v10310 = vadd.f32 %v9204, %v10270
        %v10311 = vadd.f32 %v9205, %v10275
        %v10312 = vadd.f32 %v9206, %v10278
        %s10313 = scalar_lea.vmem [#allocation2], 168
        %v10314 = vld [vmem:[%s10313] sm:$0xf]
        %v10315 = vld [vmem:[%s10313 + $0x4] sm:$0x1]
        %v10316 = vld [vmem:[%s10313 + $0x8] sm:$0xf]
        %v10317 = vld [vmem:[%s10313 + $0xc] sm:$0x1]
        %v10318 = vld [vmem:[%s10313 + $0x10] sm:$0xf]
        %v10319 = vld [vmem:[%s10313 + $0x14] sm:$0x1]
        %v10320 = vld [vmem:[%s10313 + $0x18] sm:$0xf]
        %v10321 = vld [vmem:[%s10313 + $0x1c] sm:$0x1]
        %v10322 = vld [vmem:[%s10313 + $0x20] sm:$0xf]
        %v10323 = vld [vmem:[%s10313 + $0x24] sm:$0x1]
        %v10324 = vld [vmem:[%s10313 + $0x28] sm:$0xf]
        %v10325 = vld [vmem:[%s10313 + $0x2c] sm:$0x1]
        %v10326 = vld [vmem:[%s10313 + $0x30] sm:$0xf]
        %v10327 = vld [vmem:[%s10313 + $0x34] sm:$0x1]
        %v10328 = vld [vmem:[%s10313 + $0x38] sm:$0xf]
        %v10329 = vld [vmem:[%s10313 + $0x3c] sm:$0x1]
        %v10330 = vld [vmem:[%s10313 + $0x50] sm:$0xf]
        %v10331 = vld [vmem:[%s10313 + $0x54] sm:$0x1]
        %v10332 = vld [vmem:[%s10313 + $0x58] sm:$0xf]
        %v10333 = vld [vmem:[%s10313 + $0x5c] sm:$0x1]
        %v10334 = vld [vmem:[%s10313 + $0x60] sm:$0xf]
        %v10335 = vld [vmem:[%s10313 + $0x64] sm:$0x1]
        %v10336 = vld [vmem:[%s10313 + $0x68] sm:$0xf]
        %v10337 = vld [vmem:[%s10313 + $0x6c] sm:$0x1]
        %v10338 = vld [vmem:[%s10313 + $0x70] sm:$0xf]
        %v10339 = vld [vmem:[%s10313 + $0x74] sm:$0x1]
        %v10340 = vld [vmem:[%s10313 + $0x78] sm:$0xf]
        %v10341 = vld [vmem:[%s10313 + $0x7c] sm:$0x1]
        %v10342 = vld [vmem:[%s10313 + $0x80] sm:$0xf]
        %v10343 = vld [vmem:[%s10313 + $0x84] sm:$0x1]
        %v10344 = vld [vmem:[%s10313 + $0x88] sm:$0xf]
        %v10345 = vld [vmem:[%s10313 + $0x8c] sm:$0x1]
        %v10346 = vld [vmem:[%s10313 + $0xa0] sm:$0xf]
        %v10347 = vld [vmem:[%s10313 + $0xa4] sm:$0x1]
        %v10348 = vld [vmem:[%s10313 + $0xa8] sm:$0xf]
        %v10349 = vld [vmem:[%s10313 + $0xac] sm:$0x1]
        %v10350 = vld [vmem:[%s10313 + $0xb0] sm:$0xf]
        %v10351 = vld [vmem:[%s10313 + $0xb4] sm:$0x1]
        %v10352 = vld [vmem:[%s10313 + $0xb8] sm:$0xf]
        %v10353 = vld [vmem:[%s10313 + $0xbc] sm:$0x1]
        %v10354 = vld [vmem:[%s10313 + $0xc0] sm:$0xf]
        %v10355 = vld [vmem:[%s10313 + $0xc4] sm:$0x1]
        %v10356 = vld [vmem:[%s10313 + $0xc8] sm:$0xf]
        %v10357 = vld [vmem:[%s10313 + $0xcc] sm:$0x1]
        %v10358 = vld [vmem:[%s10313 + $0xd0] sm:$0xf]
        %v10359 = vld [vmem:[%s10313 + $0xd4] sm:$0x1]
        %v10360 = vld [vmem:[%s10313 + $0xd8] sm:$0xf]
        %v10361 = vld [vmem:[%s10313 + $0xdc] sm:$0x1]
        %v10362 = vld [vmem:[%s10313 + $0xf0] sm:$0xf]
        %v10363 = vld [vmem:[%s10313 + $0xf4] sm:$0x1]
        %v10364 = vld [vmem:[%s10313 + $0xf8] sm:$0xf]
        %v10365 = vld [vmem:[%s10313 + $0xfc] sm:$0x1]
        %v10366 = vld [vmem:[%s10313 + $0x100] sm:$0xf]
        %v10367 = vld [vmem:[%s10313 + $0x104] sm:$0x1]
        %v10368 = vld [vmem:[%s10313 + $0x108] sm:$0xf]
        %v10369 = vld [vmem:[%s10313 + $0x10c] sm:$0x1]
        %v10370 = vld [vmem:[%s10313 + $0x110] sm:$0xf]
        %v10371 = vld [vmem:[%s10313 + $0x114] sm:$0x1]
        %v10372 = vld [vmem:[%s10313 + $0x118] sm:$0xf]
        %v10373 = vld [vmem:[%s10313 + $0x11c] sm:$0x1]
        %v10374 = vld [vmem:[%s10313 + $0x120] sm:$0xf]
        %v10375 = vld [vmem:[%s10313 + $0x124] sm:$0x1]
        %v10376 = vld [vmem:[%s10313 + $0x128] sm:$0xf]
        %v10377 = vld [vmem:[%s10313 + $0x12c] sm:$0x1]
        %v10442 = vunpack.c.l.b16 %v10314
        %v10443 = vunpack.c.l.b16 %v10315
        %v10444 = vunpack.c.l.b16 %v10316
        %v10445 = vunpack.c.l.b16 %v10317
        %v10446 = vunpack.c.l.b16 %v10318
        %v10447 = vunpack.c.l.b16 %v10319
        %v10448 = vunpack.c.l.b16 %v10320
        %v10449 = vunpack.c.l.b16 %v10321
        %v10450 = vunpack.c.l.b16 %v10322
        %v10451 = vunpack.c.l.b16 %v10323
        %v10452 = vunpack.c.l.b16 %v10324
        %v10453 = vunpack.c.l.b16 %v10325
        %v10454 = vunpack.c.l.b16 %v10326
        %v10455 = vunpack.c.l.b16 %v10327
        %v10456 = vunpack.c.l.b16 %v10328
        %v10457 = vunpack.c.l.b16 %v10329
        %v10458 = vunpack.c.l.b16 %v10330
        %v10459 = vunpack.c.l.b16 %v10331
        %v10460 = vunpack.c.l.b16 %v10332
        %v10461 = vunpack.c.l.b16 %v10333
        %v10462 = vunpack.c.l.b16 %v10334
        %v10463 = vunpack.c.l.b16 %v10335
        %v10464 = vunpack.c.l.b16 %v10336
        %v10465 = vunpack.c.l.b16 %v10337
        %v10466 = vunpack.c.l.b16 %v10338
        %v10467 = vunpack.c.l.b16 %v10339
        %v10468 = vunpack.c.l.b16 %v10340
        %v10469 = vunpack.c.l.b16 %v10341
        %v10470 = vunpack.c.l.b16 %v10342
        %v10471 = vunpack.c.l.b16 %v10343
        %v10472 = vunpack.c.l.b16 %v10344
        %v10473 = vunpack.c.l.b16 %v10345
        %v10474 = vunpack.c.l.b16 %v10346
        %v10475 = vunpack.c.l.b16 %v10347
        %v10476 = vunpack.c.l.b16 %v10348
        %v10477 = vunpack.c.l.b16 %v10349
        %v10478 = vunpack.c.l.b16 %v10350
        %v10479 = vunpack.c.l.b16 %v10351
        %v10480 = vunpack.c.l.b16 %v10352
        %v10481 = vunpack.c.l.b16 %v10353
        %v10482 = vunpack.c.l.b16 %v10354
        %v10483 = vunpack.c.l.b16 %v10355
        %v10484 = vunpack.c.l.b16 %v10356
        %v10485 = vunpack.c.l.b16 %v10357
        %v10486 = vunpack.c.l.b16 %v10358
        %v10487 = vunpack.c.l.b16 %v10359
        %v10488 = vunpack.c.l.b16 %v10360
        %v10489 = vunpack.c.l.b16 %v10361
        %v10490 = vunpack.c.l.b16 %v10362
        %v10491 = vunpack.c.l.b16 %v10363
        %v10492 = vunpack.c.l.b16 %v10364
        %v10493 = vunpack.c.l.b16 %v10365
        %v10494 = vunpack.c.l.b16 %v10366
        %v10495 = vunpack.c.l.b16 %v10367
        %v10496 = vunpack.c.l.b16 %v10368
        %v10497 = vunpack.c.l.b16 %v10369
        %v10498 = vunpack.c.l.b16 %v10370
        %v10499 = vunpack.c.l.b16 %v10371
        %v10500 = vunpack.c.l.b16 %v10372
        %v10501 = vunpack.c.l.b16 %v10373
        %v10502 = vunpack.c.l.b16 %v10374
        %v10503 = vunpack.c.l.b16 %v10375
        %v10504 = vunpack.c.l.b16 %v10376
        %v10505 = vunpack.c.l.b16 %v10377
        %v10506 = vpack.c.b16 %v10443, %v10442
        %v10507 = vpack.c.b16 %v10445, %v10444
        %v10508 = vpack.c.b16 %v10447, %v10446
        %v10509 = vpack.c.b16 %v10449, %v10448
        %v10510 = vpack.c.b16 %v10451, %v10450
        %v10511 = vpack.c.b16 %v10453, %v10452
        %v10512 = vpack.c.b16 %v10455, %v10454
        %v10513 = vpack.c.b16 %v10457, %v10456
        %v10514 = vpack.c.b16 %v10459, %v10458
        %v10515 = vpack.c.b16 %v10461, %v10460
        %v10516 = vpack.c.b16 %v10463, %v10462
        %v10517 = vpack.c.b16 %v10465, %v10464
        %v10518 = vpack.c.b16 %v10467, %v10466
        %v10519 = vpack.c.b16 %v10469, %v10468
        %v10520 = vpack.c.b16 %v10471, %v10470
        %v10521 = vpack.c.b16 %v10473, %v10472
        %v10522 = vpack.c.b16 %v10475, %v10474
        %v10523 = vpack.c.b16 %v10477, %v10476
        %v10524 = vpack.c.b16 %v10479, %v10478
        %v10525 = vpack.c.b16 %v10481, %v10480
        %v10526 = vpack.c.b16 %v10483, %v10482
        %v10527 = vpack.c.b16 %v10485, %v10484
        %v10528 = vpack.c.b16 %v10487, %v10486
        %v10529 = vpack.c.b16 %v10489, %v10488
        %v10530 = vpack.c.b16 %v10491, %v10490
        %v10531 = vpack.c.b16 %v10493, %v10492
        %v10532 = vpack.c.b16 %v10495, %v10494
        %v10533 = vpack.c.b16 %v10497, %v10496
        %v10534 = vpack.c.b16 %v10499, %v10498
        %v10535 = vpack.c.b16 %v10501, %v10500
        %v10536 = vpack.c.b16 %v10503, %v10502
        %v10537 = vpack.c.b16 %v10505, %v10504
        %v10539 = vshrl.u32 %v10506, 16
        %v10541 = vshll.u32 %v10506, 16
        %v10543 = vrot.slane %v10541, 1
        %v10544 = vor.u32 %v10539, %v10543
        %v10546 = vshrl.u32 %v10507, 16
        %v10548 = vshll.u32 %v10507, 16
        %v10550 = vrot.slane %v10548, 1
        %v10551 = vor.u32 %v10546, %v10550
        %v10553 = vshrl.u32 %v10508, 16
        %v10555 = vshll.u32 %v10508, 16
        %v10557 = vrot.slane %v10555, 1
        %v10558 = vor.u32 %v10553, %v10557
        %v10560 = vshrl.u32 %v10509, 16
        %v10562 = vshll.u32 %v10509, 16
        %v10564 = vrot.slane %v10562, 1
        %v10565 = vor.u32 %v10560, %v10564
        %v10567 = vshrl.u32 %v10510, 16
        %v10569 = vshll.u32 %v10510, 16
        %v10571 = vrot.slane %v10569, 1
        %v10572 = vor.u32 %v10567, %v10571
        %v10574 = vshrl.u32 %v10511, 16
        %v10576 = vshll.u32 %v10511, 16
        %v10578 = vrot.slane %v10576, 1
        %v10579 = vor.u32 %v10574, %v10578
        %v10581 = vshrl.u32 %v10512, 16
        %v10583 = vshll.u32 %v10512, 16
        %v10585 = vrot.slane %v10583, 1
        %v10586 = vor.u32 %v10581, %v10585
        %v10588 = vshrl.u32 %v10513, 16
        %v10590 = vshll.u32 %v10513, 16
        %v10592 = vrot.slane %v10590, 1
        %v10593 = vor.u32 %v10588, %v10592
        %v10595 = vshrl.u32 %v10514, 16
        %v10597 = vshll.u32 %v10514, 16
        %v10599 = vrot.slane %v10597, 1
        %v10600 = vor.u32 %v10595, %v10599
        %v10602 = vshrl.u32 %v10515, 16
        %v10604 = vshll.u32 %v10515, 16
        %v10606 = vrot.slane %v10604, 1
        %v10607 = vor.u32 %v10602, %v10606
        %v10609 = vshrl.u32 %v10516, 16
        %v10611 = vshll.u32 %v10516, 16
        %v10613 = vrot.slane %v10611, 1
        %v10614 = vor.u32 %v10609, %v10613
        %v10616 = vshrl.u32 %v10517, 16
        %v10618 = vshll.u32 %v10517, 16
        %v10620 = vrot.slane %v10618, 1
        %v10621 = vor.u32 %v10616, %v10620
        %v10623 = vshrl.u32 %v10518, 16
        %v10625 = vshll.u32 %v10518, 16
        %v10627 = vrot.slane %v10625, 1
        %v10628 = vor.u32 %v10623, %v10627
        %v10630 = vshrl.u32 %v10519, 16
        %v10632 = vshll.u32 %v10519, 16
        %v10634 = vrot.slane %v10632, 1
        %v10635 = vor.u32 %v10630, %v10634
        %v10637 = vshrl.u32 %v10520, 16
        %v10639 = vshll.u32 %v10520, 16
        %v10641 = vrot.slane %v10639, 1
        %v10642 = vor.u32 %v10637, %v10641
        %v10644 = vshrl.u32 %v10521, 16
        %v10646 = vshll.u32 %v10521, 16
        %v10648 = vrot.slane %v10646, 1
        %v10649 = vor.u32 %v10644, %v10648
        %v10651 = vshrl.u32 %v10522, 16
        %v10653 = vshll.u32 %v10522, 16
        %v10655 = vrot.slane %v10653, 1
        %v10656 = vor.u32 %v10651, %v10655
        %v10658 = vshrl.u32 %v10523, 16
        %v10660 = vshll.u32 %v10523, 16
        %v10662 = vrot.slane %v10660, 1
        %v10663 = vor.u32 %v10658, %v10662
        %v10665 = vshrl.u32 %v10524, 16
        %v10667 = vshll.u32 %v10524, 16
        %v10669 = vrot.slane %v10667, 1
        %v10670 = vor.u32 %v10665, %v10669
        %v10672 = vshrl.u32 %v10525, 16
        %v10674 = vshll.u32 %v10525, 16
        %v10676 = vrot.slane %v10674, 1
        %v10677 = vor.u32 %v10672, %v10676
        %v10679 = vshrl.u32 %v10526, 16
        %v10681 = vshll.u32 %v10526, 16
        %v10683 = vrot.slane %v10681, 1
        %v10684 = vor.u32 %v10679, %v10683
        %v10686 = vshrl.u32 %v10527, 16
        %v10688 = vshll.u32 %v10527, 16
        %v10690 = vrot.slane %v10688, 1
        %v10691 = vor.u32 %v10686, %v10690
        %v10693 = vshrl.u32 %v10528, 16
        %v10695 = vshll.u32 %v10528, 16
        %v10697 = vrot.slane %v10695, 1
        %v10698 = vor.u32 %v10693, %v10697
        %v10700 = vshrl.u32 %v10529, 16
        %v10702 = vshll.u32 %v10529, 16
        %v10704 = vrot.slane %v10702, 1
        %v10705 = vor.u32 %v10700, %v10704
        %v10707 = vshrl.u32 %v10530, 16
        %v10709 = vshll.u32 %v10530, 16
        %v10711 = vrot.slane %v10709, 1
        %v10712 = vor.u32 %v10707, %v10711
        %v10714 = vshrl.u32 %v10531, 16
        %v10716 = vshll.u32 %v10531, 16
        %v10718 = vrot.slane %v10716, 1
        %v10719 = vor.u32 %v10714, %v10718
        %v10721 = vshrl.u32 %v10532, 16
        %v10723 = vshll.u32 %v10532, 16
        %v10725 = vrot.slane %v10723, 1
        %v10726 = vor.u32 %v10721, %v10725
        %v10728 = vshrl.u32 %v10533, 16
        %v10730 = vshll.u32 %v10533, 16
        %v10732 = vrot.slane %v10730, 1
        %v10733 = vor.u32 %v10728, %v10732
        %v10735 = vshrl.u32 %v10534, 16
        %v10737 = vshll.u32 %v10534, 16
        %v10739 = vrot.slane %v10737, 1
        %v10740 = vor.u32 %v10735, %v10739
        %v10742 = vshrl.u32 %v10535, 16
        %v10744 = vshll.u32 %v10535, 16
        %v10746 = vrot.slane %v10744, 1
        %v10747 = vor.u32 %v10742, %v10746
        %v10749 = vshrl.u32 %v10536, 16
        %v10751 = vshll.u32 %v10536, 16
        %v10753 = vrot.slane %v10751, 1
        %v10754 = vor.u32 %v10749, %v10753
        %v10756 = vshrl.u32 %v10537, 16
        %v10758 = vshll.u32 %v10537, 16
        %v10760 = vrot.slane %v10758, 1
        %v10761 = vor.u32 %v10756, %v10760
        %10762 = vrot.lane.b32.xlu0 %v10544, 8
        %v10763 = vpop.permute.xlu0 %10762
        %10764 = vrot.lane.b32.xlu0 %v10551, 8
        %v10765 = vpop.permute.xlu0 %10764
        %10766 = vrot.lane.b32.xlu0 %v10558, 8
        %v10767 = vpop.permute.xlu0 %10766
        %10768 = vrot.lane.b32.xlu0 %v10565, 8
        %v10769 = vpop.permute.xlu0 %10768
        %10770 = vrot.lane.b32.xlu0 %v10572, 8
        %v10771 = vpop.permute.xlu0 %10770
        %10772 = vrot.lane.b32.xlu0 %v10579, 8
        %v10773 = vpop.permute.xlu0 %10772
        %10774 = vrot.lane.b32.xlu0 %v10586, 8
        %v10775 = vpop.permute.xlu0 %10774
        %10776 = vrot.lane.b32.xlu0 %v10593, 8
        %v10777 = vpop.permute.xlu0 %10776
        %10778 = vrot.lane.b32.xlu0 %v10600, 8
        %v10779 = vpop.permute.xlu0 %10778
        %10780 = vrot.lane.b32.xlu0 %v10607, 8
        %v10781 = vpop.permute.xlu0 %10780
        %10782 = vrot.lane.b32.xlu0 %v10614, 8
        %v10783 = vpop.permute.xlu0 %10782
        %10784 = vrot.lane.b32.xlu0 %v10621, 8
        %v10785 = vpop.permute.xlu0 %10784
        %10786 = vrot.lane.b32.xlu0 %v10628, 8
        %v10787 = vpop.permute.xlu0 %10786
        %10788 = vrot.lane.b32.xlu0 %v10635, 8
        %v10789 = vpop.permute.xlu0 %10788
        %10790 = vrot.lane.b32.xlu0 %v10642, 8
        %v10791 = vpop.permute.xlu0 %10790
        %10792 = vrot.lane.b32.xlu0 %v10649, 8
        %v10793 = vpop.permute.xlu0 %10792
        %10794 = vrot.lane.b32.xlu0 %v10656, 8
        %v10795 = vpop.permute.xlu0 %10794
        %10796 = vrot.lane.b32.xlu0 %v10663, 8
        %v10797 = vpop.permute.xlu0 %10796
        %10798 = vrot.lane.b32.xlu0 %v10670, 8
        %v10799 = vpop.permute.xlu0 %10798
        %10800 = vrot.lane.b32.xlu0 %v10677, 8
        %v10801 = vpop.permute.xlu0 %10800
        %10802 = vrot.lane.b32.xlu0 %v10684, 8
        %v10803 = vpop.permute.xlu0 %10802
        %10804 = vrot.lane.b32.xlu0 %v10691, 8
        %v10805 = vpop.permute.xlu0 %10804
        %10806 = vrot.lane.b32.xlu0 %v10698, 8
        %v10807 = vpop.permute.xlu0 %10806
        %10808 = vrot.lane.b32.xlu0 %v10705, 8
        %v10809 = vpop.permute.xlu0 %10808
        %10810 = vrot.lane.b32.xlu0 %v10712, 8
        %v10811 = vpop.permute.xlu0 %10810
        %10812 = vrot.lane.b32.xlu0 %v10719, 8
        %v10813 = vpop.permute.xlu0 %10812
        %10814 = vrot.lane.b32.xlu0 %v10726, 8
        %v10815 = vpop.permute.xlu0 %10814
        %10816 = vrot.lane.b32.xlu0 %v10733, 8
        %v10817 = vpop.permute.xlu0 %10816
        %10818 = vrot.lane.b32.xlu0 %v10740, 8
        %v10819 = vpop.permute.xlu0 %10818
        %10820 = vrot.lane.b32.xlu0 %v10747, 8
        %v10821 = vpop.permute.xlu0 %10820
        %10822 = vrot.lane.b32.xlu0 %v10754, 8
        %v10823 = vpop.permute.xlu0 %10822
        %10824 = vrot.lane.b32.xlu0 %v10761, 8
        %v10825 = vpop.permute.xlu0 %10824
        %v10826 = vrot.slane %v10506, 1
        %v10827 = vrot.slane %v10507, 1
        %v10828 = vrot.slane %v10508, 1
        %v10829 = vrot.slane %v10509, 1
        %v10830 = vrot.slane %v10510, 1
        %v10831 = vrot.slane %v10511, 1
        %v10832 = vrot.slane %v10512, 1
        %v10833 = vrot.slane %v10513, 1
        %v10834 = vrot.slane %v10514, 1
        %v10835 = vrot.slane %v10515, 1
        %v10836 = vrot.slane %v10516, 1
        %v10837 = vrot.slane %v10517, 1
        %v10838 = vrot.slane %v10518, 1
        %v10839 = vrot.slane %v10519, 1
        %v10840 = vrot.slane %v10520, 1
        %v10841 = vrot.slane %v10521, 1
        %v10842 = vrot.slane %v10522, 1
        %v10843 = vrot.slane %v10523, 1
        %v10844 = vrot.slane %v10524, 1
        %v10845 = vrot.slane %v10525, 1
        %v10846 = vrot.slane %v10526, 1
        %v10847 = vrot.slane %v10527, 1
        %v10848 = vrot.slane %v10528, 1
        %v10849 = vrot.slane %v10529, 1
        %v10850 = vrot.slane %v10530, 1
        %v10851 = vrot.slane %v10531, 1
        %v10852 = vrot.slane %v10532, 1
        %v10853 = vrot.slane %v10533, 1
        %v10854 = vrot.slane %v10534, 1
        %v10855 = vrot.slane %v10535, 1
        %v10856 = vrot.slane %v10536, 1
        %v10857 = vrot.slane %v10537, 1
        %10858 = vrot.lane.b32.xlu0 %v10826, 16
        %v10859 = vpop.permute.xlu0 %10858
        %10860 = vrot.lane.b32.xlu0 %v10827, 16
        %v10861 = vpop.permute.xlu0 %10860
        %10862 = vrot.lane.b32.xlu0 %v10828, 16
        %v10863 = vpop.permute.xlu0 %10862
        %10864 = vrot.lane.b32.xlu0 %v10829, 16
        %v10865 = vpop.permute.xlu0 %10864
        %10866 = vrot.lane.b32.xlu0 %v10830, 16
        %v10867 = vpop.permute.xlu0 %10866
        %10868 = vrot.lane.b32.xlu0 %v10831, 16
        %v10869 = vpop.permute.xlu0 %10868
        %10870 = vrot.lane.b32.xlu0 %v10832, 16
        %v10871 = vpop.permute.xlu0 %10870
        %10872 = vrot.lane.b32.xlu0 %v10833, 16
        %v10873 = vpop.permute.xlu0 %10872
        %10874 = vrot.lane.b32.xlu0 %v10834, 16
        %v10875 = vpop.permute.xlu0 %10874
        %10876 = vrot.lane.b32.xlu0 %v10835, 16
        %v10877 = vpop.permute.xlu0 %10876
        %10878 = vrot.lane.b32.xlu0 %v10836, 16
        %v10879 = vpop.permute.xlu0 %10878
        %10880 = vrot.lane.b32.xlu0 %v10837, 16
        %v10881 = vpop.permute.xlu0 %10880
        %10882 = vrot.lane.b32.xlu0 %v10838, 16
        %v10883 = vpop.permute.xlu0 %10882
        %10884 = vrot.lane.b32.xlu0 %v10839, 16
        %v10885 = vpop.permute.xlu0 %10884
        %10886 = vrot.lane.b32.xlu0 %v10840, 16
        %v10887 = vpop.permute.xlu0 %10886
        %10888 = vrot.lane.b32.xlu0 %v10841, 16
        %v10889 = vpop.permute.xlu0 %10888
        %10890 = vrot.lane.b32.xlu0 %v10842, 16
        %v10891 = vpop.permute.xlu0 %10890
        %10892 = vrot.lane.b32.xlu0 %v10843, 16
        %v10893 = vpop.permute.xlu0 %10892
        %10894 = vrot.lane.b32.xlu0 %v10844, 16
        %v10895 = vpop.permute.xlu0 %10894
        %10896 = vrot.lane.b32.xlu0 %v10845, 16
        %v10897 = vpop.permute.xlu0 %10896
        %10898 = vrot.lane.b32.xlu0 %v10846, 16
        %v10899 = vpop.permute.xlu0 %10898
        %10900 = vrot.lane.b32.xlu0 %v10847, 16
        %v10901 = vpop.permute.xlu0 %10900
        %10902 = vrot.lane.b32.xlu0 %v10848, 16
        %v10903 = vpop.permute.xlu0 %10902
        %10904 = vrot.lane.b32.xlu0 %v10849, 16
        %v10905 = vpop.permute.xlu0 %10904
        %10906 = vrot.lane.b32.xlu0 %v10850, 16
        %v10907 = vpop.permute.xlu0 %10906
        %10908 = vrot.lane.b32.xlu0 %v10851, 16
        %v10909 = vpop.permute.xlu0 %10908
        %10910 = vrot.lane.b32.xlu0 %v10852, 16
        %v10911 = vpop.permute.xlu0 %10910
        %10912 = vrot.lane.b32.xlu0 %v10853, 16
        %v10913 = vpop.permute.xlu0 %10912
        %10914 = vrot.lane.b32.xlu0 %v10854, 16
        %v10915 = vpop.permute.xlu0 %10914
        %10916 = vrot.lane.b32.xlu0 %v10855, 16
        %v10917 = vpop.permute.xlu0 %10916
        %10918 = vrot.lane.b32.xlu0 %v10856, 16
        %v10919 = vpop.permute.xlu0 %10918
        %10920 = vrot.lane.b32.xlu0 %v10857, 16
        %v10921 = vpop.permute.xlu0 %10920
        %v10924 = vsel %vm3243, %v10314, %v10763
        %v10927 = vsel %vm3243, %v10316, %v10765
        %v10930 = vsel %vm3243, %v10318, %v10767
        %v10933 = vsel %vm3243, %v10320, %v10769
        %v10936 = vsel %vm3243, %v10322, %v10771
        %v10939 = vsel %vm3243, %v10324, %v10773
        %v10942 = vsel %vm3243, %v10326, %v10775
        %v10945 = vsel %vm3243, %v10328, %v10777
        %v10948 = vsel %vm3243, %v10330, %v10779
        %v10951 = vsel %vm3243, %v10332, %v10781
        %v10954 = vsel %vm3243, %v10334, %v10783
        %v10957 = vsel %vm3243, %v10336, %v10785
        %v10960 = vsel %vm3243, %v10338, %v10787
        %v10963 = vsel %vm3243, %v10340, %v10789
        %v10966 = vsel %vm3243, %v10342, %v10791
        %v10969 = vsel %vm3243, %v10344, %v10793
        %v10972 = vsel %vm3243, %v10346, %v10795
        %v10975 = vsel %vm3243, %v10348, %v10797
        %v10978 = vsel %vm3243, %v10350, %v10799
        %v10981 = vsel %vm3243, %v10352, %v10801
        %v10984 = vsel %vm3243, %v10354, %v10803
        %v10987 = vsel %vm3243, %v10356, %v10805
        %v10990 = vsel %vm3243, %v10358, %v10807
        %v10993 = vsel %vm3243, %v10360, %v10809
        %v10996 = vsel %vm3243, %v10362, %v10811
        %v10999 = vsel %vm3243, %v10364, %v10813
        %v11002 = vsel %vm3243, %v10366, %v10815
        %v11005 = vsel %vm3243, %v10368, %v10817
        %v11008 = vsel %vm3243, %v10370, %v10819
        %v11011 = vsel %vm3243, %v10372, %v10821
        %v11014 = vsel %vm3243, %v10374, %v10823
        %v11017 = vsel %vm3243, %v10376, %v10825
        %v11019 = vsel %vm1134, %v10924, %v10859
        %v11021 = vsel %vm1134, %v10927, %v10861
        %v11023 = vsel %vm1134, %v10930, %v10863
        %v11025 = vsel %vm1134, %v10933, %v10865
        %v11027 = vsel %vm1134, %v10936, %v10867
        %v11029 = vsel %vm1134, %v10939, %v10869
        %v11031 = vsel %vm1134, %v10942, %v10871
        %v11033 = vsel %vm1134, %v10945, %v10873
        %v11035 = vsel %vm1134, %v10948, %v10875
        %v11037 = vsel %vm1134, %v10951, %v10877
        %v11039 = vsel %vm1134, %v10954, %v10879
        %v11041 = vsel %vm1134, %v10957, %v10881
        %v11043 = vsel %vm1134, %v10960, %v10883
        %v11045 = vsel %vm1134, %v10963, %v10885
        %v11047 = vsel %vm1134, %v10966, %v10887
        %v11049 = vsel %vm1134, %v10969, %v10889
        %v11051 = vsel %vm1134, %v10972, %v10891
        %v11053 = vsel %vm1134, %v10975, %v10893
        %v11055 = vsel %vm1134, %v10978, %v10895
        %v11057 = vsel %vm1134, %v10981, %v10897
        %v11059 = vsel %vm1134, %v10984, %v10899
        %v11061 = vsel %vm1134, %v10987, %v10901
        %v11063 = vsel %vm1134, %v10990, %v10903
        %v11065 = vsel %vm1134, %v10993, %v10905
        %v11067 = vsel %vm1134, %v10996, %v10907
        %v11069 = vsel %vm1134, %v10999, %v10909
        %v11071 = vsel %vm1134, %v11002, %v10911
        %v11073 = vsel %vm1134, %v11005, %v10913
        %v11075 = vsel %vm1134, %v11008, %v10915
        %v11077 = vsel %vm1134, %v11011, %v10917
        %v11079 = vsel %vm1134, %v11014, %v10919
        %v11081 = vsel %vm1134, %v11017, %v10921
        %s11082 = scalar_lea.vmem %s5, 84
        %v11083 = vld [vmem:[%s11082] sm:$0xf]
        %v11084 = vld [vmem:[%s11082 + $0x4] sm:$0xf]
        %v11085 = vld [vmem:[%s11082 + $0x8] sm:$0xf]
        %v11118 = vunpack.c.l.b16 %v11019
        %v11119 = vunpack.c.l.b16 %v11021
        %v11120 = vunpack.c.l.b16 %v11023
        %v11121 = vunpack.c.l.b16 %v11025
        %v11122 = vunpack.c.l.b16 %v11027
        %v11123 = vunpack.c.l.b16 %v11029
        %v11124 = vunpack.c.l.b16 %v11031
        %v11125 = vunpack.c.l.b16 %v11033
        %v11126 = vunpack.c.l.b16 %v11035
        %v11127 = vunpack.c.l.b16 %v11037
        %v11128 = vunpack.c.l.b16 %v11039
        %v11129 = vunpack.c.l.b16 %v11041
        %v11130 = vunpack.c.l.b16 %v11043
        %v11131 = vunpack.c.l.b16 %v11045
        %v11132 = vunpack.c.l.b16 %v11047
        %v11133 = vunpack.c.l.b16 %v11049
        %v11134 = vunpack.c.l.b16 %v11051
        %v11135 = vunpack.c.l.b16 %v11053
        %v11136 = vunpack.c.l.b16 %v11055
        %v11137 = vunpack.c.l.b16 %v11057
        %v11138 = vunpack.c.l.b16 %v11059
        %v11139 = vunpack.c.l.b16 %v11061
        %v11140 = vunpack.c.l.b16 %v11063
        %v11141 = vunpack.c.l.b16 %v11065
        %v11142 = vunpack.c.l.b16 %v11067
        %v11143 = vunpack.c.l.b16 %v11069
        %v11144 = vunpack.c.l.b16 %v11071
        %v11145 = vunpack.c.l.b16 %v11073
        %v11146 = vunpack.c.l.b16 %v11075
        %v11147 = vunpack.c.l.b16 %v11077
        %v11148 = vunpack.c.l.b16 %v11079
        %v11149 = vunpack.c.l.b16 %v11081
        %v11150 = vpack.c.b16 %v11119, %v11118
        %v11151 = vpack.c.b16 %v11121, %v11120
        %v11152 = vpack.c.b16 %v11123, %v11122
        %v11153 = vpack.c.b16 %v11125, %v11124
        %v11154 = vpack.c.b16 %v11127, %v11126
        %v11155 = vpack.c.b16 %v11129, %v11128
        %v11156 = vpack.c.b16 %v11131, %v11130
        %v11157 = vpack.c.b16 %v11133, %v11132
        %v11158 = vpack.c.b16 %v11135, %v11134
        %v11159 = vpack.c.b16 %v11137, %v11136
        %v11160 = vpack.c.b16 %v11139, %v11138
        %v11161 = vpack.c.b16 %v11141, %v11140
        %v11162 = vpack.c.b16 %v11143, %v11142
        %v11163 = vpack.c.b16 %v11145, %v11144
        %v11164 = vpack.c.b16 %v11147, %v11146
        %v11165 = vpack.c.b16 %v11149, %v11148
        %v11169 = vunpack.c.l.b16 %v11083
        %v11170 = vunpack.c.l.b16 %v11084
        %v11171 = vunpack.c.l.b16 %v11085
        %v11172 = vpack.c.b16 %v11170, %v11169
        %v11173 = vpack.c.b16 %v11171, %v11171
        %v11176 = vsel %vm4269, %v11150, 0
        %v11179 = vsel %vm4269, %v11151, 0
        %v11182 = vsel %vm4269, %v11152, 0
        %v11185 = vsel %vm4269, %v11153, 0
        %v11188 = vsel %vm4269, %v11154, 0
        %v11191 = vsel %vm4269, %v11155, 0
        %v11194 = vsel %vm4269, %v11156, 0
        %v11197 = vsel %vm4269, %v11157, 0
        %v11200 = vsel %vm4269, %v11158, 0
        %v11203 = vsel %vm4269, %v11159, 0
        %v11206 = vsel %vm4269, %v11160, 0
        %v11209 = vsel %vm4269, %v11161, 0
        %v11212 = vsel %vm4269, %v11162, 0
        %v11215 = vsel %vm4269, %v11163, 0
        %v11218 = vsel %vm4269, %v11164, 0
        %v11221 = vsel %vm4269, %v11165, 0
        %v11224 = vsel %vm4318, %v11173, 0
        %11226 = vmatprep.subr.bf16.mxu0 0
        %11227 = vmatpush1.bf16.msra.mxu0 %v11172
        %11228 = vmatprep.subr.bf16.mxu0 0
        %11229 = vmatpush1.bf16.msra.mxu0 %v11224
        %11230 = vmatprep.subr.bf16.mxu0 0
        %11231 = vmatpush1.bf16.msra.mxu0 0
        %11232 = vmatprep.subr.bf16.mxu0 0
        %11233 = vmatpush1.bf16.msra.mxu0 0
        %11234 = vmatprep.subr.bf16.mxu0 0
        %11235 = vmatpush1.bf16.msra.mxu0 0
        %11236 = vmatprep.subr.bf16.mxu0 0
        %11237 = vmatpush1.bf16.msra.mxu0 0
        %11238 = vmatprep.subr.bf16.mxu0 0
        %11239 = vmatpush1.bf16.msra.mxu0 0
        %11240 = vmatprep.subr.bf16.mxu0 0
        %11241 = vmatpush1.bf16.msra.mxu0 0
        %11242 = vmatprep.subr.bf16.mxu0 0
        %11243 = vmatpush1.bf16.msra.mxu0 0
        %11244 = vmatprep.subr.bf16.mxu0 0
        %11245 = vmatpush1.bf16.msra.mxu0 0
        %11246 = vmatprep.subr.bf16.mxu0 0
        %11247 = vmatpush1.bf16.msra.mxu0 0
        %11248 = vmatprep.subr.bf16.mxu0 0
        %11249 = vmatpush1.bf16.msra.mxu0 0
        %11250 = vmatprep.subr.bf16.mxu0 0
        %11251 = vmatpush1.bf16.msra.mxu0 0
        %11252 = vmatprep.subr.bf16.mxu0 0
        %11253 = vmatpush1.bf16.msra.mxu0 0
        %11254 = vmatprep.subr.bf16.mxu0 0
        %11255 = vmatpush1.bf16.msra.mxu0 0
        %11256 = vmatprep.subr.bf16.mxu0 0
        %11257 = vmatpush1.bf16.msra.mxu0 0
        %11258 = vmatprep.mubr.bf16.mxu0 0
        %11259 = vmatmul.mubr.bf16.gmra.mrb[0].mxu0 %v11176
        %v11260 = vpop.f32.mrb[0].mxu0
        %v11261 = vadd.f32 0.0, %v11260
        %v11262 = vpop.f32.mrb[0].mxu0
        %v11263 = vpop.f32.mrb[0].mxu0
        %v11264 = vadd.f32 0.0, %v11263
        %v11265 = vpop.f32.mrb[0].mxu0
        %11266 = vmatprep.mubr.bf16.mxu0 0
        %11267 = vmatmul.mubr.bf16.gmra.mrb[0].mxu0 %v11179
        %v11268 = vpop.f32.mrb[0].mxu0
        %v11269 = vadd.f32 0.0, %v11268
        %v11270 = vpop.f32.mrb[0].mxu0
        %v11271 = vpop.f32.mrb[0].mxu0
        %v11272 = vadd.f32 0.0, %v11271
        %v11273 = vpop.f32.mrb[0].mxu0
        %11274 = vmatprep.mubr.bf16.mxu0 0
        %11275 = vmatmul.mubr.bf16.gmra.mrb[0].mxu0 %v11182
        %v11276 = vpop.f32.mrb[0].mxu0
        %v11277 = vadd.f32 0.0, %v11276
        %v11278 = vpop.f32.mrb[0].mxu0
        %v11279 = vpop.f32.mrb[0].mxu0
        %v11280 = vadd.f32 0.0, %v11279
        %v11281 = vpop.f32.mrb[0].mxu0
        %11282 = vmatprep.mubr.bf16.mxu0 0
        %11283 = vmatmul.mubr.bf16.gmra.mrb[0].mxu0 %v11185
        %v11284 = vpop.f32.mrb[0].mxu0
        %v11285 = vadd.f32 0.0, %v11284
        %v11286 = vpop.f32.mrb[0].mxu0
        %v11287 = vpop.f32.mrb[0].mxu0
        %v11288 = vadd.f32 0.0, %v11287
        %v11289 = vpop.f32.mrb[0].mxu0
        %11290 = vmatprep.mubr.bf16.mxu0 0
        %11291 = vmatmul.mubr.bf16.gmra.mrb[0].mxu0 %v11188
        %v11292 = vpop.f32.mrb[0].mxu0
        %v11293 = vadd.f32 0.0, %v11292
        %v11294 = vpop.f32.mrb[0].mxu0
        %v11295 = vpop.f32.mrb[0].mxu0
        %v11296 = vadd.f32 0.0, %v11295
        %v11297 = vpop.f32.mrb[0].mxu0
        %11298 = vmatprep.mubr.bf16.mxu0 0
        %11299 = vmatmul.mubr.bf16.gmra.mrb[0].mxu0 %v11191
        %v11300 = vpop.f32.mrb[0].mxu0
        %v11301 = vadd.f32 0.0, %v11300
        %v11302 = vpop.f32.mrb[0].mxu0
        %v11303 = vpop.f32.mrb[0].mxu0
        %v11304 = vadd.f32 0.0, %v11303
        %v11305 = vpop.f32.mrb[0].mxu0
        %11306 = vmatprep.mubr.bf16.mxu0 0
        %11307 = vmatmul.mubr.bf16.gmra.mrb[0].mxu0 %v11194
        %v11308 = vpop.f32.mrb[0].mxu0
        %v11309 = vadd.f32 0.0, %v11308
        %v11310 = vpop.f32.mrb[0].mxu0
        %v11311 = vpop.f32.mrb[0].mxu0
        %v11312 = vadd.f32 0.0, %v11311
        %v11313 = vpop.f32.mrb[0].mxu0
        %11314 = vmatprep.mubr.bf16.mxu0 0
        %11315 = vmatmul.mubr.bf16.gmra.mrb[0].mxu0 %v11197
        %v11316 = vpop.f32.mrb[0].mxu0
        %v11317 = vadd.f32 0.0, %v11316
        %v11318 = vpop.f32.mrb[0].mxu0
        %v11319 = vpop.f32.mrb[0].mxu0
        %v11320 = vadd.f32 0.0, %v11319
        %v11321 = vpop.f32.mrb[0].mxu0
        %11322 = vmatprep.mubr.bf16.mxu0 0
        %11323 = vmatmul.mubr.bf16.gmra.mrb[0].mxu0 %v11200
        %v11324 = vpop.f32.mrb[0].mxu0
        %v11325 = vadd.f32 0.0, %v11324
        %v11326 = vpop.f32.mrb[0].mxu0
        %v11327 = vpop.f32.mrb[0].mxu0
        %v11328 = vadd.f32 0.0, %v11327
        %v11329 = vpop.f32.mrb[0].mxu0
        %11330 = vmatprep.mubr.bf16.mxu0 0
        %11331 = vmatmul.mubr.bf16.gmra.mrb[0].mxu0 %v11203
        %v11332 = vpop.f32.mrb[0].mxu0
        %v11333 = vadd.f32 0.0, %v11332
        %v11334 = vpop.f32.mrb[0].mxu0
        %v11335 = vpop.f32.mrb[0].mxu0
        %v11336 = vadd.f32 0.0, %v11335
        %v11337 = vpop.f32.mrb[0].mxu0
        %11338 = vmatprep.mubr.bf16.mxu0 0
        %11339 = vmatmul.mubr.bf16.gmra.mrb[0].mxu0 %v11206
        %v11340 = vpop.f32.mrb[0].mxu0
        %v11341 = vadd.f32 0.0, %v11340
        %v11342 = vpop.f32.mrb[0].mxu0
        %v11343 = vpop.f32.mrb[0].mxu0
        %v11344 = vadd.f32 0.0, %v11343
        %v11345 = vpop.f32.mrb[0].mxu0
        %11346 = vmatprep.mubr.bf16.mxu0 0
        %11347 = vmatmul.mubr.bf16.gmra.mrb[0].mxu0 %v11209
        %v11348 = vpop.f32.mrb[0].mxu0
        %v11349 = vadd.f32 0.0, %v11348
        %v11350 = vpop.f32.mrb[0].mxu0
        %v11351 = vpop.f32.mrb[0].mxu0
        %v11352 = vadd.f32 0.0, %v11351
        %v11353 = vpop.f32.mrb[0].mxu0
        %11354 = vmatprep.mubr.bf16.mxu0 0
        %11355 = vmatmul.mubr.bf16.gmra.mrb[0].mxu0 %v11212
        %v11356 = vpop.f32.mrb[0].mxu0
        %v11357 = vadd.f32 0.0, %v11356
        %v11358 = vpop.f32.mrb[0].mxu0
        %v11359 = vpop.f32.mrb[0].mxu0
        %v11360 = vadd.f32 0.0, %v11359
        %v11361 = vpop.f32.mrb[0].mxu0
        %11362 = vmatprep.mubr.bf16.mxu0 0
        %11363 = vmatmul.mubr.bf16.gmra.mrb[0].mxu0 %v11215
        %v11364 = vpop.f32.mrb[0].mxu0
        %v11365 = vadd.f32 0.0, %v11364
        %v11366 = vpop.f32.mrb[0].mxu0
        %v11367 = vpop.f32.mrb[0].mxu0
        %v11368 = vadd.f32 0.0, %v11367
        %v11369 = vpop.f32.mrb[0].mxu0
        %11370 = vmatprep.mubr.bf16.mxu0 0
        %11371 = vmatmul.mubr.bf16.gmra.mrb[0].mxu0 %v11218
        %v11372 = vpop.f32.mrb[0].mxu0
        %v11373 = vadd.f32 0.0, %v11372
        %v11374 = vpop.f32.mrb[0].mxu0
        %v11375 = vpop.f32.mrb[0].mxu0
        %v11376 = vadd.f32 0.0, %v11375
        %v11377 = vpop.f32.mrb[0].mxu0
        %11378 = vmatprep.mubr.bf16.mxu0 0
        %11379 = vmatmul.mubr.bf16.gmra.mrb[0].mxu0 %v11221
        %v11380 = vpop.f32.mrb[0].mxu0
        %v11381 = vadd.f32 0.0, %v11380
        %v11382 = vpop.f32.mrb[0].mxu0
        %v11383 = vpop.f32.mrb[0].mxu0
        %v11384 = vadd.f32 0.0, %v11383
        %v11385 = vpop.f32.mrb[0].mxu0
        %11386 = vdwg.mxu0
        %v11387 = vadd.f32 %v10281, %v11261
        %v11388 = vadd.f32 %v10282, %v11264
        %v11389 = vadd.f32 %v10283, %v11269
        %v11390 = vadd.f32 %v10284, %v11272
        %v11391 = vadd.f32 %v10285, %v11277
        %v11392 = vadd.f32 %v10286, %v11280
        %v11393 = vadd.f32 %v10287, %v11285
        %v11394 = vadd.f32 %v10288, %v11288
        %v11395 = vadd.f32 %v10289, %v11293
        %v11396 = vadd.f32 %v10290, %v11296
        %v11397 = vadd.f32 %v10291, %v11301
        %v11398 = vadd.f32 %v10292, %v11304
        %v11399 = vadd.f32 %v10293, %v11309
        %v11400 = vadd.f32 %v10294, %v11312
        %v11401 = vadd.f32 %v10295, %v11317
        %v11402 = vadd.f32 %v10296, %v11320
        %v11403 = vadd.f32 %v10297, %v11325
        %v11404 = vadd.f32 %v10298, %v11328
        %v11405 = vadd.f32 %v10299, %v11333
        %v11406 = vadd.f32 %v10300, %v11336
        %v11407 = vadd.f32 %v10301, %v11341
        %v11408 = vadd.f32 %v10302, %v11344
        %v11409 = vadd.f32 %v10303, %v11349
        %v11410 = vadd.f32 %v10304, %v11352
        %v11411 = vadd.f32 %v10305, %v11357
        %v11412 = vadd.f32 %v10306, %v11360
        %v11413 = vadd.f32 %v10307, %v11365
        %v11414 = vadd.f32 %v10308, %v11368
        %v11415 = vadd.f32 %v10309, %v11373
        %v11416 = vadd.f32 %v10310, %v11376
        %v11417 = vadd.f32 %v10311, %v11381
        %v11418 = vadd.f32 %v10312, %v11384
        %s11419 = scalar_lea.vmem [#allocation2], 176
        %v11420 = vld [vmem:[%s11419] sm:$0xf]
        %v11421 = vld [vmem:[%s11419 + $0x4] sm:$0x1]
        %v11422 = vld [vmem:[%s11419 + $0x8] sm:$0xf]
        %v11423 = vld [vmem:[%s11419 + $0xc] sm:$0x1]
        %v11424 = vld [vmem:[%s11419 + $0x10] sm:$0xf]
        %v11425 = vld [vmem:[%s11419 + $0x14] sm:$0x1]
        %v11426 = vld [vmem:[%s11419 + $0x18] sm:$0xf]
        %v11427 = vld [vmem:[%s11419 + $0x1c] sm:$0x1]
        %v11428 = vld [vmem:[%s11419 + $0x20] sm:$0xf]
        %v11429 = vld [vmem:[%s11419 + $0x24] sm:$0x1]
        %v11430 = vld [vmem:[%s11419 + $0x28] sm:$0xf]
        %v11431 = vld [vmem:[%s11419 + $0x2c] sm:$0x1]
        %v11432 = vld [vmem:[%s11419 + $0x30] sm:$0xf]
        %v11433 = vld [vmem:[%s11419 + $0x34] sm:$0x1]
        %v11434 = vld [vmem:[%s11419 + $0x38] sm:$0xf]
        %v11435 = vld [vmem:[%s11419 + $0x3c] sm:$0x1]
        %v11436 = vld [vmem:[%s11419 + $0x50] sm:$0xf]
        %v11437 = vld [vmem:[%s11419 + $0x54] sm:$0x1]
        %v11438 = vld [vmem:[%s11419 + $0x58] sm:$0xf]
        %v11439 = vld [vmem:[%s11419 + $0x5c] sm:$0x1]
        %v11440 = vld [vmem:[%s11419 + $0x60] sm:$0xf]
        %v11441 = vld [vmem:[%s11419 + $0x64] sm:$0x1]
        %v11442 = vld [vmem:[%s11419 + $0x68] sm:$0xf]
        %v11443 = vld [vmem:[%s11419 + $0x6c] sm:$0x1]
        %v11444 = vld [vmem:[%s11419 + $0x70] sm:$0xf]
        %v11445 = vld [vmem:[%s11419 + $0x74] sm:$0x1]
        %v11446 = vld [vmem:[%s11419 + $0x78] sm:$0xf]
        %v11447 = vld [vmem:[%s11419 + $0x7c] sm:$0x1]
        %v11448 = vld [vmem:[%s11419 + $0x80] sm:$0xf]
        %v11449 = vld [vmem:[%s11419 + $0x84] sm:$0x1]
        %v11450 = vld [vmem:[%s11419 + $0x88] sm:$0xf]
        %v11451 = vld [vmem:[%s11419 + $0x8c] sm:$0x1]
        %v11452 = vld [vmem:[%s11419 + $0xa0] sm:$0xf]
        %v11453 = vld [vmem:[%s11419 + $0xa4] sm:$0x1]
        %v11454 = vld [vmem:[%s11419 + $0xa8] sm:$0xf]
        %v11455 = vld [vmem:[%s11419 + $0xac] sm:$0x1]
        %v11456 = vld [vmem:[%s11419 + $0xb0] sm:$0xf]
        %v11457 = vld [vmem:[%s11419 + $0xb4] sm:$0x1]
        %v11458 = vld [vmem:[%s11419 + $0xb8] sm:$0xf]
        %v11459 = vld [vmem:[%s11419 + $0xbc] sm:$0x1]
        %v11460 = vld [vmem:[%s11419 + $0xc0] sm:$0xf]
        %v11461 = vld [vmem:[%s11419 + $0xc4] sm:$0x1]
        %v11462 = vld [vmem:[%s11419 + $0xc8] sm:$0xf]
        %v11463 = vld [vmem:[%s11419 + $0xcc] sm:$0x1]
        %v11464 = vld [vmem:[%s11419 + $0xd0] sm:$0xf]
        %v11465 = vld [vmem:[%s11419 + $0xd4] sm:$0x1]
        %v11466 = vld [vmem:[%s11419 + $0xd8] sm:$0xf]
        %v11467 = vld [vmem:[%s11419 + $0xdc] sm:$0x1]
        %v11468 = vld [vmem:[%s11419 + $0xf0] sm:$0xf]
        %v11469 = vld [vmem:[%s11419 + $0xf4] sm:$0x1]
        %v11470 = vld [vmem:[%s11419 + $0xf8] sm:$0xf]
        %v11471 = vld [vmem:[%s11419 + $0xfc] sm:$0x1]
        %v11472 = vld [vmem:[%s11419 + $0x100] sm:$0xf]
        %v11473 = vld [vmem:[%s11419 + $0x104] sm:$0x1]
        %v11474 = vld [vmem:[%s11419 + $0x108] sm:$0xf]
        %v11475 = vld [vmem:[%s11419 + $0x10c] sm:$0x1]
        %v11476 = vld [vmem:[%s11419 + $0x110] sm:$0xf]
        %v11477 = vld [vmem:[%s11419 + $0x114] sm:$0x1]
        %v11478 = vld [vmem:[%s11419 + $0x118] sm:$0xf]
        %v11479 = vld [vmem:[%s11419 + $0x11c] sm:$0x1]
        %v11480 = vld [vmem:[%s11419 + $0x120] sm:$0xf]
        %v11481 = vld [vmem:[%s11419 + $0x124] sm:$0x1]
        %v11482 = vld [vmem:[%s11419 + $0x128] sm:$0xf]
        %v11483 = vld [vmem:[%s11419 + $0x12c] sm:$0x1]
        %v11548 = vunpack.c.l.b16 %v11420
        %v11549 = vunpack.c.l.b16 %v11421
        %v11550 = vunpack.c.l.b16 %v11422
        %v11551 = vunpack.c.l.b16 %v11423
        %v11552 = vunpack.c.l.b16 %v11424
        %v11553 = vunpack.c.l.b16 %v11425
        %v11554 = vunpack.c.l.b16 %v11426
        %v11555 = vunpack.c.l.b16 %v11427
        %v11556 = vunpack.c.l.b16 %v11428
        %v11557 = vunpack.c.l.b16 %v11429
        %v11558 = vunpack.c.l.b16 %v11430
        %v11559 = vunpack.c.l.b16 %v11431
        %v11560 = vunpack.c.l.b16 %v11432
        %v11561 = vunpack.c.l.b16 %v11433
        %v11562 = vunpack.c.l.b16 %v11434
        %v11563 = vunpack.c.l.b16 %v11435
        %v11564 = vunpack.c.l.b16 %v11436
        %v11565 = vunpack.c.l.b16 %v11437
        %v11566 = vunpack.c.l.b16 %v11438
        %v11567 = vunpack.c.l.b16 %v11439
        %v11568 = vunpack.c.l.b16 %v11440
        %v11569 = vunpack.c.l.b16 %v11441
        %v11570 = vunpack.c.l.b16 %v11442
        %v11571 = vunpack.c.l.b16 %v11443
        %v11572 = vunpack.c.l.b16 %v11444
        %v11573 = vunpack.c.l.b16 %v11445
        %v11574 = vunpack.c.l.b16 %v11446
        %v11575 = vunpack.c.l.b16 %v11447
        %v11576 = vunpack.c.l.b16 %v11448
        %v11577 = vunpack.c.l.b16 %v11449
        %v11578 = vunpack.c.l.b16 %v11450
        %v11579 = vunpack.c.l.b16 %v11451
        %v11580 = vunpack.c.l.b16 %v11452
        %v11581 = vunpack.c.l.b16 %v11453
        %v11582 = vunpack.c.l.b16 %v11454
        %v11583 = vunpack.c.l.b16 %v11455
        %v11584 = vunpack.c.l.b16 %v11456
        %v11585 = vunpack.c.l.b16 %v11457
        %v11586 = vunpack.c.l.b16 %v11458
        %v11587 = vunpack.c.l.b16 %v11459
        %v11588 = vunpack.c.l.b16 %v11460
        %v11589 = vunpack.c.l.b16 %v11461
        %v11590 = vunpack.c.l.b16 %v11462
        %v11591 = vunpack.c.l.b16 %v11463
        %v11592 = vunpack.c.l.b16 %v11464
        %v11593 = vunpack.c.l.b16 %v11465
        %v11594 = vunpack.c.l.b16 %v11466
        %v11595 = vunpack.c.l.b16 %v11467
        %v11596 = vunpack.c.l.b16 %v11468
        %v11597 = vunpack.c.l.b16 %v11469
        %v11598 = vunpack.c.l.b16 %v11470
        %v11599 = vunpack.c.l.b16 %v11471
        %v11600 = vunpack.c.l.b16 %v11472
        %v11601 = vunpack.c.l.b16 %v11473
        %v11602 = vunpack.c.l.b16 %v11474
        %v11603 = vunpack.c.l.b16 %v11475
        %v11604 = vunpack.c.l.b16 %v11476
        %v11605 = vunpack.c.l.b16 %v11477
        %v11606 = vunpack.c.l.b16 %v11478
        %v11607 = vunpack.c.l.b16 %v11479
        %v11608 = vunpack.c.l.b16 %v11480
        %v11609 = vunpack.c.l.b16 %v11481
        %v11610 = vunpack.c.l.b16 %v11482
        %v11611 = vunpack.c.l.b16 %v11483
        %v11612 = vpack.c.b16 %v11549, %v11548
        %v11613 = vpack.c.b16 %v11551, %v11550
        %v11614 = vpack.c.b16 %v11553, %v11552
        %v11615 = vpack.c.b16 %v11555, %v11554
        %v11616 = vpack.c.b16 %v11557, %v11556
        %v11617 = vpack.c.b16 %v11559, %v11558
        %v11618 = vpack.c.b16 %v11561, %v11560
        %v11619 = vpack.c.b16 %v11563, %v11562
        %v11620 = vpack.c.b16 %v11565, %v11564
        %v11621 = vpack.c.b16 %v11567, %v11566
        %v11622 = vpack.c.b16 %v11569, %v11568
        %v11623 = vpack.c.b16 %v11571, %v11570
        %v11624 = vpack.c.b16 %v11573, %v11572
        %v11625 = vpack.c.b16 %v11575, %v11574
        %v11626 = vpack.c.b16 %v11577, %v11576
        %v11627 = vpack.c.b16 %v11579, %v11578
        %v11628 = vpack.c.b16 %v11581, %v11580
        %v11629 = vpack.c.b16 %v11583, %v11582
        %v11630 = vpack.c.b16 %v11585, %v11584
        %v11631 = vpack.c.b16 %v11587, %v11586
        %v11632 = vpack.c.b16 %v11589, %v11588
        %v11633 = vpack.c.b16 %v11591, %v11590
        %v11634 = vpack.c.b16 %v11593, %v11592
        %v11635 = vpack.c.b16 %v11595, %v11594
        %v11636 = vpack.c.b16 %v11597, %v11596
        %v11637 = vpack.c.b16 %v11599, %v11598
        %v11638 = vpack.c.b16 %v11601, %v11600
        %v11639 = vpack.c.b16 %v11603, %v11602
        %v11640 = vpack.c.b16 %v11605, %v11604
        %v11641 = vpack.c.b16 %v11607, %v11606
        %v11642 = vpack.c.b16 %v11609, %v11608
        %v11643 = vpack.c.b16 %v11611, %v11610
        %v11645 = vshrl.u32 %v11612, 16
        %v11647 = vshll.u32 %v11612, 16
        %v11649 = vrot.slane %v11647, 1
        %v11650 = vor.u32 %v11645, %v11649
        %v11652 = vshrl.u32 %v11613, 16
        %v11654 = vshll.u32 %v11613, 16
        %v11656 = vrot.slane %v11654, 1
        %v11657 = vor.u32 %v11652, %v11656
        %v11659 = vshrl.u32 %v11614, 16
        %v11661 = vshll.u32 %v11614, 16
        %v11663 = vrot.slane %v11661, 1
        %v11664 = vor.u32 %v11659, %v11663
        %v11666 = vshrl.u32 %v11615, 16
        %v11668 = vshll.u32 %v11615, 16
        %v11670 = vrot.slane %v11668, 1
        %v11671 = vor.u32 %v11666, %v11670
        %v11673 = vshrl.u32 %v11616, 16
        %v11675 = vshll.u32 %v11616, 16
        %v11677 = vrot.slane %v11675, 1
        %v11678 = vor.u32 %v11673, %v11677
        %v11680 = vshrl.u32 %v11617, 16
        %v11682 = vshll.u32 %v11617, 16
        %v11684 = vrot.slane %v11682, 1
        %v11685 = vor.u32 %v11680, %v11684
        %v11687 = vshrl.u32 %v11618, 16
        %v11689 = vshll.u32 %v11618, 16
        %v11691 = vrot.slane %v11689, 1
        %v11692 = vor.u32 %v11687, %v11691
        %v11694 = vshrl.u32 %v11619, 16
        %v11696 = vshll.u32 %v11619, 16
        %v11698 = vrot.slane %v11696, 1
        %v11699 = vor.u32 %v11694, %v11698
        %v11701 = vshrl.u32 %v11620, 16
        %v11703 = vshll.u32 %v11620, 16
        %v11705 = vrot.slane %v11703, 1
        %v11706 = vor.u32 %v11701, %v11705
        %v11708 = vshrl.u32 %v11621, 16
        %v11710 = vshll.u32 %v11621, 16
        %v11712 = vrot.slane %v11710, 1
        %v11713 = vor.u32 %v11708, %v11712
        %v11715 = vshrl.u32 %v11622, 16
        %v11717 = vshll.u32 %v11622, 16
        %v11719 = vrot.slane %v11717, 1
        %v11720 = vor.u32 %v11715, %v11719
        %v11722 = vshrl.u32 %v11623, 16
        %v11724 = vshll.u32 %v11623, 16
        %v11726 = vrot.slane %v11724, 1
        %v11727 = vor.u32 %v11722, %v11726
        %v11729 = vshrl.u32 %v11624, 16
        %v11731 = vshll.u32 %v11624, 16
        %v11733 = vrot.slane %v11731, 1
        %v11734 = vor.u32 %v11729, %v11733
        %v11736 = vshrl.u32 %v11625, 16
        %v11738 = vshll.u32 %v11625, 16
        %v11740 = vrot.slane %v11738, 1
        %v11741 = vor.u32 %v11736, %v11740
        %v11743 = vshrl.u32 %v11626, 16
        %v11745 = vshll.u32 %v11626, 16
        %v11747 = vrot.slane %v11745, 1
        %v11748 = vor.u32 %v11743, %v11747
        %v11750 = vshrl.u32 %v11627, 16
        %v11752 = vshll.u32 %v11627, 16
        %v11754 = vrot.slane %v11752, 1
        %v11755 = vor.u32 %v11750, %v11754
        %v11757 = vshrl.u32 %v11628, 16
        %v11759 = vshll.u32 %v11628, 16
        %v11761 = vrot.slane %v11759, 1
        %v11762 = vor.u32 %v11757, %v11761
        %v11764 = vshrl.u32 %v11629, 16
        %v11766 = vshll.u32 %v11629, 16
        %v11768 = vrot.slane %v11766, 1
        %v11769 = vor.u32 %v11764, %v11768
        %v11771 = vshrl.u32 %v11630, 16
        %v11773 = vshll.u32 %v11630, 16
        %v11775 = vrot.slane %v11773, 1
        %v11776 = vor.u32 %v11771, %v11775
        %v11778 = vshrl.u32 %v11631, 16
        %v11780 = vshll.u32 %v11631, 16
        %v11782 = vrot.slane %v11780, 1
        %v11783 = vor.u32 %v11778, %v11782
        %v11785 = vshrl.u32 %v11632, 16
        %v11787 = vshll.u32 %v11632, 16
        %v11789 = vrot.slane %v11787, 1
        %v11790 = vor.u32 %v11785, %v11789
        %v11792 = vshrl.u32 %v11633, 16
        %v11794 = vshll.u32 %v11633, 16
        %v11796 = vrot.slane %v11794, 1
        %v11797 = vor.u32 %v11792, %v11796
        %v11799 = vshrl.u32 %v11634, 16
        %v11801 = vshll.u32 %v11634, 16
        %v11803 = vrot.slane %v11801, 1
        %v11804 = vor.u32 %v11799, %v11803
        %v11806 = vshrl.u32 %v11635, 16
        %v11808 = vshll.u32 %v11635, 16
        %v11810 = vrot.slane %v11808, 1
        %v11811 = vor.u32 %v11806, %v11810
        %v11813 = vshrl.u32 %v11636, 16
        %v11815 = vshll.u32 %v11636, 16
        %v11817 = vrot.slane %v11815, 1
        %v11818 = vor.u32 %v11813, %v11817
        %v11820 = vshrl.u32 %v11637, 16
        %v11822 = vshll.u32 %v11637, 16
        %v11824 = vrot.slane %v11822, 1
        %v11825 = vor.u32 %v11820, %v11824
        %v11827 = vshrl.u32 %v11638, 16
        %v11829 = vshll.u32 %v11638, 16
        %v11831 = vrot.slane %v11829, 1
        %v11832 = vor.u32 %v11827, %v11831
        %v11834 = vshrl.u32 %v11639, 16
        %v11836 = vshll.u32 %v11639, 16
        %v11838 = vrot.slane %v11836, 1
        %v11839 = vor.u32 %v11834, %v11838
        %v11841 = vshrl.u32 %v11640, 16
        %v11843 = vshll.u32 %v11640, 16
        %v11845 = vrot.slane %v11843, 1
        %v11846 = vor.u32 %v11841, %v11845
        %v11848 = vshrl.u32 %v11641, 16
        %v11850 = vshll.u32 %v11641, 16
        %v11852 = vrot.slane %v11850, 1
        %v11853 = vor.u32 %v11848, %v11852
        %v11855 = vshrl.u32 %v11642, 16
        %v11857 = vshll.u32 %v11642, 16
        %v11859 = vrot.slane %v11857, 1
        %v11860 = vor.u32 %v11855, %v11859
        %v11862 = vshrl.u32 %v11643, 16
        %v11864 = vshll.u32 %v11643, 16
        %v11866 = vrot.slane %v11864, 1
        %v11867 = vor.u32 %v11862, %v11866
        %11868 = vrot.lane.b32.xlu0 %v11650, 8
        %v11869 = vpop.permute.xlu0 %11868
        %11870 = vrot.lane.b32.xlu0 %v11657, 8
        %v11871 = vpop.permute.xlu0 %11870
        %11872 = vrot.lane.b32.xlu0 %v11664, 8
        %v11873 = vpop.permute.xlu0 %11872
        %11874 = vrot.lane.b32.xlu0 %v11671, 8
        %v11875 = vpop.permute.xlu0 %11874
        %11876 = vrot.lane.b32.xlu0 %v11678, 8
        %v11877 = vpop.permute.xlu0 %11876
        %11878 = vrot.lane.b32.xlu0 %v11685, 8
        %v11879 = vpop.permute.xlu0 %11878
        %11880 = vrot.lane.b32.xlu0 %v11692, 8
        %v11881 = vpop.permute.xlu0 %11880
        %11882 = vrot.lane.b32.xlu0 %v11699, 8
        %v11883 = vpop.permute.xlu0 %11882
        %11884 = vrot.lane.b32.xlu0 %v11706, 8
        %v11885 = vpop.permute.xlu0 %11884
        %11886 = vrot.lane.b32.xlu0 %v11713, 8
        %v11887 = vpop.permute.xlu0 %11886
        %11888 = vrot.lane.b32.xlu0 %v11720, 8
        %v11889 = vpop.permute.xlu0 %11888
        %11890 = vrot.lane.b32.xlu0 %v11727, 8
        %v11891 = vpop.permute.xlu0 %11890
        %11892 = vrot.lane.b32.xlu0 %v11734, 8
        %v11893 = vpop.permute.xlu0 %11892
        %11894 = vrot.lane.b32.xlu0 %v11741, 8
        %v11895 = vpop.permute.xlu0 %11894
        %11896 = vrot.lane.b32.xlu0 %v11748, 8
        %v11897 = vpop.permute.xlu0 %11896
        %11898 = vrot.lane.b32.xlu0 %v11755, 8
        %v11899 = vpop.permute.xlu0 %11898
        %11900 = vrot.lane.b32.xlu0 %v11762, 8
        %v11901 = vpop.permute.xlu0 %11900
        %11902 = vrot.lane.b32.xlu0 %v11769, 8
        %v11903 = vpop.permute.xlu0 %11902
        %11904 = vrot.lane.b32.xlu0 %v11776, 8
        %v11905 = vpop.permute.xlu0 %11904
        %11906 = vrot.lane.b32.xlu0 %v11783, 8
        %v11907 = vpop.permute.xlu0 %11906
        %11908 = vrot.lane.b32.xlu0 %v11790, 8
        %v11909 = vpop.permute.xlu0 %11908
        %11910 = vrot.lane.b32.xlu0 %v11797, 8
        %v11911 = vpop.permute.xlu0 %11910
        %11912 = vrot.lane.b32.xlu0 %v11804, 8
        %v11913 = vpop.permute.xlu0 %11912
        %11914 = vrot.lane.b32.xlu0 %v11811, 8
        %v11915 = vpop.permute.xlu0 %11914
        %11916 = vrot.lane.b32.xlu0 %v11818, 8
        %v11917 = vpop.permute.xlu0 %11916
        %11918 = vrot.lane.b32.xlu0 %v11825, 8
        %v11919 = vpop.permute.xlu0 %11918
        %11920 = vrot.lane.b32.xlu0 %v11832, 8
        %v11921 = vpop.permute.xlu0 %11920
        %11922 = vrot.lane.b32.xlu0 %v11839, 8
        %v11923 = vpop.permute.xlu0 %11922
        %11924 = vrot.lane.b32.xlu0 %v11846, 8
        %v11925 = vpop.permute.xlu0 %11924
        %11926 = vrot.lane.b32.xlu0 %v11853, 8
        %v11927 = vpop.permute.xlu0 %11926
        %11928 = vrot.lane.b32.xlu0 %v11860, 8
        %v11929 = vpop.permute.xlu0 %11928
        %11930 = vrot.lane.b32.xlu0 %v11867, 8
        %v11931 = vpop.permute.xlu0 %11930
        %v11932 = vrot.slane %v11612, 1
        %v11933 = vrot.slane %v11613, 1
        %v11934 = vrot.slane %v11614, 1
        %v11935 = vrot.slane %v11615, 1
        %v11936 = vrot.slane %v11616, 1
        %v11937 = vrot.slane %v11617, 1
        %v11938 = vrot.slane %v11618, 1
        %v11939 = vrot.slane %v11619, 1
        %v11940 = vrot.slane %v11620, 1
        %v11941 = vrot.slane %v11621, 1
        %v11942 = vrot.slane %v11622, 1
        %v11943 = vrot.slane %v11623, 1
        %v11944 = vrot.slane %v11624, 1
        %v11945 = vrot.slane %v11625, 1
        %v11946 = vrot.slane %v11626, 1
        %v11947 = vrot.slane %v11627, 1
        %v11948 = vrot.slane %v11628, 1
        %v11949 = vrot.slane %v11629, 1
        %v11950 = vrot.slane %v11630, 1
        %v11951 = vrot.slane %v11631, 1
        %v11952 = vrot.slane %v11632, 1
        %v11953 = vrot.slane %v11633, 1
        %v11954 = vrot.slane %v11634, 1
        %v11955 = vrot.slane %v11635, 1
        %v11956 = vrot.slane %v11636, 1
        %v11957 = vrot.slane %v11637, 1
        %v11958 = vrot.slane %v11638, 1
        %v11959 = vrot.slane %v11639, 1
        %v11960 = vrot.slane %v11640, 1
        %v11961 = vrot.slane %v11641, 1
        %v11962 = vrot.slane %v11642, 1
        %v11963 = vrot.slane %v11643, 1
        %11964 = vrot.lane.b32.xlu0 %v11932, 16
        %v11965 = vpop.permute.xlu0 %11964
        %11966 = vrot.lane.b32.xlu0 %v11933, 16
        %v11967 = vpop.permute.xlu0 %11966
        %11968 = vrot.lane.b32.xlu0 %v11934, 16
        %v11969 = vpop.permute.xlu0 %11968
        %11970 = vrot.lane.b32.xlu0 %v11935, 16
        %v11971 = vpop.permute.xlu0 %11970
        %11972 = vrot.lane.b32.xlu0 %v11936, 16
        %v11973 = vpop.permute.xlu0 %11972
        %11974 = vrot.lane.b32.xlu0 %v11937, 16
        %v11975 = vpop.permute.xlu0 %11974
        %11976 = vrot.lane.b32.xlu0 %v11938, 16
        %v11977 = vpop.permute.xlu0 %11976
        %11978 = vrot.lane.b32.xlu0 %v11939, 16
        %v11979 = vpop.permute.xlu0 %11978
        %11980 = vrot.lane.b32.xlu0 %v11940, 16
        %v11981 = vpop.permute.xlu0 %11980
        %11982 = vrot.lane.b32.xlu0 %v11941, 16
        %v11983 = vpop.permute.xlu0 %11982
        %11984 = vrot.lane.b32.xlu0 %v11942, 16
        %v11985 = vpop.permute.xlu0 %11984
        %11986 = vrot.lane.b32.xlu0 %v11943, 16
        %v11987 = vpop.permute.xlu0 %11986
        %11988 = vrot.lane.b32.xlu0 %v11944, 16
        %v11989 = vpop.permute.xlu0 %11988
        %11990 = vrot.lane.b32.xlu0 %v11945, 16
        %v11991 = vpop.permute.xlu0 %11990
        %11992 = vrot.lane.b32.xlu0 %v11946, 16
        %v11993 = vpop.permute.xlu0 %11992
        %11994 = vrot.lane.b32.xlu0 %v11947, 16
        %v11995 = vpop.permute.xlu0 %11994
        %11996 = vrot.lane.b32.xlu0 %v11948, 16
        %v11997 = vpop.permute.xlu0 %11996
        %11998 = vrot.lane.b32.xlu0 %v11949, 16
        %v11999 = vpop.permute.xlu0 %11998
        %12000 = vrot.lane.b32.xlu0 %v11950, 16
        %v12001 = vpop.permute.xlu0 %12000
        %12002 = vrot.lane.b32.xlu0 %v11951, 16
        %v12003 = vpop.permute.xlu0 %12002
        %12004 = vrot.lane.b32.xlu0 %v11952, 16
        %v12005 = vpop.permute.xlu0 %12004
        %12006 = vrot.lane.b32.xlu0 %v11953, 16
        %v12007 = vpop.permute.xlu0 %12006
        %12008 = vrot.lane.b32.xlu0 %v11954, 16
        %v12009 = vpop.permute.xlu0 %12008
        %12010 = vrot.lane.b32.xlu0 %v11955, 16
        %v12011 = vpop.permute.xlu0 %12010
        %12012 = vrot.lane.b32.xlu0 %v11956, 16
        %v12013 = vpop.permute.xlu0 %12012
        %12014 = vrot.lane.b32.xlu0 %v11957, 16
        %v12015 = vpop.permute.xlu0 %12014
        %12016 = vrot.lane.b32.xlu0 %v11958, 16
        %v12017 = vpop.permute.xlu0 %12016
        %12018 = vrot.lane.b32.xlu0 %v11959, 16
        %v12019 = vpop.permute.xlu0 %12018
        %12020 = vrot.lane.b32.xlu0 %v11960, 16
        %v12021 = vpop.permute.xlu0 %12020
        %12022 = vrot.lane.b32.xlu0 %v11961, 16
        %v12023 = vpop.permute.xlu0 %12022
        %12024 = vrot.lane.b32.xlu0 %v11962, 16
        %v12025 = vpop.permute.xlu0 %12024
        %12026 = vrot.lane.b32.xlu0 %v11963, 16
        %v12027 = vpop.permute.xlu0 %12026
        %v12030 = vsel %vm3243, %v11420, %v11869
        %v12033 = vsel %vm3243, %v11422, %v11871
        %v12036 = vsel %vm3243, %v11424, %v11873
        %v12039 = vsel %vm3243, %v11426, %v11875
        %v12042 = vsel %vm3243, %v11428, %v11877
        %v12045 = vsel %vm3243, %v11430, %v11879
        %v12048 = vsel %vm3243, %v11432, %v11881
        %v12051 = vsel %vm3243, %v11434, %v11883
        %v12054 = vsel %vm3243, %v11436, %v11885
        %v12057 = vsel %vm3243, %v11438, %v11887
        %v12060 = vsel %vm3243, %v11440, %v11889
        %v12063 = vsel %vm3243, %v11442, %v11891
        %v12066 = vsel %vm3243, %v11444, %v11893
        %v12069 = vsel %vm3243, %v11446, %v11895
        %v12072 = vsel %vm3243, %v11448, %v11897
        %v12075 = vsel %vm3243, %v11450, %v11899
        %v12078 = vsel %vm3243, %v11452, %v11901
        %v12081 = vsel %vm3243, %v11454, %v11903
        %v12084 = vsel %vm3243, %v11456, %v11905
        %v12087 = vsel %vm3243, %v11458, %v11907
        %v12090 = vsel %vm3243, %v11460, %v11909
        %v12093 = vsel %vm3243, %v11462, %v11911
        %v12096 = vsel %vm3243, %v11464, %v11913
        %v12099 = vsel %vm3243, %v11466, %v11915
        %v12102 = vsel %vm3243, %v11468, %v11917
        %v12105 = vsel %vm3243, %v11470, %v11919
        %v12108 = vsel %vm3243, %v11472, %v11921
        %v12111 = vsel %vm3243, %v11474, %v11923
        %v12114 = vsel %vm3243, %v11476, %v11925
        %v12117 = vsel %vm3243, %v11478, %v11927
        %v12120 = vsel %vm3243, %v11480, %v11929
        %v12123 = vsel %vm3243, %v11482, %v11931
        %v12125 = vsel %vm1134, %v12030, %v11965
        %v12127 = vsel %vm1134, %v12033, %v11967
        %v12129 = vsel %vm1134, %v12036, %v11969
        %v12131 = vsel %vm1134, %v12039, %v11971
        %v12133 = vsel %vm1134, %v12042, %v11973
        %v12135 = vsel %vm1134, %v12045, %v11975
        %v12137 = vsel %vm1134, %v12048, %v11977
        %v12139 = vsel %vm1134, %v12051, %v11979
        %v12141 = vsel %vm1134, %v12054, %v11981
        %v12143 = vsel %vm1134, %v12057, %v11983
        %v12145 = vsel %vm1134, %v12060, %v11985
        %v12147 = vsel %vm1134, %v12063, %v11987
        %v12149 = vsel %vm1134, %v12066, %v11989
        %v12151 = vsel %vm1134, %v12069, %v11991
        %v12153 = vsel %vm1134, %v12072, %v11993
        %v12155 = vsel %vm1134, %v12075, %v11995
        %v12157 = vsel %vm1134, %v12078, %v11997
        %v12159 = vsel %vm1134, %v12081, %v11999
        %v12161 = vsel %vm1134, %v12084, %v12001
        %v12163 = vsel %vm1134, %v12087, %v12003
        %v12165 = vsel %vm1134, %v12090, %v12005
        %v12167 = vsel %vm1134, %v12093, %v12007
        %v12169 = vsel %vm1134, %v12096, %v12009
        %v12171 = vsel %vm1134, %v12099, %v12011
        %v12173 = vsel %vm1134, %v12102, %v12013
        %v12175 = vsel %vm1134, %v12105, %v12015
        %v12177 = vsel %vm1134, %v12108, %v12017
        %v12179 = vsel %vm1134, %v12111, %v12019
        %v12181 = vsel %vm1134, %v12114, %v12021
        %v12183 = vsel %vm1134, %v12117, %v12023
        %v12185 = vsel %vm1134, %v12120, %v12025
        %v12187 = vsel %vm1134, %v12123, %v12027
        %s12188 = scalar_lea.vmem %s5, 96
        %v12189 = vld [vmem:[%s12188] sm:$0xf]
        %v12190 = vld [vmem:[%s12188 + $0x4] sm:$0xf]
        %v12191 = vld [vmem:[%s12188 + $0x8] sm:$0xf]
        %v12224 = vunpack.c.l.b16 %v12125
        %v12225 = vunpack.c.l.b16 %v12127
        %v12226 = vunpack.c.l.b16 %v12129
        %v12227 = vunpack.c.l.b16 %v12131
        %v12228 = vunpack.c.l.b16 %v12133
        %v12229 = vunpack.c.l.b16 %v12135
        %v12230 = vunpack.c.l.b16 %v12137
        %v12231 = vunpack.c.l.b16 %v12139
        %v12232 = vunpack.c.l.b16 %v12141
        %v12233 = vunpack.c.l.b16 %v12143
        %v12234 = vunpack.c.l.b16 %v12145
        %v12235 = vunpack.c.l.b16 %v12147
        %v12236 = vunpack.c.l.b16 %v12149
        %v12237 = vunpack.c.l.b16 %v12151
        %v12238 = vunpack.c.l.b16 %v12153
        %v12239 = vunpack.c.l.b16 %v12155
        %v12240 = vunpack.c.l.b16 %v12157
        %v12241 = vunpack.c.l.b16 %v12159
        %v12242 = vunpack.c.l.b16 %v12161
        %v12243 = vunpack.c.l.b16 %v12163
        %v12244 = vunpack.c.l.b16 %v12165
        %v12245 = vunpack.c.l.b16 %v12167
        %v12246 = vunpack.c.l.b16 %v12169
        %v12247 = vunpack.c.l.b16 %v12171
        %v12248 = vunpack.c.l.b16 %v12173
        %v12249 = vunpack.c.l.b16 %v12175
        %v12250 = vunpack.c.l.b16 %v12177
        %v12251 = vunpack.c.l.b16 %v12179
        %v12252 = vunpack.c.l.b16 %v12181
        %v12253 = vunpack.c.l.b16 %v12183
        %v12254 = vunpack.c.l.b16 %v12185
        %v12255 = vunpack.c.l.b16 %v12187
        %v12256 = vpack.c.b16 %v12225, %v12224
        %v12257 = vpack.c.b16 %v12227, %v12226
        %v12258 = vpack.c.b16 %v12229, %v12228
        %v12259 = vpack.c.b16 %v12231, %v12230
        %v12260 = vpack.c.b16 %v12233, %v12232
        %v12261 = vpack.c.b16 %v12235, %v12234
        %v12262 = vpack.c.b16 %v12237, %v12236
        %v12263 = vpack.c.b16 %v12239, %v12238
        %v12264 = vpack.c.b16 %v12241, %v12240
        %v12265 = vpack.c.b16 %v12243, %v12242
        %v12266 = vpack.c.b16 %v12245, %v12244
        %v12267 = vpack.c.b16 %v12247, %v12246
        %v12268 = vpack.c.b16 %v12249, %v12248
        %v12269 = vpack.c.b16 %v12251, %v12250
        %v12270 = vpack.c.b16 %v12253, %v12252
        %v12271 = vpack.c.b16 %v12255, %v12254
        %v12275 = vunpack.c.l.b16 %v12189
        %v12276 = vunpack.c.l.b16 %v12190
        %v12277 = vunpack.c.l.b16 %v12191
        %v12278 = vpack.c.b16 %v12276, %v12275
        %v12279 = vpack.c.b16 %v12277, %v12277
        %v12282 = vsel %vm4269, %v12256, 0
        %v12285 = vsel %vm4269, %v12257, 0
        %v12288 = vsel %vm4269, %v12258, 0
        %v12291 = vsel %vm4269, %v12259, 0
        %v12294 = vsel %vm4269, %v12260, 0
        %v12297 = vsel %vm4269, %v12261, 0
        %v12300 = vsel %vm4269, %v12262, 0
        %v12303 = vsel %vm4269, %v12263, 0
        %v12306 = vsel %vm4269, %v12264, 0
        %v12309 = vsel %vm4269, %v12265, 0
        %v12312 = vsel %vm4269, %v12266, 0
        %v12315 = vsel %vm4269, %v12267, 0
        %v12318 = vsel %vm4269, %v12268, 0
        %v12321 = vsel %vm4269, %v12269, 0
        %v12324 = vsel %vm4269, %v12270, 0
        %v12327 = vsel %vm4269, %v12271, 0
        %v12330 = vsel %vm4318, %v12279, 0
        %12332 = vmatprep.subr.bf16.mxu0 0
        %12333 = vmatpush1.bf16.msra.mxu0 %v12278
        %12334 = vmatprep.subr.bf16.mxu0 0
        %12335 = vmatpush1.bf16.msra.mxu0 %v12330
        %12336 = vmatprep.subr.bf16.mxu0 0
        %12337 = vmatpush1.bf16.msra.mxu0 0
        %12338 = vmatprep.subr.bf16.mxu0 0
        %12339 = vmatpush1.bf16.msra.mxu0 0
        %12340 = vmatprep.subr.bf16.mxu0 0
        %12341 = vmatpush1.bf16.msra.mxu0 0
        %12342 = vmatprep.subr.bf16.mxu0 0
        %12343 = vmatpush1.bf16.msra.mxu0 0
        %12344 = vmatprep.subr.bf16.mxu0 0
        %12345 = vmatpush1.bf16.msra.mxu0 0
        %12346 = vmatprep.subr.bf16.mxu0 0
        %12347 = vmatpush1.bf16.msra.mxu0 0
        %12348 = vmatprep.subr.bf16.mxu0 0
        %12349 = vmatpush1.bf16.msra.mxu0 0
        %12350 = vmatprep.subr.bf16.mxu0 0
        %12351 = vmatpush1.bf16.msra.mxu0 0
        %12352 = vmatprep.subr.bf16.mxu0 0
        %12353 = vmatpush1.bf16.msra.mxu0 0
        %12354 = vmatprep.subr.bf16.mxu0 0
        %12355 = vmatpush1.bf16.msra.mxu0 0
        %12356 = vmatprep.subr.bf16.mxu0 0
        %12357 = vmatpush1.bf16.msra.mxu0 0
        %12358 = vmatprep.subr.bf16.mxu0 0
        %12359 = vmatpush1.bf16.msra.mxu0 0
        %12360 = vmatprep.subr.bf16.mxu0 0
        %12361 = vmatpush1.bf16.msra.mxu0 0
        %12362 = vmatprep.subr.bf16.mxu0 0
        %12363 = vmatpush1.bf16.msra.mxu0 0
        %12364 = vmatprep.mubr.bf16.mxu0 0
        %12365 = vmatmul.mubr.bf16.gmra.mrb[0].mxu0 %v12282
        %v12366 = vpop.f32.mrb[0].mxu0
        %v12367 = vadd.f32 0.0, %v12366
        %v12368 = vpop.f32.mrb[0].mxu0
        %v12369 = vpop.f32.mrb[0].mxu0
        %v12370 = vadd.f32 0.0, %v12369
        %v12371 = vpop.f32.mrb[0].mxu0
        %12372 = vmatprep.mubr.bf16.mxu0 0
        %12373 = vmatmul.mubr.bf16.gmra.mrb[0].mxu0 %v12285
        %v12374 = vpop.f32.mrb[0].mxu0
        %v12375 = vadd.f32 0.0, %v12374
        %v12376 = vpop.f32.mrb[0].mxu0
        %v12377 = vpop.f32.mrb[0].mxu0
        %v12378 = vadd.f32 0.0, %v12377
        %v12379 = vpop.f32.mrb[0].mxu0
        %12380 = vmatprep.mubr.bf16.mxu0 0
        %12381 = vmatmul.mubr.bf16.gmra.mrb[0].mxu0 %v12288
        %v12382 = vpop.f32.mrb[0].mxu0
        %v12383 = vadd.f32 0.0, %v12382
        %v12384 = vpop.f32.mrb[0].mxu0
        %v12385 = vpop.f32.mrb[0].mxu0
        %v12386 = vadd.f32 0.0, %v12385
        %v12387 = vpop.f32.mrb[0].mxu0
        %12388 = vmatprep.mubr.bf16.mxu0 0
        %12389 = vmatmul.mubr.bf16.gmra.mrb[0].mxu0 %v12291
        %v12390 = vpop.f32.mrb[0].mxu0
        %v12391 = vadd.f32 0.0, %v12390
        %v12392 = vpop.f32.mrb[0].mxu0
        %v12393 = vpop.f32.mrb[0].mxu0
        %v12394 = vadd.f32 0.0, %v12393
        %v12395 = vpop.f32.mrb[0].mxu0
        %12396 = vmatprep.mubr.bf16.mxu0 0
        %12397 = vmatmul.mubr.bf16.gmra.mrb[0].mxu0 %v12294
        %v12398 = vpop.f32.mrb[0].mxu0
        %v12399 = vadd.f32 0.0, %v12398
        %v12400 = vpop.f32.mrb[0].mxu0
        %v12401 = vpop.f32.mrb[0].mxu0
        %v12402 = vadd.f32 0.0, %v12401
        %v12403 = vpop.f32.mrb[0].mxu0
        %12404 = vmatprep.mubr.bf16.mxu0 0
        %12405 = vmatmul.mubr.bf16.gmra.mrb[0].mxu0 %v12297
        %v12406 = vpop.f32.mrb[0].mxu0
        %v12407 = vadd.f32 0.0, %v12406
        %v12408 = vpop.f32.mrb[0].mxu0
        %v12409 = vpop.f32.mrb[0].mxu0
        %v12410 = vadd.f32 0.0, %v12409
        %v12411 = vpop.f32.mrb[0].mxu0
        %12412 = vmatprep.mubr.bf16.mxu0 0
        %12413 = vmatmul.mubr.bf16.gmra.mrb[0].mxu0 %v12300
        %v12414 = vpop.f32.mrb[0].mxu0
        %v12415 = vadd.f32 0.0, %v12414
        %v12416 = vpop.f32.mrb[0].mxu0
        %v12417 = vpop.f32.mrb[0].mxu0
        %v12418 = vadd.f32 0.0, %v12417
        %v12419 = vpop.f32.mrb[0].mxu0
        %12420 = vmatprep.mubr.bf16.mxu0 0
        %12421 = vmatmul.mubr.bf16.gmra.mrb[0].mxu0 %v12303
        %v12422 = vpop.f32.mrb[0].mxu0
        %v12423 = vadd.f32 0.0, %v12422
        %v12424 = vpop.f32.mrb[0].mxu0
        %v12425 = vpop.f32.mrb[0].mxu0
        %v12426 = vadd.f32 0.0, %v12425
        %v12427 = vpop.f32.mrb[0].mxu0
        %12428 = vmatprep.mubr.bf16.mxu0 0
        %12429 = vmatmul.mubr.bf16.gmra.mrb[0].mxu0 %v12306
        %v12430 = vpop.f32.mrb[0].mxu0
        %v12431 = vadd.f32 0.0, %v12430
        %v12432 = vpop.f32.mrb[0].mxu0
        %v12433 = vpop.f32.mrb[0].mxu0
        %v12434 = vadd.f32 0.0, %v12433
        %v12435 = vpop.f32.mrb[0].mxu0
        %12436 = vmatprep.mubr.bf16.mxu0 0
        %12437 = vmatmul.mubr.bf16.gmra.mrb[0].mxu0 %v12309
        %v12438 = vpop.f32.mrb[0].mxu0
        %v12439 = vadd.f32 0.0, %v12438
        %v12440 = vpop.f32.mrb[0].mxu0
        %v12441 = vpop.f32.mrb[0].mxu0
        %v12442 = vadd.f32 0.0, %v12441
        %v12443 = vpop.f32.mrb[0].mxu0
        %12444 = vmatprep.mubr.bf16.mxu0 0
        %12445 = vmatmul.mubr.bf16.gmra.mrb[0].mxu0 %v12312
        %v12446 = vpop.f32.mrb[0].mxu0
        %v12447 = vadd.f32 0.0, %v12446
        %v12448 = vpop.f32.mrb[0].mxu0
        %v12449 = vpop.f32.mrb[0].mxu0
        %v12450 = vadd.f32 0.0, %v12449
        %v12451 = vpop.f32.mrb[0].mxu0
        %12452 = vmatprep.mubr.bf16.mxu0 0
        %12453 = vmatmul.mubr.bf16.gmra.mrb[0].mxu0 %v12315
        %v12454 = vpop.f32.mrb[0].mxu0
        %v12455 = vadd.f32 0.0, %v12454
        %v12456 = vpop.f32.mrb[0].mxu0
        %v12457 = vpop.f32.mrb[0].mxu0
        %v12458 = vadd.f32 0.0, %v12457
        %v12459 = vpop.f32.mrb[0].mxu0
        %12460 = vmatprep.mubr.bf16.mxu0 0
        %12461 = vmatmul.mubr.bf16.gmra.mrb[0].mxu0 %v12318
        %v12462 = vpop.f32.mrb[0].mxu0
        %v12463 = vadd.f32 0.0, %v12462
        %v12464 = vpop.f32.mrb[0].mxu0
        %v12465 = vpop.f32.mrb[0].mxu0
        %v12466 = vadd.f32 0.0, %v12465
        %v12467 = vpop.f32.mrb[0].mxu0
        %12468 = vmatprep.mubr.bf16.mxu0 0
        %12469 = vmatmul.mubr.bf16.gmra.mrb[0].mxu0 %v12321
        %v12470 = vpop.f32.mrb[0].mxu0
        %v12471 = vadd.f32 0.0, %v12470
        %v12472 = vpop.f32.mrb[0].mxu0
        %v12473 = vpop.f32.mrb[0].mxu0
        %v12474 = vadd.f32 0.0, %v12473
        %v12475 = vpop.f32.mrb[0].mxu0
        %12476 = vmatprep.mubr.bf16.mxu0 0
        %12477 = vmatmul.mubr.bf16.gmra.mrb[0].mxu0 %v12324
        %v12478 = vpop.f32.mrb[0].mxu0
        %v12479 = vadd.f32 0.0, %v12478
        %v12480 = vpop.f32.mrb[0].mxu0
        %v12481 = vpop.f32.mrb[0].mxu0
        %v12482 = vadd.f32 0.0, %v12481
        %v12483 = vpop.f32.mrb[0].mxu0
        %12484 = vmatprep.mubr.bf16.mxu0 0
        %12485 = vmatmul.mubr.bf16.gmra.mrb[0].mxu0 %v12327
        %v12486 = vpop.f32.mrb[0].mxu0
        %v12487 = vadd.f32 0.0, %v12486
        %v12488 = vpop.f32.mrb[0].mxu0
        %v12489 = vpop.f32.mrb[0].mxu0
        %v12490 = vadd.f32 0.0, %v12489
        %v12491 = vpop.f32.mrb[0].mxu0
        %12492 = vdwg.mxu0
        %v12493 = vadd.f32 %v11387, %v12367
        %v12494 = vadd.f32 %v11388, %v12370
        %v12495 = vadd.f32 %v11389, %v12375
        %v12496 = vadd.f32 %v11390, %v12378
        %v12497 = vadd.f32 %v11391, %v12383
        %v12498 = vadd.f32 %v11392, %v12386
        %v12499 = vadd.f32 %v11393, %v12391
        %v12500 = vadd.f32 %v11394, %v12394
        %v12501 = vadd.f32 %v11395, %v12399
        %v12502 = vadd.f32 %v11396, %v12402
        %v12503 = vadd.f32 %v11397, %v12407
        %v12504 = vadd.f32 %v11398, %v12410
        %v12505 = vadd.f32 %v11399, %v12415
        %v12506 = vadd.f32 %v11400, %v12418
        %v12507 = vadd.f32 %v11401, %v12423
        %v12508 = vadd.f32 %v11402, %v12426
        %v12509 = vadd.f32 %v11403, %v12431
        %v12510 = vadd.f32 %v11404, %v12434
        %v12511 = vadd.f32 %v11405, %v12439
        %v12512 = vadd.f32 %v11406, %v12442
        %v12513 = vadd.f32 %v11407, %v12447
        %v12514 = vadd.f32 %v11408, %v12450
        %v12515 = vadd.f32 %v11409, %v12455
        %v12516 = vadd.f32 %v11410, %v12458
        %v12517 = vadd.f32 %v11411, %v12463
        %v12518 = vadd.f32 %v11412, %v12466
        %v12519 = vadd.f32 %v11413, %v12471
        %v12520 = vadd.f32 %v11414, %v12474
        %v12521 = vadd.f32 %v11415, %v12479
        %v12522 = vadd.f32 %v11416, %v12482
        %v12523 = vadd.f32 %v11417, %v12487
        %v12524 = vadd.f32 %v11418, %v12490
        %v12526 = vlaneseq
        %v12527 = vshrl.u32 %v12526, 7
        %v12528 = vsub.s32 0, %v12527
        %v12529 = vrot.slane %v577, %v12528
        %v12531 = vmul.f32 %v12493, %v12529
        %v12532 = vmul.f32 %v12494, %v12529
        %v12533 = vmul.f32 %v12495, %v12529
        %v12534 = vmul.f32 %v12496, %v12529
        %v12535 = vmul.f32 %v12497, %v12529
        %v12536 = vmul.f32 %v12498, %v12529
        %v12537 = vmul.f32 %v12499, %v12529
        %v12538 = vmul.f32 %v12500, %v12529
        %v12539 = vmul.f32 %v12501, %v12529
        %v12540 = vmul.f32 %v12502, %v12529
        %v12541 = vmul.f32 %v12503, %v12529
        %v12542 = vmul.f32 %v12504, %v12529
        %v12543 = vmul.f32 %v12505, %v12529
        %v12544 = vmul.f32 %v12506, %v12529
        %v12545 = vmul.f32 %v12507, %v12529
        %v12546 = vmul.f32 %v12508, %v12529
        %v12547 = vmul.f32 %v12509, %v12529
        %v12548 = vmul.f32 %v12510, %v12529
        %v12549 = vmul.f32 %v12511, %v12529
        %v12550 = vmul.f32 %v12512, %v12529
        %v12551 = vmul.f32 %v12513, %v12529
        %v12552 = vmul.f32 %v12514, %v12529
        %v12553 = vmul.f32 %v12515, %v12529
        %v12554 = vmul.f32 %v12516, %v12529
        %v12555 = vmul.f32 %v12517, %v12529
        %v12556 = vmul.f32 %v12518, %v12529
        %v12557 = vmul.f32 %v12519, %v12529
        %v12558 = vmul.f32 %v12520, %v12529
        %v12559 = vmul.f32 %v12521, %v12529
        %v12560 = vmul.f32 %v12522, %v12529
        %v12561 = vmul.f32 %v12523, %v12529
        %v12562 = vmul.f32 %v12524, %v12529
        %v12564 = vlaneseq
        %v12565 = vshrl.u32 %v12564, 7
        %v12566 = vsub.s32 0, %v12565
        %v12567 = vrot.slane %v578, %v12566
        %v12569 = vadd.f32 %v12531, %v12567
        %v12570 = vadd.f32 %v12532, %v12567
        %v12571 = vadd.f32 %v12533, %v12567
        %v12572 = vadd.f32 %v12534, %v12567
        %v12573 = vadd.f32 %v12535, %v12567
        %v12574 = vadd.f32 %v12536, %v12567
        %v12575 = vadd.f32 %v12537, %v12567
        %v12576 = vadd.f32 %v12538, %v12567
        %v12577 = vadd.f32 %v12539, %v12567
        %v12578 = vadd.f32 %v12540, %v12567
        %v12579 = vadd.f32 %v12541, %v12567
        %v12580 = vadd.f32 %v12542, %v12567
        %v12581 = vadd.f32 %v12543, %v12567
        %v12582 = vadd.f32 %v12544, %v12567
        %v12583 = vadd.f32 %v12545, %v12567
        %v12584 = vadd.f32 %v12546, %v12567
        %v12585 = vadd.f32 %v12547, %v12567
        %v12586 = vadd.f32 %v12548, %v12567
        %v12587 = vadd.f32 %v12549, %v12567
        %v12588 = vadd.f32 %v12550, %v12567
        %v12589 = vadd.f32 %v12551, %v12567
        %v12590 = vadd.f32 %v12552, %v12567
        %v12591 = vadd.f32 %v12553, %v12567
        %v12592 = vadd.f32 %v12554, %v12567
        %v12593 = vadd.f32 %v12555, %v12567
        %v12594 = vadd.f32 %v12556, %v12567
        %v12595 = vadd.f32 %v12557, %v12567
        %v12596 = vadd.f32 %v12558, %v12567
        %v12597 = vadd.f32 %v12559, %v12567
        %v12598 = vadd.f32 %v12560, %v12567
        %v12599 = vadd.f32 %v12561, %v12567
        %v12600 = vadd.f32 %v12562, %v12567
        %v12601 = vld [vmem:[%s4] sm:$0xf]
        %v12603 = vsel %vm3243, %v1452, 0
        %v12606 = vsel %vm3243, %v1453, 0
        %v12609 = vsel %vm3243, %v1454, 0
        %v12612 = vsel %vm3243, %v1455, 0
        %v12615 = vsel %vm3243, %v1456, 0
        %v12618 = vsel %vm3243, %v1457, 0
        %v12621 = vsel %vm3243, %v1458, 0
        %v12624 = vsel %vm3243, %v1459, 0
        %v12627 = vsel %vm3243, %v1460, 0
        %v12630 = vsel %vm3243, %v1461, 0
        %v12633 = vsel %vm3243, %v1462, 0
        %v12636 = vsel %vm3243, %v1463, 0
        %v12639 = vsel %vm3243, %v1464, 0
        %v12642 = vsel %vm3243, %v1465, 0
        %v12645 = vsel %vm3243, %v1466, 0
        %v12648 = vsel %vm3243, %v1467, 0
        %v12651 = vsel %vm4318, %v12601, 0
        %12653 = vmatprep.subr.bf16.mxu0 0
        %12654 = vmatpush1.bf16.msra.mxu0 %v12651
        %12655 = vmatprep.subr.bf16.mxu0 0
        %12656 = vmatpush1.bf16.msra.mxu0 0
        %12657 = vmatprep.subr.bf16.mxu0 0
        %12658 = vmatpush1.bf16.msra.mxu0 0
        %12659 = vmatprep.subr.bf16.mxu0 0
        %12660 = vmatpush1.bf16.msra.mxu0 0
        %12661 = vmatprep.subr.bf16.mxu0 0
        %12662 = vmatpush1.bf16.msra.mxu0 0
        %12663 = vmatprep.subr.bf16.mxu0 0
        %12664 = vmatpush1.bf16.msra.mxu0 0
        %12665 = vmatprep.subr.bf16.mxu0 0
        %12666 = vmatpush1.bf16.msra.mxu0 0
        %12667 = vmatprep.subr.bf16.mxu0 0
        %12668 = vmatpush1.bf16.msra.mxu0 0
        %12669 = vmatprep.subr.bf16.mxu0 0
        %12670 = vmatpush1.bf16.msra.mxu0 0
        %12671 = vmatprep.subr.bf16.mxu0 0
        %12672 = vmatpush1.bf16.msra.mxu0 0
        %12673 = vmatprep.subr.bf16.mxu0 0
        %12674 = vmatpush1.bf16.msra.mxu0 0
        %12675 = vmatprep.subr.bf16.mxu0 0
        %12676 = vmatpush1.bf16.msra.mxu0 0
        %12677 = vmatprep.subr.bf16.mxu0 0
        %12678 = vmatpush1.bf16.msra.mxu0 0
        %12679 = vmatprep.subr.bf16.mxu0 0
        %12680 = vmatpush1.bf16.msra.mxu0 0
        %12681 = vmatprep.subr.bf16.mxu0 0
        %12682 = vmatpush1.bf16.msra.mxu0 0
        %12683 = vmatprep.subr.bf16.mxu0 0
        %12684 = vmatpush1.bf16.msra.mxu0 0
        %12685 = vmatprep.mubr.bf16.mxu0 0
        %12686 = vmatmul.mubr.bf16.gmra.mrb[0].mxu0 %v12603
        %v12687 = vpop.f32.mrb[0].mxu0
        %v12688 = vadd.f32 0.0, %v12687
        %v12689 = vpop.f32.mrb[0].mxu0
        %v12690 = vpop.f32.mrb[0].mxu0
        %v12691 = vadd.f32 0.0, %v12690
        %v12692 = vpop.f32.mrb[0].mxu0
        %12693 = vmatprep.mubr.bf16.mxu0 0
        %12694 = vmatmul.mubr.bf16.gmra.mrb[0].mxu0 %v12606
        %v12695 = vpop.f32.mrb[0].mxu0
        %v12696 = vadd.f32 0.0, %v12695
        %v12697 = vpop.f32.mrb[0].mxu0
        %v12698 = vpop.f32.mrb[0].mxu0
        %v12699 = vadd.f32 0.0, %v12698
        %v12700 = vpop.f32.mrb[0].mxu0
        %12701 = vmatprep.mubr.bf16.mxu0 0
        %12702 = vmatmul.mubr.bf16.gmra.mrb[0].mxu0 %v12609
        %v12703 = vpop.f32.mrb[0].mxu0
        %v12704 = vadd.f32 0.0, %v12703
        %v12705 = vpop.f32.mrb[0].mxu0
        %v12706 = vpop.f32.mrb[0].mxu0
        %v12707 = vadd.f32 0.0, %v12706
        %v12708 = vpop.f32.mrb[0].mxu0
        %12709 = vmatprep.mubr.bf16.mxu0 0
        %12710 = vmatmul.mubr.bf16.gmra.mrb[0].mxu0 %v12612
        %v12711 = vpop.f32.mrb[0].mxu0
        %v12712 = vadd.f32 0.0, %v12711
        %v12713 = vpop.f32.mrb[0].mxu0
        %v12714 = vpop.f32.mrb[0].mxu0
        %v12715 = vadd.f32 0.0, %v12714
        %v12716 = vpop.f32.mrb[0].mxu0
        %12717 = vmatprep.mubr.bf16.mxu0 0
        %12718 = vmatmul.mubr.bf16.gmra.mrb[0].mxu0 %v12615
        %v12719 = vpop.f32.mrb[0].mxu0
        %v12720 = vadd.f32 0.0, %v12719
        %v12721 = vpop.f32.mrb[0].mxu0
        %v12722 = vpop.f32.mrb[0].mxu0
        %v12723 = vadd.f32 0.0, %v12722
        %v12724 = vpop.f32.mrb[0].mxu0
        %12725 = vmatprep.mubr.bf16.mxu0 0
        %12726 = vmatmul.mubr.bf16.gmra.mrb[0].mxu0 %v12618
        %v12727 = vpop.f32.mrb[0].mxu0
        %v12728 = vadd.f32 0.0, %v12727
        %v12729 = vpop.f32.mrb[0].mxu0
        %v12730 = vpop.f32.mrb[0].mxu0
        %v12731 = vadd.f32 0.0, %v12730
        %v12732 = vpop.f32.mrb[0].mxu0
        %12733 = vmatprep.mubr.bf16.mxu0 0
        %12734 = vmatmul.mubr.bf16.gmra.mrb[0].mxu0 %v12621
        %v12735 = vpop.f32.mrb[0].mxu0
        %v12736 = vadd.f32 0.0, %v12735
        %v12737 = vpop.f32.mrb[0].mxu0
        %v12738 = vpop.f32.mrb[0].mxu0
        %v12739 = vadd.f32 0.0, %v12738
        %v12740 = vpop.f32.mrb[0].mxu0
        %12741 = vmatprep.mubr.bf16.mxu0 0
        %12742 = vmatmul.mubr.bf16.gmra.mrb[0].mxu0 %v12624
        %v12743 = vpop.f32.mrb[0].mxu0
        %v12744 = vadd.f32 0.0, %v12743
        %v12745 = vpop.f32.mrb[0].mxu0
        %v12746 = vpop.f32.mrb[0].mxu0
        %v12747 = vadd.f32 0.0, %v12746
        %v12748 = vpop.f32.mrb[0].mxu0
        %12749 = vmatprep.mubr.bf16.mxu0 0
        %12750 = vmatmul.mubr.bf16.gmra.mrb[0].mxu0 %v12627
        %v12751 = vpop.f32.mrb[0].mxu0
        %v12752 = vadd.f32 0.0, %v12751
        %v12753 = vpop.f32.mrb[0].mxu0
        %v12754 = vpop.f32.mrb[0].mxu0
        %v12755 = vadd.f32 0.0, %v12754
        %v12756 = vpop.f32.mrb[0].mxu0
        %12757 = vmatprep.mubr.bf16.mxu0 0
        %12758 = vmatmul.mubr.bf16.gmra.mrb[0].mxu0 %v12630
        %v12759 = vpop.f32.mrb[0].mxu0
        %v12760 = vadd.f32 0.0, %v12759
        %v12761 = vpop.f32.mrb[0].mxu0
        %v12762 = vpop.f32.mrb[0].mxu0
        %v12763 = vadd.f32 0.0, %v12762
        %v12764 = vpop.f32.mrb[0].mxu0
        %12765 = vmatprep.mubr.bf16.mxu0 0
        %12766 = vmatmul.mubr.bf16.gmra.mrb[0].mxu0 %v12633
        %v12767 = vpop.f32.mrb[0].mxu0
        %v12768 = vadd.f32 0.0, %v12767
        %v12769 = vpop.f32.mrb[0].mxu0
        %v12770 = vpop.f32.mrb[0].mxu0
        %v12771 = vadd.f32 0.0, %v12770
        %v12772 = vpop.f32.mrb[0].mxu0
        %12773 = vmatprep.mubr.bf16.mxu0 0
        %12774 = vmatmul.mubr.bf16.gmra.mrb[0].mxu0 %v12636
        %v12775 = vpop.f32.mrb[0].mxu0
        %v12776 = vadd.f32 0.0, %v12775
        %v12777 = vpop.f32.mrb[0].mxu0
        %v12778 = vpop.f32.mrb[0].mxu0
        %v12779 = vadd.f32 0.0, %v12778
        %v12780 = vpop.f32.mrb[0].mxu0
        %12781 = vmatprep.mubr.bf16.mxu0 0
        %12782 = vmatmul.mubr.bf16.gmra.mrb[0].mxu0 %v12639
        %v12783 = vpop.f32.mrb[0].mxu0
        %v12784 = vadd.f32 0.0, %v12783
        %v12785 = vpop.f32.mrb[0].mxu0
        %v12786 = vpop.f32.mrb[0].mxu0
        %v12787 = vadd.f32 0.0, %v12786
        %v12788 = vpop.f32.mrb[0].mxu0
        %12789 = vmatprep.mubr.bf16.mxu0 0
        %12790 = vmatmul.mubr.bf16.gmra.mrb[0].mxu0 %v12642
        %v12791 = vpop.f32.mrb[0].mxu0
        %v12792 = vadd.f32 0.0, %v12791
        %v12793 = vpop.f32.mrb[0].mxu0
        %v12794 = vpop.f32.mrb[0].mxu0
        %v12795 = vadd.f32 0.0, %v12794
        %v12796 = vpop.f32.mrb[0].mxu0
        %12797 = vmatprep.mubr.bf16.mxu0 0
        %12798 = vmatmul.mubr.bf16.gmra.mrb[0].mxu0 %v12645
        %v12799 = vpop.f32.mrb[0].mxu0
        %v12800 = vadd.f32 0.0, %v12799
        %v12801 = vpop.f32.mrb[0].mxu0
        %v12802 = vpop.f32.mrb[0].mxu0
        %v12803 = vadd.f32 0.0, %v12802
        %v12804 = vpop.f32.mrb[0].mxu0
        %12805 = vmatprep.mubr.bf16.mxu0 0
        %12806 = vmatmul.mubr.bf16.gmra.mrb[0].mxu0 %v12648
        %v12807 = vpop.f32.mrb[0].mxu0
        %v12808 = vadd.f32 0.0, %v12807
        %v12809 = vpop.f32.mrb[0].mxu0
        %v12810 = vpop.f32.mrb[0].mxu0
        %v12811 = vadd.f32 0.0, %v12810
        %v12812 = vpop.f32.mrb[0].mxu0
        %12813 = vdwg.mxu0
        %v12815 = vlaneseq
        %v12816 = vshrl.u32 %v12815, 7
        %v12817 = vsub.s32 0, %v12816
        %v12818 = vrot.slane %v575, %v12817
        %v12820 = vmul.f32 %v12688, %v12818
        %v12821 = vmul.f32 %v12691, %v12818
        %v12822 = vmul.f32 %v12696, %v12818
        %v12823 = vmul.f32 %v12699, %v12818
        %v12824 = vmul.f32 %v12704, %v12818
        %v12825 = vmul.f32 %v12707, %v12818
        %v12826 = vmul.f32 %v12712, %v12818
        %v12827 = vmul.f32 %v12715, %v12818
        %v12828 = vmul.f32 %v12720, %v12818
        %v12829 = vmul.f32 %v12723, %v12818
        %v12830 = vmul.f32 %v12728, %v12818
        %v12831 = vmul.f32 %v12731, %v12818
        %v12832 = vmul.f32 %v12736, %v12818
        %v12833 = vmul.f32 %v12739, %v12818
        %v12834 = vmul.f32 %v12744, %v12818
        %v12835 = vmul.f32 %v12747, %v12818
        %v12836 = vmul.f32 %v12752, %v12818
        %v12837 = vmul.f32 %v12755, %v12818
        %v12838 = vmul.f32 %v12760, %v12818
        %v12839 = vmul.f32 %v12763, %v12818
        %v12840 = vmul.f32 %v12768, %v12818
        %v12841 = vmul.f32 %v12771, %v12818
        %v12842 = vmul.f32 %v12776, %v12818
        %v12843 = vmul.f32 %v12779, %v12818
        %v12844 = vmul.f32 %v12784, %v12818
        %v12845 = vmul.f32 %v12787, %v12818
        %v12846 = vmul.f32 %v12792, %v12818
        %v12847 = vmul.f32 %v12795, %v12818
        %v12848 = vmul.f32 %v12800, %v12818
        %v12849 = vmul.f32 %v12803, %v12818
        %v12850 = vmul.f32 %v12808, %v12818
        %v12851 = vmul.f32 %v12811, %v12818
        %v12853 = vlaneseq
        %v12854 = vshrl.u32 %v12853, 7
        %v12855 = vsub.s32 0, %v12854
        %v12856 = vrot.slane %v576, %v12855
        %v12858 = vadd.f32 %v12820, %v12856
        %v12859 = vadd.f32 %v12821, %v12856
        %v12860 = vadd.f32 %v12822, %v12856
        %v12861 = vadd.f32 %v12823, %v12856
        %v12862 = vadd.f32 %v12824, %v12856
        %v12863 = vadd.f32 %v12825, %v12856
        %v12864 = vadd.f32 %v12826, %v12856
        %v12865 = vadd.f32 %v12827, %v12856
        %v12866 = vadd.f32 %v12828, %v12856
        %v12867 = vadd.f32 %v12829, %v12856
        %v12868 = vadd.f32 %v12830, %v12856
        %v12869 = vadd.f32 %v12831, %v12856
        %v12870 = vadd.f32 %v12832, %v12856
        %v12871 = vadd.f32 %v12833, %v12856
        %v12872 = vadd.f32 %v12834, %v12856
        %v12873 = vadd.f32 %v12835, %v12856
        %v12874 = vadd.f32 %v12836, %v12856
        %v12875 = vadd.f32 %v12837, %v12856
        %v12876 = vadd.f32 %v12838, %v12856
        %v12877 = vadd.f32 %v12839, %v12856
        %v12878 = vadd.f32 %v12840, %v12856
        %v12879 = vadd.f32 %v12841, %v12856
        %v12880 = vadd.f32 %v12842, %v12856
        %v12881 = vadd.f32 %v12843, %v12856
        %v12882 = vadd.f32 %v12844, %v12856
        %v12883 = vadd.f32 %v12845, %v12856
        %v12884 = vadd.f32 %v12846, %v12856
        %v12885 = vadd.f32 %v12847, %v12856
        %v12886 = vadd.f32 %v12848, %v12856
        %v12887 = vadd.f32 %v12849, %v12856
        %v12888 = vadd.f32 %v12850, %v12856
        %v12889 = vadd.f32 %v12851, %v12856
        %v12890 = vunpack.c.l.bf16 %v1016
        %v12891 = vunpack.c.l.bf16 %v1017
        %v12892 = vunpack.c.l.bf16 %v1018
        %v12893 = vunpack.c.l.bf16 %v1019
        %v12894 = vunpack.c.l.bf16 %v1020
        %v12895 = vunpack.c.l.bf16 %v1021
        %v12896 = vunpack.c.l.bf16 %v1022
        %v12897 = vunpack.c.l.bf16 %v1023
        %v12898 = vunpack.c.l.bf16 %v1024
        %v12899 = vunpack.c.l.bf16 %v1025
        %v12900 = vunpack.c.l.bf16 %v1026
        %v12901 = vunpack.c.l.bf16 %v1027
        %v12902 = vunpack.c.l.bf16 %v1028
        %v12903 = vunpack.c.l.bf16 %v1029
        %v12904 = vunpack.c.l.bf16 %v1030
        %v12905 = vunpack.c.l.bf16 %v1031
        %v12906 = vunpack.c.l.bf16 %v1032
        %v12907 = vunpack.c.l.bf16 %v1033
        %v12908 = vunpack.c.l.bf16 %v1034
        %v12909 = vunpack.c.l.bf16 %v1035
        %v12910 = vunpack.c.l.bf16 %v1036
        %v12911 = vunpack.c.l.bf16 %v1037
        %v12912 = vunpack.c.l.bf16 %v1038
        %v12913 = vunpack.c.l.bf16 %v1039
        %v12914 = vunpack.c.l.bf16 %v1040
        %v12915 = vunpack.c.l.bf16 %v1041
        %v12916 = vunpack.c.l.bf16 %v1042
        %v12917 = vunpack.c.l.bf16 %v1043
        %v12918 = vunpack.c.l.bf16 %v1044
        %v12919 = vunpack.c.l.bf16 %v1045
        %v12920 = vunpack.c.l.bf16 %v1046
        %v12921 = vunpack.c.l.bf16 %v1047
        %v12922 = vadd.f32 %v12858, %v12890
        %v12923 = vadd.f32 %v12859, %v12891
        %v12924 = vadd.f32 %v12860, %v12892
        %v12925 = vadd.f32 %v12861, %v12893
        %v12926 = vadd.f32 %v12862, %v12894
        %v12927 = vadd.f32 %v12863, %v12895
        %v12928 = vadd.f32 %v12864, %v12896
        %v12929 = vadd.f32 %v12865, %v12897
        %v12930 = vadd.f32 %v12866, %v12898
        %v12931 = vadd.f32 %v12867, %v12899
        %v12932 = vadd.f32 %v12868, %v12900
        %v12933 = vadd.f32 %v12869, %v12901
        %v12934 = vadd.f32 %v12870, %v12902
        %v12935 = vadd.f32 %v12871, %v12903
        %v12936 = vadd.f32 %v12872, %v12904
        %v12937 = vadd.f32 %v12873, %v12905
        %v12938 = vadd.f32 %v12874, %v12906
        %v12939 = vadd.f32 %v12875, %v12907
        %v12940 = vadd.f32 %v12876, %v12908
        %v12941 = vadd.f32 %v12877, %v12909
        %v12942 = vadd.f32 %v12878, %v12910
        %v12943 = vadd.f32 %v12879, %v12911
        %v12944 = vadd.f32 %v12880, %v12912
        %v12945 = vadd.f32 %v12881, %v12913
        %v12946 = vadd.f32 %v12882, %v12914
        %v12947 = vadd.f32 %v12883, %v12915
        %v12948 = vadd.f32 %v12884, %v12916
        %v12949 = vadd.f32 %v12885, %v12917
        %v12950 = vadd.f32 %v12886, %v12918
        %v12951 = vadd.f32 %v12887, %v12919
        %v12952 = vadd.f32 %v12888, %v12920
        %v12953 = vadd.f32 %v12889, %v12921
        %12986 = vrot.lane.b32.xlu0 %v12890, 120
        %v12987 = vpop.permute.xlu0 %12986
        %12988 = vrot.lane.b32.xlu0 %v12891, 120
        %v12989 = vpop.permute.xlu0 %12988
        %12990 = vrot.lane.b32.xlu0 %v12892, 120
        %v12991 = vpop.permute.xlu0 %12990
        %12992 = vrot.lane.b32.xlu0 %v12893, 120
        %v12993 = vpop.permute.xlu0 %12992
        %12994 = vrot.lane.b32.xlu0 %v12894, 120
        %v12995 = vpop.permute.xlu0 %12994
        %12996 = vrot.lane.b32.xlu0 %v12895, 120
        %v12997 = vpop.permute.xlu0 %12996
        %12998 = vrot.lane.b32.xlu0 %v12896, 120
        %v12999 = vpop.permute.xlu0 %12998
        %13000 = vrot.lane.b32.xlu0 %v12897, 120
        %v13001 = vpop.permute.xlu0 %13000
        %13002 = vrot.lane.b32.xlu0 %v12898, 120
        %v13003 = vpop.permute.xlu0 %13002
        %13004 = vrot.lane.b32.xlu0 %v12899, 120
        %v13005 = vpop.permute.xlu0 %13004
        %13006 = vrot.lane.b32.xlu0 %v12900, 120
        %v13007 = vpop.permute.xlu0 %13006
        %13008 = vrot.lane.b32.xlu0 %v12901, 120
        %v13009 = vpop.permute.xlu0 %13008
        %13010 = vrot.lane.b32.xlu0 %v12902, 120
        %v13011 = vpop.permute.xlu0 %13010
        %13012 = vrot.lane.b32.xlu0 %v12903, 120
        %v13013 = vpop.permute.xlu0 %13012
        %13014 = vrot.lane.b32.xlu0 %v12904, 120
        %v13015 = vpop.permute.xlu0 %13014
        %13016 = vrot.lane.b32.xlu0 %v12905, 120
        %v13017 = vpop.permute.xlu0 %13016
        %13018 = vrot.lane.b32.xlu0 %v12906, 120
        %v13019 = vpop.permute.xlu0 %13018
        %13020 = vrot.lane.b32.xlu0 %v12907, 120
        %v13021 = vpop.permute.xlu0 %13020
        %13022 = vrot.lane.b32.xlu0 %v12908, 120
        %v13023 = vpop.permute.xlu0 %13022
        %13024 = vrot.lane.b32.xlu0 %v12909, 120
        %v13025 = vpop.permute.xlu0 %13024
        %13026 = vrot.lane.b32.xlu0 %v12910, 120
        %v13027 = vpop.permute.xlu0 %13026
        %13028 = vrot.lane.b32.xlu0 %v12911, 120
        %v13029 = vpop.permute.xlu0 %13028
        %13030 = vrot.lane.b32.xlu0 %v12912, 120
        %v13031 = vpop.permute.xlu0 %13030
        %13032 = vrot.lane.b32.xlu0 %v12913, 120
        %v13033 = vpop.permute.xlu0 %13032
        %13034 = vrot.lane.b32.xlu0 %v12914, 120
        %v13035 = vpop.permute.xlu0 %13034
        %13036 = vrot.lane.b32.xlu0 %v12915, 120
        %v13037 = vpop.permute.xlu0 %13036
        %13038 = vrot.lane.b32.xlu0 %v12916, 120
        %v13039 = vpop.permute.xlu0 %13038
        %13040 = vrot.lane.b32.xlu0 %v12917, 120
        %v13041 = vpop.permute.xlu0 %13040
        %13042 = vrot.lane.b32.xlu0 %v12918, 120
        %v13043 = vpop.permute.xlu0 %13042
        %13044 = vrot.lane.b32.xlu0 %v12919, 120
        %v13045 = vpop.permute.xlu0 %13044
        %13046 = vrot.lane.b32.xlu0 %v12920, 120
        %v13047 = vpop.permute.xlu0 %13046
        %13048 = vrot.lane.b32.xlu0 %v12921, 120
        %v13049 = vpop.permute.xlu0 %13048
        %v13082 = vadd.f32 %v12569, %v12987
        %v13083 = vadd.f32 %v12570, %v12989
        %v13084 = vadd.f32 %v12571, %v12991
        %v13085 = vadd.f32 %v12572, %v12993
        %v13086 = vadd.f32 %v12573, %v12995
        %v13087 = vadd.f32 %v12574, %v12997
        %v13088 = vadd.f32 %v12575, %v12999
        %v13089 = vadd.f32 %v12576, %v13001
        %v13090 = vadd.f32 %v12577, %v13003
        %v13091 = vadd.f32 %v12578, %v13005
        %v13092 = vadd.f32 %v12579, %v13007
        %v13093 = vadd.f32 %v12580, %v13009
        %v13094 = vadd.f32 %v12581, %v13011
        %v13095 = vadd.f32 %v12582, %v13013
        %v13096 = vadd.f32 %v12583, %v13015
        %v13097 = vadd.f32 %v12584, %v13017
        %v13098 = vadd.f32 %v12585, %v13019
        %v13099 = vadd.f32 %v12586, %v13021
        %v13100 = vadd.f32 %v12587, %v13023
        %v13101 = vadd.f32 %v12588, %v13025
        %v13102 = vadd.f32 %v12589, %v13027
        %v13103 = vadd.f32 %v12590, %v13029
        %v13104 = vadd.f32 %v12591, %v13031
        %v13105 = vadd.f32 %v12592, %v13033
        %v13106 = vadd.f32 %v12593, %v13035
        %v13107 = vadd.f32 %v12594, %v13037
        %v13108 = vadd.f32 %v12595, %v13039
        %v13109 = vadd.f32 %v12596, %v13041
        %v13110 = vadd.f32 %v12597, %v13043
        %v13111 = vadd.f32 %v12598, %v13045
        %v13112 = vadd.f32 %v12599, %v13047
        %v13113 = vadd.f32 %v12600, %v13049
        %v13114 = vmax.f32 %v12922, 0.0
        %v13115 = vmax.f32 %v12923, 0.0
        %v13116 = vmax.f32 %v12924, 0.0
        %v13117 = vmax.f32 %v12925, 0.0
        %v13118 = vmax.f32 %v12926, 0.0
        %v13119 = vmax.f32 %v12927, 0.0
        %v13120 = vmax.f32 %v12928, 0.0
        %v13121 = vmax.f32 %v12929, 0.0
        %v13122 = vmax.f32 %v12930, 0.0
        %v13123 = vmax.f32 %v12931, 0.0
        %v13124 = vmax.f32 %v12932, 0.0
        %v13125 = vmax.f32 %v12933, 0.0
        %v13126 = vmax.f32 %v12934, 0.0
        %v13127 = vmax.f32 %v12935, 0.0
        %v13128 = vmax.f32 %v12936, 0.0
        %v13129 = vmax.f32 %v12937, 0.0
        %v13130 = vmax.f32 %v12938, 0.0
        %v13131 = vmax.f32 %v12939, 0.0
        %v13132 = vmax.f32 %v12940, 0.0
        %v13133 = vmax.f32 %v12941, 0.0
        %v13134 = vmax.f32 %v12942, 0.0
        %v13135 = vmax.f32 %v12943, 0.0
        %v13136 = vmax.f32 %v12944, 0.0
        %v13137 = vmax.f32 %v12945, 0.0
        %v13138 = vmax.f32 %v12946, 0.0
        %v13139 = vmax.f32 %v12947, 0.0
        %v13140 = vmax.f32 %v12948, 0.0
        %v13141 = vmax.f32 %v12949, 0.0
        %v13142 = vmax.f32 %v12950, 0.0
        %v13143 = vmax.f32 %v12951, 0.0
        %v13144 = vmax.f32 %v12952, 0.0
        %v13145 = vmax.f32 %v12953, 0.0
        %v13146 = vmax.f32 %v13082, 0.0
        %v13147 = vmax.f32 %v13083, 0.0
        %v13148 = vmax.f32 %v13084, 0.0
        %v13149 = vmax.f32 %v13085, 0.0
        %v13150 = vmax.f32 %v13086, 0.0
        %v13151 = vmax.f32 %v13087, 0.0
        %v13152 = vmax.f32 %v13088, 0.0
        %v13153 = vmax.f32 %v13089, 0.0
        %v13154 = vmax.f32 %v13090, 0.0
        %v13155 = vmax.f32 %v13091, 0.0
        %v13156 = vmax.f32 %v13092, 0.0
        %v13157 = vmax.f32 %v13093, 0.0
        %v13158 = vmax.f32 %v13094, 0.0
        %v13159 = vmax.f32 %v13095, 0.0
        %v13160 = vmax.f32 %v13096, 0.0
        %v13161 = vmax.f32 %v13097, 0.0
        %v13162 = vmax.f32 %v13098, 0.0
        %v13163 = vmax.f32 %v13099, 0.0
        %v13164 = vmax.f32 %v13100, 0.0
        %v13165 = vmax.f32 %v13101, 0.0
        %v13166 = vmax.f32 %v13102, 0.0
        %v13167 = vmax.f32 %v13103, 0.0
        %v13168 = vmax.f32 %v13104, 0.0
        %v13169 = vmax.f32 %v13105, 0.0
        %v13170 = vmax.f32 %v13106, 0.0
        %v13171 = vmax.f32 %v13107, 0.0
        %v13172 = vmax.f32 %v13108, 0.0
        %v13173 = vmax.f32 %v13109, 0.0
        %v13174 = vmax.f32 %v13110, 0.0
        %v13175 = vmax.f32 %v13111, 0.0
        %v13176 = vmax.f32 %v13112, 0.0
        %v13177 = vmax.f32 %v13113, 0.0
        %13210 = vrot.lane.b32.xlu0 %v13146, 8
        %v13211 = vpop.permute.xlu0 %13210
        %13212 = vrot.lane.b32.xlu0 %v13147, 8
        %v13213 = vpop.permute.xlu0 %13212
        %13214 = vrot.lane.b32.xlu0 %v13148, 8
        %v13215 = vpop.permute.xlu0 %13214
        %13216 = vrot.lane.b32.xlu0 %v13149, 8
        %v13217 = vpop.permute.xlu0 %13216
        %13218 = vrot.lane.b32.xlu0 %v13150, 8
        %v13219 = vpop.permute.xlu0 %13218
        %13220 = vrot.lane.b32.xlu0 %v13151, 8
        %v13221 = vpop.permute.xlu0 %13220
        %13222 = vrot.lane.b32.xlu0 %v13152, 8
        %v13223 = vpop.permute.xlu0 %13222
        %13224 = vrot.lane.b32.xlu0 %v13153, 8
        %v13225 = vpop.permute.xlu0 %13224
        %13226 = vrot.lane.b32.xlu0 %v13154, 8
        %v13227 = vpop.permute.xlu0 %13226
        %13228 = vrot.lane.b32.xlu0 %v13155, 8
        %v13229 = vpop.permute.xlu0 %13228
        %13230 = vrot.lane.b32.xlu0 %v13156, 8
        %v13231 = vpop.permute.xlu0 %13230
        %13232 = vrot.lane.b32.xlu0 %v13157, 8
        %v13233 = vpop.permute.xlu0 %13232
        %13234 = vrot.lane.b32.xlu0 %v13158, 8
        %v13235 = vpop.permute.xlu0 %13234
        %13236 = vrot.lane.b32.xlu0 %v13159, 8
        %v13237 = vpop.permute.xlu0 %13236
        %13238 = vrot.lane.b32.xlu0 %v13160, 8
        %v13239 = vpop.permute.xlu0 %13238
        %13240 = vrot.lane.b32.xlu0 %v13161, 8
        %v13241 = vpop.permute.xlu0 %13240
        %13242 = vrot.lane.b32.xlu0 %v13162, 8
        %v13243 = vpop.permute.xlu0 %13242
        %13244 = vrot.lane.b32.xlu0 %v13163, 8
        %v13245 = vpop.permute.xlu0 %13244
        %13246 = vrot.lane.b32.xlu0 %v13164, 8
        %v13247 = vpop.permute.xlu0 %13246
        %13248 = vrot.lane.b32.xlu0 %v13165, 8
        %v13249 = vpop.permute.xlu0 %13248
        %13250 = vrot.lane.b32.xlu0 %v13166, 8
        %v13251 = vpop.permute.xlu0 %13250
        %13252 = vrot.lane.b32.xlu0 %v13167, 8
        %v13253 = vpop.permute.xlu0 %13252
        %13254 = vrot.lane.b32.xlu0 %v13168, 8
        %v13255 = vpop.permute.xlu0 %13254
        %13256 = vrot.lane.b32.xlu0 %v13169, 8
        %v13257 = vpop.permute.xlu0 %13256
        %13258 = vrot.lane.b32.xlu0 %v13170, 8
        %v13259 = vpop.permute.xlu0 %13258
        %13260 = vrot.lane.b32.xlu0 %v13171, 8
        %v13261 = vpop.permute.xlu0 %13260
        %13262 = vrot.lane.b32.xlu0 %v13172, 8
        %v13263 = vpop.permute.xlu0 %13262
        %13264 = vrot.lane.b32.xlu0 %v13173, 8
        %v13265 = vpop.permute.xlu0 %13264
        %13266 = vrot.lane.b32.xlu0 %v13174, 8
        %v13267 = vpop.permute.xlu0 %13266
        %13268 = vrot.lane.b32.xlu0 %v13175, 8
        %v13269 = vpop.permute.xlu0 %13268
        %13270 = vrot.lane.b32.xlu0 %v13176, 8
        %v13271 = vpop.permute.xlu0 %13270
        %13272 = vrot.lane.b32.xlu0 %v13177, 8
        %v13273 = vpop.permute.xlu0 %13272
        %v13306 = vsel %vm3243, %v13114, %v13211
        %v13307 = vsel %vm3243, %v13115, %v13213
        %v13308 = vsel %vm3243, %v13116, %v13215
        %v13309 = vsel %vm3243, %v13117, %v13217
        %v13310 = vsel %vm3243, %v13118, %v13219
        %v13311 = vsel %vm3243, %v13119, %v13221
        %v13312 = vsel %vm3243, %v13120, %v13223
        %v13313 = vsel %vm3243, %v13121, %v13225
        %v13314 = vsel %vm3243, %v13122, %v13227
        %v13315 = vsel %vm3243, %v13123, %v13229
        %v13316 = vsel %vm3243, %v13124, %v13231
        %v13317 = vsel %vm3243, %v13125, %v13233
        %v13318 = vsel %vm3243, %v13126, %v13235
        %v13319 = vsel %vm3243, %v13127, %v13237
        %v13320 = vsel %vm3243, %v13128, %v13239
        %v13321 = vsel %vm3243, %v13129, %v13241
        %v13322 = vsel %vm3243, %v13130, %v13243
        %v13323 = vsel %vm3243, %v13131, %v13245
        %v13324 = vsel %vm3243, %v13132, %v13247
        %v13325 = vsel %vm3243, %v13133, %v13249
        %v13326 = vsel %vm3243, %v13134, %v13251
        %v13327 = vsel %vm3243, %v13135, %v13253
        %v13328 = vsel %vm3243, %v13136, %v13255
        %v13329 = vsel %vm3243, %v13137, %v13257
        %v13330 = vsel %vm3243, %v13138, %v13259
        %v13331 = vsel %vm3243, %v13139, %v13261
        %v13332 = vsel %vm3243, %v13140, %v13263
        %v13333 = vsel %vm3243, %v13141, %v13265
        %v13334 = vsel %vm3243, %v13142, %v13267
        %v13335 = vsel %vm3243, %v13143, %v13269
        %v13336 = vsel %vm3243, %v13144, %v13271
        %v13337 = vsel %vm3243, %v13145, %v13273
        %13338 = vst.msk [vmem:[%s523] sm:$0xff] %vm1134, %v13306
        %13339 = vst.msk [vmem:[%s523 + $0x8] sm:$0xff] %vm1134, %v13307
        %13340 = vst.msk [vmem:[%s523 + $0x10] sm:$0xff] %vm1134, %v13308
        %13341 = vst.msk [vmem:[%s523 + $0x18] sm:$0xff] %vm1134, %v13309
        %13342 = vst.msk [vmem:[%s523 + $0x20] sm:$0xff] %vm1134, %v13310
        %13343 = vst.msk [vmem:[%s523 + $0x28] sm:$0xff] %vm1134, %v13311
        %13344 = vst.msk [vmem:[%s523 + $0x30] sm:$0xff] %vm1134, %v13312
        %13345 = vst.msk [vmem:[%s523 + $0x38] sm:$0xff] %vm1134, %v13313
        %13346 = vst.msk [vmem:[%s523 + $0x40] sm:$0xff] %vm1134, %v13314
        %13347 = vst.msk [vmem:[%s523 + $0x48] sm:$0xff] %vm1134, %v13315
        %13348 = vst.msk [vmem:[%s523 + $0x50] sm:$0xff] %vm1134, %v13316
        %13349 = vst.msk [vmem:[%s523 + $0x58] sm:$0xff] %vm1134, %v13317
        %13350 = vst.msk [vmem:[%s523 + $0x60] sm:$0xff] %vm1134, %v13318
        %13351 = vst.msk [vmem:[%s523 + $0x68] sm:$0xff] %vm1134, %v13319
        %13352 = vst.msk [vmem:[%s523 + $0x70] sm:$0xff] %vm1134, %v13320
        %13353 = vst.msk [vmem:[%s523 + $0x78] sm:$0xff] %vm1134, %v13321
        %13354 = vst.msk [vmem:[%s523 + $0x80] sm:$0xff] %vm1134, %v13322
        %13355 = vst.msk [vmem:[%s523 + $0x88] sm:$0xff] %vm1134, %v13323
        %13356 = vst.msk [vmem:[%s523 + $0x90] sm:$0xff] %vm1134, %v13324
        %13357 = vst.msk [vmem:[%s523 + $0x98] sm:$0xff] %vm1134, %v13325
        %13358 = vst.msk [vmem:[%s523 + $0xa0] sm:$0xff] %vm1134, %v13326
        %13359 = vst.msk [vmem:[%s523 + $0xa8] sm:$0xff] %vm1134, %v13327
        %13360 = vst.msk [vmem:[%s523 + $0xb0] sm:$0xff] %vm1134, %v13328
        %13361 = vst.msk [vmem:[%s523 + $0xb8] sm:$0xff] %vm1134, %v13329
        %13362 = vst.msk [vmem:[%s523 + $0xc0] sm:$0xff] %vm1134, %v13330
        %13363 = vst.msk [vmem:[%s523 + $0xc8] sm:$0xff] %vm1134, %v13331
        %13364 = vst.msk [vmem:[%s523 + $0xd0] sm:$0xff] %vm1134, %v13332
        %13365 = vst.msk [vmem:[%s523 + $0xd8] sm:$0xff] %vm1134, %v13333
        %13366 = vst.msk [vmem:[%s523 + $0xe0] sm:$0xff] %vm1134, %v13334
        %13367 = vst.msk [vmem:[%s523 + $0xe8] sm:$0xff] %vm1134, %v13335
        %13368 = vst.msk [vmem:[%s523 + $0xf0] sm:$0xff] %vm1134, %v13336
        %13369 = vst.msk [vmem:[%s523 + $0xf8] sm:$0xff] %vm1134, %v13337
        %s13370 = sand.u32 %s337, 1
        %s13371 = scalar_lea.sflag [#allocation4], %s13370
        %s13372 = sand.u32 %s337, 1
        %s13373 = smul.addr %s13372, 256
        %s13374 = scalar_lea.vmem [#allocation3], %s13373
        // Predicated region
        $region81: #{fire_forward.1} parent=67 // pred_check
          %p13375 = pneg %p347
        $region82: #{fire_forward.1} parent=67 // pred_check_branch
          %13377 = sbr.rel (%p13375) target = $region84
        $region83: #{fire_forward.1} parent=67 // pred_region
          %s13378 = smul.u32 4, %s31
          %s13380 = ssub.s32 4096, 4096
          %13381 = vsyncadd %s13371, %s13380
          %s13382 = smul.addr %s13378, 8
          %s13383 = smul.addr %s30, 32
          %s13384 = sadd.s32 %s13382, %s13383
          %s13385 = smul.addr %s13384, 128
          %s13386 = scalar_lea.hbm %s12, %s13385
          %s13387 = sshll.u32 %s13374, 4
          %s13388 = int_to_ptr.vmem [resolvable:$true] %s13387
          %13393 = dma.vmem_to_hbm [thread:$0]  %s13388, 4096, %s13386, %s13371, 128, 128, 8
        $region84: #{fire_forward.1} parent=67 // pred_fallthru
          _
      $region68: #{fire_forward.1} parent=5 // pred_fallthru
        _
      %p13394 = scmp.le.s32.totalorder 2, %s21
      // Predicated region
      $region85: #{fire_forward.1} parent=5 // pred_check
        %p13395 = pneg %p13394
      $region86: #{fire_forward.1} parent=5 // pred_check_branch
        %13397 = sbr.rel (%p13395) target = $region88
      $region87: #{fire_forward.1} parent=5 // pred_region
        %s13398 = ssub.s32 %s21, 2
        // Predicated region
        $region89: #{fire_forward.1} parent=87 // pred_check
          %p13399 = pneg %p353
        $region90: #{fire_forward.1} parent=87 // pred_check_branch
          %13401 = sbr.rel (%p13399) target = $region92
        $region91: #{fire_forward.1} parent=87 // pred_region
          %s13402 = sand.u32 %s338, 1
          %s13403 = scalar_lea.sflag [#allocation4], %s13402
          %s13404 = sand.u32 %s338, 1
          %s13405 = smul.addr %s13404, 256
          %s13406 = scalar_lea.vmem [#allocation3], %s13405
          %13407 = dma.done %s13403, 4096
        $region92: #{fire_forward.1} parent=87 // pred_fallthru
          _
      $region88: #{fire_forward.1} parent=5 // pred_fallthru
        _
    $region6: #{fire_forward.1} parent=1 // loop_footer
      %s25 = sadd.s32 1, %s21
    $region7: #{fire_forward.1} parent=1 // loop_footer_branch
      %20 = sbr.rel target = $region3
    $region8: #{fire_forward.1} parent=1 // loop_exit
      _
    %13408 = vsyncpa [#allocation4], 1
    %s13409 = scalar_lea.sflag [#allocation4], 1
    %13410 = vsyncpa %s13409, 1

</llo_original>
